<compile_context>
chip_gen: v5e
topology: v5e:2x2
jax: 0.10.0
libtpu: 0.0.40
codegen_flags: <defaults>
</compile_context>

<pallas_src>
import functools
import math

import jax
import jax.numpy as jnp
from jax import lax
from jax.experimental import pallas as pl
from jax.experimental.pallas import tpu as pltpu


# ------------------------------------------------------------------ tiled matmul (+bias)

def _matmul_bias_kernel(x_ref, w_ref, b_ref, o_ref, acc_ref, *, apply_relu):
    @pl.when(pl.program_id(2) == 0)
    def _():
        acc_ref[...] = jnp.zeros_like(acc_ref)

    acc_ref[...] += jnp.dot(x_ref[...], w_ref[...],
                            preferred_element_type=jnp.float32)

    @pl.when(pl.program_id(2) == pl.num_programs(2) - 1)
    def _():
        r = acc_ref[...] + b_ref[...].astype(jnp.float32)
        if apply_relu:
            r = jnp.maximum(r, 0.0)
        o_ref[...] = r.astype(o_ref.dtype)


def pallas_linear(x, w, b, apply_relu=False):
    """x:(M,K) @ w:(K,N) + b:(N,) with K-accumulation in VMEM scratch."""
    M, K = x.shape
    N = w.shape[1]

    def tile(d, cap):
        t = min(d, cap)
        return t if d % t == 0 else d

    tm, tn, tk = tile(M, 256), tile(N, 256), tile(K, 512)
    grid = (M // tm, N // tn, K // tk)
    return pl.pallas_call(
        functools.partial(_matmul_bias_kernel, apply_relu=apply_relu),
        grid=grid,
        in_specs=[
            pl.BlockSpec((tm, tk), lambda i, j, k: (i, k)),
            pl.BlockSpec((tk, tn), lambda i, j, k: (k, j)),
            pl.BlockSpec((1, tn), lambda i, j, k: (0, j)),
        ],
        out_specs=pl.BlockSpec((tm, tn), lambda i, j, k: (i, j)),
        out_shape=jax.ShapeDtypeStruct((M, N), x.dtype),
        scratch_shapes=[pltpu.VMEM((tm, tn), jnp.float32)],
        compiler_params=pltpu.CompilerParams(
            dimension_semantics=("parallel", "parallel", "arbitrary")),
    )(x, w, b.reshape(1, N))


# ------------------------------------------------------------------ fused conv kernel
# Generic "stride-1 small-tap conv + bias + ReLU" on a padded channels-last image
# kept entirely in VMEM.  `subpos` output sub-positions per axis (1 for the
# space-to-depth down conv, 2 for the upsample-folded up conv), `ktaps` taps per axis.

def _fused_conv_kernel(x_ref, w_ref, b_ref, o_ref, *, subpos, ktaps, Ho, Wo):
    cin = x_ref.shape[3]
    oc = o_ref.shape[4]
    bias = b_ref[...].astype(jnp.float32)                     # (1, OC)
    xfull = x_ref[0].astype(jnp.float32)                      # (HP, WP, Cin)
    for p in range(subpos):
        for q in range(subpos):
            acc = jnp.zeros((Ho, Wo, oc), jnp.float32) + bias
            for a in range(ktaps):
                for bb in range(ktaps):
                    t = ((p * subpos + q) * ktaps + a) * ktaps + bb
                    win = xfull[p + a:p + a + Ho, q + bb:q + bb + Wo, :]   # (Ho,Wo,Cin)
                    wmat = w_ref[t].astype(jnp.float32)                    # (Cin,OC)
                    wb = jnp.broadcast_to(wmat[None], (Ho, cin, oc))
                    # row-batched matmul: per output row (Wo,Cin)@(Cin,OC)
                    acc = acc + lax.dot_general(
                        win, wb,
                        dimension_numbers=(((2,), (1,)), ((0,), (0,))),
                        preferred_element_type=jnp.float32)
            o_ref[0, p * subpos + q] = jnp.maximum(acc, 0.0).astype(o_ref.dtype)


def fused_conv(xpad, wtaps, bias, *, subpos, ktaps, Ho, Wo):
    """xpad:(B,HP,WP,Cin) padded input, wtaps:(T,Cin,OC) folded tap weights."""
    B, HP, WP, Cin = xpad.shape
    T, _, OC = wtaps.shape
    kern = functools.partial(_fused_conv_kernel, subpos=subpos, ktaps=ktaps,
                             Ho=Ho, Wo=Wo)
    return pl.pallas_call(
        kern,
        grid=(B,),
        in_specs=[
            pl.BlockSpec((1, HP, WP, Cin), lambda i: (i, 0, 0, 0)),
            pl.BlockSpec((T, Cin, OC), lambda i: (0, 0, 0)),
            pl.BlockSpec((1, OC), lambda i: (0, 0)),
        ],
        out_specs=pl.BlockSpec((1, subpos * subpos, Ho, Wo, OC),
                               lambda i: (i, 0, 0, 0, 0)),
        out_shape=jax.ShapeDtypeStruct((B, subpos * subpos, Ho, Wo, OC), xpad.dtype),
        compiler_params=pltpu.CompilerParams(dimension_semantics=("parallel",)),
    )(xpad, wtaps, bias.reshape(1, OC))


# ---- wrapper-side weight folds / layout transforms (pure layout, no data expansion)

def space_to_depth_pad(x):
    """(B,C,H,W) -> (B,(H+2)//2,(W+2)//2,4C), padded by 1 then 2x2 space-to-depth."""
    B, C, H, W = x.shape
    xp = jnp.pad(x, ((0, 0), (0, 0), (1, 1), (1, 1)))
    xhwc = jnp.transpose(xp, (0, 2, 3, 1))                       # (B,H+2,W+2,C)
    z = xhwc.reshape(B, (H + 2) // 2, 2, (W + 2) // 2, 2, C)
    z = jnp.transpose(z, (0, 1, 3, 2, 4, 5))                     # (B,Hz,Wz,2,2,C)
    return z.reshape(B, (H + 2) // 2, (W + 2) // 2, 4 * C)


def fold_s2d_conv_weights(w):
    """3x3 stride-2 conv weights (OC,C,3,3) -> 2x2-tap weights (4, 4C, OC) on s2d input."""
    OC, Cin, _, _ = w.shape
    wt = jnp.transpose(w, (2, 3, 1, 0))                          # (3,3,Cin,OC)
    zero = jnp.zeros((Cin, OC), w.dtype)
    taps = []
    for a in range(2):
        for b in range(2):
            parts = []
            for r in range(2):
                for s in range(2):
                    i, j = 2 * a + r, 2 * b + s
                    parts.append(wt[i, j] if (i < 3 and j < 3) else zero)
            taps.append(jnp.concatenate(parts, axis=0))          # (4*Cin, OC)
    return jnp.stack(taps)                                       # (4, 4*Cin, OC)


def fold_upsample_conv_weights(w):
    """Fold nearest-2x-upsample + 3x3 s1 p1 conv into four 2x2-tap convs on the
    low-res (padded) input.  Returns (16, Cin, OC) in (p,q,a,b) order."""
    OC, Cin, _, _ = w.shape
    wt = jnp.transpose(w, (2, 3, 1, 0))                          # (3,3,Cin,OC)
    rowsets = {(0, 0): (0,), (0, 1): (1, 2), (1, 0): (0, 1), (1, 1): (2,)}
    taps = []
    for p in range(2):
        for q in range(2):
            for a in range(2):
                for b in range(2):
                    acc = jnp.zeros((Cin, OC), w.dtype)
                    for i in rowsets[(p, a)]:
                        for j in rowsets[(q, b)]:
                            acc = acc + wt[i, j]
                    taps.append(acc)
    return jnp.stack(taps)                                       # (16, Cin, OC)


# ------------------------------------------------------------------ fused ResNorm-attention

def _res_attn_kernel(t_ref, wqkv_ref, bqkv_ref, wproj_ref, bproj_ref,
                     g_ref, beta_ref, o_ref, *, num_heads, head_dim, scale):
    t = t_ref[0].astype(jnp.float32)                             # (N, D)
    qkv = jnp.dot(t, wqkv_ref[...].astype(jnp.float32),
                  preferred_element_type=jnp.float32)
    qkv = qkv + bqkv_ref[...].astype(jnp.float32)                # (N, 3D)
    d = num_heads * head_dim
    outs = []
    for h in range(num_heads):                                   # all heads in ONE kernel
        q = qkv[:, h * head_dim:(h + 1) * head_dim]
        k = qkv[:, d + h * head_dim:d + (h + 1) * head_dim]
        v = qkv[:, 2 * d + h * head_dim:2 * d + (h + 1) * head_dim]
        s = jnp.dot(q, k.T, preferred_element_type=jnp.float32) * scale
        s = s - jnp.max(s, axis=-1, keepdims=True)
        p = jnp.exp(s)
        p = p * pl.reciprocal(jnp.sum(p, axis=-1, keepdims=True), approx=True)
        outs.append(jnp.dot(p, v, preferred_element_type=jnp.float32))
    attn = jnp.concatenate(outs, axis=-1)                        # (N, D)
    proj = jnp.dot(attn, wproj_ref[...].astype(jnp.float32),
                   preferred_element_type=jnp.float32)
    proj = proj + bproj_ref[...].astype(jnp.float32)
    t2 = t + proj                                                # residual
    mean = jnp.mean(t2, axis=-1, keepdims=True)                  # post-norm LayerNorm
    var = jnp.mean(jnp.square(t2 - mean), axis=-1, keepdims=True)
    y = (t2 - mean) * lax.rsqrt(var + 1e-5)
    o_ref[0] = (y * g_ref[...].astype(jnp.float32)
                + beta_ref[...].astype(jnp.float32)).astype(o_ref.dtype)


def patchify(x, ps):
    B, C, H, W = x.shape
    x = x.reshape(B, C, H // ps, ps, W // ps, ps)
    x = x.transpose(0, 2, 4, 1, 3, 5)
    return x.reshape(B, (H // ps) * (W // ps), C * ps * ps)


def unpatchify(t, C, H, W, ps):
    B = t.shape[0]
    x = t.reshape(B, H // ps, W // ps, C, ps, ps)
    x = x.transpose(0, 3, 1, 4, 2, 5)
    return x.reshape(B, C, H, W)


def res_attn_block(x, p, num_heads, patch_size):
    B, C, H, W = x.shape
    t = patchify(x, patch_size)                                  # (B, N, D)
    N, D = t.shape[1], t.shape[2]
    head_dim = D // num_heads
    kern = functools.partial(_res_attn_kernel, num_heads=num_heads,
                             head_dim=head_dim, scale=1.0 / math.sqrt(head_dim))
    out = pl.pallas_call(
        kern,
        grid=(B,),
        in_specs=[
            pl.BlockSpec((1, N, D), lambda i: (i, 0, 0)),
            pl.BlockSpec((D, 3 * D), lambda i: (0, 0)),
            pl.BlockSpec((1, 3 * D), lambda i: (0, 0)),
            pl.BlockSpec((D, D), lambda i: (0, 0)),
            pl.BlockSpec((1, D), lambda i: (0, 0)),
            pl.BlockSpec((1, D), lambda i: (0, 0)),
            pl.BlockSpec((1, D), lambda i: (0, 0)),
        ],
        out_specs=pl.BlockSpec((1, N, D), lambda i: (i, 0, 0)),
        out_shape=jax.ShapeDtypeStruct((B, N, D), x.dtype),
        compiler_params=pltpu.CompilerParams(dimension_semantics=("parallel",)),
    )(t, p["qkv"]["w"], p["qkv"]["b"].reshape(1, 3 * D),
      p["proj"]["w"], p["proj"]["b"].reshape(1, D),
      p["ln_g"].reshape(1, D), p["ln_b"].reshape(1, D))
    return unpatchify(out, C, H, W, patch_size)


# ------------------------------------------------------------------ down / up blocks

def down_block(x, p, num_heads, patch_size):
    B, C, H, W = x.shape
    z = space_to_depth_pad(x)                                    # (B, H/2+1, W/2+1, 4C)
    y = fused_conv(z, p["conv_taps"], p["conv_b"],
                   subpos=1, ktaps=2, Ho=H // 2, Wo=W // 2)      # (B,1,Ho,Wo,OC)
    y = jnp.transpose(y[:, 0], (0, 3, 1, 2))                     # NCHW
    return res_attn_block(y, p["attn"], num_heads, patch_size)


def up_block(x, p, num_heads, patch_size):
    B, C, H, W = x.shape
    OC = p["conv_b"].shape[0]
    xlp = jnp.pad(jnp.transpose(x, (0, 2, 3, 1)),
                  ((0, 0), (1, 1), (1, 1), (0, 0)))              # (B,H+2,W+2,C)
    y = fused_conv(xlp, p["conv_taps"], p["conv_b"],
                   subpos=2, ktaps=2, Ho=H, Wo=W)                # (B,4,H,W,OC)
    y = y.reshape(B, 2, 2, H, W, OC).transpose(0, 5, 3, 1, 4, 2)
    y = y.reshape(B, OC, 2 * H, 2 * W)                           # interleave sub-positions
    return res_attn_block(y, p["attn"], num_heads, patch_size)


# ------------------------------------------------------------------ parameter init

def init_linear(key, fan_in, fan_out):
    w = jax.random.normal(key, (fan_in, fan_out), jnp.float32) / math.sqrt(fan_in)
    return {"w": w, "b": jnp.zeros((fan_out,), jnp.float32)}


def init_conv_raw(key, in_c, out_c, k=3):
    w = jax.random.normal(key, (out_c, in_c, k, k), jnp.float32) / math.sqrt(in_c * k * k)
    return w, jnp.zeros((out_c,), jnp.float32)


def init_attn(key, dim):
    k1, k2 = jax.random.split(key)
    return {
        "qkv": init_linear(k1, dim, 3 * dim),
        "proj": init_linear(k2, dim, dim),
        "ln_g": jnp.ones((dim,), jnp.float32),
        "ln_b": jnp.zeros((dim,), jnp.float32),
    }


def init_model(key, channels, num_heads, patch_sizes, latent_dim, init_h, init_w):
    keys = iter(jax.random.split(key, 64))
    params = {"down": [], "up": []}
    cfg = {"down": [], "up": []}

    in_c, h, w = channels[0], init_h, init_w
    for out_c, nh, ps in zip(channels[1:], num_heads, patch_sizes):
        wconv, bconv = init_conv_raw(next(keys), in_c, out_c)
        params["down"].append({
            "conv_taps": fold_s2d_conv_weights(wconv),
            "conv_b": bconv,
            "attn": init_attn(next(keys), out_c * ps * ps),
        })
        cfg["down"].append((nh, ps))
        in_c, h, w = out_c, h // 2, w // 2

    decode_shape = (in_c, h, w)
    flat = in_c * h * w
    fc_mu = init_linear(next(keys), flat, latent_dim)
    fc_logvar = init_linear(next(keys), flat, latent_dim)
    params["fc_heads"] = {"w": jnp.concatenate([fc_mu["w"], fc_logvar["w"]], axis=1),
                          "b": jnp.concatenate([fc_mu["b"], fc_logvar["b"]])}
    params["fc_decode"] = init_linear(next(keys), latent_dim, flat)

    up_specs = list(zip(reversed(channels[:-1]), reversed(num_heads[:-1]),
                        reversed(patch_sizes[:-1])))
    up_specs.append((channels[0], num_heads[0], patch_sizes[0]))
    for out_c, nh, ps in up_specs:
        wconv, bconv = init_conv_raw(next(keys), in_c, out_c)
        params["up"].append({
            "conv_taps": fold_upsample_conv_weights(wconv),
            "conv_b": bconv,
            "attn": init_attn(next(keys), out_c * ps * ps),
        })
        cfg["up"].append((nh, ps))
        in_c = out_c

    cfg["decode_shape"] = decode_shape
    cfg["latent_dim"] = latent_dim
    return params, cfg


# ------------------------------------------------------------------ VAE forward (jit-ed)

def make_forward(cfg):
    dec_c, dec_h, dec_w = cfg["decode_shape"]
    latent = cfg["latent_dim"]
    down_cfg = tuple(cfg["down"])
    up_cfg = tuple(cfg["up"])

    def forward(params, x, noise_key):
        # encode
        for p, (nh, ps) in zip(params["down"], down_cfg):
            x = down_block(x, p, nh, ps)
        B = x.shape[0]
        xf = x.reshape(B, -1)
        heads = pallas_linear(xf, params["fc_heads"]["w"], params["fc_heads"]["b"])
        mu, logvar = heads[:, :latent], heads[:, latent:]
        logvar = jnp.clip(logvar, -2.0, 2.0)
        # reparameterize (jax.random stand-in for torch.randn_like)
        std = jnp.exp(0.5 * logvar)
        eps = jax.random.normal(noise_key, std.shape, std.dtype)
        z = mu + eps * std
        # decode
        xd = pallas_linear(z, params["fc_decode"]["w"], params["fc_decode"]["b"])
        xd = xd.reshape(B, dec_c, dec_h, dec_w)
        for p, (nh, ps) in zip(params["up"], up_cfg):
            xd = up_block(xd, p, nh, ps)
        return xd, mu, logvar

    return jax.jit(forward)


# ------------------------------------------------------------------ main

if __name__ == "__main__":
    channels = [1, 8, 16]
    num_heads = [2, 4]
    patch_sizes = [2, 2]
    latent_dim = 16
    init_h = init_w = 16

    root = jax.random.PRNGKey(0)
    k_param, k_input, k_noise = jax.random.split(root, 3)

    params, cfg = init_model(k_param, channels, num_heads, patch_sizes,
                             latent_dim, init_h, init_w)
    forward = make_forward(cfg)

    x = jax.random.normal(k_input, (2, channels[0], init_h, init_w), jnp.float32)

    x_rec, mu, logvar = forward(params, x, k_noise)
    jax.block_until_ready((x_rec, mu, logvar))

    assert x_rec.shape == (2, 1, 16, 16)
    assert mu.shape == (2, latent_dim)
    assert logvar.shape == (2, latent_dim)
    assert bool(jnp.all(jnp.isfinite(x_rec)))
    assert bool(jnp.all(jnp.isfinite(mu)))
    assert bool(jnp.all(jnp.isfinite(logvar)))
    print("KERNEL_OK")
</pallas_src>

<mosaic_0001>
module attributes {stable_mosaic.version = 11 : i64} {
  func.func @_fused_conv_kernel(%arg0: i32, %arg1: memref<1x9x9x4xf32, #tpu.memory_space<vmem>>, %arg2: memref<4x4x8xf32, #tpu.memory_space<vmem>>, %arg3: memref<1x8xf32, #tpu.memory_space<vmem>>, %arg4: memref<1x1x8x8x8xf32, #tpu.memory_space<vmem>>) attributes {dimension_semantics = [#tpu.dimension_semantics<parallel>], iteration_bounds = array<i64: 2>, scalar_prefetch = 0 : i64, scratch_operands = 0 : i64, tpu.core_type = #tpu.core_type<tc>, window_params = [{transform_indices = @transform_0, window_bounds = array<i64: 1, 9, 9, 4>}, {pipeline_mode = #tpu.pipeline_mode<synchronous>, transform_indices = @transform_1, window_bounds = array<i64: 4, 4, 8>}, {pipeline_mode = #tpu.pipeline_mode<synchronous>, transform_indices = @transform_2, window_bounds = array<i64: 1, 8>}, {transform_indices = @transform_3, window_bounds = array<i64: 1, 1, 8, 8, 8>}]} {
    %c0 = arith.constant 0 : index
    %c0_0 = arith.constant 0 : index
    %0 = vector.load %arg3[%c0, %c0_0] : memref<1x8xf32, #tpu.memory_space<vmem>>, vector<1x8xf32>
    %c0_1 = arith.constant 0 : index
    %c0_2 = arith.constant 0 : index
    %c0_3 = arith.constant 0 : index
    %c0_4 = arith.constant 0 : index
    %1 = vector.load %arg1[%c0_1, %c0_2, %c0_3, %c0_4] : memref<1x9x9x4xf32, #tpu.memory_space<vmem>>, vector<1x9x9x4xf32>
    %2 = vector.shape_cast %1 : vector<1x9x9x4xf32> to vector<9x9x4xf32>
    %cst = arith.constant 0.000000e+00 : f32
    %3 = vector.broadcast %cst : f32 to vector<8x8x8xf32>
    %4 = vector.shape_cast %0 : vector<1x8xf32> to vector<1x1x8xf32>
    %5 = vector.broadcast %4 : vector<1x1x8xf32> to vector<8x8x8xf32>
    %6 = arith.addf %3, %5 : vector<8x8x8xf32>
    %7 = vector.extract_strided_slice %2 {offsets = [0, 0, 0], sizes = [8, 8, 4], strides = [1, 1, 1]} : vector<9x9x4xf32> to vector<8x8x4xf32>
    %c0_5 = arith.constant 0 : index
    %c0_6 = arith.constant 0 : index
    %c0_7 = arith.constant 0 : index
    %8 = vector.load %arg2[%c0_5, %c0_6, %c0_7] : memref<4x4x8xf32, #tpu.memory_space<vmem>>, vector<1x4x8xf32>
    %9 = vector.shape_cast %8 : vector<1x4x8xf32> to vector<4x8xf32>
    %10 = vector.shape_cast %9 : vector<4x8xf32> to vector<1x4x8xf32>
    %11 = vector.shape_cast %10 : vector<1x4x8xf32> to vector<1x4x8xf32>
    %12 = vector.broadcast %11 : vector<1x4x8xf32> to vector<8x4x8xf32>
    %cst_8 = arith.constant dense<0.000000e+00> : vector<8x8x8xf32>
    %13 = tpu.matmul %7, %12, %cst_8 {dimension_numbers = #tpu.dot_dimension_numbers<[2], [1], [1], [2], [0, 0, 0, 1, 1, 2], [0], [0]>} : vector<8x8x4xf32>, vector<8x4x8xf32>, vector<8x8x8xf32> -> vector<8x8x8xf32>
    %14 = arith.addf %6, %13 : vector<8x8x8xf32>
    %15 = vector.extract_strided_slice %2 {offsets = [0, 1, 0], sizes = [8, 8, 4], strides = [1, 1, 1]} : vector<9x9x4xf32> to vector<8x8x4xf32>
    %c1 = arith.constant 1 : index
    %c0_9 = arith.constant 0 : index
    %c0_10 = arith.constant 0 : index
    %16 = vector.load %arg2[%c1, %c0_9, %c0_10] : memref<4x4x8xf32, #tpu.memory_space<vmem>>, vector<1x4x8xf32>
    %17 = vector.shape_cast %16 : vector<1x4x8xf32> to vector<4x8xf32>
    %18 = vector.shape_cast %17 : vector<4x8xf32> to vector<1x4x8xf32>
    %19 = vector.shape_cast %18 : vector<1x4x8xf32> to vector<1x4x8xf32>
    %20 = vector.broadcast %19 : vector<1x4x8xf32> to vector<8x4x8xf32>
    %cst_11 = arith.constant dense<0.000000e+00> : vector<8x8x8xf32>
    %21 = tpu.matmul %15, %20, %cst_11 {dimension_numbers = #tpu.dot_dimension_numbers<[2], [1], [1], [2], [0, 0, 0, 1, 1, 2], [0], [0]>} : vector<8x8x4xf32>, vector<8x4x8xf32>, vector<8x8x8xf32> -> vector<8x8x8xf32>
    %22 = arith.addf %14, %21 : vector<8x8x8xf32>
    %23 = vector.extract_strided_slice %2 {offsets = [1, 0, 0], sizes = [8, 8, 4], strides = [1, 1, 1]} : vector<9x9x4xf32> to vector<8x8x4xf32>
    %c2 = arith.constant 2 : index
    %c0_12 = arith.constant 0 : index
    %c0_13 = arith.constant 0 : index
    %24 = vector.load %arg2[%c2, %c0_12, %c0_13] : memref<4x4x8xf32, #tpu.memory_space<vmem>>, vector<1x4x8xf32>
    %25 = vector.shape_cast %24 : vector<1x4x8xf32> to vector<4x8xf32>
    %26 = vector.shape_cast %25 : vector<4x8xf32> to vector<1x4x8xf32>
    %27 = vector.shape_cast %26 : vector<1x4x8xf32> to vector<1x4x8xf32>
    %28 = vector.broadcast %27 : vector<1x4x8xf32> to vector<8x4x8xf32>
    %cst_14 = arith.constant dense<0.000000e+00> : vector<8x8x8xf32>
    %29 = tpu.matmul %23, %28, %cst_14 {dimension_numbers = #tpu.dot_dimension_numbers<[2], [1], [1], [2], [0, 0, 0, 1, 1, 2], [0], [0]>} : vector<8x8x4xf32>, vector<8x4x8xf32>, vector<8x8x8xf32> -> vector<8x8x8xf32>
    %30 = arith.addf %22, %29 : vector<8x8x8xf32>
    %31 = vector.extract_strided_slice %2 {offsets = [1, 1, 0], sizes = [8, 8, 4], strides = [1, 1, 1]} : vector<9x9x4xf32> to vector<8x8x4xf32>
    %c3 = arith.constant 3 : index
    %c0_15 = arith.constant 0 : index
    %c0_16 = arith.constant 0 : index
    %32 = vector.load %arg2[%c3, %c0_15, %c0_16] : memref<4x4x8xf32, #tpu.memory_space<vmem>>, vector<1x4x8xf32>
    %33 = vector.shape_cast %32 : vector<1x4x8xf32> to vector<4x8xf32>
    %34 = vector.shape_cast %33 : vector<4x8xf32> to vector<1x4x8xf32>
    %35 = vector.shape_cast %34 : vector<1x4x8xf32> to vector<1x4x8xf32>
    %36 = vector.broadcast %35 : vector<1x4x8xf32> to vector<8x4x8xf32>
    %cst_17 = arith.constant dense<0.000000e+00> : vector<8x8x8xf32>
    %37 = tpu.matmul %31, %36, %cst_17 {dimension_numbers = #tpu.dot_dimension_numbers<[2], [1], [1], [2], [0, 0, 0, 1, 1, 2], [0], [0]>} : vector<8x8x4xf32>, vector<8x4x8xf32>, vector<8x8x8xf32> -> vector<8x8x8xf32>
    %38 = arith.addf %30, %37 : vector<8x8x8xf32>
    %cst_18 = arith.constant 0.000000e+00 : f32
    %39 = vector.broadcast %cst_18 : f32 to vector<8x8x8xf32>
    %40 = arith.maximumf %38, %39 : vector<8x8x8xf32>
    %c0_19 = arith.constant 0 : index
    %c0_20 = arith.constant 0 : index
    %c0_21 = arith.constant 0 : index
    %c0_22 = arith.constant 0 : index
    %c0_23 = arith.constant 0 : index
    %41 = vector.load %arg4[%c0_19, %c0_20, %c0_21, %c0_22, %c0_23] : memref<1x1x8x8x8xf32, #tpu.memory_space<vmem>>, vector<1x1x8x8x8xf32>
    %42 = vector.shape_cast %41 : vector<1x1x8x8x8xf32> to vector<8x8x8xf32>
    %43 = vector.shape_cast %40 : vector<8x8x8xf32> to vector<1x1x8x8x8xf32>
    tpu.vector_store %arg4[%c0_19, %c0_20, %c0_21, %c0_22, %c0_23], %43 {strides = array<i32>} : memref<1x1x8x8x8xf32, #tpu.memory_space<vmem>>, vector<1x1x8x8x8xf32>,
    return
  }
  func.func @transform_0(%arg0: i32) -> (i32, i32, i32, i32) {
    %c0_i32 = arith.constant 0 : i32
    %c0_i32_0 = arith.constant 0 : i32
    %c0_i32_1 = arith.constant 0 : i32
    %c0_i32_2 = arith.constant 0 : i32
    return %arg0, %c0_i32, %c0_i32_0, %c0_i32_1 : i32, i32, i32, i32
  }
  func.func @transform_1(%arg0: i32) -> (i32, i32, i32) {
    %c0_i32 = arith.constant 0 : i32
    %c0_i32_0 = arith.constant 0 : i32
    %c0_i32_1 = arith.constant 0 : i32
    %c0_i32_2 = arith.constant 0 : i32
    return %c0_i32, %c0_i32_0, %c0_i32_1 : i32, i32, i32
  }
  func.func @transform_2(%arg0: i32) -> (i32, i32) {
    %c0_i32 = arith.constant 0 : i32
    %c0_i32_0 = arith.constant 0 : i32
    %c0_i32_1 = arith.constant 0 : i32
    return %c0_i32, %c0_i32_0 : i32, i32
  }
  func.func @transform_3(%arg0: i32) -> (i32, i32, i32, i32, i32) {
    %c0_i32 = arith.constant 0 : i32
    %c0_i32_0 = arith.constant 0 : i32
    %c0_i32_1 = arith.constant 0 : i32
    %c0_i32_2 = arith.constant 0 : i32
    %c0_i32_3 = arith.constant 0 : i32
    return %arg0, %c0_i32, %c0_i32_0, %c0_i32_1, %c0_i32_2 : i32, i32, i32, i32, i32
  }
}

module attributes {stable_mosaic.version = 11 : i64} {
  func.func @_res_attn_kernel(%arg0: i32, %arg1: memref<1x16x32xf32, #tpu.memory_space<vmem>>, %arg2: memref<32x96xf32, #tpu.memory_space<vmem>>, %arg3: memref<1x96xf32, #tpu.memory_space<vmem>>, %arg4: memref<32x32xf32, #tpu.memory_space<vmem>>, %arg5: memref<1x32xf32, #tpu.memory_space<vmem>>, %arg6: memref<1x32xf32, #tpu.memory_space<vmem>>, %arg7: memref<1x32xf32, #tpu.memory_space<vmem>>, %arg8: memref<1x16x32xf32, #tpu.memory_space<vmem>>) attributes {dimension_semantics = [#tpu.dimension_semantics<parallel>], iteration_bounds = array<i64: 2>, scalar_prefetch = 0 : i64, scratch_operands = 0 : i64, tpu.core_type = #tpu.core_type<tc>, window_params = [{transform_indices = @transform_0, window_bounds = array<i64: 1, 16, 32>}, {pipeline_mode = #tpu.pipeline_mode<synchronous>, transform_indices = @transform_1, window_bounds = array<i64: 32, 96>}, {pipeline_mode = #tpu.pipeline_mode<synchronous>, transform_indices = @transform_2, window_bounds = array<i64: 1, 96>}, {pipeline_mode = #tpu.pipeline_mode<synchronous>, transform_indices = @transform_3, window_bounds = array<i64: 32, 32>}, {pipeline_mode = #tpu.pipeline_mode<synchronous>, transform_indices = @transform_4, window_bounds = array<i64: 1, 32>}, {pipeline_mode = #tpu.pipeline_mode<synchronous>, transform_indices = @transform_5, window_bounds = array<i64: 1, 32>}, {pipeline_mode = #tpu.pipeline_mode<synchronous>, transform_indices = @transform_6, window_bounds = array<i64: 1, 32>}, {transform_indices = @transform_7, window_bounds = array<i64: 1, 16, 32>}]} {
    %c0 = arith.constant 0 : index
    %c0_0 = arith.constant 0 : index
    %c0_1 = arith.constant 0 : index
    %0 = vector.load %arg1[%c0, %c0_0, %c0_1] : memref<1x16x32xf32, #tpu.memory_space<vmem>>, vector<1x16x32xf32>
    %1 = vector.shape_cast %0 : vector<1x16x32xf32> to vector<16x32xf32>
    %c0_2 = arith.constant 0 : index
    %c0_3 = arith.constant 0 : index
    %2 = vector.load %arg2[%c0_2, %c0_3] : memref<32x96xf32, #tpu.memory_space<vmem>>, vector<32x96xf32>
    %cst = arith.constant dense<0.000000e+00> : vector<16x96xf32>
    %3 = tpu.matmul %1, %2, %cst {dimension_numbers = #tpu.dot_dimension_numbers<[1], [0], [0], [1], [0, 0, 1, 1], [], []>} : vector<16x32xf32>, vector<32x96xf32>, vector<16x96xf32> -> vector<16x96xf32>
    %c0_4 = arith.constant 0 : index
    %c0_5 = arith.constant 0 : index
    %4 = vector.load %arg3[%c0_4, %c0_5] : memref<1x96xf32, #tpu.memory_space<vmem>>, vector<1x96xf32>
    %5 = vector.broadcast %4 : vector<1x96xf32> to vector<16x96xf32>
    %6 = arith.addf %3, %5 : vector<16x96xf32>
    %7 = vector.extract_strided_slice %6 {offsets = [0, 0], sizes = [16, 16], strides = [1, 1]} : vector<16x96xf32> to vector<16x16xf32>
    %8 = vector.extract_strided_slice %6 {offsets = [0, 32], sizes = [16, 16], strides = [1, 1]} : vector<16x96xf32> to vector<16x16xf32>
    %9 = vector.extract_strided_slice %6 {offsets = [0, 64], sizes = [16, 16], strides = [1, 1]} : vector<16x96xf32> to vector<16x16xf32>
    %10 = tpu.transpose %8, [1, 0] : vector<16x16xf32> -> vector<16x16xf32>
    %cst_6 = arith.constant dense<0.000000e+00> : vector<16x16xf32>
    %11 = tpu.matmul %7, %10, %cst_6 {dimension_numbers = #tpu.dot_dimension_numbers<[1], [0], [0], [1], [0, 0, 1, 1], [], []>} : vector<16x16xf32>, vector<16x16xf32>, vector<16x16xf32> -> vector<16x16xf32>
    %cst_7 = arith.constant 2.500000e-01 : f32
    %12 = vector.broadcast %cst_7 : f32 to vector<16x16xf32>
    %13 = arith.mulf %11, %12 : vector<16x16xf32>
    %cst_8 = arith.constant dense<0xFF800000> : vector<16xf32>
    %14 = vector.multi_reduction <maximumf>, %13, %cst_8 [1] : vector<16x16xf32> to vector<16xf32>
    %15 = vector.shape_cast %14 : vector<16xf32> to vector<16x1xf32>
    %16 = vector.broadcast %15 : vector<16x1xf32> to vector<16x16xf32>
    %17 = arith.subf %13, %16 : vector<16x16xf32>
    %18 = math.exp %17 : vector<16x16xf32>
    %cst_9 = arith.constant dense<0.000000e+00> : vector<16xf32>
    %19 = vector.multi_reduction <add>, %18, %cst_9 [1] : vector<16x16xf32> to vector<16xf32>
    %20 = vector.shape_cast %19 : vector<16xf32> to vector<16x1xf32>
    %21 = tpu.reciprocal %20 {approx = true} : vector<16x1xf32> -> vector<16x1xf32>
    %22 = vector.broadcast %21 : vector<16x1xf32> to vector<16x16xf32>
    %23 = arith.mulf %18, %22 : vector<16x16xf32>
    %cst_10 = arith.constant dense<0.000000e+00> : vector<16x16xf32>
    %24 = tpu.matmul %23, %9, %cst_10 {dimension_numbers = #tpu.dot_dimension_numbers<[1], [0], [0], [1], [0, 0, 1, 1], [], []>} : vector<16x16xf32>, vector<16x16xf32>, vector<16x16xf32> -> vector<16x16xf32>
    %25 = vector.extract_strided_slice %6 {offsets = [0, 16], sizes = [16, 16], strides = [1, 1]} : vector<16x96xf32> to vector<16x16xf32>
    %26 = vector.extract_strided_slice %6 {offsets = [0, 48], sizes = [16, 16], strides = [1, 1]} : vector<16x96xf32> to vector<16x16xf32>
    %27 = vector.extract_strided_slice %6 {offsets = [0, 80], sizes = [16, 16], strides = [1, 1]} : vector<16x96xf32> to vector<16x16xf32>
    %28 = tpu.transpose %26, [1, 0] : vector<16x16xf32> -> vector<16x16xf32>
    %cst_11 = arith.constant dense<0.000000e+00> : vector<16x16xf32>
    %29 = tpu.matmul %25, %28, %cst_11 {dimension_numbers = #tpu.dot_dimension_numbers<[1], [0], [0], [1], [0, 0, 1, 1], [], []>} : vector<16x16xf32>, vector<16x16xf32>, vector<16x16xf32> -> vector<16x16xf32>
    %cst_12 = arith.constant 2.500000e-01 : f32
    %30 = vector.broadcast %cst_12 : f32 to vector<16x16xf32>
    %31 = arith.mulf %29, %30 : vector<16x16xf32>
    %cst_13 = arith.constant dense<0xFF800000> : vector<16xf32>
    %32 = vector.multi_reduction <maximumf>, %31, %cst_13 [1] : vector<16x16xf32> to vector<16xf32>
    %33 = vector.shape_cast %32 : vector<16xf32> to vector<16x1xf32>
    %34 = vector.broadcast %33 : vector<16x1xf32> to vector<16x16xf32>
    %35 = arith.subf %31, %34 : vector<16x16xf32>
    %36 = math.exp %35 : vector<16x16xf32>
    %cst_14 = arith.constant dense<0.000000e+00> : vector<16xf32>
    %37 = vector.multi_reduction <add>, %36, %cst_14 [1] : vector<16x16xf32> to vector<16xf32>
    %38 = vector.shape_cast %37 : vector<16xf32> to vector<16x1xf32>
    %39 = tpu.reciprocal %38 {approx = true} : vector<16x1xf32> -> vector<16x1xf32>
    %40 = vector.broadcast %39 : vector<16x1xf32> to vector<16x16xf32>
    %41 = arith.mulf %36, %40 : vector<16x16xf32>
    %cst_15 = arith.constant dense<0.000000e+00> : vector<16x16xf32>
    %42 = tpu.matmul %41, %27, %cst_15 {dimension_numbers = #tpu.dot_dimension_numbers<[1], [0], [0], [1], [0, 0, 1, 1], [], []>} : vector<16x16xf32>, vector<16x16xf32>, vector<16x16xf32> -> vector<16x16xf32>
    %43 = tpu.concatenate %24, %42 in 1 : vector<16x16xf32>, vector<16x16xf32> -> vector<16x32xf32>
    %c0_16 = arith.constant 0 : index
    %c0_17 = arith.constant 0 : index
    %44 = vector.load %arg4[%c0_16, %c0_17] : memref<32x32xf32, #tpu.memory_space<vmem>>, vector<32x32xf32>
    %cst_18 = arith.constant dense<0.000000e+00> : vector<16x32xf32>
    %45 = tpu.matmul %43, %44, %cst_18 {dimension_numbers = #tpu.dot_dimension_numbers<[1], [0], [0], [1], [0, 0, 1, 1], [], []>} : vector<16x32xf32>, vector<32x32xf32>, vector<16x32xf32> -> vector<16x32xf32>
    %c0_19 = arith.constant 0 : index
    %c0_20 = arith.constant 0 : index
    %46 = vector.load %arg5[%c0_19, %c0_20] : memref<1x32xf32, #tpu.memory_space<vmem>>, vector<1x32xf32>
    %47 = vector.broadcast %46 : vector<1x32xf32> to vector<16x32xf32>
    %48 = arith.addf %45, %47 : vector<16x32xf32>
    %49 = arith.addf %1, %48 : vector<16x32xf32>
    %cst_21 = arith.constant dense<0.000000e+00> : vector<16xf32>
    %50 = vector.multi_reduction <add>, %49, %cst_21 [1] : vector<16x32xf32> to vector<16xf32>
    %51 = vector.shape_cast %50 : vector<16xf32> to vector<16x1xf32>
    %cst_22 = arith.constant 3.200000e+01 : f32
    %52 = vector.broadcast %cst_22 : f32 to vector<16x1xf32>
    %53 = arith.divf %51, %52 : vector<16x1xf32>
    %54 = vector.broadcast %53 : vector<16x1xf32> to vector<16x32xf32>
    %55 = arith.subf %49, %54 : vector<16x32xf32>
    %56 = arith.mulf %55, %55 : vector<16x32xf32>
    %cst_23 = arith.constant dense<0.000000e+00> : vector<16xf32>
    %57 = vector.multi_reduction <add>, %56, %cst_23 [1] : vector<16x32xf32> to vector<16xf32>
    %58 = vector.shape_cast %57 : vector<16xf32> to vector<16x1xf32>
    %cst_24 = arith.constant 3.200000e+01 : f32
    %59 = vector.broadcast %cst_24 : f32 to vector<16x1xf32>
    %60 = arith.divf %58, %59 : vector<16x1xf32>
    %61 = vector.broadcast %53 : vector<16x1xf32> to vector<16x32xf32>
    %62 = arith.subf %49, %61 : vector<16x32xf32>
    %cst_25 = arith.constant 9.99999974E-6 : f32
    %63 = vector.broadcast %cst_25 : f32 to vector<16x1xf32>
    %64 = arith.addf %60, %63 : vector<16x1xf32>
    %65 = math.rsqrt %64 : vector<16x1xf32>
    %66 = vector.broadcast %65 : vector<16x1xf32> to vector<16x32xf32>
    %67 = arith.mulf %62, %66 : vector<16x32xf32>
    %c0_26 = arith.constant 0 : index
    %c0_27 = arith.constant 0 : index
    %68 = vector.load %arg6[%c0_26, %c0_27] : memref<1x32xf32, #tpu.memory_space<vmem>>, vector<1x32xf32>
    %69 = vector.broadcast %68 : vector<1x32xf32> to vector<16x32xf32>
    %70 = arith.mulf %67, %69 : vector<16x32xf32>
    %c0_28 = arith.constant 0 : index
    %c0_29 = arith.constant 0 : index
    %71 = vector.load %arg7[%c0_28, %c0_29] : memref<1x32xf32, #tpu.memory_space<vmem>>, vector<1x32xf32>
    %72 = vector.broadcast %71 : vector<1x32xf32> to vector<16x32xf32>
    %73 = arith.addf %70, %72 : vector<16x32xf32>
    %c0_30 = arith.constant 0 : index
    %c0_31 = arith.constant 0 : index
    %c0_32 = arith.constant 0 : index
    %74 = vector.load %arg8[%c0_30, %c0_31, %c0_32] : memref<1x16x32xf32, #tpu.memory_space<vmem>>, vector<1x16x32xf32>
    %75 = vector.shape_cast %74 : vector<1x16x32xf32> to vector<16x32xf32>
    %76 = vector.shape_cast %73 : vector<16x32xf32> to vector<1x16x32xf32>
    tpu.vector_store %arg8[%c0_30, %c0_31, %c0_32], %76 {strides = array<i32>} : memref<1x16x32xf32, #tpu.memory_space<vmem>>, vector<1x16x32xf32>,
    return
  }
  func.func @transform_0(%arg0: i32) -> (i32, i32, i32) {
    %c0_i32 = arith.constant 0 : i32
    %c0_i32_0 = arith.constant 0 : i32
    %c0_i32_1 = arith.constant 0 : i32
    return %arg0, %c0_i32, %c0_i32_0 : i32, i32, i32
  }
  func.func @transform_1(%arg0: i32) -> (i32, i32) {
    %c0_i32 = arith.constant 0 : i32
    %c0_i32_0 = arith.constant 0 : i32
    %c0_i32_1 = arith.constant 0 : i32
    return %c0_i32, %c0_i32_0 : i32, i32
  }
  func.func @transform_2(%arg0: i32) -> (i32, i32) {
    %c0_i32 = arith.constant 0 : i32
    %c0_i32_0 = arith.constant 0 : i32
    %c0_i32_1 = arith.constant 0 : i32
    return %c0_i32, %c0_i32_0 : i32, i32
  }
  func.func @transform_3(%arg0: i32) -> (i32, i32) {
    %c0_i32 = arith.constant 0 : i32
    %c0_i32_0 = arith.constant 0 : i32
    %c0_i32_1 = arith.constant 0 : i32
    return %c0_i32, %c0_i32_0 : i32, i32
  }
  func.func @transform_4(%arg0: i32) -> (i32, i32) {
    %c0_i32 = arith.constant 0 : i32
    %c0_i32_0 = arith.constant 0 : i32
    %c0_i32_1 = arith.constant 0 : i32
    return %c0_i32, %c0_i32_0 : i32, i32
  }
  func.func @transform_5(%arg0: i32) -> (i32, i32) {
    %c0_i32 = arith.constant 0 : i32
    %c0_i32_0 = arith.constant 0 : i32
    %c0_i32_1 = arith.constant 0 : i32
    return %c0_i32, %c0_i32_0 : i32, i32
  }
  func.func @transform_6(%arg0: i32) -> (i32, i32) {
    %c0_i32 = arith.constant 0 : i32
    %c0_i32_0 = arith.constant 0 : i32
    %c0_i32_1 = arith.constant 0 : i32
    return %c0_i32, %c0_i32_0 : i32, i32
  }
  func.func @transform_7(%arg0: i32) -> (i32, i32, i32) {
    %c0_i32 = arith.constant 0 : i32
    %c0_i32_0 = arith.constant 0 : i32
    %c0_i32_1 = arith.constant 0 : i32
    return %arg0, %c0_i32, %c0_i32_0 : i32, i32, i32
  }
}

module attributes {stable_mosaic.version = 11 : i64} {
  func.func @_fused_conv_kernel(%arg0: i32, %arg1: memref<1x5x5x32xf32, #tpu.memory_space<vmem>>, %arg2: memref<4x32x16xf32, #tpu.memory_space<vmem>>, %arg3: memref<1x16xf32, #tpu.memory_space<vmem>>, %arg4: memref<1x1x4x4x16xf32, #tpu.memory_space<vmem>>) attributes {dimension_semantics = [#tpu.dimension_semantics<parallel>], iteration_bounds = array<i64: 2>, scalar_prefetch = 0 : i64, scratch_operands = 0 : i64, tpu.core_type = #tpu.core_type<tc>, window_params = [{transform_indices = @transform_0, window_bounds = array<i64: 1, 5, 5, 32>}, {pipeline_mode = #tpu.pipeline_mode<synchronous>, transform_indices = @transform_1, window_bounds = array<i64: 4, 32, 16>}, {pipeline_mode = #tpu.pipeline_mode<synchronous>, transform_indices = @transform_2, window_bounds = array<i64: 1, 16>}, {transform_indices = @transform_3, window_bounds = array<i64: 1, 1, 4, 4, 16>}]} {
    %c0 = arith.constant 0 : index
    %c0_0 = arith.constant 0 : index
    %0 = vector.load %arg3[%c0, %c0_0] : memref<1x16xf32, #tpu.memory_space<vmem>>, vector<1x16xf32>
    %c0_1 = arith.constant 0 : index
    %c0_2 = arith.constant 0 : index
    %c0_3 = arith.constant 0 : index
    %c0_4 = arith.constant 0 : index
    %1 = vector.load %arg1[%c0_1, %c0_2, %c0_3, %c0_4] : memref<1x5x5x32xf32, #tpu.memory_space<vmem>>, vector<1x5x5x32xf32>
    %2 = vector.shape_cast %1 : vector<1x5x5x32xf32> to vector<5x5x32xf32>
    %cst = arith.constant 0.000000e+00 : f32
    %3 = vector.broadcast %cst : f32 to vector<4x4x16xf32>
    %4 = vector.shape_cast %0 : vector<1x16xf32> to vector<1x1x16xf32>
    %5 = vector.broadcast %4 : vector<1x1x16xf32> to vector<4x4x16xf32>
    %6 = arith.addf %3, %5 : vector<4x4x16xf32>
    %7 = vector.extract_strided_slice %2 {offsets = [0, 0, 0], sizes = [4, 4, 32], strides = [1, 1, 1]} : vector<5x5x32xf32> to vector<4x4x32xf32>
    %c0_5 = arith.constant 0 : index
    %c0_6 = arith.constant 0 : index
    %c0_7 = arith.constant 0 : index
    %8 = vector.load %arg2[%c0_5, %c0_6, %c0_7] : memref<4x32x16xf32, #tpu.memory_space<vmem>>, vector<1x32x16xf32>
    %9 = vector.shape_cast %8 : vector<1x32x16xf32> to vector<32x16xf32>
    %10 = vector.shape_cast %9 : vector<32x16xf32> to vector<1x32x16xf32>
    %11 = vector.shape_cast %10 : vector<1x32x16xf32> to vector<1x32x16xf32>
    %12 = vector.broadcast %11 : vector<1x32x16xf32> to vector<4x32x16xf32>
    %cst_8 = arith.constant dense<0.000000e+00> : vector<4x4x16xf32>
    %13 = tpu.matmul %7, %12, %cst_8 {dimension_numbers = #tpu.dot_dimension_numbers<[2], [1], [1], [2], [0, 0, 0, 1, 1, 2], [0], [0]>} : vector<4x4x32xf32>, vector<4x32x16xf32>, vector<4x4x16xf32> -> vector<4x4x16xf32>
    %14 = arith.addf %6, %13 : vector<4x4x16xf32>
    %15 = vector.extract_strided_slice %2 {offsets = [0, 1, 0], sizes = [4, 4, 32], strides = [1, 1, 1]} : vector<5x5x32xf32> to vector<4x4x32xf32>
    %c1 = arith.constant 1 : index
    %c0_9 = arith.constant 0 : index
    %c0_10 = arith.constant 0 : index
    %16 = vector.load %arg2[%c1, %c0_9, %c0_10] : memref<4x32x16xf32, #tpu.memory_space<vmem>>, vector<1x32x16xf32>
    %17 = vector.shape_cast %16 : vector<1x32x16xf32> to vector<32x16xf32>
    %18 = vector.shape_cast %17 : vector<32x16xf32> to vector<1x32x16xf32>
    %19 = vector.shape_cast %18 : vector<1x32x16xf32> to vector<1x32x16xf32>
    %20 = vector.broadcast %19 : vector<1x32x16xf32> to vector<4x32x16xf32>
    %cst_11 = arith.constant dense<0.000000e+00> : vector<4x4x16xf32>
    %21 = tpu.matmul %15, %20, %cst_11 {dimension_numbers = #tpu.dot_dimension_numbers<[2], [1], [1], [2], [0, 0, 0, 1, 1, 2], [0], [0]>} : vector<4x4x32xf32>, vector<4x32x16xf32>, vector<4x4x16xf32> -> vector<4x4x16xf32>
    %22 = arith.addf %14, %21 : vector<4x4x16xf32>
    %23 = vector.extract_strided_slice %2 {offsets = [1, 0, 0], sizes = [4, 4, 32], strides = [1, 1, 1]} : vector<5x5x32xf32> to vector<4x4x32xf32>
    %c2 = arith.constant 2 : index
    %c0_12 = arith.constant 0 : index
    %c0_13 = arith.constant 0 : index
    %24 = vector.load %arg2[%c2, %c0_12, %c0_13] : memref<4x32x16xf32, #tpu.memory_space<vmem>>, vector<1x32x16xf32>
    %25 = vector.shape_cast %24 : vector<1x32x16xf32> to vector<32x16xf32>
    %26 = vector.shape_cast %25 : vector<32x16xf32> to vector<1x32x16xf32>
    %27 = vector.shape_cast %26 : vector<1x32x16xf32> to vector<1x32x16xf32>
    %28 = vector.broadcast %27 : vector<1x32x16xf32> to vector<4x32x16xf32>
    %cst_14 = arith.constant dense<0.000000e+00> : vector<4x4x16xf32>
    %29 = tpu.matmul %23, %28, %cst_14 {dimension_numbers = #tpu.dot_dimension_numbers<[2], [1], [1], [2], [0, 0, 0, 1, 1, 2], [0], [0]>} : vector<4x4x32xf32>, vector<4x32x16xf32>, vector<4x4x16xf32> -> vector<4x4x16xf32>
    %30 = arith.addf %22, %29 : vector<4x4x16xf32>
    %31 = vector.extract_strided_slice %2 {offsets = [1, 1, 0], sizes = [4, 4, 32], strides = [1, 1, 1]} : vector<5x5x32xf32> to vector<4x4x32xf32>
    %c3 = arith.constant 3 : index
    %c0_15 = arith.constant 0 : index
    %c0_16 = arith.constant 0 : index
    %32 = vector.load %arg2[%c3, %c0_15, %c0_16] : memref<4x32x16xf32, #tpu.memory_space<vmem>>, vector<1x32x16xf32>
    %33 = vector.shape_cast %32 : vector<1x32x16xf32> to vector<32x16xf32>
    %34 = vector.shape_cast %33 : vector<32x16xf32> to vector<1x32x16xf32>
    %35 = vector.shape_cast %34 : vector<1x32x16xf32> to vector<1x32x16xf32>
    %36 = vector.broadcast %35 : vector<1x32x16xf32> to vector<4x32x16xf32>
    %cst_17 = arith.constant dense<0.000000e+00> : vector<4x4x16xf32>
    %37 = tpu.matmul %31, %36, %cst_17 {dimension_numbers = #tpu.dot_dimension_numbers<[2], [1], [1], [2], [0, 0, 0, 1, 1, 2], [0], [0]>} : vector<4x4x32xf32>, vector<4x32x16xf32>, vector<4x4x16xf32> -> vector<4x4x16xf32>
    %38 = arith.addf %30, %37 : vector<4x4x16xf32>
    %cst_18 = arith.constant 0.000000e+00 : f32
    %39 = vector.broadcast %cst_18 : f32 to vector<4x4x16xf32>
    %40 = arith.maximumf %38, %39 : vector<4x4x16xf32>
    %c0_19 = arith.constant 0 : index
    %c0_20 = arith.constant 0 : index
    %c0_21 = arith.constant 0 : index
    %c0_22 = arith.constant 0 : index
    %c0_23 = arith.constant 0 : index
    %41 = vector.load %arg4[%c0_19, %c0_20, %c0_21, %c0_22, %c0_23] : memref<1x1x4x4x16xf32, #tpu.memory_space<vmem>>, vector<1x1x4x4x16xf32>
    %42 = vector.shape_cast %41 : vector<1x1x4x4x16xf32> to vector<4x4x16xf32>
    %43 = vector.shape_cast %40 : vector<4x4x16xf32> to vector<1x1x4x4x16xf32>
    tpu.vector_store %arg4[%c0_19, %c0_20, %c0_21, %c0_22, %c0_23], %43 {strides = array<i32>} : memref<1x1x4x4x16xf32, #tpu.memory_space<vmem>>, vector<1x1x4x4x16xf32>,
    return
  }
  func.func @transform_0(%arg0: i32) -> (i32, i32, i32, i32) {
    %c0_i32 = arith.constant 0 : i32
    %c0_i32_0 = arith.constant 0 : i32
    %c0_i32_1 = arith.constant 0 : i32
    %c0_i32_2 = arith.constant 0 : i32
    return %arg0, %c0_i32, %c0_i32_0, %c0_i32_1 : i32, i32, i32, i32
  }
  func.func @transform_1(%arg0: i32) -> (i32, i32, i32) {
    %c0_i32 = arith.constant 0 : i32
    %c0_i32_0 = arith.constant 0 : i32
    %c0_i32_1 = arith.constant 0 : i32
    %c0_i32_2 = arith.constant 0 : i32
    return %c0_i32, %c0_i32_0, %c0_i32_1 : i32, i32, i32
  }
  func.func @transform_2(%arg0: i32) -> (i32, i32) {
    %c0_i32 = arith.constant 0 : i32
    %c0_i32_0 = arith.constant 0 : i32
    %c0_i32_1 = arith.constant 0 : i32
    return %c0_i32, %c0_i32_0 : i32, i32
  }
  func.func @transform_3(%arg0: i32) -> (i32, i32, i32, i32, i32) {
    %c0_i32 = arith.constant 0 : i32
    %c0_i32_0 = arith.constant 0 : i32
    %c0_i32_1 = arith.constant 0 : i32
    %c0_i32_2 = arith.constant 0 : i32
    %c0_i32_3 = arith.constant 0 : i32
    return %arg0, %c0_i32, %c0_i32_0, %c0_i32_1, %c0_i32_2 : i32, i32, i32, i32, i32
  }
}

module attributes {stable_mosaic.version = 11 : i64} {
  func.func @_res_attn_kernel(%arg0: i32, %arg1: memref<1x4x64xf32, #tpu.memory_space<vmem>>, %arg2: memref<64x192xf32, #tpu.memory_space<vmem>>, %arg3: memref<1x192xf32, #tpu.memory_space<vmem>>, %arg4: memref<64x64xf32, #tpu.memory_space<vmem>>, %arg5: memref<1x64xf32, #tpu.memory_space<vmem>>, %arg6: memref<1x64xf32, #tpu.memory_space<vmem>>, %arg7: memref<1x64xf32, #tpu.memory_space<vmem>>, %arg8: memref<1x4x64xf32, #tpu.memory_space<vmem>>) attributes {dimension_semantics = [#tpu.dimension_semantics<parallel>], iteration_bounds = array<i64: 2>, scalar_prefetch = 0 : i64, scratch_operands = 0 : i64, tpu.core_type = #tpu.core_type<tc>, window_params = [{transform_indices = @transform_0, window_bounds = array<i64: 1, 4, 64>}, {pipeline_mode = #tpu.pipeline_mode<synchronous>, transform_indices = @transform_1, window_bounds = array<i64: 64, 192>}, {pipeline_mode = #tpu.pipeline_mode<synchronous>, transform_indices = @transform_2, window_bounds = array<i64: 1, 192>}, {pipeline_mode = #tpu.pipeline_mode<synchronous>, transform_indices = @transform_3, window_bounds = array<i64: 64, 64>}, {pipeline_mode = #tpu.pipeline_mode<synchronous>, transform_indices = @transform_4, window_bounds = array<i64: 1, 64>}, {pipeline_mode = #tpu.pipeline_mode<synchronous>, transform_indices = @transform_5, window_bounds = array<i64: 1, 64>}, {pipeline_mode = #tpu.pipeline_mode<synchronous>, transform_indices = @transform_6, window_bounds = array<i64: 1, 64>}, {transform_indices = @transform_7, window_bounds = array<i64: 1, 4, 64>}]} {
    %c0 = arith.constant 0 : index
    %c0_0 = arith.constant 0 : index
    %c0_1 = arith.constant 0 : index
    %0 = vector.load %arg1[%c0, %c0_0, %c0_1] : memref<1x4x64xf32, #tpu.memory_space<vmem>>, vector<1x4x64xf32>
    %1 = vector.shape_cast %0 : vector<1x4x64xf32> to vector<4x64xf32>
    %c0_2 = arith.constant 0 : index
    %c0_3 = arith.constant 0 : index
    %2 = vector.load %arg2[%c0_2, %c0_3] : memref<64x192xf32, #tpu.memory_space<vmem>>, vector<64x192xf32>
    %cst = arith.constant dense<0.000000e+00> : vector<4x192xf32>
    %3 = tpu.matmul %1, %2, %cst {dimension_numbers = #tpu.dot_dimension_numbers<[1], [0], [0], [1], [0, 0, 1, 1], [], []>} : vector<4x64xf32>, vector<64x192xf32>, vector<4x192xf32> -> vector<4x192xf32>
    %c0_4 = arith.constant 0 : index
    %c0_5 = arith.constant 0 : index
    %4 = vector.load %arg3[%c0_4, %c0_5] : memref<1x192xf32, #tpu.memory_space<vmem>>, vector<1x192xf32>
    %5 = vector.broadcast %4 : vector<1x192xf32> to vector<4x192xf32>
    %6 = arith.addf %3, %5 : vector<4x192xf32>
    %7 = vector.extract_strided_slice %6 {offsets = [0, 0], sizes = [4, 16], strides = [1, 1]} : vector<4x192xf32> to vector<4x16xf32>
    %8 = vector.extract_strided_slice %6 {offsets = [0, 64], sizes = [4, 16], strides = [1, 1]} : vector<4x192xf32> to vector<4x16xf32>
    %9 = vector.extract_strided_slice %6 {offsets = [0, 128], sizes = [4, 16], strides = [1, 1]} : vector<4x192xf32> to vector<4x16xf32>
    %10 = tpu.transpose %8, [1, 0] : vector<4x16xf32> -> vector<16x4xf32>
    %cst_6 = arith.constant dense<0.000000e+00> : vector<4x4xf32>
    %11 = tpu.matmul %7, %10, %cst_6 {dimension_numbers = #tpu.dot_dimension_numbers<[1], [0], [0], [1], [0, 0, 1, 1], [], []>} : vector<4x16xf32>, vector<16x4xf32>, vector<4x4xf32> -> vector<4x4xf32>
    %cst_7 = arith.constant 2.500000e-01 : f32
    %12 = vector.broadcast %cst_7 : f32 to vector<4x4xf32>
    %13 = arith.mulf %11, %12 : vector<4x4xf32>
    %cst_8 = arith.constant dense<0xFF800000> : vector<4xf32>
    %14 = vector.multi_reduction <maximumf>, %13, %cst_8 [1] : vector<4x4xf32> to vector<4xf32>
    %15 = vector.shape_cast %14 : vector<4xf32> to vector<4x1xf32>
    %16 = vector.broadcast %15 : vector<4x1xf32> to vector<4x4xf32>
    %17 = arith.subf %13, %16 : vector<4x4xf32>
    %18 = math.exp %17 : vector<4x4xf32>
    %cst_9 = arith.constant dense<0.000000e+00> : vector<4xf32>
    %19 = vector.multi_reduction <add>, %18, %cst_9 [1] : vector<4x4xf32> to vector<4xf32>
    %20 = vector.shape_cast %19 : vector<4xf32> to vector<4x1xf32>
    %21 = tpu.reciprocal %20 {approx = true} : vector<4x1xf32> -> vector<4x1xf32>
    %22 = vector.broadcast %21 : vector<4x1xf32> to vector<4x4xf32>
    %23 = arith.mulf %18, %22 : vector<4x4xf32>
    %cst_10 = arith.constant dense<0.000000e+00> : vector<4x16xf32>
    %24 = tpu.matmul %23, %9, %cst_10 {dimension_numbers = #tpu.dot_dimension_numbers<[1], [0], [0], [1], [0, 0, 1, 1], [], []>} : vector<4x4xf32>, vector<4x16xf32>, vector<4x16xf32> -> vector<4x16xf32>
    %25 = vector.extract_strided_slice %6 {offsets = [0, 16], sizes = [4, 16], strides = [1, 1]} : vector<4x192xf32> to vector<4x16xf32>
    %26 = vector.extract_strided_slice %6 {offsets = [0, 80], sizes = [4, 16], strides = [1, 1]} : vector<4x192xf32> to vector<4x16xf32>
    %27 = vector.extract_strided_slice %6 {offsets = [0, 144], sizes = [4, 16], strides = [1, 1]} : vector<4x192xf32> to vector<4x16xf32>
    %28 = tpu.transpose %26, [1, 0] : vector<4x16xf32> -> vector<16x4xf32>
    %cst_11 = arith.constant dense<0.000000e+00> : vector<4x4xf32>
    %29 = tpu.matmul %25, %28, %cst_11 {dimension_numbers = #tpu.dot_dimension_numbers<[1], [0], [0], [1], [0, 0, 1, 1], [], []>} : vector<4x16xf32>, vector<16x4xf32>, vector<4x4xf32> -> vector<4x4xf32>
    %cst_12 = arith.constant 2.500000e-01 : f32
    %30 = vector.broadcast %cst_12 : f32 to vector<4x4xf32>
    %31 = arith.mulf %29, %30 : vector<4x4xf32>
    %cst_13 = arith.constant dense<0xFF800000> : vector<4xf32>
    %32 = vector.multi_reduction <maximumf>, %31, %cst_13 [1] : vector<4x4xf32> to vector<4xf32>
    %33 = vector.shape_cast %32 : vector<4xf32> to vector<4x1xf32>
    %34 = vector.broadcast %33 : vector<4x1xf32> to vector<4x4xf32>
    %35 = arith.subf %31, %34 : vector<4x4xf32>
    %36 = math.exp %35 : vector<4x4xf32>
    %cst_14 = arith.constant dense<0.000000e+00> : vector<4xf32>
    %37 = vector.multi_reduction <add>, %36, %cst_14 [1] : vector<4x4xf32> to vector<4xf32>
    %38 = vector.shape_cast %37 : vector<4xf32> to vector<4x1xf32>
    %39 = tpu.reciprocal %38 {approx = true} : vector<4x1xf32> -> vector<4x1xf32>
    %40 = vector.broadcast %39 : vector<4x1xf32> to vector<4x4xf32>
    %41 = arith.mulf %36, %40 : vector<4x4xf32>
    %cst_15 = arith.constant dense<0.000000e+00> : vector<4x16xf32>
    %42 = tpu.matmul %41, %27, %cst_15 {dimension_numbers = #tpu.dot_dimension_numbers<[1], [0], [0], [1], [0, 0, 1, 1], [], []>} : vector<4x4xf32>, vector<4x16xf32>, vector<4x16xf32> -> vector<4x16xf32>
    %43 = vector.extract_strided_slice %6 {offsets = [0, 32], sizes = [4, 16], strides = [1, 1]} : vector<4x192xf32> to vector<4x16xf32>
    %44 = vector.extract_strided_slice %6 {offsets = [0, 96], sizes = [4, 16], strides = [1, 1]} : vector<4x192xf32> to vector<4x16xf32>
    %45 = vector.extract_strided_slice %6 {offsets = [0, 160], sizes = [4, 16], strides = [1, 1]} : vector<4x192xf32> to vector<4x16xf32>
    %46 = tpu.transpose %44, [1, 0] : vector<4x16xf32> -> vector<16x4xf32>
    %cst_16 = arith.constant dense<0.000000e+00> : vector<4x4xf32>
    %47 = tpu.matmul %43, %46, %cst_16 {dimension_numbers = #tpu.dot_dimension_numbers<[1], [0], [0], [1], [0, 0, 1, 1], [], []>} : vector<4x16xf32>, vector<16x4xf32>, vector<4x4xf32> -> vector<4x4xf32>
    %cst_17 = arith.constant 2.500000e-01 : f32
    %48 = vector.broadcast %cst_17 : f32 to vector<4x4xf32>
    %49 = arith.mulf %47, %48 : vector<4x4xf32>
    %cst_18 = arith.constant dense<0xFF800000> : vector<4xf32>
    %50 = vector.multi_reduction <maximumf>, %49, %cst_18 [1] : vector<4x4xf32> to vector<4xf32>
    %51 = vector.shape_cast %50 : vector<4xf32> to vector<4x1xf32>
    %52 = vector.broadcast %51 : vector<4x1xf32> to vector<4x4xf32>
    %53 = arith.subf %49, %52 : vector<4x4xf32>
    %54 = math.exp %53 : vector<4x4xf32>
    %cst_19 = arith.constant dense<0.000000e+00> : vector<4xf32>
    %55 = vector.multi_reduction <add>, %54, %cst_19 [1] : vector<4x4xf32> to vector<4xf32>
    %56 = vector.shape_cast %55 : vector<4xf32> to vector<4x1xf32>
    %57 = tpu.reciprocal %56 {approx = true} : vector<4x1xf32> -> vector<4x1xf32>
    %58 = vector.broadcast %57 : vector<4x1xf32> to vector<4x4xf32>
    %59 = arith.mulf %54, %58 : vector<4x4xf32>
    %cst_20 = arith.constant dense<0.000000e+00> : vector<4x16xf32>
    %60 = tpu.matmul %59, %45, %cst_20 {dimension_numbers = #tpu.dot_dimension_numbers<[1], [0], [0], [1], [0, 0, 1, 1], [], []>} : vector<4x4xf32>, vector<4x16xf32>, vector<4x16xf32> -> vector<4x16xf32>
    %61 = vector.extract_strided_slice %6 {offsets = [0, 48], sizes = [4, 16], strides = [1, 1]} : vector<4x192xf32> to vector<4x16xf32>
    %62 = vector.extract_strided_slice %6 {offsets = [0, 112], sizes = [4, 16], strides = [1, 1]} : vector<4x192xf32> to vector<4x16xf32>
    %63 = vector.extract_strided_slice %6 {offsets = [0, 176], sizes = [4, 16], strides = [1, 1]} : vector<4x192xf32> to vector<4x16xf32>
    %64 = tpu.transpose %62, [1, 0] : vector<4x16xf32> -> vector<16x4xf32>
    %cst_21 = arith.constant dense<0.000000e+00> : vector<4x4xf32>
    %65 = tpu.matmul %61, %64, %cst_21 {dimension_numbers = #tpu.dot_dimension_numbers<[1], [0], [0], [1], [0, 0, 1, 1], [], []>} : vector<4x16xf32>, vector<16x4xf32>, vector<4x4xf32> -> vector<4x4xf32>
    %cst_22 = arith.constant 2.500000e-01 : f32
    %66 = vector.broadcast %cst_22 : f32 to vector<4x4xf32>
    %67 = arith.mulf %65, %66 : vector<4x4xf32>
    %cst_23 = arith.constant dense<0xFF800000> : vector<4xf32>
    %68 = vector.multi_reduction <maximumf>, %67, %cst_23 [1] : vector<4x4xf32> to vector<4xf32>
    %69 = vector.shape_cast %68 : vector<4xf32> to vector<4x1xf32>
    %70 = vector.broadcast %69 : vector<4x1xf32> to vector<4x4xf32>
    %71 = arith.subf %67, %70 : vector<4x4xf32>
    %72 = math.exp %71 : vector<4x4xf32>
    %cst_24 = arith.constant dense<0.000000e+00> : vector<4xf32>
    %73 = vector.multi_reduction <add>, %72, %cst_24 [1] : vector<4x4xf32> to vector<4xf32>
    %74 = vector.shape_cast %73 : vector<4xf32> to vector<4x1xf32>
    %75 = tpu.reciprocal %74 {approx = true} : vector<4x1xf32> -> vector<4x1xf32>
    %76 = vector.broadcast %75 : vector<4x1xf32> to vector<4x4xf32>
    %77 = arith.mulf %72, %76 : vector<4x4xf32>
    %cst_25 = arith.constant dense<0.000000e+00> : vector<4x16xf32>
    %78 = tpu.matmul %77, %63, %cst_25 {dimension_numbers = #tpu.dot_dimension_numbers<[1], [0], [0], [1], [0, 0, 1, 1], [], []>} : vector<4x4xf32>, vector<4x16xf32>, vector<4x16xf32> -> vector<4x16xf32>
    %79 = tpu.concatenate %24, %42, %60, %78 in 1 : vector<4x16xf32>, vector<4x16xf32>, vector<4x16xf32>, vector<4x16xf32> -> vector<4x64xf32>
    %c0_26 = arith.constant 0 : index
    %c0_27 = arith.constant 0 : index
    %80 = vector.load %arg4[%c0_26, %c0_27] : memref<64x64xf32, #tpu.memory_space<vmem>>, vector<64x64xf32>
    %cst_28 = arith.constant dense<0.000000e+00> : vector<4x64xf32>
    %81 = tpu.matmul %79, %80, %cst_28 {dimension_numbers = #tpu.dot_dimension_numbers<[1], [0], [0], [1], [0, 0, 1, 1], [], []>} : vector<4x64xf32>, vector<64x64xf32>, vector<4x64xf32> -> vector<4x64xf32>
    %c0_29 = arith.constant 0 : index
    %c0_30 = arith.constant 0 : index
    %82 = vector.load %arg5[%c0_29, %c0_30] : memref<1x64xf32, #tpu.memory_space<vmem>>, vector<1x64xf32>
    %83 = vector.broadcast %82 : vector<1x64xf32> to vector<4x64xf32>
    %84 = arith.addf %81, %83 : vector<4x64xf32>
    %85 = arith.addf %1, %84 : vector<4x64xf32>
    %cst_31 = arith.constant dense<0.000000e+00> : vector<4xf32>
    %86 = vector.multi_reduction <add>, %85, %cst_31 [1] : vector<4x64xf32> to vector<4xf32>
    %87 = vector.shape_cast %86 : vector<4xf32> to vector<4x1xf32>
    %cst_32 = arith.constant 6.400000e+01 : f32
    %88 = vector.broadcast %cst_32 : f32 to vector<4x1xf32>
    %89 = arith.divf %87, %88 : vector<4x1xf32>
    %90 = vector.broadcast %89 : vector<4x1xf32> to vector<4x64xf32>
    %91 = arith.subf %85, %90 : vector<4x64xf32>
    %92 = arith.mulf %91, %91 : vector<4x64xf32>
    %cst_33 = arith.constant dense<0.000000e+00> : vector<4xf32>
    %93 = vector.multi_reduction <add>, %92, %cst_33 [1] : vector<4x64xf32> to vector<4xf32>
    %94 = vector.shape_cast %93 : vector<4xf32> to vector<4x1xf32>
    %cst_34 = arith.constant 6.400000e+01 : f32
    %95 = vector.broadcast %cst_34 : f32 to vector<4x1xf32>
    %96 = arith.divf %94, %95 : vector<4x1xf32>
    %97 = vector.broadcast %89 : vector<4x1xf32> to vector<4x64xf32>
    %98 = arith.subf %85, %97 : vector<4x64xf32>
    %cst_35 = arith.constant 9.99999974E-6 : f32
    %99 = vector.broadcast %cst_35 : f32 to vector<4x1xf32>
    %100 = arith.addf %96, %99 : vector<4x1xf32>
    %101 = math.rsqrt %100 : vector<4x1xf32>
    %102 = vector.broadcast %101 : vector<4x1xf32> to vector<4x64xf32>
    %103 = arith.mulf %98, %102 : vector<4x64xf32>
    %c0_36 = arith.constant 0 : index
    %c0_37 = arith.constant 0 : index
    %104 = vector.load %arg6[%c0_36, %c0_37] : memref<1x64xf32, #tpu.memory_space<vmem>>, vector<1x64xf32>
    %105 = vector.broadcast %104 : vector<1x64xf32> to vector<4x64xf32>
    %106 = arith.mulf %103, %105 : vector<4x64xf32>
    %c0_38 = arith.constant 0 : index
    %c0_39 = arith.constant 0 : index
    %107 = vector.load %arg7[%c0_38, %c0_39] : memref<1x64xf32, #tpu.memory_space<vmem>>, vector<1x64xf32>
    %108 = vector.broadcast %107 : vector<1x64xf32> to vector<4x64xf32>
    %109 = arith.addf %106, %108 : vector<4x64xf32>
    %c0_40 = arith.constant 0 : index
    %c0_41 = arith.constant 0 : index
    %c0_42 = arith.constant 0 : index
    %110 = vector.load %arg8[%c0_40, %c0_41, %c0_42] : memref<1x4x64xf32, #tpu.memory_space<vmem>>, vector<1x4x64xf32>
    %111 = vector.shape_cast %110 : vector<1x4x64xf32> to vector<4x64xf32>
    %112 = vector.shape_cast %109 : vector<4x64xf32> to vector<1x4x64xf32>
    tpu.vector_store %arg8[%c0_40, %c0_41, %c0_42], %112 {strides = array<i32>} : memref<1x4x64xf32, #tpu.memory_space<vmem>>, vector<1x4x64xf32>,
    return
  }
  func.func @transform_0(%arg0: i32) -> (i32, i32, i32) {
    %c0_i32 = arith.constant 0 : i32
    %c0_i32_0 = arith.constant 0 : i32
    %c0_i32_1 = arith.constant 0 : i32
    return %arg0, %c0_i32, %c0_i32_0 : i32, i32, i32
  }
  func.func @transform_1(%arg0: i32) -> (i32, i32) {
    %c0_i32 = arith.constant 0 : i32
    %c0_i32_0 = arith.constant 0 : i32
    %c0_i32_1 = arith.constant 0 : i32
    return %c0_i32, %c0_i32_0 : i32, i32
  }
  func.func @transform_2(%arg0: i32) -> (i32, i32) {
    %c0_i32 = arith.constant 0 : i32
    %c0_i32_0 = arith.constant 0 : i32
    %c0_i32_1 = arith.constant 0 : i32
    return %c0_i32, %c0_i32_0 : i32, i32
  }
  func.func @transform_3(%arg0: i32) -> (i32, i32) {
    %c0_i32 = arith.constant 0 : i32
    %c0_i32_0 = arith.constant 0 : i32
    %c0_i32_1 = arith.constant 0 : i32
    return %c0_i32, %c0_i32_0 : i32, i32
  }
  func.func @transform_4(%arg0: i32) -> (i32, i32) {
    %c0_i32 = arith.constant 0 : i32
    %c0_i32_0 = arith.constant 0 : i32
    %c0_i32_1 = arith.constant 0 : i32
    return %c0_i32, %c0_i32_0 : i32, i32
  }
  func.func @transform_5(%arg0: i32) -> (i32, i32) {
    %c0_i32 = arith.constant 0 : i32
    %c0_i32_0 = arith.constant 0 : i32
    %c0_i32_1 = arith.constant 0 : i32
    return %c0_i32, %c0_i32_0 : i32, i32
  }
  func.func @transform_6(%arg0: i32) -> (i32, i32) {
    %c0_i32 = arith.constant 0 : i32
    %c0_i32_0 = arith.constant 0 : i32
    %c0_i32_1 = arith.constant 0 : i32
    return %c0_i32, %c0_i32_0 : i32, i32
  }
  func.func @transform_7(%arg0: i32) -> (i32, i32, i32) {
    %c0_i32 = arith.constant 0 : i32
    %c0_i32_0 = arith.constant 0 : i32
    %c0_i32_1 = arith.constant 0 : i32
    return %arg0, %c0_i32, %c0_i32_0 : i32, i32, i32
  }
}

module attributes {stable_mosaic.version = 11 : i64} {
  func.func @_matmul_bias_kernel(%arg0: i32, %arg1: i32, %arg2: i32, %arg3: memref<2x256xf32, #tpu.memory_space<vmem>>, %arg4: memref<256x32xf32, #tpu.memory_space<vmem>>, %arg5: memref<1x32xf32, #tpu.memory_space<vmem>>, %arg6: memref<2x32xf32, #tpu.memory_space<vmem>>, %arg7: memref<2x32xf32, #tpu.memory_space<vmem>>) attributes {dimension_semantics = [#tpu.dimension_semantics<parallel>, #tpu.dimension_semantics<parallel>, #tpu.dimension_semantics<arbitrary>], iteration_bounds = array<i64: 1, 1, 1>, scalar_prefetch = 0 : i64, scratch_operands = 1 : i64, tpu.core_type = #tpu.core_type<tc>, window_params = [{transform_indices = @transform_0, window_bounds = array<i64: 2, 256>}, {transform_indices = @transform_1, window_bounds = array<i64: 256, 32>}, {transform_indices = @transform_2, window_bounds = array<i64: 1, 32>}, {transform_indices = @transform_3, window_bounds = array<i64: 2, 32>}]} {
    %c0_i32 = arith.constant 0 : i32
    %0 = arith.cmpi eq, %arg2, %c0_i32 : i32
    %1 = arith.extui %0 : i1 to i32
    %c0_i32_0 = arith.constant 0 : i32
    %2 = arith.cmpi ne, %1, %c0_i32_0 : i32
    scf.if %2 {
      %cst_10 = arith.constant 0.000000e+00 : f32
      %12 = vector.broadcast %cst_10 : f32 to vector<2x32xf32>
      %c0_11 = arith.constant 0 : index
      %c0_12 = arith.constant 0 : index
      %13 = vector.load %arg7[%c0_11, %c0_12] : memref<2x32xf32, #tpu.memory_space<vmem>>, vector<2x32xf32>
      tpu.vector_store %arg7[%c0_11, %c0_12], %12 {strides = array<i32>} : memref<2x32xf32, #tpu.memory_space<vmem>>, vector<2x32xf32>,
    } else {
    }
    %c0 = arith.constant 0 : index
    %c0_1 = arith.constant 0 : index
    %3 = vector.load %arg7[%c0, %c0_1] : memref<2x32xf32, #tpu.memory_space<vmem>>, vector<2x32xf32>
    %c0_2 = arith.constant 0 : index
    %c0_3 = arith.constant 0 : index
    %4 = vector.load %arg3[%c0_2, %c0_3] : memref<2x256xf32, #tpu.memory_space<vmem>>, vector<2x256xf32>
    %c0_4 = arith.constant 0 : index
    %c0_5 = arith.constant 0 : index
    %5 = vector.load %arg4[%c0_4, %c0_5] : memref<256x32xf32, #tpu.memory_space<vmem>>, vector<256x32xf32>
    %cst = arith.constant dense<0.000000e+00> : vector<2x32xf32>
    %6 = tpu.matmul %4, %5, %cst {dimension_numbers = #tpu.dot_dimension_numbers<[1], [0], [0], [1], [0, 0, 1, 1], [], []>} : vector<2x256xf32>, vector<256x32xf32>, vector<2x32xf32> -> vector<2x32xf32>
    %7 = arith.addf %3, %6 : vector<2x32xf32>
    %c0_6 = arith.constant 0 : index
    %c0_7 = arith.constant 0 : index
    %8 = vector.load %arg7[%c0_6, %c0_7] : memref<2x32xf32, #tpu.memory_space<vmem>>, vector<2x32xf32>
    tpu.vector_store %arg7[%c0_6, %c0_7], %7 {strides = array<i32>} : memref<2x32xf32, #tpu.memory_space<vmem>>, vector<2x32xf32>,
    %c0_i32_8 = arith.constant 0 : i32
    %9 = arith.cmpi eq, %arg2, %c0_i32_8 : i32
    %10 = arith.extui %9 : i1 to i32
    %c0_i32_9 = arith.constant 0 : i32
    %11 = arith.cmpi ne, %10, %c0_i32_9 : i32
    scf.if %11 {
      %c0_10 = arith.constant 0 : index
      %c0_11 = arith.constant 0 : index
      %12 = vector.load %arg7[%c0_10, %c0_11] : memref<2x32xf32, #tpu.memory_space<vmem>>, vector<2x32xf32>
      %c0_12 = arith.constant 0 : index
      %c0_13 = arith.constant 0 : index
      %13 = vector.load %arg5[%c0_12, %c0_13] : memref<1x32xf32, #tpu.memory_space<vmem>>, vector<1x32xf32>
      %14 = vector.broadcast %13 : vector<1x32xf32> to vector<2x32xf32>
      %15 = arith.addf %12, %14 : vector<2x32xf32>
      %c0_14 = arith.constant 0 : index
      %c0_15 = arith.constant 0 : index
      %16 = vector.load %arg6[%c0_14, %c0_15] : memref<2x32xf32, #tpu.memory_space<vmem>>, vector<2x32xf32>
      tpu.vector_store %arg6[%c0_14, %c0_15], %15 {strides = array<i32>} : memref<2x32xf32, #tpu.memory_space<vmem>>, vector<2x32xf32>,
    } else {
    }
    return
  }
  func.func @transform_0(%arg0: i32, %arg1: i32, %arg2: i32) -> (i32, i32) {
    %c0_i32 = arith.constant 0 : i32
    return %arg0, %arg2 : i32, i32
  }
  func.func @transform_1(%arg0: i32, %arg1: i32, %arg2: i32) -> (i32, i32) {
    %c0_i32 = arith.constant 0 : i32
    return %arg2, %arg1 : i32, i32
  }
  func.func @transform_2(%arg0: i32, %arg1: i32, %arg2: i32) -> (i32, i32) {
    %c0_i32 = arith.constant 0 : i32
    %c0_i32_0 = arith.constant 0 : i32
    return %c0_i32, %arg1 : i32, i32
  }
  func.func @transform_3(%arg0: i32, %arg1: i32, %arg2: i32) -> (i32, i32) {
    %c0_i32 = arith.constant 0 : i32
    return %arg0, %arg1 : i32, i32
  }
}

module attributes {stable_mosaic.version = 11 : i64} {
  func.func @_matmul_bias_kernel(%arg0: i32, %arg1: i32, %arg2: i32, %arg3: memref<2x16xf32, #tpu.memory_space<vmem>>, %arg4: memref<16x256xf32, #tpu.memory_space<vmem>>, %arg5: memref<1x256xf32, #tpu.memory_space<vmem>>, %arg6: memref<2x256xf32, #tpu.memory_space<vmem>>, %arg7: memref<2x256xf32, #tpu.memory_space<vmem>>) attributes {dimension_semantics = [#tpu.dimension_semantics<parallel>, #tpu.dimension_semantics<parallel>, #tpu.dimension_semantics<arbitrary>], iteration_bounds = array<i64: 1, 1, 1>, scalar_prefetch = 0 : i64, scratch_operands = 1 : i64, tpu.core_type = #tpu.core_type<tc>, window_params = [{transform_indices = @transform_0, window_bounds = array<i64: 2, 16>}, {transform_indices = @transform_1, window_bounds = array<i64: 16, 256>}, {transform_indices = @transform_2, window_bounds = array<i64: 1, 256>}, {transform_indices = @transform_3, window_bounds = array<i64: 2, 256>}]} {
    %c0_i32 = arith.constant 0 : i32
    %0 = arith.cmpi eq, %arg2, %c0_i32 : i32
    %1 = arith.extui %0 : i1 to i32
    %c0_i32_0 = arith.constant 0 : i32
    %2 = arith.cmpi ne, %1, %c0_i32_0 : i32
    scf.if %2 {
      %cst_10 = arith.constant 0.000000e+00 : f32
      %12 = vector.broadcast %cst_10 : f32 to vector<2x256xf32>
      %c0_11 = arith.constant 0 : index
      %c0_12 = arith.constant 0 : index
      %13 = vector.load %arg7[%c0_11, %c0_12] : memref<2x256xf32, #tpu.memory_space<vmem>>, vector<2x256xf32>
      tpu.vector_store %arg7[%c0_11, %c0_12], %12 {strides = array<i32>} : memref<2x256xf32, #tpu.memory_space<vmem>>, vector<2x256xf32>,
    } else {
    }
    %c0 = arith.constant 0 : index
    %c0_1 = arith.constant 0 : index
    %3 = vector.load %arg7[%c0, %c0_1] : memref<2x256xf32, #tpu.memory_space<vmem>>, vector<2x256xf32>
    %c0_2 = arith.constant 0 : index
    %c0_3 = arith.constant 0 : index
    %4 = vector.load %arg3[%c0_2, %c0_3] : memref<2x16xf32, #tpu.memory_space<vmem>>, vector<2x16xf32>
    %c0_4 = arith.constant 0 : index
    %c0_5 = arith.constant 0 : index
    %5 = vector.load %arg4[%c0_4, %c0_5] : memref<16x256xf32, #tpu.memory_space<vmem>>, vector<16x256xf32>
    %cst = arith.constant dense<0.000000e+00> : vector<2x256xf32>
    %6 = tpu.matmul %4, %5, %cst {dimension_numbers = #tpu.dot_dimension_numbers<[1], [0], [0], [1], [0, 0, 1, 1], [], []>} : vector<2x16xf32>, vector<16x256xf32>, vector<2x256xf32> -> vector<2x256xf32>
    %7 = arith.addf %3, %6 : vector<2x256xf32>
    %c0_6 = arith.constant 0 : index
    %c0_7 = arith.constant 0 : index
    %8 = vector.load %arg7[%c0_6, %c0_7] : memref<2x256xf32, #tpu.memory_space<vmem>>, vector<2x256xf32>
    tpu.vector_store %arg7[%c0_6, %c0_7], %7 {strides = array<i32>} : memref<2x256xf32, #tpu.memory_space<vmem>>, vector<2x256xf32>,
    %c0_i32_8 = arith.constant 0 : i32
    %9 = arith.cmpi eq, %arg2, %c0_i32_8 : i32
    %10 = arith.extui %9 : i1 to i32
    %c0_i32_9 = arith.constant 0 : i32
    %11 = arith.cmpi ne, %10, %c0_i32_9 : i32
    scf.if %11 {
      %c0_10 = arith.constant 0 : index
      %c0_11 = arith.constant 0 : index
      %12 = vector.load %arg7[%c0_10, %c0_11] : memref<2x256xf32, #tpu.memory_space<vmem>>, vector<2x256xf32>
      %c0_12 = arith.constant 0 : index
      %c0_13 = arith.constant 0 : index
      %13 = vector.load %arg5[%c0_12, %c0_13] : memref<1x256xf32, #tpu.memory_space<vmem>>, vector<1x256xf32>
      %14 = vector.broadcast %13 : vector<1x256xf32> to vector<2x256xf32>
      %15 = arith.addf %12, %14 : vector<2x256xf32>
      %c0_14 = arith.constant 0 : index
      %c0_15 = arith.constant 0 : index
      %16 = vector.load %arg6[%c0_14, %c0_15] : memref<2x256xf32, #tpu.memory_space<vmem>>, vector<2x256xf32>
      tpu.vector_store %arg6[%c0_14, %c0_15], %15 {strides = array<i32>} : memref<2x256xf32, #tpu.memory_space<vmem>>, vector<2x256xf32>,
    } else {
    }
    return
  }
  func.func @transform_0(%arg0: i32, %arg1: i32, %arg2: i32) -> (i32, i32) {
    %c0_i32 = arith.constant 0 : i32
    return %arg0, %arg2 : i32, i32
  }
  func.func @transform_1(%arg0: i32, %arg1: i32, %arg2: i32) -> (i32, i32) {
    %c0_i32 = arith.constant 0 : i32
    return %arg2, %arg1 : i32, i32
  }
  func.func @transform_2(%arg0: i32, %arg1: i32, %arg2: i32) -> (i32, i32) {
    %c0_i32 = arith.constant 0 : i32
    %c0_i32_0 = arith.constant 0 : i32
    return %c0_i32, %arg1 : i32, i32
  }
  func.func @transform_3(%arg0: i32, %arg1: i32, %arg2: i32) -> (i32, i32) {
    %c0_i32 = arith.constant 0 : i32
    return %arg0, %arg1 : i32, i32
  }
}

module attributes {stable_mosaic.version = 11 : i64} {
  func.func @_fused_conv_kernel(%arg0: i32, %arg1: memref<1x6x6x16xf32, #tpu.memory_space<vmem>>, %arg2: memref<16x16x8xf32, #tpu.memory_space<vmem>>, %arg3: memref<1x8xf32, #tpu.memory_space<vmem>>, %arg4: memref<1x4x4x4x8xf32, #tpu.memory_space<vmem>>) attributes {dimension_semantics = [#tpu.dimension_semantics<parallel>], iteration_bounds = array<i64: 2>, scalar_prefetch = 0 : i64, scratch_operands = 0 : i64, tpu.core_type = #tpu.core_type<tc>, window_params = [{transform_indices = @transform_0, window_bounds = array<i64: 1, 6, 6, 16>}, {pipeline_mode = #tpu.pipeline_mode<synchronous>, transform_indices = @transform_1, window_bounds = array<i64: 16, 16, 8>}, {pipeline_mode = #tpu.pipeline_mode<synchronous>, transform_indices = @transform_2, window_bounds = array<i64: 1, 8>}, {transform_indices = @transform_3, window_bounds = array<i64: 1, 4, 4, 4, 8>}]} {
    %c0 = arith.constant 0 : index
    %c0_0 = arith.constant 0 : index
    %0 = vector.load %arg3[%c0, %c0_0] : memref<1x8xf32, #tpu.memory_space<vmem>>, vector<1x8xf32>
    %c0_1 = arith.constant 0 : index
    %c0_2 = arith.constant 0 : index
    %c0_3 = arith.constant 0 : index
    %c0_4 = arith.constant 0 : index
    %1 = vector.load %arg1[%c0_1, %c0_2, %c0_3, %c0_4] : memref<1x6x6x16xf32, #tpu.memory_space<vmem>>, vector<1x6x6x16xf32>
    %2 = vector.shape_cast %1 : vector<1x6x6x16xf32> to vector<6x6x16xf32>
    %cst = arith.constant 0.000000e+00 : f32
    %3 = vector.broadcast %cst : f32 to vector<4x4x8xf32>
    %4 = vector.shape_cast %0 : vector<1x8xf32> to vector<1x1x8xf32>
    %5 = vector.broadcast %4 : vector<1x1x8xf32> to vector<4x4x8xf32>
    %6 = arith.addf %3, %5 : vector<4x4x8xf32>
    %7 = vector.extract_strided_slice %2 {offsets = [0, 0, 0], sizes = [4, 4, 16], strides = [1, 1, 1]} : vector<6x6x16xf32> to vector<4x4x16xf32>
    %c0_5 = arith.constant 0 : index
    %c0_6 = arith.constant 0 : index
    %c0_7 = arith.constant 0 : index
    %8 = vector.load %arg2[%c0_5, %c0_6, %c0_7] : memref<16x16x8xf32, #tpu.memory_space<vmem>>, vector<1x16x8xf32>
    %9 = vector.shape_cast %8 : vector<1x16x8xf32> to vector<16x8xf32>
    %10 = vector.shape_cast %9 : vector<16x8xf32> to vector<1x16x8xf32>
    %11 = vector.shape_cast %10 : vector<1x16x8xf32> to vector<1x16x8xf32>
    %12 = vector.broadcast %11 : vector<1x16x8xf32> to vector<4x16x8xf32>
    %cst_8 = arith.constant dense<0.000000e+00> : vector<4x4x8xf32>
    %13 = tpu.matmul %7, %12, %cst_8 {dimension_numbers = #tpu.dot_dimension_numbers<[2], [1], [1], [2], [0, 0, 0, 1, 1, 2], [0], [0]>} : vector<4x4x16xf32>, vector<4x16x8xf32>, vector<4x4x8xf32> -> vector<4x4x8xf32>
    %14 = arith.addf %6, %13 : vector<4x4x8xf32>
    %15 = vector.extract_strided_slice %2 {offsets = [0, 1, 0], sizes = [4, 4, 16], strides = [1, 1, 1]} : vector<6x6x16xf32> to vector<4x4x16xf32>
    %c1 = arith.constant 1 : index
    %c0_9 = arith.constant 0 : index
    %c0_10 = arith.constant 0 : index
    %16 = vector.load %arg2[%c1, %c0_9, %c0_10] : memref<16x16x8xf32, #tpu.memory_space<vmem>>, vector<1x16x8xf32>
    %17 = vector.shape_cast %16 : vector<1x16x8xf32> to vector<16x8xf32>
    %18 = vector.shape_cast %17 : vector<16x8xf32> to vector<1x16x8xf32>
    %19 = vector.shape_cast %18 : vector<1x16x8xf32> to vector<1x16x8xf32>
    %20 = vector.broadcast %19 : vector<1x16x8xf32> to vector<4x16x8xf32>
    %cst_11 = arith.constant dense<0.000000e+00> : vector<4x4x8xf32>
    %21 = tpu.matmul %15, %20, %cst_11 {dimension_numbers = #tpu.dot_dimension_numbers<[2], [1], [1], [2], [0, 0, 0, 1, 1, 2], [0], [0]>} : vector<4x4x16xf32>, vector<4x16x8xf32>, vector<4x4x8xf32> -> vector<4x4x8xf32>
    %22 = arith.addf %14, %21 : vector<4x4x8xf32>
    %23 = vector.extract_strided_slice %2 {offsets = [1, 0, 0], sizes = [4, 4, 16], strides = [1, 1, 1]} : vector<6x6x16xf32> to vector<4x4x16xf32>
    %c2 = arith.constant 2 : index
    %c0_12 = arith.constant 0 : index
    %c0_13 = arith.constant 0 : index
    %24 = vector.load %arg2[%c2, %c0_12, %c0_13] : memref<16x16x8xf32, #tpu.memory_space<vmem>>, vector<1x16x8xf32>
    %25 = vector.shape_cast %24 : vector<1x16x8xf32> to vector<16x8xf32>
    %26 = vector.shape_cast %25 : vector<16x8xf32> to vector<1x16x8xf32>
    %27 = vector.shape_cast %26 : vector<1x16x8xf32> to vector<1x16x8xf32>
    %28 = vector.broadcast %27 : vector<1x16x8xf32> to vector<4x16x8xf32>
    %cst_14 = arith.constant dense<0.000000e+00> : vector<4x4x8xf32>
    %29 = tpu.matmul %23, %28, %cst_14 {dimension_numbers = #tpu.dot_dimension_numbers<[2], [1], [1], [2], [0, 0, 0, 1, 1, 2], [0], [0]>} : vector<4x4x16xf32>, vector<4x16x8xf32>, vector<4x4x8xf32> -> vector<4x4x8xf32>
    %30 = arith.addf %22, %29 : vector<4x4x8xf32>
    %31 = vector.extract_strided_slice %2 {offsets = [1, 1, 0], sizes = [4, 4, 16], strides = [1, 1, 1]} : vector<6x6x16xf32> to vector<4x4x16xf32>
    %c3 = arith.constant 3 : index
    %c0_15 = arith.constant 0 : index
    %c0_16 = arith.constant 0 : index
    %32 = vector.load %arg2[%c3, %c0_15, %c0_16] : memref<16x16x8xf32, #tpu.memory_space<vmem>>, vector<1x16x8xf32>
    %33 = vector.shape_cast %32 : vector<1x16x8xf32> to vector<16x8xf32>
    %34 = vector.shape_cast %33 : vector<16x8xf32> to vector<1x16x8xf32>
    %35 = vector.shape_cast %34 : vector<1x16x8xf32> to vector<1x16x8xf32>
    %36 = vector.broadcast %35 : vector<1x16x8xf32> to vector<4x16x8xf32>
    %cst_17 = arith.constant dense<0.000000e+00> : vector<4x4x8xf32>
    %37 = tpu.matmul %31, %36, %cst_17 {dimension_numbers = #tpu.dot_dimension_numbers<[2], [1], [1], [2], [0, 0, 0, 1, 1, 2], [0], [0]>} : vector<4x4x16xf32>, vector<4x16x8xf32>, vector<4x4x8xf32> -> vector<4x4x8xf32>
    %38 = arith.addf %30, %37 : vector<4x4x8xf32>
    %cst_18 = arith.constant 0.000000e+00 : f32
    %39 = vector.broadcast %cst_18 : f32 to vector<4x4x8xf32>
    %40 = arith.maximumf %38, %39 : vector<4x4x8xf32>
    %c0_19 = arith.constant 0 : index
    %c0_20 = arith.constant 0 : index
    %c0_21 = arith.constant 0 : index
    %c0_22 = arith.constant 0 : index
    %c0_23 = arith.constant 0 : index
    %41 = vector.load %arg4[%c0_19, %c0_20, %c0_21, %c0_22, %c0_23] : memref<1x4x4x4x8xf32, #tpu.memory_space<vmem>>, vector<1x1x4x4x8xf32>
    %42 = vector.shape_cast %41 : vector<1x1x4x4x8xf32> to vector<4x4x8xf32>
    %43 = vector.shape_cast %40 : vector<4x4x8xf32> to vector<1x1x4x4x8xf32>
    tpu.vector_store %arg4[%c0_19, %c0_20, %c0_21, %c0_22, %c0_23], %43 {strides = array<i32>} : memref<1x4x4x4x8xf32, #tpu.memory_space<vmem>>, vector<1x1x4x4x8xf32>,
    %cst_24 = arith.constant 0.000000e+00 : f32
    %44 = vector.broadcast %cst_24 : f32 to vector<4x4x8xf32>
    %45 = vector.shape_cast %0 : vector<1x8xf32> to vector<1x1x8xf32>
    %46 = vector.broadcast %45 : vector<1x1x8xf32> to vector<4x4x8xf32>
    %47 = arith.addf %44, %46 : vector<4x4x8xf32>
    %48 = vector.extract_strided_slice %2 {offsets = [0, 1, 0], sizes = [4, 4, 16], strides = [1, 1, 1]} : vector<6x6x16xf32> to vector<4x4x16xf32>
    %c4 = arith.constant 4 : index
    %c0_25 = arith.constant 0 : index
    %c0_26 = arith.constant 0 : index
    %49 = vector.load %arg2[%c4, %c0_25, %c0_26] : memref<16x16x8xf32, #tpu.memory_space<vmem>>, vector<1x16x8xf32>
    %50 = vector.shape_cast %49 : vector<1x16x8xf32> to vector<16x8xf32>
    %51 = vector.shape_cast %50 : vector<16x8xf32> to vector<1x16x8xf32>
    %52 = vector.shape_cast %51 : vector<1x16x8xf32> to vector<1x16x8xf32>
    %53 = vector.broadcast %52 : vector<1x16x8xf32> to vector<4x16x8xf32>
    %cst_27 = arith.constant dense<0.000000e+00> : vector<4x4x8xf32>
    %54 = tpu.matmul %48, %53, %cst_27 {dimension_numbers = #tpu.dot_dimension_numbers<[2], [1], [1], [2], [0, 0, 0, 1, 1, 2], [0], [0]>} : vector<4x4x16xf32>, vector<4x16x8xf32>, vector<4x4x8xf32> -> vector<4x4x8xf32>
    %55 = arith.addf %47, %54 : vector<4x4x8xf32>
    %56 = vector.extract_strided_slice %2 {offsets = [0, 2, 0], sizes = [4, 4, 16], strides = [1, 1, 1]} : vector<6x6x16xf32> to vector<4x4x16xf32>
    %c5 = arith.constant 5 : index
    %c0_28 = arith.constant 0 : index
    %c0_29 = arith.constant 0 : index
    %57 = vector.load %arg2[%c5, %c0_28, %c0_29] : memref<16x16x8xf32, #tpu.memory_space<vmem>>, vector<1x16x8xf32>
    %58 = vector.shape_cast %57 : vector<1x16x8xf32> to vector<16x8xf32>
    %59 = vector.shape_cast %58 : vector<16x8xf32> to vector<1x16x8xf32>
    %60 = vector.shape_cast %59 : vector<1x16x8xf32> to vector<1x16x8xf32>
    %61 = vector.broadcast %60 : vector<1x16x8xf32> to vector<4x16x8xf32>
    %cst_30 = arith.constant dense<0.000000e+00> : vector<4x4x8xf32>
    %62 = tpu.matmul %56, %61, %cst_30 {dimension_numbers = #tpu.dot_dimension_numbers<[2], [1], [1], [2], [0, 0, 0, 1, 1, 2], [0], [0]>} : vector<4x4x16xf32>, vector<4x16x8xf32>, vector<4x4x8xf32> -> vector<4x4x8xf32>
    %63 = arith.addf %55, %62 : vector<4x4x8xf32>
    %64 = vector.extract_strided_slice %2 {offsets = [1, 1, 0], sizes = [4, 4, 16], strides = [1, 1, 1]} : vector<6x6x16xf32> to vector<4x4x16xf32>
    %c6 = arith.constant 6 : index
    %c0_31 = arith.constant 0 : index
    %c0_32 = arith.constant 0 : index
    %65 = vector.load %arg2[%c6, %c0_31, %c0_32] : memref<16x16x8xf32, #tpu.memory_space<vmem>>, vector<1x16x8xf32>
    %66 = vector.shape_cast %65 : vector<1x16x8xf32> to vector<16x8xf32>
    %67 = vector.shape_cast %66 : vector<16x8xf32> to vector<1x16x8xf32>
    %68 = vector.shape_cast %67 : vector<1x16x8xf32> to vector<1x16x8xf32>
    %69 = vector.broadcast %68 : vector<1x16x8xf32> to vector<4x16x8xf32>
    %cst_33 = arith.constant dense<0.000000e+00> : vector<4x4x8xf32>
    %70 = tpu.matmul %64, %69, %cst_33 {dimension_numbers = #tpu.dot_dimension_numbers<[2], [1], [1], [2], [0, 0, 0, 1, 1, 2], [0], [0]>} : vector<4x4x16xf32>, vector<4x16x8xf32>, vector<4x4x8xf32> -> vector<4x4x8xf32>
    %71 = arith.addf %63, %70 : vector<4x4x8xf32>
    %72 = vector.extract_strided_slice %2 {offsets = [1, 2, 0], sizes = [4, 4, 16], strides = [1, 1, 1]} : vector<6x6x16xf32> to vector<4x4x16xf32>
    %c7 = arith.constant 7 : index
    %c0_34 = arith.constant 0 : index
    %c0_35 = arith.constant 0 : index
    %73 = vector.load %arg2[%c7, %c0_34, %c0_35] : memref<16x16x8xf32, #tpu.memory_space<vmem>>, vector<1x16x8xf32>
    %74 = vector.shape_cast %73 : vector<1x16x8xf32> to vector<16x8xf32>
    %75 = vector.shape_cast %74 : vector<16x8xf32> to vector<1x16x8xf32>
    %76 = vector.shape_cast %75 : vector<1x16x8xf32> to vector<1x16x8xf32>
    %77 = vector.broadcast %76 : vector<1x16x8xf32> to vector<4x16x8xf32>
    %cst_36 = arith.constant dense<0.000000e+00> : vector<4x4x8xf32>
    %78 = tpu.matmul %72, %77, %cst_36 {dimension_numbers = #tpu.dot_dimension_numbers<[2], [1], [1], [2], [0, 0, 0, 1, 1, 2], [0], [0]>} : vector<4x4x16xf32>, vector<4x16x8xf32>, vector<4x4x8xf32> -> vector<4x4x8xf32>
    %79 = arith.addf %71, %78 : vector<4x4x8xf32>
    %cst_37 = arith.constant 0.000000e+00 : f32
    %80 = vector.broadcast %cst_37 : f32 to vector<4x4x8xf32>
    %81 = arith.maximumf %79, %80 : vector<4x4x8xf32>
    %c0_38 = arith.constant 0 : index
    %c1_39 = arith.constant 1 : index
    %c0_40 = arith.constant 0 : index
    %c0_41 = arith.constant 0 : index
    %c0_42 = arith.constant 0 : index
    %82 = vector.load %arg4[%c0_38, %c1_39, %c0_40, %c0_41, %c0_42] : memref<1x4x4x4x8xf32, #tpu.memory_space<vmem>>, vector<1x1x4x4x8xf32>
    %83 = vector.shape_cast %82 : vector<1x1x4x4x8xf32> to vector<4x4x8xf32>
    %84 = vector.shape_cast %81 : vector<4x4x8xf32> to vector<1x1x4x4x8xf32>
    tpu.vector_store %arg4[%c0_38, %c1_39, %c0_40, %c0_41, %c0_42], %84 {strides = array<i32>} : memref<1x4x4x4x8xf32, #tpu.memory_space<vmem>>, vector<1x1x4x4x8xf32>,
    %cst_43 = arith.constant 0.000000e+00 : f32
    %85 = vector.broadcast %cst_43 : f32 to vector<4x4x8xf32>
    %86 = vector.shape_cast %0 : vector<1x8xf32> to vector<1x1x8xf32>
    %87 = vector.broadcast %86 : vector<1x1x8xf32> to vector<4x4x8xf32>
    %88 = arith.addf %85, %87 : vector<4x4x8xf32>
    %89 = vector.extract_strided_slice %2 {offsets = [1, 0, 0], sizes = [4, 4, 16], strides = [1, 1, 1]} : vector<6x6x16xf32> to vector<4x4x16xf32>
    %c8 = arith.constant 8 : index
    %c0_44 = arith.constant 0 : index
    %c0_45 = arith.constant 0 : index
    %90 = vector.load %arg2[%c8, %c0_44, %c0_45] : memref<16x16x8xf32, #tpu.memory_space<vmem>>, vector<1x16x8xf32>
    %91 = vector.shape_cast %90 : vector<1x16x8xf32> to vector<16x8xf32>
    %92 = vector.shape_cast %91 : vector<16x8xf32> to vector<1x16x8xf32>
    %93 = vector.shape_cast %92 : vector<1x16x8xf32> to vector<1x16x8xf32>
    %94 = vector.broadcast %93 : vector<1x16x8xf32> to vector<4x16x8xf32>
    %cst_46 = arith.constant dense<0.000000e+00> : vector<4x4x8xf32>
    %95 = tpu.matmul %89, %94, %cst_46 {dimension_numbers = #tpu.dot_dimension_numbers<[2], [1], [1], [2], [0, 0, 0, 1, 1, 2], [0], [0]>} : vector<4x4x16xf32>, vector<4x16x8xf32>, vector<4x4x8xf32> -> vector<4x4x8xf32>
    %96 = arith.addf %88, %95 : vector<4x4x8xf32>
    %97 = vector.extract_strided_slice %2 {offsets = [1, 1, 0], sizes = [4, 4, 16], strides = [1, 1, 1]} : vector<6x6x16xf32> to vector<4x4x16xf32>
    %c9 = arith.constant 9 : index
    %c0_47 = arith.constant 0 : index
    %c0_48 = arith.constant 0 : index
    %98 = vector.load %arg2[%c9, %c0_47, %c0_48] : memref<16x16x8xf32, #tpu.memory_space<vmem>>, vector<1x16x8xf32>
    %99 = vector.shape_cast %98 : vector<1x16x8xf32> to vector<16x8xf32>
    %100 = vector.shape_cast %99 : vector<16x8xf32> to vector<1x16x8xf32>
    %101 = vector.shape_cast %100 : vector<1x16x8xf32> to vector<1x16x8xf32>
    %102 = vector.broadcast %101 : vector<1x16x8xf32> to vector<4x16x8xf32>
    %cst_49 = arith.constant dense<0.000000e+00> : vector<4x4x8xf32>
    %103 = tpu.matmul %97, %102, %cst_49 {dimension_numbers = #tpu.dot_dimension_numbers<[2], [1], [1], [2], [0, 0, 0, 1, 1, 2], [0], [0]>} : vector<4x4x16xf32>, vector<4x16x8xf32>, vector<4x4x8xf32> -> vector<4x4x8xf32>
    %104 = arith.addf %96, %103 : vector<4x4x8xf32>
    %105 = vector.extract_strided_slice %2 {offsets = [2, 0, 0], sizes = [4, 4, 16], strides = [1, 1, 1]} : vector<6x6x16xf32> to vector<4x4x16xf32>
    %c10 = arith.constant 10 : index
    %c0_50 = arith.constant 0 : index
    %c0_51 = arith.constant 0 : index
    %106 = vector.load %arg2[%c10, %c0_50, %c0_51] : memref<16x16x8xf32, #tpu.memory_space<vmem>>, vector<1x16x8xf32>
    %107 = vector.shape_cast %106 : vector<1x16x8xf32> to vector<16x8xf32>
    %108 = vector.shape_cast %107 : vector<16x8xf32> to vector<1x16x8xf32>
    %109 = vector.shape_cast %108 : vector<1x16x8xf32> to vector<1x16x8xf32>
    %110 = vector.broadcast %109 : vector<1x16x8xf32> to vector<4x16x8xf32>
    %cst_52 = arith.constant dense<0.000000e+00> : vector<4x4x8xf32>
    %111 = tpu.matmul %105, %110, %cst_52 {dimension_numbers = #tpu.dot_dimension_numbers<[2], [1], [1], [2], [0, 0, 0, 1, 1, 2], [0], [0]>} : vector<4x4x16xf32>, vector<4x16x8xf32>, vector<4x4x8xf32> -> vector<4x4x8xf32>
    %112 = arith.addf %104, %111 : vector<4x4x8xf32>
    %113 = vector.extract_strided_slice %2 {offsets = [2, 1, 0], sizes = [4, 4, 16], strides = [1, 1, 1]} : vector<6x6x16xf32> to vector<4x4x16xf32>
    %c11 = arith.constant 11 : index
    %c0_53 = arith.constant 0 : index
    %c0_54 = arith.constant 0 : index
    %114 = vector.load %arg2[%c11, %c0_53, %c0_54] : memref<16x16x8xf32, #tpu.memory_space<vmem>>, vector<1x16x8xf32>
    %115 = vector.shape_cast %114 : vector<1x16x8xf32> to vector<16x8xf32>
    %116 = vector.shape_cast %115 : vector<16x8xf32> to vector<1x16x8xf32>
    %117 = vector.shape_cast %116 : vector<1x16x8xf32> to vector<1x16x8xf32>
    %118 = vector.broadcast %117 : vector<1x16x8xf32> to vector<4x16x8xf32>
    %cst_55 = arith.constant dense<0.000000e+00> : vector<4x4x8xf32>
    %119 = tpu.matmul %113, %118, %cst_55 {dimension_numbers = #tpu.dot_dimension_numbers<[2], [1], [1], [2], [0, 0, 0, 1, 1, 2], [0], [0]>} : vector<4x4x16xf32>, vector<4x16x8xf32>, vector<4x4x8xf32> -> vector<4x4x8xf32>
    %120 = arith.addf %112, %119 : vector<4x4x8xf32>
    %cst_56 = arith.constant 0.000000e+00 : f32
    %121 = vector.broadcast %cst_56 : f32 to vector<4x4x8xf32>
    %122 = arith.maximumf %120, %121 : vector<4x4x8xf32>
    %c0_57 = arith.constant 0 : index
    %c2_58 = arith.constant 2 : index
    %c0_59 = arith.constant 0 : index
    %c0_60 = arith.constant 0 : index
    %c0_61 = arith.constant 0 : index
    %123 = vector.load %arg4[%c0_57, %c2_58, %c0_59, %c0_60, %c0_61] : memref<1x4x4x4x8xf32, #tpu.memory_space<vmem>>, vector<1x1x4x4x8xf32>
    %124 = vector.shape_cast %123 : vector<1x1x4x4x8xf32> to vector<4x4x8xf32>
    %125 = vector.shape_cast %122 : vector<4x4x8xf32> to vector<1x1x4x4x8xf32>
    tpu.vector_store %arg4[%c0_57, %c2_58, %c0_59, %c0_60, %c0_61], %125 {strides = array<i32>} : memref<1x4x4x4x8xf32, #tpu.memory_space<vmem>>, vector<1x1x4x4x8xf32>,
    %cst_62 = arith.constant 0.000000e+00 : f32
    %126 = vector.broadcast %cst_62 : f32 to vector<4x4x8xf32>
    %127 = vector.shape_cast %0 : vector<1x8xf32> to vector<1x1x8xf32>
    %128 = vector.broadcast %127 : vector<1x1x8xf32> to vector<4x4x8xf32>
    %129 = arith.addf %126, %128 : vector<4x4x8xf32>
    %130 = vector.extract_strided_slice %2 {offsets = [1, 1, 0], sizes = [4, 4, 16], strides = [1, 1, 1]} : vector<6x6x16xf32> to vector<4x4x16xf32>
    %c12 = arith.constant 12 : index
    %c0_63 = arith.constant 0 : index
    %c0_64 = arith.constant 0 : index
    %131 = vector.load %arg2[%c12, %c0_63, %c0_64] : memref<16x16x8xf32, #tpu.memory_space<vmem>>, vector<1x16x8xf32>
    %132 = vector.shape_cast %131 : vector<1x16x8xf32> to vector<16x8xf32>
    %133 = vector.shape_cast %132 : vector<16x8xf32> to vector<1x16x8xf32>
    %134 = vector.shape_cast %133 : vector<1x16x8xf32> to vector<1x16x8xf32>
    %135 = vector.broadcast %134 : vector<1x16x8xf32> to vector<4x16x8xf32>
    %cst_65 = arith.constant dense<0.000000e+00> : vector<4x4x8xf32>
    %136 = tpu.matmul %130, %135, %cst_65 {dimension_numbers = #tpu.dot_dimension_numbers<[2], [1], [1], [2], [0, 0, 0, 1, 1, 2], [0], [0]>} : vector<4x4x16xf32>, vector<4x16x8xf32>, vector<4x4x8xf32> -> vector<4x4x8xf32>
    %137 = arith.addf %129, %136 : vector<4x4x8xf32>
    %138 = vector.extract_strided_slice %2 {offsets = [1, 2, 0], sizes = [4, 4, 16], strides = [1, 1, 1]} : vector<6x6x16xf32> to vector<4x4x16xf32>
    %c13 = arith.constant 13 : index
    %c0_66 = arith.constant 0 : index
    %c0_67 = arith.constant 0 : index
    %139 = vector.load %arg2[%c13, %c0_66, %c0_67] : memref<16x16x8xf32, #tpu.memory_space<vmem>>, vector<1x16x8xf32>
    %140 = vector.shape_cast %139 : vector<1x16x8xf32> to vector<16x8xf32>
    %141 = vector.shape_cast %140 : vector<16x8xf32> to vector<1x16x8xf32>
    %142 = vector.shape_cast %141 : vector<1x16x8xf32> to vector<1x16x8xf32>
    %143 = vector.broadcast %142 : vector<1x16x8xf32> to vector<4x16x8xf32>
    %cst_68 = arith.constant dense<0.000000e+00> : vector<4x4x8xf32>
    %144 = tpu.matmul %138, %143, %cst_68 {dimension_numbers = #tpu.dot_dimension_numbers<[2], [1], [1], [2], [0, 0, 0, 1, 1, 2], [0], [0]>} : vector<4x4x16xf32>, vector<4x16x8xf32>, vector<4x4x8xf32> -> vector<4x4x8xf32>
    %145 = arith.addf %137, %144 : vector<4x4x8xf32>
    %146 = vector.extract_strided_slice %2 {offsets = [2, 1, 0], sizes = [4, 4, 16], strides = [1, 1, 1]} : vector<6x6x16xf32> to vector<4x4x16xf32>
    %c14 = arith.constant 14 : index
    %c0_69 = arith.constant 0 : index
    %c0_70 = arith.constant 0 : index
    %147 = vector.load %arg2[%c14, %c0_69, %c0_70] : memref<16x16x8xf32, #tpu.memory_space<vmem>>, vector<1x16x8xf32>
    %148 = vector.shape_cast %147 : vector<1x16x8xf32> to vector<16x8xf32>
    %149 = vector.shape_cast %148 : vector<16x8xf32> to vector<1x16x8xf32>
    %150 = vector.shape_cast %149 : vector<1x16x8xf32> to vector<1x16x8xf32>
    %151 = vector.broadcast %150 : vector<1x16x8xf32> to vector<4x16x8xf32>
    %cst_71 = arith.constant dense<0.000000e+00> : vector<4x4x8xf32>
    %152 = tpu.matmul %146, %151, %cst_71 {dimension_numbers = #tpu.dot_dimension_numbers<[2], [1], [1], [2], [0, 0, 0, 1, 1, 2], [0], [0]>} : vector<4x4x16xf32>, vector<4x16x8xf32>, vector<4x4x8xf32> -> vector<4x4x8xf32>
    %153 = arith.addf %145, %152 : vector<4x4x8xf32>
    %154 = vector.extract_strided_slice %2 {offsets = [2, 2, 0], sizes = [4, 4, 16], strides = [1, 1, 1]} : vector<6x6x16xf32> to vector<4x4x16xf32>
    %c15 = arith.constant 15 : index
    %c0_72 = arith.constant 0 : index
    %c0_73 = arith.constant 0 : index
    %155 = vector.load %arg2[%c15, %c0_72, %c0_73] : memref<16x16x8xf32, #tpu.memory_space<vmem>>, vector<1x16x8xf32>
    %156 = vector.shape_cast %155 : vector<1x16x8xf32> to vector<16x8xf32>
    %157 = vector.shape_cast %156 : vector<16x8xf32> to vector<1x16x8xf32>
    %158 = vector.shape_cast %157 : vector<1x16x8xf32> to vector<1x16x8xf32>
    %159 = vector.broadcast %158 : vector<1x16x8xf32> to vector<4x16x8xf32>
    %cst_74 = arith.constant dense<0.000000e+00> : vector<4x4x8xf32>
    %160 = tpu.matmul %154, %159, %cst_74 {dimension_numbers = #tpu.dot_dimension_numbers<[2], [1], [1], [2], [0, 0, 0, 1, 1, 2], [0], [0]>} : vector<4x4x16xf32>, vector<4x16x8xf32>, vector<4x4x8xf32> -> vector<4x4x8xf32>
    %161 = arith.addf %153, %160 : vector<4x4x8xf32>
    %cst_75 = arith.constant 0.000000e+00 : f32
    %162 = vector.broadcast %cst_75 : f32 to vector<4x4x8xf32>
    %163 = arith.maximumf %161, %162 : vector<4x4x8xf32>
    %c0_76 = arith.constant 0 : index
    %c3_77 = arith.constant 3 : index
    %c0_78 = arith.constant 0 : index
    %c0_79 = arith.constant 0 : index
    %c0_80 = arith.constant 0 : index
    %164 = vector.load %arg4[%c0_76, %c3_77, %c0_78, %c0_79, %c0_80] : memref<1x4x4x4x8xf32, #tpu.memory_space<vmem>>, vector<1x1x4x4x8xf32>
    %165 = vector.shape_cast %164 : vector<1x1x4x4x8xf32> to vector<4x4x8xf32>
    %166 = vector.shape_cast %163 : vector<4x4x8xf32> to vector<1x1x4x4x8xf32>
    tpu.vector_store %arg4[%c0_76, %c3_77, %c0_78, %c0_79, %c0_80], %166 {strides = array<i32>} : memref<1x4x4x4x8xf32, #tpu.memory_space<vmem>>, vector<1x1x4x4x8xf32>,
    return
  }
  func.func @transform_0(%arg0: i32) -> (i32, i32, i32, i32) {
    %c0_i32 = arith.constant 0 : i32
    %c0_i32_0 = arith.constant 0 : i32
    %c0_i32_1 = arith.constant 0 : i32
    %c0_i32_2 = arith.constant 0 : i32
    return %arg0, %c0_i32, %c0_i32_0, %c0_i32_1 : i32, i32, i32, i32
  }
  func.func @transform_1(%arg0: i32) -> (i32, i32, i32) {
    %c0_i32 = arith.constant 0 : i32
    %c0_i32_0 = arith.constant 0 : i32
    %c0_i32_1 = arith.constant 0 : i32
    %c0_i32_2 = arith.constant 0 : i32
    return %c0_i32, %c0_i32_0, %c0_i32_1 : i32, i32, i32
  }
  func.func @transform_2(%arg0: i32) -> (i32, i32) {
    %c0_i32 = arith.constant 0 : i32
    %c0_i32_0 = arith.constant 0 : i32
    %c0_i32_1 = arith.constant 0 : i32
    return %c0_i32, %c0_i32_0 : i32, i32
  }
  func.func @transform_3(%arg0: i32) -> (i32, i32, i32, i32, i32) {
    %c0_i32 = arith.constant 0 : i32
    %c0_i32_0 = arith.constant 0 : i32
    %c0_i32_1 = arith.constant 0 : i32
    %c0_i32_2 = arith.constant 0 : i32
    %c0_i32_3 = arith.constant 0 : i32
    return %arg0, %c0_i32, %c0_i32_0, %c0_i32_1, %c0_i32_2 : i32, i32, i32, i32, i32
  }
}

module attributes {stable_mosaic.version = 11 : i64} {
  func.func @_fused_conv_kernel(%arg0: i32, %arg1: memref<1x10x10x8xf32, #tpu.memory_space<vmem>>, %arg2: memref<16x8x1xf32, #tpu.memory_space<vmem>>, %arg3: memref<1x1xf32, #tpu.memory_space<vmem>>, %arg4: memref<1x4x8x8x1xf32, #tpu.memory_space<vmem>>) attributes {dimension_semantics = [#tpu.dimension_semantics<parallel>], iteration_bounds = array<i64: 2>, scalar_prefetch = 0 : i64, scratch_operands = 0 : i64, tpu.core_type = #tpu.core_type<tc>, window_params = [{transform_indices = @transform_0, window_bounds = array<i64: 1, 10, 10, 8>}, {pipeline_mode = #tpu.pipeline_mode<synchronous>, transform_indices = @transform_1, window_bounds = array<i64: 16, 8, 1>}, {pipeline_mode = #tpu.pipeline_mode<synchronous>, transform_indices = @transform_2, window_bounds = array<i64: 1, 1>}, {transform_indices = @transform_3, window_bounds = array<i64: 1, 4, 8, 8, 1>}]} {
    %c0 = arith.constant 0 : index
    %c0_0 = arith.constant 0 : index
    %0 = vector.load %arg3[%c0, %c0_0] : memref<1x1xf32, #tpu.memory_space<vmem>>, vector<1x1xf32>
    %c0_1 = arith.constant 0 : index
    %c0_2 = arith.constant 0 : index
    %c0_3 = arith.constant 0 : index
    %c0_4 = arith.constant 0 : index
    %1 = vector.load %arg1[%c0_1, %c0_2, %c0_3, %c0_4] : memref<1x10x10x8xf32, #tpu.memory_space<vmem>>, vector<1x10x10x8xf32>
    %2 = vector.shape_cast %1 : vector<1x10x10x8xf32> to vector<10x10x8xf32>
    %cst = arith.constant 0.000000e+00 : f32
    %3 = vector.broadcast %cst : f32 to vector<8x8x1xf32>
    %4 = vector.shape_cast %0 : vector<1x1xf32> to vector<1x1x1xf32>
    %5 = vector.broadcast %4 : vector<1x1x1xf32> to vector<8x8x1xf32>
    %6 = arith.addf %3, %5 : vector<8x8x1xf32>
    %7 = vector.extract_strided_slice %2 {offsets = [0, 0, 0], sizes = [8, 8, 8], strides = [1, 1, 1]} : vector<10x10x8xf32> to vector<8x8x8xf32>
    %c0_5 = arith.constant 0 : index
    %c0_6 = arith.constant 0 : index
    %c0_7 = arith.constant 0 : index
    %8 = vector.load %arg2[%c0_5, %c0_6, %c0_7] : memref<16x8x1xf32, #tpu.memory_space<vmem>>, vector<1x8x1xf32>
    %9 = vector.shape_cast %8 : vector<1x8x1xf32> to vector<8x1xf32>
    %10 = vector.shape_cast %9 : vector<8x1xf32> to vector<1x8x1xf32>
    %11 = vector.shape_cast %10 : vector<1x8x1xf32> to vector<1x8x1xf32>
    %12 = vector.broadcast %11 : vector<1x8x1xf32> to vector<8x8x1xf32>
    %cst_8 = arith.constant dense<0.000000e+00> : vector<8x8x1xf32>
    %13 = tpu.matmul %7, %12, %cst_8 {dimension_numbers = #tpu.dot_dimension_numbers<[2], [1], [1], [2], [0, 0, 0, 1, 1, 2], [0], [0]>} : vector<8x8x8xf32>, vector<8x8x1xf32>, vector<8x8x1xf32> -> vector<8x8x1xf32>
    %14 = arith.addf %6, %13 : vector<8x8x1xf32>
    %15 = vector.extract_strided_slice %2 {offsets = [0, 1, 0], sizes = [8, 8, 8], strides = [1, 1, 1]} : vector<10x10x8xf32> to vector<8x8x8xf32>
    %c1 = arith.constant 1 : index
    %c0_9 = arith.constant 0 : index
    %c0_10 = arith.constant 0 : index
    %16 = vector.load %arg2[%c1, %c0_9, %c0_10] : memref<16x8x1xf32, #tpu.memory_space<vmem>>, vector<1x8x1xf32>
    %17 = vector.shape_cast %16 : vector<1x8x1xf32> to vector<8x1xf32>
    %18 = vector.shape_cast %17 : vector<8x1xf32> to vector<1x8x1xf32>
    %19 = vector.shape_cast %18 : vector<1x8x1xf32> to vector<1x8x1xf32>
    %20 = vector.broadcast %19 : vector<1x8x1xf32> to vector<8x8x1xf32>
    %cst_11 = arith.constant dense<0.000000e+00> : vector<8x8x1xf32>
    %21 = tpu.matmul %15, %20, %cst_11 {dimension_numbers = #tpu.dot_dimension_numbers<[2], [1], [1], [2], [0, 0, 0, 1, 1, 2], [0], [0]>} : vector<8x8x8xf32>, vector<8x8x1xf32>, vector<8x8x1xf32> -> vector<8x8x1xf32>
    %22 = arith.addf %14, %21 : vector<8x8x1xf32>
    %23 = vector.extract_strided_slice %2 {offsets = [1, 0, 0], sizes = [8, 8, 8], strides = [1, 1, 1]} : vector<10x10x8xf32> to vector<8x8x8xf32>
    %c2 = arith.constant 2 : index
    %c0_12 = arith.constant 0 : index
    %c0_13 = arith.constant 0 : index
    %24 = vector.load %arg2[%c2, %c0_12, %c0_13] : memref<16x8x1xf32, #tpu.memory_space<vmem>>, vector<1x8x1xf32>
    %25 = vector.shape_cast %24 : vector<1x8x1xf32> to vector<8x1xf32>
    %26 = vector.shape_cast %25 : vector<8x1xf32> to vector<1x8x1xf32>
    %27 = vector.shape_cast %26 : vector<1x8x1xf32> to vector<1x8x1xf32>
    %28 = vector.broadcast %27 : vector<1x8x1xf32> to vector<8x8x1xf32>
    %cst_14 = arith.constant dense<0.000000e+00> : vector<8x8x1xf32>
    %29 = tpu.matmul %23, %28, %cst_14 {dimension_numbers = #tpu.dot_dimension_numbers<[2], [1], [1], [2], [0, 0, 0, 1, 1, 2], [0], [0]>} : vector<8x8x8xf32>, vector<8x8x1xf32>, vector<8x8x1xf32> -> vector<8x8x1xf32>
    %30 = arith.addf %22, %29 : vector<8x8x1xf32>
    %31 = vector.extract_strided_slice %2 {offsets = [1, 1, 0], sizes = [8, 8, 8], strides = [1, 1, 1]} : vector<10x10x8xf32> to vector<8x8x8xf32>
    %c3 = arith.constant 3 : index
    %c0_15 = arith.constant 0 : index
    %c0_16 = arith.constant 0 : index
    %32 = vector.load %arg2[%c3, %c0_15, %c0_16] : memref<16x8x1xf32, #tpu.memory_space<vmem>>, vector<1x8x1xf32>
    %33 = vector.shape_cast %32 : vector<1x8x1xf32> to vector<8x1xf32>
    %34 = vector.shape_cast %33 : vector<8x1xf32> to vector<1x8x1xf32>
    %35 = vector.shape_cast %34 : vector<1x8x1xf32> to vector<1x8x1xf32>
    %36 = vector.broadcast %35 : vector<1x8x1xf32> to vector<8x8x1xf32>
    %cst_17 = arith.constant dense<0.000000e+00> : vector<8x8x1xf32>
    %37 = tpu.matmul %31, %36, %cst_17 {dimension_numbers = #tpu.dot_dimension_numbers<[2], [1], [1], [2], [0, 0, 0, 1, 1, 2], [0], [0]>} : vector<8x8x8xf32>, vector<8x8x1xf32>, vector<8x8x1xf32> -> vector<8x8x1xf32>
    %38 = arith.addf %30, %37 : vector<8x8x1xf32>
    %cst_18 = arith.constant 0.000000e+00 : f32
    %39 = vector.broadcast %cst_18 : f32 to vector<8x8x1xf32>
    %40 = arith.maximumf %38, %39 : vector<8x8x1xf32>
    %c0_19 = arith.constant 0 : index
    %c0_20 = arith.constant 0 : index
    %c0_21 = arith.constant 0 : index
    %c0_22 = arith.constant 0 : index
    %c0_23 = arith.constant 0 : index
    %41 = vector.load %arg4[%c0_19, %c0_20, %c0_21, %c0_22, %c0_23] : memref<1x4x8x8x1xf32, #tpu.memory_space<vmem>>, vector<1x1x8x8x1xf32>
    %42 = vector.shape_cast %41 : vector<1x1x8x8x1xf32> to vector<8x8x1xf32>
    %43 = vector.shape_cast %40 : vector<8x8x1xf32> to vector<1x1x8x8x1xf32>
    tpu.vector_store %arg4[%c0_19, %c0_20, %c0_21, %c0_22, %c0_23], %43 {strides = array<i32>} : memref<1x4x8x8x1xf32, #tpu.memory_space<vmem>>, vector<1x1x8x8x1xf32>,
    %cst_24 = arith.constant 0.000000e+00 : f32
    %44 = vector.broadcast %cst_24 : f32 to vector<8x8x1xf32>
    %45 = vector.shape_cast %0 : vector<1x1xf32> to vector<1x1x1xf32>
    %46 = vector.broadcast %45 : vector<1x1x1xf32> to vector<8x8x1xf32>
    %47 = arith.addf %44, %46 : vector<8x8x1xf32>
    %48 = vector.extract_strided_slice %2 {offsets = [0, 1, 0], sizes = [8, 8, 8], strides = [1, 1, 1]} : vector<10x10x8xf32> to vector<8x8x8xf32>
    %c4 = arith.constant 4 : index
    %c0_25 = arith.constant 0 : index
    %c0_26 = arith.constant 0 : index
    %49 = vector.load %arg2[%c4, %c0_25, %c0_26] : memref<16x8x1xf32, #tpu.memory_space<vmem>>, vector<1x8x1xf32>
    %50 = vector.shape_cast %49 : vector<1x8x1xf32> to vector<8x1xf32>
    %51 = vector.shape_cast %50 : vector<8x1xf32> to vector<1x8x1xf32>
    %52 = vector.shape_cast %51 : vector<1x8x1xf32> to vector<1x8x1xf32>
    %53 = vector.broadcast %52 : vector<1x8x1xf32> to vector<8x8x1xf32>
    %cst_27 = arith.constant dense<0.000000e+00> : vector<8x8x1xf32>
    %54 = tpu.matmul %48, %53, %cst_27 {dimension_numbers = #tpu.dot_dimension_numbers<[2], [1], [1], [2], [0, 0, 0, 1, 1, 2], [0], [0]>} : vector<8x8x8xf32>, vector<8x8x1xf32>, vector<8x8x1xf32> -> vector<8x8x1xf32>
    %55 = arith.addf %47, %54 : vector<8x8x1xf32>
    %56 = vector.extract_strided_slice %2 {offsets = [0, 2, 0], sizes = [8, 8, 8], strides = [1, 1, 1]} : vector<10x10x8xf32> to vector<8x8x8xf32>
    %c5 = arith.constant 5 : index
    %c0_28 = arith.constant 0 : index
    %c0_29 = arith.constant 0 : index
    %57 = vector.load %arg2[%c5, %c0_28, %c0_29] : memref<16x8x1xf32, #tpu.memory_space<vmem>>, vector<1x8x1xf32>
    %58 = vector.shape_cast %57 : vector<1x8x1xf32> to vector<8x1xf32>
    %59 = vector.shape_cast %58 : vector<8x1xf32> to vector<1x8x1xf32>
    %60 = vector.shape_cast %59 : vector<1x8x1xf32> to vector<1x8x1xf32>
    %61 = vector.broadcast %60 : vector<1x8x1xf32> to vector<8x8x1xf32>
    %cst_30 = arith.constant dense<0.000000e+00> : vector<8x8x1xf32>
    %62 = tpu.matmul %56, %61, %cst_30 {dimension_numbers = #tpu.dot_dimension_numbers<[2], [1], [1], [2], [0, 0, 0, 1, 1, 2], [0], [0]>} : vector<8x8x8xf32>, vector<8x8x1xf32>, vector<8x8x1xf32> -> vector<8x8x1xf32>
    %63 = arith.addf %55, %62 : vector<8x8x1xf32>
    %64 = vector.extract_strided_slice %2 {offsets = [1, 1, 0], sizes = [8, 8, 8], strides = [1, 1, 1]} : vector<10x10x8xf32> to vector<8x8x8xf32>
    %c6 = arith.constant 6 : index
    %c0_31 = arith.constant 0 : index
    %c0_32 = arith.constant 0 : index
    %65 = vector.load %arg2[%c6, %c0_31, %c0_32] : memref<16x8x1xf32, #tpu.memory_space<vmem>>, vector<1x8x1xf32>
    %66 = vector.shape_cast %65 : vector<1x8x1xf32> to vector<8x1xf32>
    %67 = vector.shape_cast %66 : vector<8x1xf32> to vector<1x8x1xf32>
    %68 = vector.shape_cast %67 : vector<1x8x1xf32> to vector<1x8x1xf32>
    %69 = vector.broadcast %68 : vector<1x8x1xf32> to vector<8x8x1xf32>
    %cst_33 = arith.constant dense<0.000000e+00> : vector<8x8x1xf32>
    %70 = tpu.matmul %64, %69, %cst_33 {dimension_numbers = #tpu.dot_dimension_numbers<[2], [1], [1], [2], [0, 0, 0, 1, 1, 2], [0], [0]>} : vector<8x8x8xf32>, vector<8x8x1xf32>, vector<8x8x1xf32> -> vector<8x8x1xf32>
    %71 = arith.addf %63, %70 : vector<8x8x1xf32>
    %72 = vector.extract_strided_slice %2 {offsets = [1, 2, 0], sizes = [8, 8, 8], strides = [1, 1, 1]} : vector<10x10x8xf32> to vector<8x8x8xf32>
    %c7 = arith.constant 7 : index
    %c0_34 = arith.constant 0 : index
    %c0_35 = arith.constant 0 : index
    %73 = vector.load %arg2[%c7, %c0_34, %c0_35] : memref<16x8x1xf32, #tpu.memory_space<vmem>>, vector<1x8x1xf32>
    %74 = vector.shape_cast %73 : vector<1x8x1xf32> to vector<8x1xf32>
    %75 = vector.shape_cast %74 : vector<8x1xf32> to vector<1x8x1xf32>
    %76 = vector.shape_cast %75 : vector<1x8x1xf32> to vector<1x8x1xf32>
    %77 = vector.broadcast %76 : vector<1x8x1xf32> to vector<8x8x1xf32>
    %cst_36 = arith.constant dense<0.000000e+00> : vector<8x8x1xf32>
    %78 = tpu.matmul %72, %77, %cst_36 {dimension_numbers = #tpu.dot_dimension_numbers<[2], [1], [1], [2], [0, 0, 0, 1, 1, 2], [0], [0]>} : vector<8x8x8xf32>, vector<8x8x1xf32>, vector<8x8x1xf32> -> vector<8x8x1xf32>
    %79 = arith.addf %71, %78 : vector<8x8x1xf32>
    %cst_37 = arith.constant 0.000000e+00 : f32
    %80 = vector.broadcast %cst_37 : f32 to vector<8x8x1xf32>
    %81 = arith.maximumf %79, %80 : vector<8x8x1xf32>
    %c0_38 = arith.constant 0 : index
    %c1_39 = arith.constant 1 : index
    %c0_40 = arith.constant 0 : index
    %c0_41 = arith.constant 0 : index
    %c0_42 = arith.constant 0 : index
    %82 = vector.load %arg4[%c0_38, %c1_39, %c0_40, %c0_41, %c0_42] : memref<1x4x8x8x1xf32, #tpu.memory_space<vmem>>, vector<1x1x8x8x1xf32>
    %83 = vector.shape_cast %82 : vector<1x1x8x8x1xf32> to vector<8x8x1xf32>
    %84 = vector.shape_cast %81 : vector<8x8x1xf32> to vector<1x1x8x8x1xf32>
    tpu.vector_store %arg4[%c0_38, %c1_39, %c0_40, %c0_41, %c0_42], %84 {strides = array<i32>} : memref<1x4x8x8x1xf32, #tpu.memory_space<vmem>>, vector<1x1x8x8x1xf32>,
    %cst_43 = arith.constant 0.000000e+00 : f32
    %85 = vector.broadcast %cst_43 : f32 to vector<8x8x1xf32>
    %86 = vector.shape_cast %0 : vector<1x1xf32> to vector<1x1x1xf32>
    %87 = vector.broadcast %86 : vector<1x1x1xf32> to vector<8x8x1xf32>
    %88 = arith.addf %85, %87 : vector<8x8x1xf32>
    %89 = vector.extract_strided_slice %2 {offsets = [1, 0, 0], sizes = [8, 8, 8], strides = [1, 1, 1]} : vector<10x10x8xf32> to vector<8x8x8xf32>
    %c8 = arith.constant 8 : index
    %c0_44 = arith.constant 0 : index
    %c0_45 = arith.constant 0 : index
    %90 = vector.load %arg2[%c8, %c0_44, %c0_45] : memref<16x8x1xf32, #tpu.memory_space<vmem>>, vector<1x8x1xf32>
    %91 = vector.shape_cast %90 : vector<1x8x1xf32> to vector<8x1xf32>
    %92 = vector.shape_cast %91 : vector<8x1xf32> to vector<1x8x1xf32>
    %93 = vector.shape_cast %92 : vector<1x8x1xf32> to vector<1x8x1xf32>
    %94 = vector.broadcast %93 : vector<1x8x1xf32> to vector<8x8x1xf32>
    %cst_46 = arith.constant dense<0.000000e+00> : vector<8x8x1xf32>
    %95 = tpu.matmul %89, %94, %cst_46 {dimension_numbers = #tpu.dot_dimension_numbers<[2], [1], [1], [2], [0, 0, 0, 1, 1, 2], [0], [0]>} : vector<8x8x8xf32>, vector<8x8x1xf32>, vector<8x8x1xf32> -> vector<8x8x1xf32>
    %96 = arith.addf %88, %95 : vector<8x8x1xf32>
    %97 = vector.extract_strided_slice %2 {offsets = [1, 1, 0], sizes = [8, 8, 8], strides = [1, 1, 1]} : vector<10x10x8xf32> to vector<8x8x8xf32>
    %c9 = arith.constant 9 : index
    %c0_47 = arith.constant 0 : index
    %c0_48 = arith.constant 0 : index
    %98 = vector.load %arg2[%c9, %c0_47, %c0_48] : memref<16x8x1xf32, #tpu.memory_space<vmem>>, vector<1x8x1xf32>
    %99 = vector.shape_cast %98 : vector<1x8x1xf32> to vector<8x1xf32>
    %100 = vector.shape_cast %99 : vector<8x1xf32> to vector<1x8x1xf32>
    %101 = vector.shape_cast %100 : vector<1x8x1xf32> to vector<1x8x1xf32>
    %102 = vector.broadcast %101 : vector<1x8x1xf32> to vector<8x8x1xf32>
    %cst_49 = arith.constant dense<0.000000e+00> : vector<8x8x1xf32>
    %103 = tpu.matmul %97, %102, %cst_49 {dimension_numbers = #tpu.dot_dimension_numbers<[2], [1], [1], [2], [0, 0, 0, 1, 1, 2], [0], [0]>} : vector<8x8x8xf32>, vector<8x8x1xf32>, vector<8x8x1xf32> -> vector<8x8x1xf32>
    %104 = arith.addf %96, %103 : vector<8x8x1xf32>
    %105 = vector.extract_strided_slice %2 {offsets = [2, 0, 0], sizes = [8, 8, 8], strides = [1, 1, 1]} : vector<10x10x8xf32> to vector<8x8x8xf32>
    %c10 = arith.constant 10 : index
    %c0_50 = arith.constant 0 : index
    %c0_51 = arith.constant 0 : index
    %106 = vector.load %arg2[%c10, %c0_50, %c0_51] : memref<16x8x1xf32, #tpu.memory_space<vmem>>, vector<1x8x1xf32>
    %107 = vector.shape_cast %106 : vector<1x8x1xf32> to vector<8x1xf32>
    %108 = vector.shape_cast %107 : vector<8x1xf32> to vector<1x8x1xf32>
    %109 = vector.shape_cast %108 : vector<1x8x1xf32> to vector<1x8x1xf32>
    %110 = vector.broadcast %109 : vector<1x8x1xf32> to vector<8x8x1xf32>
    %cst_52 = arith.constant dense<0.000000e+00> : vector<8x8x1xf32>
    %111 = tpu.matmul %105, %110, %cst_52 {dimension_numbers = #tpu.dot_dimension_numbers<[2], [1], [1], [2], [0, 0, 0, 1, 1, 2], [0], [0]>} : vector<8x8x8xf32>, vector<8x8x1xf32>, vector<8x8x1xf32> -> vector<8x8x1xf32>
    %112 = arith.addf %104, %111 : vector<8x8x1xf32>
    %113 = vector.extract_strided_slice %2 {offsets = [2, 1, 0], sizes = [8, 8, 8], strides = [1, 1, 1]} : vector<10x10x8xf32> to vector<8x8x8xf32>
    %c11 = arith.constant 11 : index
    %c0_53 = arith.constant 0 : index
    %c0_54 = arith.constant 0 : index
    %114 = vector.load %arg2[%c11, %c0_53, %c0_54] : memref<16x8x1xf32, #tpu.memory_space<vmem>>, vector<1x8x1xf32>
    %115 = vector.shape_cast %114 : vector<1x8x1xf32> to vector<8x1xf32>
    %116 = vector.shape_cast %115 : vector<8x1xf32> to vector<1x8x1xf32>
    %117 = vector.shape_cast %116 : vector<1x8x1xf32> to vector<1x8x1xf32>
    %118 = vector.broadcast %117 : vector<1x8x1xf32> to vector<8x8x1xf32>
    %cst_55 = arith.constant dense<0.000000e+00> : vector<8x8x1xf32>
    %119 = tpu.matmul %113, %118, %cst_55 {dimension_numbers = #tpu.dot_dimension_numbers<[2], [1], [1], [2], [0, 0, 0, 1, 1, 2], [0], [0]>} : vector<8x8x8xf32>, vector<8x8x1xf32>, vector<8x8x1xf32> -> vector<8x8x1xf32>
    %120 = arith.addf %112, %119 : vector<8x8x1xf32>
    %cst_56 = arith.constant 0.000000e+00 : f32
    %121 = vector.broadcast %cst_56 : f32 to vector<8x8x1xf32>
    %122 = arith.maximumf %120, %121 : vector<8x8x1xf32>
    %c0_57 = arith.constant 0 : index
    %c2_58 = arith.constant 2 : index
    %c0_59 = arith.constant 0 : index
    %c0_60 = arith.constant 0 : index
    %c0_61 = arith.constant 0 : index
    %123 = vector.load %arg4[%c0_57, %c2_58, %c0_59, %c0_60, %c0_61] : memref<1x4x8x8x1xf32, #tpu.memory_space<vmem>>, vector<1x1x8x8x1xf32>
    %124 = vector.shape_cast %123 : vector<1x1x8x8x1xf32> to vector<8x8x1xf32>
    %125 = vector.shape_cast %122 : vector<8x8x1xf32> to vector<1x1x8x8x1xf32>
    tpu.vector_store %arg4[%c0_57, %c2_58, %c0_59, %c0_60, %c0_61], %125 {strides = array<i32>} : memref<1x4x8x8x1xf32, #tpu.memory_space<vmem>>, vector<1x1x8x8x1xf32>,
    %cst_62 = arith.constant 0.000000e+00 : f32
    %126 = vector.broadcast %cst_62 : f32 to vector<8x8x1xf32>
    %127 = vector.shape_cast %0 : vector<1x1xf32> to vector<1x1x1xf32>
    %128 = vector.broadcast %127 : vector<1x1x1xf32> to vector<8x8x1xf32>
    %129 = arith.addf %126, %128 : vector<8x8x1xf32>
    %130 = vector.extract_strided_slice %2 {offsets = [1, 1, 0], sizes = [8, 8, 8], strides = [1, 1, 1]} : vector<10x10x8xf32> to vector<8x8x8xf32>
    %c12 = arith.constant 12 : index
    %c0_63 = arith.constant 0 : index
    %c0_64 = arith.constant 0 : index
    %131 = vector.load %arg2[%c12, %c0_63, %c0_64] : memref<16x8x1xf32, #tpu.memory_space<vmem>>, vector<1x8x1xf32>
    %132 = vector.shape_cast %131 : vector<1x8x1xf32> to vector<8x1xf32>
    %133 = vector.shape_cast %132 : vector<8x1xf32> to vector<1x8x1xf32>
    %134 = vector.shape_cast %133 : vector<1x8x1xf32> to vector<1x8x1xf32>
    %135 = vector.broadcast %134 : vector<1x8x1xf32> to vector<8x8x1xf32>
    %cst_65 = arith.constant dense<0.000000e+00> : vector<8x8x1xf32>
    %136 = tpu.matmul %130, %135, %cst_65 {dimension_numbers = #tpu.dot_dimension_numbers<[2], [1], [1], [2], [0, 0, 0, 1, 1, 2], [0], [0]>} : vector<8x8x8xf32>, vector<8x8x1xf32>, vector<8x8x1xf32> -> vector<8x8x1xf32>
    %137 = arith.addf %129, %136 : vector<8x8x1xf32>
    %138 = vector.extract_strided_slice %2 {offsets = [1, 2, 0], sizes = [8, 8, 8], strides = [1, 1, 1]} : vector<10x10x8xf32> to vector<8x8x8xf32>
    %c13 = arith.constant 13 : index
    %c0_66 = arith.constant 0 : index
    %c0_67 = arith.constant 0 : index
    %139 = vector.load %arg2[%c13, %c0_66, %c0_67] : memref<16x8x1xf32, #tpu.memory_space<vmem>>, vector<1x8x1xf32>
    %140 = vector.shape_cast %139 : vector<1x8x1xf32> to vector<8x1xf32>
    %141 = vector.shape_cast %140 : vector<8x1xf32> to vector<1x8x1xf32>
    %142 = vector.shape_cast %141 : vector<1x8x1xf32> to vector<1x8x1xf32>
    %143 = vector.broadcast %142 : vector<1x8x1xf32> to vector<8x8x1xf32>
    %cst_68 = arith.constant dense<0.000000e+00> : vector<8x8x1xf32>
    %144 = tpu.matmul %138, %143, %cst_68 {dimension_numbers = #tpu.dot_dimension_numbers<[2], [1], [1], [2], [0, 0, 0, 1, 1, 2], [0], [0]>} : vector<8x8x8xf32>, vector<8x8x1xf32>, vector<8x8x1xf32> -> vector<8x8x1xf32>
    %145 = arith.addf %137, %144 : vector<8x8x1xf32>
    %146 = vector.extract_strided_slice %2 {offsets = [2, 1, 0], sizes = [8, 8, 8], strides = [1, 1, 1]} : vector<10x10x8xf32> to vector<8x8x8xf32>
    %c14 = arith.constant 14 : index
    %c0_69 = arith.constant 0 : index
    %c0_70 = arith.constant 0 : index
    %147 = vector.load %arg2[%c14, %c0_69, %c0_70] : memref<16x8x1xf32, #tpu.memory_space<vmem>>, vector<1x8x1xf32>
    %148 = vector.shape_cast %147 : vector<1x8x1xf32> to vector<8x1xf32>
    %149 = vector.shape_cast %148 : vector<8x1xf32> to vector<1x8x1xf32>
    %150 = vector.shape_cast %149 : vector<1x8x1xf32> to vector<1x8x1xf32>
    %151 = vector.broadcast %150 : vector<1x8x1xf32> to vector<8x8x1xf32>
    %cst_71 = arith.constant dense<0.000000e+00> : vector<8x8x1xf32>
    %152 = tpu.matmul %146, %151, %cst_71 {dimension_numbers = #tpu.dot_dimension_numbers<[2], [1], [1], [2], [0, 0, 0, 1, 1, 2], [0], [0]>} : vector<8x8x8xf32>, vector<8x8x1xf32>, vector<8x8x1xf32> -> vector<8x8x1xf32>
    %153 = arith.addf %145, %152 : vector<8x8x1xf32>
    %154 = vector.extract_strided_slice %2 {offsets = [2, 2, 0], sizes = [8, 8, 8], strides = [1, 1, 1]} : vector<10x10x8xf32> to vector<8x8x8xf32>
    %c15 = arith.constant 15 : index
    %c0_72 = arith.constant 0 : index
    %c0_73 = arith.constant 0 : index
    %155 = vector.load %arg2[%c15, %c0_72, %c0_73] : memref<16x8x1xf32, #tpu.memory_space<vmem>>, vector<1x8x1xf32>
    %156 = vector.shape_cast %155 : vector<1x8x1xf32> to vector<8x1xf32>
    %157 = vector.shape_cast %156 : vector<8x1xf32> to vector<1x8x1xf32>
    %158 = vector.shape_cast %157 : vector<1x8x1xf32> to vector<1x8x1xf32>
    %159 = vector.broadcast %158 : vector<1x8x1xf32> to vector<8x8x1xf32>
    %cst_74 = arith.constant dense<0.000000e+00> : vector<8x8x1xf32>
    %160 = tpu.matmul %154, %159, %cst_74 {dimension_numbers = #tpu.dot_dimension_numbers<[2], [1], [1], [2], [0, 0, 0, 1, 1, 2], [0], [0]>} : vector<8x8x8xf32>, vector<8x8x1xf32>, vector<8x8x1xf32> -> vector<8x8x1xf32>
    %161 = arith.addf %153, %160 : vector<8x8x1xf32>
    %cst_75 = arith.constant 0.000000e+00 : f32
    %162 = vector.broadcast %cst_75 : f32 to vector<8x8x1xf32>
    %163 = arith.maximumf %161, %162 : vector<8x8x1xf32>
    %c0_76 = arith.constant 0 : index
    %c3_77 = arith.constant 3 : index
    %c0_78 = arith.constant 0 : index
    %c0_79 = arith.constant 0 : index
    %c0_80 = arith.constant 0 : index
    %164 = vector.load %arg4[%c0_76, %c3_77, %c0_78, %c0_79, %c0_80] : memref<1x4x8x8x1xf32, #tpu.memory_space<vmem>>, vector<1x1x8x8x1xf32>
    %165 = vector.shape_cast %164 : vector<1x1x8x8x1xf32> to vector<8x8x1xf32>
    %166 = vector.shape_cast %163 : vector<8x8x1xf32> to vector<1x1x8x8x1xf32>
    tpu.vector_store %arg4[%c0_76, %c3_77, %c0_78, %c0_79, %c0_80], %166 {strides = array<i32>} : memref<1x4x8x8x1xf32, #tpu.memory_space<vmem>>, vector<1x1x8x8x1xf32>,
    return
  }
  func.func @transform_0(%arg0: i32) -> (i32, i32, i32, i32) {
    %c0_i32 = arith.constant 0 : i32
    %c0_i32_0 = arith.constant 0 : i32
    %c0_i32_1 = arith.constant 0 : i32
    %c0_i32_2 = arith.constant 0 : i32
    return %arg0, %c0_i32, %c0_i32_0, %c0_i32_1 : i32, i32, i32, i32
  }
  func.func @transform_1(%arg0: i32) -> (i32, i32, i32) {
    %c0_i32 = arith.constant 0 : i32
    %c0_i32_0 = arith.constant 0 : i32
    %c0_i32_1 = arith.constant 0 : i32
    %c0_i32_2 = arith.constant 0 : i32
    return %c0_i32, %c0_i32_0, %c0_i32_1 : i32, i32, i32
  }
  func.func @transform_2(%arg0: i32) -> (i32, i32) {
    %c0_i32 = arith.constant 0 : i32
    %c0_i32_0 = arith.constant 0 : i32
    %c0_i32_1 = arith.constant 0 : i32
    return %c0_i32, %c0_i32_0 : i32, i32
  }
  func.func @transform_3(%arg0: i32) -> (i32, i32, i32, i32, i32) {
    %c0_i32 = arith.constant 0 : i32
    %c0_i32_0 = arith.constant 0 : i32
    %c0_i32_1 = arith.constant 0 : i32
    %c0_i32_2 = arith.constant 0 : i32
    %c0_i32_3 = arith.constant 0 : i32
    return %arg0, %c0_i32, %c0_i32_0, %c0_i32_1, %c0_i32_2 : i32, i32, i32, i32, i32
  }
}

module attributes {stable_mosaic.version = 11 : i64} {
  func.func @_res_attn_kernel(%arg0: i32, %arg1: memref<1x64x4xf32, #tpu.memory_space<vmem>>, %arg2: memref<4x12xf32, #tpu.memory_space<vmem>>, %arg3: memref<1x12xf32, #tpu.memory_space<vmem>>, %arg4: memref<4x4xf32, #tpu.memory_space<vmem>>, %arg5: memref<1x4xf32, #tpu.memory_space<vmem>>, %arg6: memref<1x4xf32, #tpu.memory_space<vmem>>, %arg7: memref<1x4xf32, #tpu.memory_space<vmem>>, %arg8: memref<1x64x4xf32, #tpu.memory_space<vmem>>) attributes {dimension_semantics = [#tpu.dimension_semantics<parallel>], iteration_bounds = array<i64: 2>, scalar_prefetch = 0 : i64, scratch_operands = 0 : i64, tpu.core_type = #tpu.core_type<tc>, window_params = [{transform_indices = @transform_0, window_bounds = array<i64: 1, 64, 4>}, {pipeline_mode = #tpu.pipeline_mode<synchronous>, transform_indices = @transform_1, window_bounds = array<i64: 4, 12>}, {pipeline_mode = #tpu.pipeline_mode<synchronous>, transform_indices = @transform_2, window_bounds = array<i64: 1, 12>}, {pipeline_mode = #tpu.pipeline_mode<synchronous>, transform_indices = @transform_3, window_bounds = array<i64: 4, 4>}, {pipeline_mode = #tpu.pipeline_mode<synchronous>, transform_indices = @transform_4, window_bounds = array<i64: 1, 4>}, {pipeline_mode = #tpu.pipeline_mode<synchronous>, transform_indices = @transform_5, window_bounds = array<i64: 1, 4>}, {pipeline_mode = #tpu.pipeline_mode<synchronous>, transform_indices = @transform_6, window_bounds = array<i64: 1, 4>}, {transform_indices = @transform_7, window_bounds = array<i64: 1, 64, 4>}]} {
    %c0 = arith.constant 0 : index
    %c0_0 = arith.constant 0 : index
    %c0_1 = arith.constant 0 : index
    %0 = vector.load %arg1[%c0, %c0_0, %c0_1] : memref<1x64x4xf32, #tpu.memory_space<vmem>>, vector<1x64x4xf32>
    %1 = vector.shape_cast %0 : vector<1x64x4xf32> to vector<64x4xf32>
    %c0_2 = arith.constant 0 : index
    %c0_3 = arith.constant 0 : index
    %2 = vector.load %arg2[%c0_2, %c0_3] : memref<4x12xf32, #tpu.memory_space<vmem>>, vector<4x12xf32>
    %cst = arith.constant dense<0.000000e+00> : vector<64x12xf32>
    %3 = tpu.matmul %1, %2, %cst {dimension_numbers = #tpu.dot_dimension_numbers<[1], [0], [0], [1], [0, 0, 1, 1], [], []>} : vector<64x4xf32>, vector<4x12xf32>, vector<64x12xf32> -> vector<64x12xf32>
    %c0_4 = arith.constant 0 : index
    %c0_5 = arith.constant 0 : index
    %4 = vector.load %arg3[%c0_4, %c0_5] : memref<1x12xf32, #tpu.memory_space<vmem>>, vector<1x12xf32>
    %5 = vector.broadcast %4 : vector<1x12xf32> to vector<64x12xf32>
    %6 = arith.addf %3, %5 : vector<64x12xf32>
    %7 = vector.extract_strided_slice %6 {offsets = [0, 0], sizes = [64, 2], strides = [1, 1]} : vector<64x12xf32> to vector<64x2xf32>
    %8 = vector.extract_strided_slice %6 {offsets = [0, 4], sizes = [64, 2], strides = [1, 1]} : vector<64x12xf32> to vector<64x2xf32>
    %9 = vector.extract_strided_slice %6 {offsets = [0, 8], sizes = [64, 2], strides = [1, 1]} : vector<64x12xf32> to vector<64x2xf32>
    %10 = tpu.transpose %8, [1, 0] : vector<64x2xf32> -> vector<2x64xf32>
    %cst_6 = arith.constant dense<0.000000e+00> : vector<64x64xf32>
    %11 = tpu.matmul %7, %10, %cst_6 {dimension_numbers = #tpu.dot_dimension_numbers<[1], [0], [0], [1], [0, 0, 1, 1], [], []>} : vector<64x2xf32>, vector<2x64xf32>, vector<64x64xf32> -> vector<64x64xf32>
    %cst_7 = arith.constant 0.707106769 : f32
    %12 = vector.broadcast %cst_7 : f32 to vector<64x64xf32>
    %13 = arith.mulf %11, %12 : vector<64x64xf32>
    %cst_8 = arith.constant dense<0xFF800000> : vector<64xf32>
    %14 = vector.multi_reduction <maximumf>, %13, %cst_8 [1] : vector<64x64xf32> to vector<64xf32>
    %15 = vector.shape_cast %14 : vector<64xf32> to vector<64x1xf32>
    %16 = vector.broadcast %15 : vector<64x1xf32> to vector<64x64xf32>
    %17 = arith.subf %13, %16 : vector<64x64xf32>
    %18 = math.exp %17 : vector<64x64xf32>
    %cst_9 = arith.constant dense<0.000000e+00> : vector<64xf32>
    %19 = vector.multi_reduction <add>, %18, %cst_9 [1] : vector<64x64xf32> to vector<64xf32>
    %20 = vector.shape_cast %19 : vector<64xf32> to vector<64x1xf32>
    %21 = tpu.reciprocal %20 {approx = true} : vector<64x1xf32> -> vector<64x1xf32>
    %22 = vector.broadcast %21 : vector<64x1xf32> to vector<64x64xf32>
    %23 = arith.mulf %18, %22 : vector<64x64xf32>
    %cst_10 = arith.constant dense<0.000000e+00> : vector<64x2xf32>
    %24 = tpu.matmul %23, %9, %cst_10 {dimension_numbers = #tpu.dot_dimension_numbers<[1], [0], [0], [1], [0, 0, 1, 1], [], []>} : vector<64x64xf32>, vector<64x2xf32>, vector<64x2xf32> -> vector<64x2xf32>
    %25 = vector.extract_strided_slice %6 {offsets = [0, 2], sizes = [64, 2], strides = [1, 1]} : vector<64x12xf32> to vector<64x2xf32>
    %26 = vector.extract_strided_slice %6 {offsets = [0, 6], sizes = [64, 2], strides = [1, 1]} : vector<64x12xf32> to vector<64x2xf32>
    %27 = vector.extract_strided_slice %6 {offsets = [0, 10], sizes = [64, 2], strides = [1, 1]} : vector<64x12xf32> to vector<64x2xf32>
    %28 = tpu.transpose %26, [1, 0] : vector<64x2xf32> -> vector<2x64xf32>
    %cst_11 = arith.constant dense<0.000000e+00> : vector<64x64xf32>
    %29 = tpu.matmul %25, %28, %cst_11 {dimension_numbers = #tpu.dot_dimension_numbers<[1], [0], [0], [1], [0, 0, 1, 1], [], []>} : vector<64x2xf32>, vector<2x64xf32>, vector<64x64xf32> -> vector<64x64xf32>
    %cst_12 = arith.constant 0.707106769 : f32
    %30 = vector.broadcast %cst_12 : f32 to vector<64x64xf32>
    %31 = arith.mulf %29, %30 : vector<64x64xf32>
    %cst_13 = arith.constant dense<0xFF800000> : vector<64xf32>
    %32 = vector.multi_reduction <maximumf>, %31, %cst_13 [1] : vector<64x64xf32> to vector<64xf32>
    %33 = vector.shape_cast %32 : vector<64xf32> to vector<64x1xf32>
    %34 = vector.broadcast %33 : vector<64x1xf32> to vector<64x64xf32>
    %35 = arith.subf %31, %34 : vector<64x64xf32>
    %36 = math.exp %35 : vector<64x64xf32>
    %cst_14 = arith.constant dense<0.000000e+00> : vector<64xf32>
    %37 = vector.multi_reduction <add>, %36, %cst_14 [1] : vector<64x64xf32> to vector<64xf32>
    %38 = vector.shape_cast %37 : vector<64xf32> to vector<64x1xf32>
    %39 = tpu.reciprocal %38 {approx = true} : vector<64x1xf32> -> vector<64x1xf32>
    %40 = vector.broadcast %39 : vector<64x1xf32> to vector<64x64xf32>
    %41 = arith.mulf %36, %40 : vector<64x64xf32>
    %cst_15 = arith.constant dense<0.000000e+00> : vector<64x2xf32>
    %42 = tpu.matmul %41, %27, %cst_15 {dimension_numbers = #tpu.dot_dimension_numbers<[1], [0], [0], [1], [0, 0, 1, 1], [], []>} : vector<64x64xf32>, vector<64x2xf32>, vector<64x2xf32> -> vector<64x2xf32>
    %43 = tpu.concatenate %24, %42 in 1 : vector<64x2xf32>, vector<64x2xf32> -> vector<64x4xf32>
    %c0_16 = arith.constant 0 : index
    %c0_17 = arith.constant 0 : index
    %44 = vector.load %arg4[%c0_16, %c0_17] : memref<4x4xf32, #tpu.memory_space<vmem>>, vector<4x4xf32>
    %cst_18 = arith.constant dense<0.000000e+00> : vector<64x4xf32>
    %45 = tpu.matmul %43, %44, %cst_18 {dimension_numbers = #tpu.dot_dimension_numbers<[1], [0], [0], [1], [0, 0, 1, 1], [], []>} : vector<64x4xf32>, vector<4x4xf32>, vector<64x4xf32> -> vector<64x4xf32>
    %c0_19 = arith.constant 0 : index
    %c0_20 = arith.constant 0 : index
    %46 = vector.load %arg5[%c0_19, %c0_20] : memref<1x4xf32, #tpu.memory_space<vmem>>, vector<1x4xf32>
    %47 = vector.broadcast %46 : vector<1x4xf32> to vector<64x4xf32>
    %48 = arith.addf %45, %47 : vector<64x4xf32>
    %49 = arith.addf %1, %48 : vector<64x4xf32>
    %cst_21 = arith.constant dense<0.000000e+00> : vector<64xf32>
    %50 = vector.multi_reduction <add>, %49, %cst_21 [1] : vector<64x4xf32> to vector<64xf32>
    %51 = vector.shape_cast %50 : vector<64xf32> to vector<64x1xf32>
    %cst_22 = arith.constant 4.000000e+00 : f32
    %52 = vector.broadcast %cst_22 : f32 to vector<64x1xf32>
    %53 = arith.divf %51, %52 : vector<64x1xf32>
    %54 = vector.broadcast %53 : vector<64x1xf32> to vector<64x4xf32>
    %55 = arith.subf %49, %54 : vector<64x4xf32>
    %56 = arith.mulf %55, %55 : vector<64x4xf32>
    %cst_23 = arith.constant dense<0.000000e+00> : vector<64xf32>
    %57 = vector.multi_reduction <add>, %56, %cst_23 [1] : vector<64x4xf32> to vector<64xf32>
    %58 = vector.shape_cast %57 : vector<64xf32> to vector<64x1xf32>
    %cst_24 = arith.constant 4.000000e+00 : f32
    %59 = vector.broadcast %cst_24 : f32 to vector<64x1xf32>
    %60 = arith.divf %58, %59 : vector<64x1xf32>
    %61 = vector.broadcast %53 : vector<64x1xf32> to vector<64x4xf32>
    %62 = arith.subf %49, %61 : vector<64x4xf32>
    %cst_25 = arith.constant 9.99999974E-6 : f32
    %63 = vector.broadcast %cst_25 : f32 to vector<64x1xf32>
    %64 = arith.addf %60, %63 : vector<64x1xf32>
    %65 = math.rsqrt %64 : vector<64x1xf32>
    %66 = vector.broadcast %65 : vector<64x1xf32> to vector<64x4xf32>
    %67 = arith.mulf %62, %66 : vector<64x4xf32>
    %c0_26 = arith.constant 0 : index
    %c0_27 = arith.constant 0 : index
    %68 = vector.load %arg6[%c0_26, %c0_27] : memref<1x4xf32, #tpu.memory_space<vmem>>, vector<1x4xf32>
    %69 = vector.broadcast %68 : vector<1x4xf32> to vector<64x4xf32>
    %70 = arith.mulf %67, %69 : vector<64x4xf32>
    %c0_28 = arith.constant 0 : index
    %c0_29 = arith.constant 0 : index
    %71 = vector.load %arg7[%c0_28, %c0_29] : memref<1x4xf32, #tpu.memory_space<vmem>>, vector<1x4xf32>
    %72 = vector.broadcast %71 : vector<1x4xf32> to vector<64x4xf32>
    %73 = arith.addf %70, %72 : vector<64x4xf32>
    %c0_30 = arith.constant 0 : index
    %c0_31 = arith.constant 0 : index
    %c0_32 = arith.constant 0 : index
    %74 = vector.load %arg8[%c0_30, %c0_31, %c0_32] : memref<1x64x4xf32, #tpu.memory_space<vmem>>, vector<1x64x4xf32>
    %75 = vector.shape_cast %74 : vector<1x64x4xf32> to vector<64x4xf32>
    %76 = vector.shape_cast %73 : vector<64x4xf32> to vector<1x64x4xf32>
    tpu.vector_store %arg8[%c0_30, %c0_31, %c0_32], %76 {strides = array<i32>} : memref<1x64x4xf32, #tpu.memory_space<vmem>>, vector<1x64x4xf32>,
    return
  }
  func.func @transform_0(%arg0: i32) -> (i32, i32, i32) {
    %c0_i32 = arith.constant 0 : i32
    %c0_i32_0 = arith.constant 0 : i32
    %c0_i32_1 = arith.constant 0 : i32
    return %arg0, %c0_i32, %c0_i32_0 : i32, i32, i32
  }
  func.func @transform_1(%arg0: i32) -> (i32, i32) {
    %c0_i32 = arith.constant 0 : i32
    %c0_i32_0 = arith.constant 0 : i32
    %c0_i32_1 = arith.constant 0 : i32
    return %c0_i32, %c0_i32_0 : i32, i32
  }
  func.func @transform_2(%arg0: i32) -> (i32, i32) {
    %c0_i32 = arith.constant 0 : i32
    %c0_i32_0 = arith.constant 0 : i32
    %c0_i32_1 = arith.constant 0 : i32
    return %c0_i32, %c0_i32_0 : i32, i32
  }
  func.func @transform_3(%arg0: i32) -> (i32, i32) {
    %c0_i32 = arith.constant 0 : i32
    %c0_i32_0 = arith.constant 0 : i32
    %c0_i32_1 = arith.constant 0 : i32
    return %c0_i32, %c0_i32_0 : i32, i32
  }
  func.func @transform_4(%arg0: i32) -> (i32, i32) {
    %c0_i32 = arith.constant 0 : i32
    %c0_i32_0 = arith.constant 0 : i32
    %c0_i32_1 = arith.constant 0 : i32
    return %c0_i32, %c0_i32_0 : i32, i32
  }
  func.func @transform_5(%arg0: i32) -> (i32, i32) {
    %c0_i32 = arith.constant 0 : i32
    %c0_i32_0 = arith.constant 0 : i32
    %c0_i32_1 = arith.constant 0 : i32
    return %c0_i32, %c0_i32_0 : i32, i32
  }
  func.func @transform_6(%arg0: i32) -> (i32, i32) {
    %c0_i32 = arith.constant 0 : i32
    %c0_i32_0 = arith.constant 0 : i32
    %c0_i32_1 = arith.constant 0 : i32
    return %c0_i32, %c0_i32_0 : i32, i32
  }
  func.func @transform_7(%arg0: i32) -> (i32, i32, i32) {
    %c0_i32 = arith.constant 0 : i32
    %c0_i32_0 = arith.constant 0 : i32
    %c0_i32_1 = arith.constant 0 : i32
    return %arg0, %c0_i32, %c0_i32_0 : i32, i32, i32
  }
}

</mosaic_0001>

<llo_original>
// kernel: forward.10
$region0: #{forward.10}
  #allocation0 [shape = 'u32[]', space=smem, size = 0x4, offset = 0x4, fixed_abs, tag = 'smem constant byte address 0x4 - core index']
  #allocation1 [shape = 'u32[72,128]{1,0:T(1,128)}', space=vmem, size = 0x9000, scoped, tag = 'internal scratch']
  %s0 = inlined_call_operand.vmem [shape: f32[2,9,9,4], index: 0, kind: input, shape index: {}]
  %s1 = inlined_call_operand.vmem [shape: f32[4,4,8], index: 1, kind: input, shape index: {}]
  %s2 = inlined_call_operand.vmem [shape: f32[1,8], index: 2, kind: input, shape index: {}]
  %s3 = inlined_call_operand.vmem [shape: f32[2,1,8,8,8], index: 3, kind: output, shape index: {}]
  %s4 = sld [smem:[#allocation0]]
  $region45: #{forward.10} parent=0
    _
  %s6 = ssub.s32 1, %s4
  %s7 = scalar_select 0, %s6, %s4
  loop: start=0, step=1, limit=4
  $region2: #{forward.10} parent=0 // loop_pre_header
    _
  $region3: #{forward.10} parent=0 // loop_header
    %s9 = sphi 0, %s13
    %p10 = scmp.ge.s32.totalorder %s9, 4
    %s19 = sphi 0, %s21
    %s22 = sphi 0, %s19
    %s23 = sphi 0, %s22
    %s39 = sphi 0, %s23
    %s43 = sphi 0, %s43
    %s45 = sphi 0, %s43
    %s46 = sphi 0, %s45
    %s60 = sphi 0, %s46
    %s64 = sphi 0, %s64
    %s66 = sphi 0, %s64
    %s67 = sphi 0, %s66
    %s81 = sphi 0, %s67
    %s87 = sphi 0, %s89
    %s90 = sphi 0, %s87
    %s91 = sphi 0, %s90
    %s107 = sphi 0, %s91
  $region4: #{forward.10} parent=0 // loop_header_branch
    %12 = sbr.rel (%p10) target = $region8
  $region5: #{forward.10} parent=0 // loop_body
    %s14 = ssub.s32 %s9, 1
    %s15 = ssub.s32 %s9, 2
    %s16 = sadd.s32 %s9, 1
    %s17 = ssub.s32 %s9, %s16
    %p18 = scmp.eq.s32.totalorder %s17, 0
    %s20 = sadd.s32 %s19, 1
    %s21 = scalar_select %p18, %s19, %s20
    %p24 = pneg %p18
    %p25 = scmp.eq.s32.totalorder %s9, 1
    %p26 = por %p24, %p25
    %p27 = scmp.ne.s32.totalorder %s19, %s22
    %p28 = scmp.eq.s32.totalorder %s9, 0
    %p29 = por %p27, %p28
    %p30 = scmp.ne.s32.totalorder %s19, %s22
    %p31 = scmp.eq.s32.totalorder %s14, 1
    %p32 = por %p30, %p31
    %p33 = scmp.ne.s32.totalorder %s22, %s23
    %p34 = scmp.eq.s32.totalorder %s14, 0
    %p35 = por %p33, %p34
    %p36 = scmp.ne.s32.totalorder %s22, %s23
    %p37 = scmp.eq.s32.totalorder %s15, 1
    %p38 = por %p36, %p37
    %p40 = scmp.ne.s32.totalorder %s23, %s39
    %p41 = scmp.eq.s32.totalorder %s15, 0
    %p42 = por %p40, %p41
    %s44 = sadd.s32 %s43, 1
    %p47 = scmp.eq.s32.totalorder %s9, 1
    %p48 = scmp.ne.s32.totalorder %s43, %s45
    %p49 = scmp.eq.s32.totalorder %s9, 0
    %p50 = por %p48, %p49
    %p51 = scmp.ne.s32.totalorder %s43, %s45
    %p52 = scmp.eq.s32.totalorder %s14, 1
    %p53 = por %p51, %p52
    %p54 = scmp.ne.s32.totalorder %s45, %s46
    %p55 = scmp.eq.s32.totalorder %s14, 0
    %p56 = por %p54, %p55
    %p57 = scmp.ne.s32.totalorder %s45, %s46
    %p58 = scmp.eq.s32.totalorder %s15, 1
    %p59 = por %p57, %p58
    %p61 = scmp.ne.s32.totalorder %s46, %s60
    %p62 = scmp.eq.s32.totalorder %s15, 0
    %p63 = por %p61, %p62
    %s65 = sadd.s32 %s64, 1
    %p68 = scmp.eq.s32.totalorder %s9, 1
    %p69 = scmp.ne.s32.totalorder %s64, %s66
    %p70 = scmp.eq.s32.totalorder %s9, 0
    %p71 = por %p69, %p70
    %p72 = scmp.ne.s32.totalorder %s64, %s66
    %p73 = scmp.eq.s32.totalorder %s14, 1
    %p74 = por %p72, %p73
    %p75 = scmp.ne.s32.totalorder %s66, %s67
    %p76 = scmp.eq.s32.totalorder %s14, 0
    %p77 = por %p75, %p76
    %p78 = scmp.ne.s32.totalorder %s66, %s67
    %p79 = scmp.eq.s32.totalorder %s15, 1
    %p80 = por %p78, %p79
    %p82 = scmp.ne.s32.totalorder %s67, %s81
    %p83 = scmp.eq.s32.totalorder %s15, 0
    %p84 = por %p82, %p83
    %s85 = ssub.s32 %s9, %s16
    %p86 = scmp.eq.s32.totalorder %s85, 0
    %s88 = sadd.s32 %s87, 1
    %s89 = scalar_select %p86, %s87, %s88
    %p92 = pneg %p86
    %p93 = scmp.eq.s32.totalorder %s9, 1
    %p94 = por %p92, %p93
    %p95 = scmp.ne.s32.totalorder %s87, %s90
    %p96 = scmp.eq.s32.totalorder %s9, 0
    %p97 = por %p95, %p96
    %p98 = scmp.ne.s32.totalorder %s87, %s90
    %p99 = scmp.eq.s32.totalorder %s14, 1
    %p100 = por %p98, %p99
    %p101 = scmp.ne.s32.totalorder %s90, %s91
    %p102 = scmp.eq.s32.totalorder %s14, 0
    %p103 = por %p101, %p102
    %p104 = scmp.ne.s32.totalorder %s90, %s91
    %p105 = scmp.eq.s32.totalorder %s15, 1
    %p106 = por %p104, %p105
    %p108 = scmp.ne.s32.totalorder %s91, %s107
    %p109 = scmp.eq.s32.totalorder %s15, 0
    %p110 = por %p108, %p109
    %p111 = scmp.le.s32.totalorder 1, %s9
    %p112 = scmp.lt.s32.totalorder %s9, 3
    %p113 = pnand %p111, %p112
    %p114 = pneg %p113
    // Predicated region
    $region9: #{forward.10} parent=5 // pred_check
      _
    $region10: #{forward.10} parent=5 // pred_check_branch
      %116 = sbr.rel (%p113) target = $region12
    $region11: #{forward.10} parent=5 // pred_region
      %s117 = ssub.s32 %s9, 1
      // Predicated region
      $region13: #{forward.10} parent=11 // pred_check
        %p118 = pneg %p56
      $region14: #{forward.10} parent=11 // pred_check_branch
        %120 = sbr.rel (%p118) target = $region16
      $region15: #{forward.10} parent=11 // pred_region
        _
      $region16: #{forward.10} parent=11 // pred_fallthru
        _
      // Predicated region
      $region17: #{forward.10} parent=11 // pred_check
        %p121 = pneg %p77
      $region18: #{forward.10} parent=11 // pred_check_branch
        %123 = sbr.rel (%p121) target = $region20
      $region19: #{forward.10} parent=11 // pred_region
        _
      $region20: #{forward.10} parent=11 // pred_fallthru
        _
    $region12: #{forward.10} parent=5 // pred_fallthru
      _
    %p124 = scmp.lt.s32.totalorder %s9, 2
    // Predicated region
    $region21: #{forward.10} parent=5 // pred_check
      %p125 = pneg %p124
    $region22: #{forward.10} parent=5 // pred_check_branch
      %127 = sbr.rel (%p125) target = $region24
    $region23: #{forward.10} parent=5 // pred_region
      // Predicated region
      $region25: #{forward.10} parent=23 // pred_check
        %p128 = pneg %p29
      $region26: #{forward.10} parent=23 // pred_check_branch
        %130 = sbr.rel (%p128) target = $region28
      $region27: #{forward.10} parent=23 // pred_region
        %p131 = scmp.lt.s32.totalorder %s9, 1
        %s132 = scalar_select %p131, %s9, 1
        %s133 = smul.addr %s132, 18
        %s134 = smul.addr %s133, 8
        %s135 = scalar_lea.vmem %s0, %s134
      $region28: #{forward.10} parent=23 // pred_fallthru
        _
    $region24: #{forward.10} parent=5 // pred_fallthru
      _
    %p136 = scmp.le.s32.totalorder 1, %s9
    %p137 = scmp.lt.s32.totalorder %s9, 3
    %p138 = pnand %p136, %p137
    %p139 = pneg %p138
    // Predicated region
    $region29: #{forward.10} parent=5 // pred_check
      _
    $region30: #{forward.10} parent=5 // pred_check_branch
      %141 = sbr.rel (%p138) target = $region32
    $region31: #{forward.10} parent=5 // pred_region
      %s142 = ssub.s32 %s9, 1
      %p143 = scmp.lt.s32.totalorder %s14, 1
      %s144 = scalar_select %p143, %s14, 1
      %s145 = smul.addr %s144, 18
      %s146 = smul.addr %s145, 8
      %s147 = scalar_lea.vmem %s0, %s146
      %p148 = pneg %p35
      %p149 = pneg %p32
      %p150 = pneg %p56
      %p151 = pneg %p53
      %p152 = pneg %p77
      %p153 = pneg %p74
      %p154 = pneg %p103
      %p155 = pneg %p100
      %p156 = scmp.lt.s32.totalorder %s14, 1
      %s157 = scalar_select %p156, %s14, 1
      %s158 = smul.addr %s157, 8
      %s159 = smul.addr %s158, 8
      %s160 = scalar_lea.vmem %s3, %s159
      %p161 = scmp.lt.s32.totalorder %s14, 1
      %s162 = scalar_select %p161, %s14, 1
      %s163 = smul.addr %s162, 18
      %s164 = smul.addr %s163, 8
      %s165 = scalar_lea.vmem %s0, %s164
      %p166 = scmp.lt.s32.totalorder %s14, 1
      %s167 = scalar_select %p166, %s14, 1
      %s168 = smul.addr %s167, 8
      %s169 = smul.addr %s168, 8
      %s170 = scalar_lea.vmem %s3, %s169
      %v171 = vld [vmem:[%s2] sm:$0x1]
      %v172 = vld [vmem:[%s165] sm:$0xff]
      %v173 = vld [vmem:[%s165 + $0x8] sm:$0x1]
      %v174 = vld [vmem:[%s165 + $0x10] sm:$0xff]
      %v175 = vld [vmem:[%s165 + $0x18] sm:$0x1]
      %v176 = vld [vmem:[%s165 + $0x20] sm:$0xff]
      %v177 = vld [vmem:[%s165 + $0x28] sm:$0x1]
      %v178 = vld [vmem:[%s165 + $0x30] sm:$0xff]
      %v179 = vld [vmem:[%s165 + $0x38] sm:$0x1]
      %v180 = vld [vmem:[%s165 + $0x40] sm:$0xff]
      %v181 = vld [vmem:[%s165 + $0x48] sm:$0x1]
      %v182 = vld [vmem:[%s165 + $0x50] sm:$0xff]
      %v183 = vld [vmem:[%s165 + $0x58] sm:$0x1]
      %v184 = vld [vmem:[%s165 + $0x60] sm:$0xff]
      %v185 = vld [vmem:[%s165 + $0x68] sm:$0x1]
      %v186 = vld [vmem:[%s165 + $0x70] sm:$0xff]
      %v187 = vld [vmem:[%s165 + $0x78] sm:$0x1]
      %v188 = vld [vmem:[%s165 + $0x80] sm:$0xff]
      %v189 = vld [vmem:[%s165 + $0x88] sm:$0x1]
      %v191 = vperm.slane %v171, 0
      %v193 = vadd.f32 %v191, 0.0
      %v194 = vld [vmem:[%s1] sm:$0xf]
      %vm195 = vcmask 31744
      %v197 = vsel %vm195, %v172, 0
      %vm199 = vcmask 1043456
      %v201 = vsel %vm199, %v194, 0
      %203 = vmatpush.msra.mxu0 0.0
      %204 = vmatpush.msra.mxu0 0.0
      %205 = vmatpush.msra.mxu0 0.0
      %206 = vmatpush.msra.mxu0 0.0
      %207 = vmatpush.msra.mxu0 0.0
      %208 = vmatpush.msra.mxu0 0.0
      %209 = vmatpush.msra.mxu0 0.0
      %210 = vmatpush.msra.mxu0 0.0
      %211 = vmatpush.msra.mxu0 0.0
      %212 = vmatpush.msra.mxu0 0.0
      %213 = vmatpush.msra.mxu0 0.0
      %214 = vmatpush.msra.mxu0 0.0
      %215 = vmatpush.msra.mxu0 0.0
      %216 = vmatpush.msra.mxu0 0.0
      %217 = vmatpush.msra.mxu0 0.0
      %218 = vmatpush.msra.mxu0 %v201
      %219 = vmatmul.f32.gmra.mxu0 %v197
      %v220 = vpop.f32.mrf.mxu0
      %v221 = vadd.f32 0.0, %v220
      %222 = vdwg.mxu0
      %v224 = vsel %vm195, %v174, 0
      %226 = vmatpush.msra.mxu0 0.0
      %227 = vmatpush.msra.mxu0 0.0
      %228 = vmatpush.msra.mxu0 0.0
      %229 = vmatpush.msra.mxu0 0.0
      %230 = vmatpush.msra.mxu0 0.0
      %231 = vmatpush.msra.mxu0 0.0
      %232 = vmatpush.msra.mxu0 0.0
      %233 = vmatpush.msra.mxu0 0.0
      %234 = vmatpush.msra.mxu0 0.0
      %235 = vmatpush.msra.mxu0 0.0
      %236 = vmatpush.msra.mxu0 0.0
      %237 = vmatpush.msra.mxu0 0.0
      %238 = vmatpush.msra.mxu0 0.0
      %239 = vmatpush.msra.mxu0 0.0
      %240 = vmatpush.msra.mxu0 0.0
      %241 = vmatpush.msra.mxu0 %v201
      %242 = vmatmul.f32.gmra.mxu0 %v224
      %v243 = vpop.f32.mrf.mxu0
      %v244 = vadd.f32 0.0, %v243
      %245 = vdwg.mxu0
      %v247 = vsel %vm195, %v176, 0
      %249 = vmatpush.msra.mxu0 0.0
      %250 = vmatpush.msra.mxu0 0.0
      %251 = vmatpush.msra.mxu0 0.0
      %252 = vmatpush.msra.mxu0 0.0
      %253 = vmatpush.msra.mxu0 0.0
      %254 = vmatpush.msra.mxu0 0.0
      %255 = vmatpush.msra.mxu0 0.0
      %256 = vmatpush.msra.mxu0 0.0
      %257 = vmatpush.msra.mxu0 0.0
      %258 = vmatpush.msra.mxu0 0.0
      %259 = vmatpush.msra.mxu0 0.0
      %260 = vmatpush.msra.mxu0 0.0
      %261 = vmatpush.msra.mxu0 0.0
      %262 = vmatpush.msra.mxu0 0.0
      %263 = vmatpush.msra.mxu0 0.0
      %264 = vmatpush.msra.mxu0 %v201
      %265 = vmatmul.f32.gmra.mxu0 %v247
      %v266 = vpop.f32.mrf.mxu0
      %v267 = vadd.f32 0.0, %v266
      %268 = vdwg.mxu0
      %v270 = vsel %vm195, %v178, 0
      %272 = vmatpush.msra.mxu0 0.0
      %273 = vmatpush.msra.mxu0 0.0
      %274 = vmatpush.msra.mxu0 0.0
      %275 = vmatpush.msra.mxu0 0.0
      %276 = vmatpush.msra.mxu0 0.0
      %277 = vmatpush.msra.mxu0 0.0
      %278 = vmatpush.msra.mxu0 0.0
      %279 = vmatpush.msra.mxu0 0.0
      %280 = vmatpush.msra.mxu0 0.0
      %281 = vmatpush.msra.mxu0 0.0
      %282 = vmatpush.msra.mxu0 0.0
      %283 = vmatpush.msra.mxu0 0.0
      %284 = vmatpush.msra.mxu0 0.0
      %285 = vmatpush.msra.mxu0 0.0
      %286 = vmatpush.msra.mxu0 0.0
      %287 = vmatpush.msra.mxu0 %v201
      %288 = vmatmul.f32.gmra.mxu0 %v270
      %v289 = vpop.f32.mrf.mxu0
      %v290 = vadd.f32 0.0, %v289
      %291 = vdwg.mxu0
      %v293 = vsel %vm195, %v180, 0
      %295 = vmatpush.msra.mxu0 0.0
      %296 = vmatpush.msra.mxu0 0.0
      %297 = vmatpush.msra.mxu0 0.0
      %298 = vmatpush.msra.mxu0 0.0
      %299 = vmatpush.msra.mxu0 0.0
      %300 = vmatpush.msra.mxu0 0.0
      %301 = vmatpush.msra.mxu0 0.0
      %302 = vmatpush.msra.mxu0 0.0
      %303 = vmatpush.msra.mxu0 0.0
      %304 = vmatpush.msra.mxu0 0.0
      %305 = vmatpush.msra.mxu0 0.0
      %306 = vmatpush.msra.mxu0 0.0
      %307 = vmatpush.msra.mxu0 0.0
      %308 = vmatpush.msra.mxu0 0.0
      %309 = vmatpush.msra.mxu0 0.0
      %310 = vmatpush.msra.mxu0 %v201
      %311 = vmatmul.f32.gmra.mxu0 %v293
      %v312 = vpop.f32.mrf.mxu0
      %v313 = vadd.f32 0.0, %v312
      %314 = vdwg.mxu0
      %v316 = vsel %vm195, %v182, 0
      %318 = vmatpush.msra.mxu0 0.0
      %319 = vmatpush.msra.mxu0 0.0
      %320 = vmatpush.msra.mxu0 0.0
      %321 = vmatpush.msra.mxu0 0.0
      %322 = vmatpush.msra.mxu0 0.0
      %323 = vmatpush.msra.mxu0 0.0
      %324 = vmatpush.msra.mxu0 0.0
      %325 = vmatpush.msra.mxu0 0.0
      %326 = vmatpush.msra.mxu0 0.0
      %327 = vmatpush.msra.mxu0 0.0
      %328 = vmatpush.msra.mxu0 0.0
      %329 = vmatpush.msra.mxu0 0.0
      %330 = vmatpush.msra.mxu0 0.0
      %331 = vmatpush.msra.mxu0 0.0
      %332 = vmatpush.msra.mxu0 0.0
      %333 = vmatpush.msra.mxu0 %v201
      %334 = vmatmul.f32.gmra.mxu0 %v316
      %v335 = vpop.f32.mrf.mxu0
      %v336 = vadd.f32 0.0, %v335
      %337 = vdwg.mxu0
      %v339 = vsel %vm195, %v184, 0
      %341 = vmatpush.msra.mxu0 0.0
      %342 = vmatpush.msra.mxu0 0.0
      %343 = vmatpush.msra.mxu0 0.0
      %344 = vmatpush.msra.mxu0 0.0
      %345 = vmatpush.msra.mxu0 0.0
      %346 = vmatpush.msra.mxu0 0.0
      %347 = vmatpush.msra.mxu0 0.0
      %348 = vmatpush.msra.mxu0 0.0
      %349 = vmatpush.msra.mxu0 0.0
      %350 = vmatpush.msra.mxu0 0.0
      %351 = vmatpush.msra.mxu0 0.0
      %352 = vmatpush.msra.mxu0 0.0
      %353 = vmatpush.msra.mxu0 0.0
      %354 = vmatpush.msra.mxu0 0.0
      %355 = vmatpush.msra.mxu0 0.0
      %356 = vmatpush.msra.mxu0 %v201
      %357 = vmatmul.f32.gmra.mxu0 %v339
      %v358 = vpop.f32.mrf.mxu0
      %v359 = vadd.f32 0.0, %v358
      %360 = vdwg.mxu0
      %v362 = vsel %vm195, %v186, 0
      %364 = vmatpush.msra.mxu0 0.0
      %365 = vmatpush.msra.mxu0 0.0
      %366 = vmatpush.msra.mxu0 0.0
      %367 = vmatpush.msra.mxu0 0.0
      %368 = vmatpush.msra.mxu0 0.0
      %369 = vmatpush.msra.mxu0 0.0
      %370 = vmatpush.msra.mxu0 0.0
      %371 = vmatpush.msra.mxu0 0.0
      %372 = vmatpush.msra.mxu0 0.0
      %373 = vmatpush.msra.mxu0 0.0
      %374 = vmatpush.msra.mxu0 0.0
      %375 = vmatpush.msra.mxu0 0.0
      %376 = vmatpush.msra.mxu0 0.0
      %377 = vmatpush.msra.mxu0 0.0
      %378 = vmatpush.msra.mxu0 0.0
      %379 = vmatpush.msra.mxu0 %v201
      %380 = vmatmul.f32.gmra.mxu0 %v362
      %v381 = vpop.f32.mrf.mxu0
      %v382 = vadd.f32 0.0, %v381
      %383 = vdwg.mxu0
      %v384 = vadd.f32 %v193, %v221
      %v385 = vadd.f32 %v193, %v244
      %v386 = vadd.f32 %v193, %v267
      %v387 = vadd.f32 %v193, %v290
      %v388 = vadd.f32 %v193, %v313
      %v389 = vadd.f32 %v193, %v336
      %v390 = vadd.f32 %v193, %v359
      %v391 = vadd.f32 %v193, %v382
      %s392 = scalar_lea.vmem %s1, 4
      %v393 = vld [vmem:[%s392] sm:$0xf]
      %vm395 = vcmask 1046528
      %v396 = vrot.slane %v172, 1
      %v397 = vrot.slane %v173, 1
      %v398 = vsel %vm395, %v396, %v397
      %v399 = vsel %vm195, %v398, 0
      %v402 = vsel %vm199, %v393, 0
      %404 = vmatpush.msra.mxu0 0.0
      %405 = vmatpush.msra.mxu0 0.0
      %406 = vmatpush.msra.mxu0 0.0
      %407 = vmatpush.msra.mxu0 0.0
      %408 = vmatpush.msra.mxu0 0.0
      %409 = vmatpush.msra.mxu0 0.0
      %410 = vmatpush.msra.mxu0 0.0
      %411 = vmatpush.msra.mxu0 0.0
      %412 = vmatpush.msra.mxu0 0.0
      %413 = vmatpush.msra.mxu0 0.0
      %414 = vmatpush.msra.mxu0 0.0
      %415 = vmatpush.msra.mxu0 0.0
      %416 = vmatpush.msra.mxu0 0.0
      %417 = vmatpush.msra.mxu0 0.0
      %418 = vmatpush.msra.mxu0 0.0
      %419 = vmatpush.msra.mxu0 %v402
      %420 = vmatmul.f32.gmra.mxu0 %v399
      %v421 = vpop.f32.mrf.mxu0
      %v422 = vadd.f32 0.0, %v421
      %423 = vdwg.mxu0
      %v425 = vrot.slane %v174, 1
      %v426 = vrot.slane %v175, 1
      %v427 = vsel %vm395, %v425, %v426
      %v428 = vsel %vm195, %v427, 0
      %430 = vmatpush.msra.mxu0 0.0
      %431 = vmatpush.msra.mxu0 0.0
      %432 = vmatpush.msra.mxu0 0.0
      %433 = vmatpush.msra.mxu0 0.0
      %434 = vmatpush.msra.mxu0 0.0
      %435 = vmatpush.msra.mxu0 0.0
      %436 = vmatpush.msra.mxu0 0.0
      %437 = vmatpush.msra.mxu0 0.0
      %438 = vmatpush.msra.mxu0 0.0
      %439 = vmatpush.msra.mxu0 0.0
      %440 = vmatpush.msra.mxu0 0.0
      %441 = vmatpush.msra.mxu0 0.0
      %442 = vmatpush.msra.mxu0 0.0
      %443 = vmatpush.msra.mxu0 0.0
      %444 = vmatpush.msra.mxu0 0.0
      %445 = vmatpush.msra.mxu0 %v402
      %446 = vmatmul.f32.gmra.mxu0 %v428
      %v447 = vpop.f32.mrf.mxu0
      %v448 = vadd.f32 0.0, %v447
      %449 = vdwg.mxu0
      %v451 = vrot.slane %v176, 1
      %v452 = vrot.slane %v177, 1
      %v453 = vsel %vm395, %v451, %v452
      %v454 = vsel %vm195, %v453, 0
      %456 = vmatpush.msra.mxu0 0.0
      %457 = vmatpush.msra.mxu0 0.0
      %458 = vmatpush.msra.mxu0 0.0
      %459 = vmatpush.msra.mxu0 0.0
      %460 = vmatpush.msra.mxu0 0.0
      %461 = vmatpush.msra.mxu0 0.0
      %462 = vmatpush.msra.mxu0 0.0
      %463 = vmatpush.msra.mxu0 0.0
      %464 = vmatpush.msra.mxu0 0.0
      %465 = vmatpush.msra.mxu0 0.0
      %466 = vmatpush.msra.mxu0 0.0
      %467 = vmatpush.msra.mxu0 0.0
      %468 = vmatpush.msra.mxu0 0.0
      %469 = vmatpush.msra.mxu0 0.0
      %470 = vmatpush.msra.mxu0 0.0
      %471 = vmatpush.msra.mxu0 %v402
      %472 = vmatmul.f32.gmra.mxu0 %v454
      %v473 = vpop.f32.mrf.mxu0
      %v474 = vadd.f32 0.0, %v473
      %475 = vdwg.mxu0
      %v477 = vrot.slane %v178, 1
      %v478 = vrot.slane %v179, 1
      %v479 = vsel %vm395, %v477, %v478
      %v480 = vsel %vm195, %v479, 0
      %482 = vmatpush.msra.mxu0 0.0
      %483 = vmatpush.msra.mxu0 0.0
      %484 = vmatpush.msra.mxu0 0.0
      %485 = vmatpush.msra.mxu0 0.0
      %486 = vmatpush.msra.mxu0 0.0
      %487 = vmatpush.msra.mxu0 0.0
      %488 = vmatpush.msra.mxu0 0.0
      %489 = vmatpush.msra.mxu0 0.0
      %490 = vmatpush.msra.mxu0 0.0
      %491 = vmatpush.msra.mxu0 0.0
      %492 = vmatpush.msra.mxu0 0.0
      %493 = vmatpush.msra.mxu0 0.0
      %494 = vmatpush.msra.mxu0 0.0
      %495 = vmatpush.msra.mxu0 0.0
      %496 = vmatpush.msra.mxu0 0.0
      %497 = vmatpush.msra.mxu0 %v402
      %498 = vmatmul.f32.gmra.mxu0 %v480
      %v499 = vpop.f32.mrf.mxu0
      %v500 = vadd.f32 0.0, %v499
      %501 = vdwg.mxu0
      %v503 = vrot.slane %v180, 1
      %v504 = vrot.slane %v181, 1
      %v505 = vsel %vm395, %v503, %v504
      %v506 = vsel %vm195, %v505, 0
      %508 = vmatpush.msra.mxu0 0.0
      %509 = vmatpush.msra.mxu0 0.0
      %510 = vmatpush.msra.mxu0 0.0
      %511 = vmatpush.msra.mxu0 0.0
      %512 = vmatpush.msra.mxu0 0.0
      %513 = vmatpush.msra.mxu0 0.0
      %514 = vmatpush.msra.mxu0 0.0
      %515 = vmatpush.msra.mxu0 0.0
      %516 = vmatpush.msra.mxu0 0.0
      %517 = vmatpush.msra.mxu0 0.0
      %518 = vmatpush.msra.mxu0 0.0
      %519 = vmatpush.msra.mxu0 0.0
      %520 = vmatpush.msra.mxu0 0.0
      %521 = vmatpush.msra.mxu0 0.0
      %522 = vmatpush.msra.mxu0 0.0
      %523 = vmatpush.msra.mxu0 %v402
      %524 = vmatmul.f32.gmra.mxu0 %v506
      %v525 = vpop.f32.mrf.mxu0
      %v526 = vadd.f32 0.0, %v525
      %527 = vdwg.mxu0
      %v529 = vrot.slane %v182, 1
      %v530 = vrot.slane %v183, 1
      %v531 = vsel %vm395, %v529, %v530
      %v532 = vsel %vm195, %v531, 0
      %534 = vmatpush.msra.mxu0 0.0
      %535 = vmatpush.msra.mxu0 0.0
      %536 = vmatpush.msra.mxu0 0.0
      %537 = vmatpush.msra.mxu0 0.0
      %538 = vmatpush.msra.mxu0 0.0
      %539 = vmatpush.msra.mxu0 0.0
      %540 = vmatpush.msra.mxu0 0.0
      %541 = vmatpush.msra.mxu0 0.0
      %542 = vmatpush.msra.mxu0 0.0
      %543 = vmatpush.msra.mxu0 0.0
      %544 = vmatpush.msra.mxu0 0.0
      %545 = vmatpush.msra.mxu0 0.0
      %546 = vmatpush.msra.mxu0 0.0
      %547 = vmatpush.msra.mxu0 0.0
      %548 = vmatpush.msra.mxu0 0.0
      %549 = vmatpush.msra.mxu0 %v402
      %550 = vmatmul.f32.gmra.mxu0 %v532
      %v551 = vpop.f32.mrf.mxu0
      %v552 = vadd.f32 0.0, %v551
      %553 = vdwg.mxu0
      %v555 = vrot.slane %v184, 1
      %v556 = vrot.slane %v185, 1
      %v557 = vsel %vm395, %v555, %v556
      %v558 = vsel %vm195, %v557, 0
      %560 = vmatpush.msra.mxu0 0.0
      %561 = vmatpush.msra.mxu0 0.0
      %562 = vmatpush.msra.mxu0 0.0
      %563 = vmatpush.msra.mxu0 0.0
      %564 = vmatpush.msra.mxu0 0.0
      %565 = vmatpush.msra.mxu0 0.0
      %566 = vmatpush.msra.mxu0 0.0
      %567 = vmatpush.msra.mxu0 0.0
      %568 = vmatpush.msra.mxu0 0.0
      %569 = vmatpush.msra.mxu0 0.0
      %570 = vmatpush.msra.mxu0 0.0
      %571 = vmatpush.msra.mxu0 0.0
      %572 = vmatpush.msra.mxu0 0.0
      %573 = vmatpush.msra.mxu0 0.0
      %574 = vmatpush.msra.mxu0 0.0
      %575 = vmatpush.msra.mxu0 %v402
      %576 = vmatmul.f32.gmra.mxu0 %v558
      %v577 = vpop.f32.mrf.mxu0
      %v578 = vadd.f32 0.0, %v577
      %579 = vdwg.mxu0
      %v581 = vrot.slane %v186, 1
      %v582 = vrot.slane %v187, 1
      %v583 = vsel %vm395, %v581, %v582
      %v584 = vsel %vm195, %v583, 0
      %586 = vmatpush.msra.mxu0 0.0
      %587 = vmatpush.msra.mxu0 0.0
      %588 = vmatpush.msra.mxu0 0.0
      %589 = vmatpush.msra.mxu0 0.0
      %590 = vmatpush.msra.mxu0 0.0
      %591 = vmatpush.msra.mxu0 0.0
      %592 = vmatpush.msra.mxu0 0.0
      %593 = vmatpush.msra.mxu0 0.0
      %594 = vmatpush.msra.mxu0 0.0
      %595 = vmatpush.msra.mxu0 0.0
      %596 = vmatpush.msra.mxu0 0.0
      %597 = vmatpush.msra.mxu0 0.0
      %598 = vmatpush.msra.mxu0 0.0
      %599 = vmatpush.msra.mxu0 0.0
      %600 = vmatpush.msra.mxu0 0.0
      %601 = vmatpush.msra.mxu0 %v402
      %602 = vmatmul.f32.gmra.mxu0 %v584
      %v603 = vpop.f32.mrf.mxu0
      %v604 = vadd.f32 0.0, %v603
      %605 = vdwg.mxu0
      %v606 = vadd.f32 %v384, %v422
      %v607 = vadd.f32 %v385, %v448
      %v608 = vadd.f32 %v386, %v474
      %v609 = vadd.f32 %v387, %v500
      %v610 = vadd.f32 %v388, %v526
      %v611 = vadd.f32 %v389, %v552
      %v612 = vadd.f32 %v390, %v578
      %v613 = vadd.f32 %v391, %v604
      %s614 = scalar_lea.vmem %s1, 8
      %v615 = vld [vmem:[%s614] sm:$0xf]
      %v617 = vsel %vm199, %v615, 0
      %619 = vmatpush.msra.mxu0 0.0
      %620 = vmatpush.msra.mxu0 0.0
      %621 = vmatpush.msra.mxu0 0.0
      %622 = vmatpush.msra.mxu0 0.0
      %623 = vmatpush.msra.mxu0 0.0
      %624 = vmatpush.msra.mxu0 0.0
      %625 = vmatpush.msra.mxu0 0.0
      %626 = vmatpush.msra.mxu0 0.0
      %627 = vmatpush.msra.mxu0 0.0
      %628 = vmatpush.msra.mxu0 0.0
      %629 = vmatpush.msra.mxu0 0.0
      %630 = vmatpush.msra.mxu0 0.0
      %631 = vmatpush.msra.mxu0 0.0
      %632 = vmatpush.msra.mxu0 0.0
      %633 = vmatpush.msra.mxu0 0.0
      %634 = vmatpush.msra.mxu0 %v617
      %635 = vmatmul.f32.gmra.mxu0 %v224
      %v636 = vpop.f32.mrf.mxu0
      %v637 = vadd.f32 0.0, %v636
      %638 = vdwg.mxu0
      %639 = vmatpush.msra.mxu0 0.0
      %640 = vmatpush.msra.mxu0 0.0
      %641 = vmatpush.msra.mxu0 0.0
      %642 = vmatpush.msra.mxu0 0.0
      %643 = vmatpush.msra.mxu0 0.0
      %644 = vmatpush.msra.mxu0 0.0
      %645 = vmatpush.msra.mxu0 0.0
      %646 = vmatpush.msra.mxu0 0.0
      %647 = vmatpush.msra.mxu0 0.0
      %648 = vmatpush.msra.mxu0 0.0
      %649 = vmatpush.msra.mxu0 0.0
      %650 = vmatpush.msra.mxu0 0.0
      %651 = vmatpush.msra.mxu0 0.0
      %652 = vmatpush.msra.mxu0 0.0
      %653 = vmatpush.msra.mxu0 0.0
      %654 = vmatpush.msra.mxu0 %v617
      %655 = vmatmul.f32.gmra.mxu0 %v247
      %v656 = vpop.f32.mrf.mxu0
      %v657 = vadd.f32 0.0, %v656
      %658 = vdwg.mxu0
      %659 = vmatpush.msra.mxu0 0.0
      %660 = vmatpush.msra.mxu0 0.0
      %661 = vmatpush.msra.mxu0 0.0
      %662 = vmatpush.msra.mxu0 0.0
      %663 = vmatpush.msra.mxu0 0.0
      %664 = vmatpush.msra.mxu0 0.0
      %665 = vmatpush.msra.mxu0 0.0
      %666 = vmatpush.msra.mxu0 0.0
      %667 = vmatpush.msra.mxu0 0.0
      %668 = vmatpush.msra.mxu0 0.0
      %669 = vmatpush.msra.mxu0 0.0
      %670 = vmatpush.msra.mxu0 0.0
      %671 = vmatpush.msra.mxu0 0.0
      %672 = vmatpush.msra.mxu0 0.0
      %673 = vmatpush.msra.mxu0 0.0
      %674 = vmatpush.msra.mxu0 %v617
      %675 = vmatmul.f32.gmra.mxu0 %v270
      %v676 = vpop.f32.mrf.mxu0
      %v677 = vadd.f32 0.0, %v676
      %678 = vdwg.mxu0
      %679 = vmatpush.msra.mxu0 0.0
      %680 = vmatpush.msra.mxu0 0.0
      %681 = vmatpush.msra.mxu0 0.0
      %682 = vmatpush.msra.mxu0 0.0
      %683 = vmatpush.msra.mxu0 0.0
      %684 = vmatpush.msra.mxu0 0.0
      %685 = vmatpush.msra.mxu0 0.0
      %686 = vmatpush.msra.mxu0 0.0
      %687 = vmatpush.msra.mxu0 0.0
      %688 = vmatpush.msra.mxu0 0.0
      %689 = vmatpush.msra.mxu0 0.0
      %690 = vmatpush.msra.mxu0 0.0
      %691 = vmatpush.msra.mxu0 0.0
      %692 = vmatpush.msra.mxu0 0.0
      %693 = vmatpush.msra.mxu0 0.0
      %694 = vmatpush.msra.mxu0 %v617
      %695 = vmatmul.f32.gmra.mxu0 %v293
      %v696 = vpop.f32.mrf.mxu0
      %v697 = vadd.f32 0.0, %v696
      %698 = vdwg.mxu0
      %699 = vmatpush.msra.mxu0 0.0
      %700 = vmatpush.msra.mxu0 0.0
      %701 = vmatpush.msra.mxu0 0.0
      %702 = vmatpush.msra.mxu0 0.0
      %703 = vmatpush.msra.mxu0 0.0
      %704 = vmatpush.msra.mxu0 0.0
      %705 = vmatpush.msra.mxu0 0.0
      %706 = vmatpush.msra.mxu0 0.0
      %707 = vmatpush.msra.mxu0 0.0
      %708 = vmatpush.msra.mxu0 0.0
      %709 = vmatpush.msra.mxu0 0.0
      %710 = vmatpush.msra.mxu0 0.0
      %711 = vmatpush.msra.mxu0 0.0
      %712 = vmatpush.msra.mxu0 0.0
      %713 = vmatpush.msra.mxu0 0.0
      %714 = vmatpush.msra.mxu0 %v617
      %715 = vmatmul.f32.gmra.mxu0 %v316
      %v716 = vpop.f32.mrf.mxu0
      %v717 = vadd.f32 0.0, %v716
      %718 = vdwg.mxu0
      %719 = vmatpush.msra.mxu0 0.0
      %720 = vmatpush.msra.mxu0 0.0
      %721 = vmatpush.msra.mxu0 0.0
      %722 = vmatpush.msra.mxu0 0.0
      %723 = vmatpush.msra.mxu0 0.0
      %724 = vmatpush.msra.mxu0 0.0
      %725 = vmatpush.msra.mxu0 0.0
      %726 = vmatpush.msra.mxu0 0.0
      %727 = vmatpush.msra.mxu0 0.0
      %728 = vmatpush.msra.mxu0 0.0
      %729 = vmatpush.msra.mxu0 0.0
      %730 = vmatpush.msra.mxu0 0.0
      %731 = vmatpush.msra.mxu0 0.0
      %732 = vmatpush.msra.mxu0 0.0
      %733 = vmatpush.msra.mxu0 0.0
      %734 = vmatpush.msra.mxu0 %v617
      %735 = vmatmul.f32.gmra.mxu0 %v339
      %v736 = vpop.f32.mrf.mxu0
      %v737 = vadd.f32 0.0, %v736
      %738 = vdwg.mxu0
      %739 = vmatpush.msra.mxu0 0.0
      %740 = vmatpush.msra.mxu0 0.0
      %741 = vmatpush.msra.mxu0 0.0
      %742 = vmatpush.msra.mxu0 0.0
      %743 = vmatpush.msra.mxu0 0.0
      %744 = vmatpush.msra.mxu0 0.0
      %745 = vmatpush.msra.mxu0 0.0
      %746 = vmatpush.msra.mxu0 0.0
      %747 = vmatpush.msra.mxu0 0.0
      %748 = vmatpush.msra.mxu0 0.0
      %749 = vmatpush.msra.mxu0 0.0
      %750 = vmatpush.msra.mxu0 0.0
      %751 = vmatpush.msra.mxu0 0.0
      %752 = vmatpush.msra.mxu0 0.0
      %753 = vmatpush.msra.mxu0 0.0
      %754 = vmatpush.msra.mxu0 %v617
      %755 = vmatmul.f32.gmra.mxu0 %v362
      %v756 = vpop.f32.mrf.mxu0
      %v757 = vadd.f32 0.0, %v756
      %758 = vdwg.mxu0
      %v760 = vsel %vm195, %v188, 0
      %762 = vmatpush.msra.mxu0 0.0
      %763 = vmatpush.msra.mxu0 0.0
      %764 = vmatpush.msra.mxu0 0.0
      %765 = vmatpush.msra.mxu0 0.0
      %766 = vmatpush.msra.mxu0 0.0
      %767 = vmatpush.msra.mxu0 0.0
      %768 = vmatpush.msra.mxu0 0.0
      %769 = vmatpush.msra.mxu0 0.0
      %770 = vmatpush.msra.mxu0 0.0
      %771 = vmatpush.msra.mxu0 0.0
      %772 = vmatpush.msra.mxu0 0.0
      %773 = vmatpush.msra.mxu0 0.0
      %774 = vmatpush.msra.mxu0 0.0
      %775 = vmatpush.msra.mxu0 0.0
      %776 = vmatpush.msra.mxu0 0.0
      %777 = vmatpush.msra.mxu0 %v617
      %778 = vmatmul.f32.gmra.mxu0 %v760
      %v779 = vpop.f32.mrf.mxu0
      %v780 = vadd.f32 0.0, %v779
      %781 = vdwg.mxu0
      %v782 = vadd.f32 %v606, %v637
      %v783 = vadd.f32 %v607, %v657
      %v784 = vadd.f32 %v608, %v677
      %v785 = vadd.f32 %v609, %v697
      %v786 = vadd.f32 %v610, %v717
      %v787 = vadd.f32 %v611, %v737
      %v788 = vadd.f32 %v612, %v757
      %v789 = vadd.f32 %v613, %v780
      %s790 = scalar_lea.vmem %s1, 12
      %v791 = vld [vmem:[%s790] sm:$0xf]
      %v793 = vsel %vm199, %v791, 0
      %795 = vmatpush.msra.mxu0 0.0
      %796 = vmatpush.msra.mxu0 0.0
      %797 = vmatpush.msra.mxu0 0.0
      %798 = vmatpush.msra.mxu0 0.0
      %799 = vmatpush.msra.mxu0 0.0
      %800 = vmatpush.msra.mxu0 0.0
      %801 = vmatpush.msra.mxu0 0.0
      %802 = vmatpush.msra.mxu0 0.0
      %803 = vmatpush.msra.mxu0 0.0
      %804 = vmatpush.msra.mxu0 0.0
      %805 = vmatpush.msra.mxu0 0.0
      %806 = vmatpush.msra.mxu0 0.0
      %807 = vmatpush.msra.mxu0 0.0
      %808 = vmatpush.msra.mxu0 0.0
      %809 = vmatpush.msra.mxu0 0.0
      %810 = vmatpush.msra.mxu0 %v793
      %811 = vmatmul.f32.gmra.mxu0 %v428
      %v812 = vpop.f32.mrf.mxu0
      %v813 = vadd.f32 0.0, %v812
      %814 = vdwg.mxu0
      %815 = vmatpush.msra.mxu0 0.0
      %816 = vmatpush.msra.mxu0 0.0
      %817 = vmatpush.msra.mxu0 0.0
      %818 = vmatpush.msra.mxu0 0.0
      %819 = vmatpush.msra.mxu0 0.0
      %820 = vmatpush.msra.mxu0 0.0
      %821 = vmatpush.msra.mxu0 0.0
      %822 = vmatpush.msra.mxu0 0.0
      %823 = vmatpush.msra.mxu0 0.0
      %824 = vmatpush.msra.mxu0 0.0
      %825 = vmatpush.msra.mxu0 0.0
      %826 = vmatpush.msra.mxu0 0.0
      %827 = vmatpush.msra.mxu0 0.0
      %828 = vmatpush.msra.mxu0 0.0
      %829 = vmatpush.msra.mxu0 0.0
      %830 = vmatpush.msra.mxu0 %v793
      %831 = vmatmul.f32.gmra.mxu0 %v454
      %v832 = vpop.f32.mrf.mxu0
      %v833 = vadd.f32 0.0, %v832
      %834 = vdwg.mxu0
      %835 = vmatpush.msra.mxu0 0.0
      %836 = vmatpush.msra.mxu0 0.0
      %837 = vmatpush.msra.mxu0 0.0
      %838 = vmatpush.msra.mxu0 0.0
      %839 = vmatpush.msra.mxu0 0.0
      %840 = vmatpush.msra.mxu0 0.0
      %841 = vmatpush.msra.mxu0 0.0
      %842 = vmatpush.msra.mxu0 0.0
      %843 = vmatpush.msra.mxu0 0.0
      %844 = vmatpush.msra.mxu0 0.0
      %845 = vmatpush.msra.mxu0 0.0
      %846 = vmatpush.msra.mxu0 0.0
      %847 = vmatpush.msra.mxu0 0.0
      %848 = vmatpush.msra.mxu0 0.0
      %849 = vmatpush.msra.mxu0 0.0
      %850 = vmatpush.msra.mxu0 %v793
      %851 = vmatmul.f32.gmra.mxu0 %v480
      %v852 = vpop.f32.mrf.mxu0
      %v853 = vadd.f32 0.0, %v852
      %854 = vdwg.mxu0
      %855 = vmatpush.msra.mxu0 0.0
      %856 = vmatpush.msra.mxu0 0.0
      %857 = vmatpush.msra.mxu0 0.0
      %858 = vmatpush.msra.mxu0 0.0
      %859 = vmatpush.msra.mxu0 0.0
      %860 = vmatpush.msra.mxu0 0.0
      %861 = vmatpush.msra.mxu0 0.0
      %862 = vmatpush.msra.mxu0 0.0
      %863 = vmatpush.msra.mxu0 0.0
      %864 = vmatpush.msra.mxu0 0.0
      %865 = vmatpush.msra.mxu0 0.0
      %866 = vmatpush.msra.mxu0 0.0
      %867 = vmatpush.msra.mxu0 0.0
      %868 = vmatpush.msra.mxu0 0.0
      %869 = vmatpush.msra.mxu0 0.0
      %870 = vmatpush.msra.mxu0 %v793
      %871 = vmatmul.f32.gmra.mxu0 %v506
      %v872 = vpop.f32.mrf.mxu0
      %v873 = vadd.f32 0.0, %v872
      %874 = vdwg.mxu0
      %875 = vmatpush.msra.mxu0 0.0
      %876 = vmatpush.msra.mxu0 0.0
      %877 = vmatpush.msra.mxu0 0.0
      %878 = vmatpush.msra.mxu0 0.0
      %879 = vmatpush.msra.mxu0 0.0
      %880 = vmatpush.msra.mxu0 0.0
      %881 = vmatpush.msra.mxu0 0.0
      %882 = vmatpush.msra.mxu0 0.0
      %883 = vmatpush.msra.mxu0 0.0
      %884 = vmatpush.msra.mxu0 0.0
      %885 = vmatpush.msra.mxu0 0.0
      %886 = vmatpush.msra.mxu0 0.0
      %887 = vmatpush.msra.mxu0 0.0
      %888 = vmatpush.msra.mxu0 0.0
      %889 = vmatpush.msra.mxu0 0.0
      %890 = vmatpush.msra.mxu0 %v793
      %891 = vmatmul.f32.gmra.mxu0 %v532
      %v892 = vpop.f32.mrf.mxu0
      %v893 = vadd.f32 0.0, %v892
      %894 = vdwg.mxu0
      %895 = vmatpush.msra.mxu0 0.0
      %896 = vmatpush.msra.mxu0 0.0
      %897 = vmatpush.msra.mxu0 0.0
      %898 = vmatpush.msra.mxu0 0.0
      %899 = vmatpush.msra.mxu0 0.0
      %900 = vmatpush.msra.mxu0 0.0
      %901 = vmatpush.msra.mxu0 0.0
      %902 = vmatpush.msra.mxu0 0.0
      %903 = vmatpush.msra.mxu0 0.0
      %904 = vmatpush.msra.mxu0 0.0
      %905 = vmatpush.msra.mxu0 0.0
      %906 = vmatpush.msra.mxu0 0.0
      %907 = vmatpush.msra.mxu0 0.0
      %908 = vmatpush.msra.mxu0 0.0
      %909 = vmatpush.msra.mxu0 0.0
      %910 = vmatpush.msra.mxu0 %v793
      %911 = vmatmul.f32.gmra.mxu0 %v558
      %v912 = vpop.f32.mrf.mxu0
      %v913 = vadd.f32 0.0, %v912
      %914 = vdwg.mxu0
      %915 = vmatpush.msra.mxu0 0.0
      %916 = vmatpush.msra.mxu0 0.0
      %917 = vmatpush.msra.mxu0 0.0
      %918 = vmatpush.msra.mxu0 0.0
      %919 = vmatpush.msra.mxu0 0.0
      %920 = vmatpush.msra.mxu0 0.0
      %921 = vmatpush.msra.mxu0 0.0
      %922 = vmatpush.msra.mxu0 0.0
      %923 = vmatpush.msra.mxu0 0.0
      %924 = vmatpush.msra.mxu0 0.0
      %925 = vmatpush.msra.mxu0 0.0
      %926 = vmatpush.msra.mxu0 0.0
      %927 = vmatpush.msra.mxu0 0.0
      %928 = vmatpush.msra.mxu0 0.0
      %929 = vmatpush.msra.mxu0 0.0
      %930 = vmatpush.msra.mxu0 %v793
      %931 = vmatmul.f32.gmra.mxu0 %v584
      %v932 = vpop.f32.mrf.mxu0
      %v933 = vadd.f32 0.0, %v932
      %934 = vdwg.mxu0
      %v936 = vrot.slane %v188, 1
      %v937 = vrot.slane %v189, 1
      %v938 = vsel %vm395, %v936, %v937
      %v939 = vsel %vm195, %v938, 0
      %941 = vmatpush.msra.mxu0 0.0
      %942 = vmatpush.msra.mxu0 0.0
      %943 = vmatpush.msra.mxu0 0.0
      %944 = vmatpush.msra.mxu0 0.0
      %945 = vmatpush.msra.mxu0 0.0
      %946 = vmatpush.msra.mxu0 0.0
      %947 = vmatpush.msra.mxu0 0.0
      %948 = vmatpush.msra.mxu0 0.0
      %949 = vmatpush.msra.mxu0 0.0
      %950 = vmatpush.msra.mxu0 0.0
      %951 = vmatpush.msra.mxu0 0.0
      %952 = vmatpush.msra.mxu0 0.0
      %953 = vmatpush.msra.mxu0 0.0
      %954 = vmatpush.msra.mxu0 0.0
      %955 = vmatpush.msra.mxu0 0.0
      %956 = vmatpush.msra.mxu0 %v793
      %957 = vmatmul.f32.gmra.mxu0 %v939
      %v958 = vpop.f32.mrf.mxu0
      %v959 = vadd.f32 0.0, %v958
      %960 = vdwg.mxu0
      %v961 = vadd.f32 %v782, %v813
      %v962 = vadd.f32 %v783, %v833
      %v963 = vadd.f32 %v784, %v853
      %v964 = vadd.f32 %v785, %v873
      %v965 = vadd.f32 %v786, %v893
      %v966 = vadd.f32 %v787, %v913
      %v967 = vadd.f32 %v788, %v933
      %v968 = vadd.f32 %v789, %v959
      %v969 = vmax.f32 %v961, 0.0
      %v970 = vmax.f32 %v962, 0.0
      %v971 = vmax.f32 %v963, 0.0
      %v972 = vmax.f32 %v964, 0.0
      %v973 = vmax.f32 %v965, 0.0
      %v974 = vmax.f32 %v966, 0.0
      %v975 = vmax.f32 %v967, 0.0
      %v976 = vmax.f32 %v968, 0.0
      %vm977 = vcmask 64512
      %978 = vst.msk [vmem:[%s170] sm:$0xff] %vm977, %v969
      %979 = vst.msk [vmem:[%s170 + $0x8] sm:$0xff] %vm977, %v970
      %980 = vst.msk [vmem:[%s170 + $0x10] sm:$0xff] %vm977, %v971
      %981 = vst.msk [vmem:[%s170 + $0x18] sm:$0xff] %vm977, %v972
      %982 = vst.msk [vmem:[%s170 + $0x20] sm:$0xff] %vm977, %v973
      %983 = vst.msk [vmem:[%s170 + $0x28] sm:$0xff] %vm977, %v974
      %984 = vst.msk [vmem:[%s170 + $0x30] sm:$0xff] %vm977, %v975
      %985 = vst.msk [vmem:[%s170 + $0x38] sm:$0xff] %vm977, %v976
      %p986 = scmp.lt.s32.totalorder %s14, 1
      %s987 = scalar_select %p986, %s14, 1
      %s988 = smul.addr %s987, 8
      %s989 = smul.addr %s988, 8
      %s990 = scalar_lea.vmem %s3, %s989
      // Predicated region
      $region33: #{forward.10} parent=31 // pred_check
        %p991 = pneg %p100
      $region34: #{forward.10} parent=31 // pred_check_branch
        %993 = sbr.rel (%p991) target = $region36
      $region35: #{forward.10} parent=31 // pred_region
        _
      $region36: #{forward.10} parent=31 // pred_fallthru
        _
    $region32: #{forward.10} parent=5 // pred_fallthru
      _
    %p994 = scmp.le.s32.totalorder 2, %s9
    // Predicated region
    $region37: #{forward.10} parent=5 // pred_check
      %p995 = pneg %p994
    $region38: #{forward.10} parent=5 // pred_check_branch
      %997 = sbr.rel (%p995) target = $region40
    $region39: #{forward.10} parent=5 // pred_region
      %s998 = ssub.s32 %s9, 2
      // Predicated region
      $region41: #{forward.10} parent=39 // pred_check
        %p999 = pneg %p106
      $region42: #{forward.10} parent=39 // pred_check_branch
        %1001 = sbr.rel (%p999) target = $region44
      $region43: #{forward.10} parent=39 // pred_region
        %p1002 = scmp.lt.s32.totalorder %s15, 1
        %s1003 = scalar_select %p1002, %s15, 1
        %s1004 = smul.addr %s1003, 8
        %s1005 = smul.addr %s1004, 8
        %s1006 = scalar_lea.vmem %s3, %s1005
      $region44: #{forward.10} parent=39 // pred_fallthru
        _
    $region40: #{forward.10} parent=5 // pred_fallthru
      _
  $region6: #{forward.10} parent=0 // loop_footer
    %s13 = sadd.s32 1, %s9
  $region7: #{forward.10} parent=0 // loop_footer_branch
    %8 = sbr.rel target = $region3
  $region8: #{forward.10} parent=0 // loop_exit
    _

// kernel: forward.11
$region0: #{forward.11}
  #allocation0 [shape = 'u32[]', space=smem, size = 0x4, offset = 0x4, fixed_abs, tag = 'smem constant byte address 0x4 - core index']
  #allocation1 [shape = 'u32[72,128]{1,0:T(1,128)}', space=vmem, size = 0x9000, scoped, tag = 'internal scratch']
  %s0 = inlined_call_operand.vmem [shape: f32[2,16,32], index: 0, kind: input, shape index: {}]
  %s1 = inlined_call_operand.vmem [shape: f32[32,96], index: 1, kind: input, shape index: {}]
  %s2 = inlined_call_operand.vmem [shape: f32[1,96], index: 2, kind: input, shape index: {}]
  %s3 = inlined_call_operand.vmem [shape: f32[32,32], index: 3, kind: input, shape index: {}]
  %s4 = inlined_call_operand.vmem [shape: f32[1,32], index: 4, kind: input, shape index: {}]
  %s5 = inlined_call_operand.vmem [shape: f32[1,32], index: 5, kind: input, shape index: {}]
  %s6 = inlined_call_operand.vmem [shape: f32[1,32], index: 6, kind: input, shape index: {}]
  %s7 = inlined_call_operand.vmem [shape: f32[2,16,32], index: 7, kind: output, shape index: {}]
  %s8 = sld [smem:[#allocation0]]
  $region61: #{forward.11} parent=0
    _
  %s10 = ssub.s32 1, %s8
  %s11 = scalar_select 0, %s10, %s8
  loop: start=0, step=1, limit=4
  $region2: #{forward.11} parent=0 // loop_pre_header
    _
  $region3: #{forward.11} parent=0 // loop_header
    %s13 = sphi 0, %s17
    %p14 = scmp.ge.s32.totalorder %s13, 4
    %s23 = sphi 0, %s25
    %s26 = sphi 0, %s23
    %s27 = sphi 0, %s26
    %s43 = sphi 0, %s27
    %s47 = sphi 0, %s47
    %s49 = sphi 0, %s47
    %s50 = sphi 0, %s49
    %s64 = sphi 0, %s50
    %s68 = sphi 0, %s68
    %s70 = sphi 0, %s68
    %s71 = sphi 0, %s70
    %s85 = sphi 0, %s71
    %s89 = sphi 0, %s89
    %s91 = sphi 0, %s89
    %s92 = sphi 0, %s91
    %s106 = sphi 0, %s92
    %s110 = sphi 0, %s110
    %s112 = sphi 0, %s110
    %s113 = sphi 0, %s112
    %s127 = sphi 0, %s113
    %s131 = sphi 0, %s131
    %s133 = sphi 0, %s131
    %s134 = sphi 0, %s133
    %s148 = sphi 0, %s134
    %s152 = sphi 0, %s152
    %s154 = sphi 0, %s152
    %s155 = sphi 0, %s154
    %s169 = sphi 0, %s155
    %s175 = sphi 0, %s177
    %s178 = sphi 0, %s175
    %s179 = sphi 0, %s178
    %s195 = sphi 0, %s179
  $region4: #{forward.11} parent=0 // loop_header_branch
    %16 = sbr.rel (%p14) target = $region8
  $region5: #{forward.11} parent=0 // loop_body
    %s18 = ssub.s32 %s13, 1
    %s19 = ssub.s32 %s13, 2
    %s20 = sadd.s32 %s13, 1
    %s21 = ssub.s32 %s13, %s20
    %p22 = scmp.eq.s32.totalorder %s21, 0
    %s24 = sadd.s32 %s23, 1
    %s25 = scalar_select %p22, %s23, %s24
    %p28 = pneg %p22
    %p29 = scmp.eq.s32.totalorder %s13, 1
    %p30 = por %p28, %p29
    %p31 = scmp.ne.s32.totalorder %s23, %s26
    %p32 = scmp.eq.s32.totalorder %s13, 0
    %p33 = por %p31, %p32
    %p34 = scmp.ne.s32.totalorder %s23, %s26
    %p35 = scmp.eq.s32.totalorder %s18, 1
    %p36 = por %p34, %p35
    %p37 = scmp.ne.s32.totalorder %s26, %s27
    %p38 = scmp.eq.s32.totalorder %s18, 0
    %p39 = por %p37, %p38
    %p40 = scmp.ne.s32.totalorder %s26, %s27
    %p41 = scmp.eq.s32.totalorder %s19, 1
    %p42 = por %p40, %p41
    %p44 = scmp.ne.s32.totalorder %s27, %s43
    %p45 = scmp.eq.s32.totalorder %s19, 0
    %p46 = por %p44, %p45
    %s48 = sadd.s32 %s47, 1
    %p51 = scmp.eq.s32.totalorder %s13, 1
    %p52 = scmp.ne.s32.totalorder %s47, %s49
    %p53 = scmp.eq.s32.totalorder %s13, 0
    %p54 = por %p52, %p53
    %p55 = scmp.ne.s32.totalorder %s47, %s49
    %p56 = scmp.eq.s32.totalorder %s18, 1
    %p57 = por %p55, %p56
    %p58 = scmp.ne.s32.totalorder %s49, %s50
    %p59 = scmp.eq.s32.totalorder %s18, 0
    %p60 = por %p58, %p59
    %p61 = scmp.ne.s32.totalorder %s49, %s50
    %p62 = scmp.eq.s32.totalorder %s19, 1
    %p63 = por %p61, %p62
    %p65 = scmp.ne.s32.totalorder %s50, %s64
    %p66 = scmp.eq.s32.totalorder %s19, 0
    %p67 = por %p65, %p66
    %s69 = sadd.s32 %s68, 1
    %p72 = scmp.eq.s32.totalorder %s13, 1
    %p73 = scmp.ne.s32.totalorder %s68, %s70
    %p74 = scmp.eq.s32.totalorder %s13, 0
    %p75 = por %p73, %p74
    %p76 = scmp.ne.s32.totalorder %s68, %s70
    %p77 = scmp.eq.s32.totalorder %s18, 1
    %p78 = por %p76, %p77
    %p79 = scmp.ne.s32.totalorder %s70, %s71
    %p80 = scmp.eq.s32.totalorder %s18, 0
    %p81 = por %p79, %p80
    %p82 = scmp.ne.s32.totalorder %s70, %s71
    %p83 = scmp.eq.s32.totalorder %s19, 1
    %p84 = por %p82, %p83
    %p86 = scmp.ne.s32.totalorder %s71, %s85
    %p87 = scmp.eq.s32.totalorder %s19, 0
    %p88 = por %p86, %p87
    %s90 = sadd.s32 %s89, 1
    %p93 = scmp.eq.s32.totalorder %s13, 1
    %p94 = scmp.ne.s32.totalorder %s89, %s91
    %p95 = scmp.eq.s32.totalorder %s13, 0
    %p96 = por %p94, %p95
    %p97 = scmp.ne.s32.totalorder %s89, %s91
    %p98 = scmp.eq.s32.totalorder %s18, 1
    %p99 = por %p97, %p98
    %p100 = scmp.ne.s32.totalorder %s91, %s92
    %p101 = scmp.eq.s32.totalorder %s18, 0
    %p102 = por %p100, %p101
    %p103 = scmp.ne.s32.totalorder %s91, %s92
    %p104 = scmp.eq.s32.totalorder %s19, 1
    %p105 = por %p103, %p104
    %p107 = scmp.ne.s32.totalorder %s92, %s106
    %p108 = scmp.eq.s32.totalorder %s19, 0
    %p109 = por %p107, %p108
    %s111 = sadd.s32 %s110, 1
    %p114 = scmp.eq.s32.totalorder %s13, 1
    %p115 = scmp.ne.s32.totalorder %s110, %s112
    %p116 = scmp.eq.s32.totalorder %s13, 0
    %p117 = por %p115, %p116
    %p118 = scmp.ne.s32.totalorder %s110, %s112
    %p119 = scmp.eq.s32.totalorder %s18, 1
    %p120 = por %p118, %p119
    %p121 = scmp.ne.s32.totalorder %s112, %s113
    %p122 = scmp.eq.s32.totalorder %s18, 0
    %p123 = por %p121, %p122
    %p124 = scmp.ne.s32.totalorder %s112, %s113
    %p125 = scmp.eq.s32.totalorder %s19, 1
    %p126 = por %p124, %p125
    %p128 = scmp.ne.s32.totalorder %s113, %s127
    %p129 = scmp.eq.s32.totalorder %s19, 0
    %p130 = por %p128, %p129
    %s132 = sadd.s32 %s131, 1
    %p135 = scmp.eq.s32.totalorder %s13, 1
    %p136 = scmp.ne.s32.totalorder %s131, %s133
    %p137 = scmp.eq.s32.totalorder %s13, 0
    %p138 = por %p136, %p137
    %p139 = scmp.ne.s32.totalorder %s131, %s133
    %p140 = scmp.eq.s32.totalorder %s18, 1
    %p141 = por %p139, %p140
    %p142 = scmp.ne.s32.totalorder %s133, %s134
    %p143 = scmp.eq.s32.totalorder %s18, 0
    %p144 = por %p142, %p143
    %p145 = scmp.ne.s32.totalorder %s133, %s134
    %p146 = scmp.eq.s32.totalorder %s19, 1
    %p147 = por %p145, %p146
    %p149 = scmp.ne.s32.totalorder %s134, %s148
    %p150 = scmp.eq.s32.totalorder %s19, 0
    %p151 = por %p149, %p150
    %s153 = sadd.s32 %s152, 1
    %p156 = scmp.eq.s32.totalorder %s13, 1
    %p157 = scmp.ne.s32.totalorder %s152, %s154
    %p158 = scmp.eq.s32.totalorder %s13, 0
    %p159 = por %p157, %p158
    %p160 = scmp.ne.s32.totalorder %s152, %s154
    %p161 = scmp.eq.s32.totalorder %s18, 1
    %p162 = por %p160, %p161
    %p163 = scmp.ne.s32.totalorder %s154, %s155
    %p164 = scmp.eq.s32.totalorder %s18, 0
    %p165 = por %p163, %p164
    %p166 = scmp.ne.s32.totalorder %s154, %s155
    %p167 = scmp.eq.s32.totalorder %s19, 1
    %p168 = por %p166, %p167
    %p170 = scmp.ne.s32.totalorder %s155, %s169
    %p171 = scmp.eq.s32.totalorder %s19, 0
    %p172 = por %p170, %p171
    %s173 = ssub.s32 %s13, %s20
    %p174 = scmp.eq.s32.totalorder %s173, 0
    %s176 = sadd.s32 %s175, 1
    %s177 = scalar_select %p174, %s175, %s176
    %p180 = pneg %p174
    %p181 = scmp.eq.s32.totalorder %s13, 1
    %p182 = por %p180, %p181
    %p183 = scmp.ne.s32.totalorder %s175, %s178
    %p184 = scmp.eq.s32.totalorder %s13, 0
    %p185 = por %p183, %p184
    %p186 = scmp.ne.s32.totalorder %s175, %s178
    %p187 = scmp.eq.s32.totalorder %s18, 1
    %p188 = por %p186, %p187
    %p189 = scmp.ne.s32.totalorder %s178, %s179
    %p190 = scmp.eq.s32.totalorder %s18, 0
    %p191 = por %p189, %p190
    %p192 = scmp.ne.s32.totalorder %s178, %s179
    %p193 = scmp.eq.s32.totalorder %s19, 1
    %p194 = por %p192, %p193
    %p196 = scmp.ne.s32.totalorder %s179, %s195
    %p197 = scmp.eq.s32.totalorder %s19, 0
    %p198 = por %p196, %p197
    %p199 = scmp.le.s32.totalorder 1, %s13
    %p200 = scmp.lt.s32.totalorder %s13, 3
    %p201 = pnand %p199, %p200
    %p202 = pneg %p201
    // Predicated region
    $region9: #{forward.11} parent=5 // pred_check
      _
    $region10: #{forward.11} parent=5 // pred_check_branch
      %204 = sbr.rel (%p201) target = $region12
    $region11: #{forward.11} parent=5 // pred_region
      %s205 = ssub.s32 %s13, 1
      // Predicated region
      $region13: #{forward.11} parent=11 // pred_check
        %p206 = pneg %p60
      $region14: #{forward.11} parent=11 // pred_check_branch
        %208 = sbr.rel (%p206) target = $region16
      $region15: #{forward.11} parent=11 // pred_region
        _
      $region16: #{forward.11} parent=11 // pred_fallthru
        _
      // Predicated region
      $region17: #{forward.11} parent=11 // pred_check
        %p209 = pneg %p81
      $region18: #{forward.11} parent=11 // pred_check_branch
        %211 = sbr.rel (%p209) target = $region20
      $region19: #{forward.11} parent=11 // pred_region
        _
      $region20: #{forward.11} parent=11 // pred_fallthru
        _
      // Predicated region
      $region21: #{forward.11} parent=11 // pred_check
        %p212 = pneg %p102
      $region22: #{forward.11} parent=11 // pred_check_branch
        %214 = sbr.rel (%p212) target = $region24
      $region23: #{forward.11} parent=11 // pred_region
        _
      $region24: #{forward.11} parent=11 // pred_fallthru
        _
      // Predicated region
      $region25: #{forward.11} parent=11 // pred_check
        %p215 = pneg %p123
      $region26: #{forward.11} parent=11 // pred_check_branch
        %217 = sbr.rel (%p215) target = $region28
      $region27: #{forward.11} parent=11 // pred_region
        _
      $region28: #{forward.11} parent=11 // pred_fallthru
        _
      // Predicated region
      $region29: #{forward.11} parent=11 // pred_check
        %p218 = pneg %p144
      $region30: #{forward.11} parent=11 // pred_check_branch
        %220 = sbr.rel (%p218) target = $region32
      $region31: #{forward.11} parent=11 // pred_region
        _
      $region32: #{forward.11} parent=11 // pred_fallthru
        _
      // Predicated region
      $region33: #{forward.11} parent=11 // pred_check
        %p221 = pneg %p165
      $region34: #{forward.11} parent=11 // pred_check_branch
        %223 = sbr.rel (%p221) target = $region36
      $region35: #{forward.11} parent=11 // pred_region
        _
      $region36: #{forward.11} parent=11 // pred_fallthru
        _
    $region12: #{forward.11} parent=5 // pred_fallthru
      _
    %p224 = scmp.lt.s32.totalorder %s13, 2
    // Predicated region
    $region37: #{forward.11} parent=5 // pred_check
      %p225 = pneg %p224
    $region38: #{forward.11} parent=5 // pred_check_branch
      %227 = sbr.rel (%p225) target = $region40
    $region39: #{forward.11} parent=5 // pred_region
      // Predicated region
      $region41: #{forward.11} parent=39 // pred_check
        %p228 = pneg %p33
      $region42: #{forward.11} parent=39 // pred_check_branch
        %230 = sbr.rel (%p228) target = $region44
      $region43: #{forward.11} parent=39 // pred_region
        %p231 = scmp.lt.s32.totalorder %s13, 1
        %s232 = scalar_select %p231, %s13, 1
        %s233 = smul.addr %s232, 2
        %s234 = smul.addr %s233, 8
        %s235 = scalar_lea.vmem %s0, %s234
      $region44: #{forward.11} parent=39 // pred_fallthru
        _
    $region40: #{forward.11} parent=5 // pred_fallthru
      _
    %p236 = scmp.le.s32.totalorder 1, %s13
    %p237 = scmp.lt.s32.totalorder %s13, 3
    %p238 = pnand %p236, %p237
    %p239 = pneg %p238
    // Predicated region
    $region45: #{forward.11} parent=5 // pred_check
      _
    $region46: #{forward.11} parent=5 // pred_check_branch
      %241 = sbr.rel (%p238) target = $region48
    $region47: #{forward.11} parent=5 // pred_region
      %s242 = ssub.s32 %s13, 1
      %p243 = scmp.lt.s32.totalorder %s18, 1
      %s244 = scalar_select %p243, %s18, 1
      %s245 = smul.addr %s244, 2
      %s246 = smul.addr %s245, 8
      %s247 = scalar_lea.vmem %s0, %s246
      %p248 = pneg %p39
      %p249 = pneg %p36
      %p250 = pneg %p60
      %p251 = pneg %p57
      %p252 = pneg %p81
      %p253 = pneg %p78
      %p254 = pneg %p102
      %p255 = pneg %p99
      %p256 = pneg %p123
      %p257 = pneg %p120
      %p258 = pneg %p144
      %p259 = pneg %p141
      %p260 = pneg %p165
      %p261 = pneg %p162
      %p262 = pneg %p191
      %p263 = pneg %p188
      %p264 = scmp.lt.s32.totalorder %s18, 1
      %s265 = scalar_select %p264, %s18, 1
      %s266 = smul.addr %s265, 2
      %s267 = smul.addr %s266, 8
      %s268 = scalar_lea.vmem %s7, %s267
      %p269 = scmp.lt.s32.totalorder %s18, 1
      %s270 = scalar_select %p269, %s18, 1
      %s271 = smul.addr %s270, 2
      %s272 = smul.addr %s271, 8
      %s273 = scalar_lea.vmem %s0, %s272
      %p274 = scmp.lt.s32.totalorder %s18, 1
      %s275 = scalar_select %p274, %s18, 1
      %s276 = smul.addr %s275, 2
      %s277 = smul.addr %s276, 8
      %s278 = scalar_lea.vmem %s7, %s277
      %v279 = vld [vmem:[%s273] sm:$0xff]
      %v280 = vld [vmem:[%s273 + $0x8] sm:$0xff]
      %v281 = vld [vmem:[%s1] sm:$0xff]
      %v282 = vld [vmem:[%s1 + $0x8] sm:$0xff]
      %v283 = vld [vmem:[%s1 + $0x10] sm:$0xff]
      %v284 = vld [vmem:[%s1 + $0x18] sm:$0xff]
      %v285 = vld [vmem:[%s2] sm:$0x1]
      %v287 = vperm.slane %v285, 0
      %vm289 = vcmask 261120
      %v291 = vsel %vm289, %v279, 0
      %v294 = vsel %vm289, %v280, 0
      %296 = vmatpush.msra.mxu0 0.0
      %297 = vmatpush.msra.mxu0 0.0
      %298 = vmatpush.msra.mxu0 0.0
      %299 = vmatpush.msra.mxu0 0.0
      %300 = vmatpush.msra.mxu0 0.0
      %301 = vmatpush.msra.mxu0 0.0
      %302 = vmatpush.msra.mxu0 0.0
      %303 = vmatpush.msra.mxu0 0.0
      %304 = vmatpush.msra.mxu0 0.0
      %305 = vmatpush.msra.mxu0 0.0
      %306 = vmatpush.msra.mxu0 0.0
      %307 = vmatpush.msra.mxu0 0.0
      %308 = vmatpush.msra.mxu0 %v284
      %309 = vmatpush.msra.mxu0 %v283
      %310 = vmatpush.msra.mxu0 %v282
      %311 = vmatpush.msra.mxu0 %v281
      %312 = vmatmul.f32.gmra.mxu0 %v291
      %v313 = vpop.f32.mrf.mxu0
      %v314 = vadd.f32 %v287, %v313
      %315 = vmatmul.f32.gmra.mxu0 %v294
      %v316 = vpop.f32.mrf.mxu0
      %v317 = vadd.f32 %v287, %v316
      %318 = vdwg.mxu0
      %321 = vrot.lane.b32.xlu0 %v314, 96
      %v322 = vpop.permute.xlu0 %321
      %323 = vrot.lane.b32.xlu0 %v317, 96
      %v324 = vpop.permute.xlu0 %323
      %vm325 = vcmask 130048
      %v326 = vsel %vm325, %v314, 0
      %v328 = vsel %vm325, %v317, 0
      %v330 = vsel %vm325, %v322, 0
      %v332 = vsel %vm325, %v324, 0
      %334 = vmatpush.xpose.msra.mxu0 0.0
      %335 = vmatpush.xpose.msra.mxu0 0.0
      %336 = vmatpush.xpose.msra.mxu0 0.0
      %337 = vmatpush.xpose.msra.mxu0 0.0
      %338 = vmatpush.xpose.msra.mxu0 0.0
      %339 = vmatpush.xpose.msra.mxu0 0.0
      %340 = vmatpush.xpose.msra.mxu0 0.0
      %341 = vmatpush.xpose.msra.mxu0 0.0
      %342 = vmatpush.xpose.msra.mxu0 0.0
      %343 = vmatpush.xpose.msra.mxu0 0.0
      %344 = vmatpush.xpose.msra.mxu0 0.0
      %345 = vmatpush.xpose.msra.mxu0 0.0
      %346 = vmatpush.xpose.msra.mxu0 0.0
      %347 = vmatpush.xpose.msra.mxu0 0.0
      %348 = vmatpush.xpose.msra.mxu0 %v332
      %349 = vmatpush.xpose.msra.mxu0 %v330
      %350 = vmatmul.f32.gmra.mxu0 %v326
      %v351 = vpop.f32.mrf.mxu0
      %v352 = vadd.f32 0.0, %v351
      %353 = vmatmul.f32.gmra.mxu0 %v328
      %v354 = vpop.f32.mrf.mxu0
      %v355 = vadd.f32 0.0, %v354
      %356 = vdwg.mxu0
      %v357 = vmul.f32 %v352, 0.25
      %v358 = vmul.f32 %v355, 0.25
      %v359 = vsel %vm325, %v357, -inf
      %360 = vmax.xlane.f32.xlu0 %v359
      %v361 = vpop.xlane.xlu0 %360
      %v362 = vsel %vm325, %v358, -inf
      %363 = vmax.xlane.f32.xlu0 %v362
      %v364 = vpop.xlane.xlu0 %363
      %v365 = vsub.f32 %v357, %v361
      %v366 = vsub.f32 %v358, %v364
      %v367 = vmul.f32 %v365, 1.442695
      %v368 = vpow.pop %v367
      %v369 = vmul.f32 %v366, 1.442695
      %v370 = vpow.pop %v369
      %v371 = vsel %vm325, %v368, 0.0
      %372 = vadd.xlane.f32.xlu0 %v371
      %v373 = vpop.xlane.xlu0 %372
      %v374 = vsel %vm325, %v370, 0.0
      %375 = vadd.xlane.f32.xlu0 %v374
      %v376 = vpop.xlane.xlu0 %375
      %v377 = vrcp.pop %v373
      %v378 = vrcp.pop %v376
      %v379 = vmul.f32 %v368, %v377
      %v380 = vmul.f32 %v370, %v378
      %381 = vrot.lane.b32.xlu0 %v314, 64
      %v382 = vpop.permute.xlu0 %381
      %383 = vrot.lane.b32.xlu0 %v317, 64
      %v384 = vpop.permute.xlu0 %383
      %v388 = vsel %vm325, %v379, 0
      %v391 = vsel %vm325, %v380, 0
      %393 = vmatpush.msra.mxu0 0.0
      %394 = vmatpush.msra.mxu0 0.0
      %395 = vmatpush.msra.mxu0 0.0
      %396 = vmatpush.msra.mxu0 0.0
      %397 = vmatpush.msra.mxu0 0.0
      %398 = vmatpush.msra.mxu0 0.0
      %399 = vmatpush.msra.mxu0 0.0
      %400 = vmatpush.msra.mxu0 0.0
      %401 = vmatpush.msra.mxu0 0.0
      %402 = vmatpush.msra.mxu0 0.0
      %403 = vmatpush.msra.mxu0 0.0
      %404 = vmatpush.msra.mxu0 0.0
      %405 = vmatpush.msra.mxu0 0.0
      %406 = vmatpush.msra.mxu0 0.0
      %407 = vmatpush.msra.mxu0 %v384
      %408 = vmatpush.msra.mxu0 %v382
      %409 = vmatmul.f32.gmra.mxu0 %v388
      %v410 = vpop.f32.mrf.mxu0
      %v411 = vadd.f32 0.0, %v410
      %412 = vmatmul.f32.gmra.mxu0 %v391
      %v413 = vpop.f32.mrf.mxu0
      %v414 = vadd.f32 0.0, %v413
      %415 = vdwg.mxu0
      %416 = vrot.lane.b32.xlu0 %v314, 112
      %v417 = vpop.permute.xlu0 %416
      %418 = vrot.lane.b32.xlu0 %v317, 112
      %v419 = vpop.permute.xlu0 %418
      %420 = vrot.lane.b32.xlu0 %v314, 80
      %v421 = vpop.permute.xlu0 %420
      %422 = vrot.lane.b32.xlu0 %v317, 80
      %v423 = vpop.permute.xlu0 %422
      %v424 = vsel %vm325, %v417, 0
      %v426 = vsel %vm325, %v419, 0
      %v428 = vsel %vm325, %v421, 0
      %v430 = vsel %vm325, %v423, 0
      %432 = vmatpush.xpose.msra.mxu0 0.0
      %433 = vmatpush.xpose.msra.mxu0 0.0
      %434 = vmatpush.xpose.msra.mxu0 0.0
      %435 = vmatpush.xpose.msra.mxu0 0.0
      %436 = vmatpush.xpose.msra.mxu0 0.0
      %437 = vmatpush.xpose.msra.mxu0 0.0
      %438 = vmatpush.xpose.msra.mxu0 0.0
      %439 = vmatpush.xpose.msra.mxu0 0.0
      %440 = vmatpush.xpose.msra.mxu0 0.0
      %441 = vmatpush.xpose.msra.mxu0 0.0
      %442 = vmatpush.xpose.msra.mxu0 0.0
      %443 = vmatpush.xpose.msra.mxu0 0.0
      %444 = vmatpush.xpose.msra.mxu0 0.0
      %445 = vmatpush.xpose.msra.mxu0 0.0
      %446 = vmatpush.xpose.msra.mxu0 %v430
      %447 = vmatpush.xpose.msra.mxu0 %v428
      %448 = vmatmul.f32.gmra.mxu0 %v424
      %v449 = vpop.f32.mrf.mxu0
      %v450 = vadd.f32 0.0, %v449
      %451 = vmatmul.f32.gmra.mxu0 %v426
      %v452 = vpop.f32.mrf.mxu0
      %v453 = vadd.f32 0.0, %v452
      %454 = vdwg.mxu0
      %v455 = vmul.f32 %v450, 0.25
      %v456 = vmul.f32 %v453, 0.25
      %v457 = vsel %vm325, %v455, -inf
      %458 = vmax.xlane.f32.xlu0 %v457
      %v459 = vpop.xlane.xlu0 %458
      %v460 = vsel %vm325, %v456, -inf
      %461 = vmax.xlane.f32.xlu0 %v460
      %v462 = vpop.xlane.xlu0 %461
      %v463 = vsub.f32 %v455, %v459
      %v464 = vsub.f32 %v456, %v462
      %v465 = vmul.f32 %v463, 1.442695
      %v466 = vpow.pop %v465
      %v467 = vmul.f32 %v464, 1.442695
      %v468 = vpow.pop %v467
      %v469 = vsel %vm325, %v466, 0.0
      %470 = vadd.xlane.f32.xlu0 %v469
      %v471 = vpop.xlane.xlu0 %470
      %v472 = vsel %vm325, %v468, 0.0
      %473 = vadd.xlane.f32.xlu0 %v472
      %v474 = vpop.xlane.xlu0 %473
      %v475 = vrcp.pop %v471
      %v476 = vrcp.pop %v474
      %v477 = vmul.f32 %v466, %v475
      %v478 = vmul.f32 %v468, %v476
      %479 = vrot.lane.b32.xlu0 %v314, 48
      %v480 = vpop.permute.xlu0 %479
      %481 = vrot.lane.b32.xlu0 %v317, 48
      %v482 = vpop.permute.xlu0 %481
      %v486 = vsel %vm325, %v477, 0
      %v489 = vsel %vm325, %v478, 0
      %491 = vmatpush.msra.mxu0 0.0
      %492 = vmatpush.msra.mxu0 0.0
      %493 = vmatpush.msra.mxu0 0.0
      %494 = vmatpush.msra.mxu0 0.0
      %495 = vmatpush.msra.mxu0 0.0
      %496 = vmatpush.msra.mxu0 0.0
      %497 = vmatpush.msra.mxu0 0.0
      %498 = vmatpush.msra.mxu0 0.0
      %499 = vmatpush.msra.mxu0 0.0
      %500 = vmatpush.msra.mxu0 0.0
      %501 = vmatpush.msra.mxu0 0.0
      %502 = vmatpush.msra.mxu0 0.0
      %503 = vmatpush.msra.mxu0 0.0
      %504 = vmatpush.msra.mxu0 0.0
      %505 = vmatpush.msra.mxu0 %v482
      %506 = vmatpush.msra.mxu0 %v480
      %507 = vmatmul.f32.gmra.mxu0 %v486
      %v508 = vpop.f32.mrf.mxu0
      %v509 = vadd.f32 0.0, %v508
      %510 = vmatmul.f32.gmra.mxu0 %v489
      %v511 = vpop.f32.mrf.mxu0
      %v512 = vadd.f32 0.0, %v511
      %513 = vdwg.mxu0
      %516 = vrot.lane.b32.xlu0 %v509, 16
      %v517 = vpop.permute.xlu0 %516
      %518 = vrot.lane.b32.xlu0 %v512, 16
      %v519 = vpop.permute.xlu0 %518
      %v522 = vsel %vm325, %v411, %v517
      %v523 = vsel %vm325, %v414, %v519
      %v524 = vld [vmem:[%s3] sm:$0xff]
      %v525 = vld [vmem:[%s3 + $0x8] sm:$0xff]
      %v526 = vld [vmem:[%s3 + $0x10] sm:$0xff]
      %v527 = vld [vmem:[%s3 + $0x18] sm:$0xff]
      %v528 = vld [vmem:[%s4] sm:$0x1]
      %v530 = vperm.slane %v528, 0
      %v533 = vsel %vm289, %v522, 0
      %v536 = vsel %vm289, %v523, 0
      %538 = vmatpush.msra.mxu0 0.0
      %539 = vmatpush.msra.mxu0 0.0
      %540 = vmatpush.msra.mxu0 0.0
      %541 = vmatpush.msra.mxu0 0.0
      %542 = vmatpush.msra.mxu0 0.0
      %543 = vmatpush.msra.mxu0 0.0
      %544 = vmatpush.msra.mxu0 0.0
      %545 = vmatpush.msra.mxu0 0.0
      %546 = vmatpush.msra.mxu0 0.0
      %547 = vmatpush.msra.mxu0 0.0
      %548 = vmatpush.msra.mxu0 0.0
      %549 = vmatpush.msra.mxu0 0.0
      %550 = vmatpush.msra.mxu0 %v527
      %551 = vmatpush.msra.mxu0 %v526
      %552 = vmatpush.msra.mxu0 %v525
      %553 = vmatpush.msra.mxu0 %v524
      %554 = vmatmul.f32.gmra.mxu0 %v533
      %v555 = vpop.f32.mrf.mxu0
      %v556 = vadd.f32 %v530, %v555
      %557 = vmatmul.f32.gmra.mxu0 %v536
      %v558 = vpop.f32.mrf.mxu0
      %v559 = vadd.f32 %v530, %v558
      %560 = vdwg.mxu0
      %v561 = vadd.f32 %v279, %v556
      %v562 = vadd.f32 %v280, %v559
      %v563 = vsel %vm289, %v561, 0.0
      %564 = vadd.xlane.f32.xlu0 %v563
      %v565 = vpop.xlane.xlu0 %564
      %v566 = vsel %vm289, %v562, 0.0
      %567 = vadd.xlane.f32.xlu0 %v566
      %v568 = vpop.xlane.xlu0 %567
      %v569 = vrcp.pop 32.0
      %v570 = vmul.f32 32.0, %v569
      %v571 = vsub.f32 1.0, %v570
      %v572 = vmul.f32 %v569, %v571
      %v573 = vadd.f32 %v569, %v572
      %vm574 = vweird.f32 %v569
      %v575 = vsel %vm574, %v569, %v573
      %v576 = vmul.f32 %v565, %v575
      %v577 = vmul.f32 %v568, %v575
      %v578 = vsub.f32 %v561, %v576
      %v579 = vsub.f32 %v562, %v577
      %v580 = vmul.f32 %v578, %v578
      %v581 = vmul.f32 %v579, %v579
      %v582 = vsel %vm289, %v580, 0.0
      %583 = vadd.xlane.f32.xlu0 %v582
      %v584 = vpop.xlane.xlu0 %583
      %v585 = vsel %vm289, %v581, 0.0
      %586 = vadd.xlane.f32.xlu0 %v585
      %v587 = vpop.xlane.xlu0 %586
      %v588 = vmul.f32 %v584, %v575
      %v589 = vmul.f32 %v587, %v575
      %v590 = vadd.f32 %v588, 1e-05
      %v591 = vadd.f32 %v589, 1e-05
      %v592 = vrsqrt.pop %v590
      %v593 = vmul.f32 %v592, %v590
      %v594 = vmul.f32 %v593, %v592
      %v595 = vmul.f32 0.5, %v594
      %v596 = vsub.f32 1.5, %v595
      %v597 = vmul.f32 %v592, %v596
      %vm598 = vweird.f32 %v590
      %vm599 = vweird.f32 %v592
      %vm600 = vmor %vm598, %vm599
      %v601 = vsel %vm600, %v592, %v597
      %v602 = vrsqrt.pop %v591
      %v603 = vmul.f32 %v602, %v591
      %v604 = vmul.f32 %v603, %v602
      %v605 = vmul.f32 0.5, %v604
      %v606 = vsub.f32 1.5, %v605
      %v607 = vmul.f32 %v602, %v606
      %vm608 = vweird.f32 %v591
      %vm609 = vweird.f32 %v602
      %vm610 = vmor %vm608, %vm609
      %v611 = vsel %vm610, %v602, %v607
      %v612 = vmul.f32 %v578, %v601
      %v613 = vmul.f32 %v579, %v611
      %v614 = vld [vmem:[%s5] sm:$0x1]
      %v616 = vperm.slane %v614, 0
      %v618 = vmul.f32 %v612, %v616
      %v619 = vmul.f32 %v613, %v616
      %v620 = vld [vmem:[%s6] sm:$0x1]
      %v622 = vperm.slane %v620, 0
      %v624 = vadd.f32 %v618, %v622
      %v625 = vadd.f32 %v619, %v622
      %626 = vst.msk [vmem:[%s278] sm:$0xff] %vm289, %v624
      %627 = vst.msk [vmem:[%s278 + $0x8] sm:$0xff] %vm289, %v625
      %p628 = scmp.lt.s32.totalorder %s18, 1
      %s629 = scalar_select %p628, %s18, 1
      %s630 = smul.addr %s629, 2
      %s631 = smul.addr %s630, 8
      %s632 = scalar_lea.vmem %s7, %s631
      // Predicated region
      $region49: #{forward.11} parent=47 // pred_check
        %p633 = pneg %p188
      $region50: #{forward.11} parent=47 // pred_check_branch
        %635 = sbr.rel (%p633) target = $region52
      $region51: #{forward.11} parent=47 // pred_region
        _
      $region52: #{forward.11} parent=47 // pred_fallthru
        _
    $region48: #{forward.11} parent=5 // pred_fallthru
      _
    %p636 = scmp.le.s32.totalorder 2, %s13
    // Predicated region
    $region53: #{forward.11} parent=5 // pred_check
      %p637 = pneg %p636
    $region54: #{forward.11} parent=5 // pred_check_branch
      %639 = sbr.rel (%p637) target = $region56
    $region55: #{forward.11} parent=5 // pred_region
      %s640 = ssub.s32 %s13, 2
      // Predicated region
      $region57: #{forward.11} parent=55 // pred_check
        %p641 = pneg %p194
      $region58: #{forward.11} parent=55 // pred_check_branch
        %643 = sbr.rel (%p641) target = $region60
      $region59: #{forward.11} parent=55 // pred_region
        %p644 = scmp.lt.s32.totalorder %s19, 1
        %s645 = scalar_select %p644, %s19, 1
        %s646 = smul.addr %s645, 2
        %s647 = smul.addr %s646, 8
        %s648 = scalar_lea.vmem %s7, %s647
      $region60: #{forward.11} parent=55 // pred_fallthru
        _
    $region56: #{forward.11} parent=5 // pred_fallthru
      _
  $region6: #{forward.11} parent=0 // loop_footer
    %s17 = sadd.s32 1, %s13
  $region7: #{forward.11} parent=0 // loop_footer_branch
    %12 = sbr.rel target = $region3
  $region8: #{forward.11} parent=0 // loop_exit
    _

// kernel: forward.12
$region0: #{forward.12}
  #allocation0 [shape = 'u32[]', space=smem, size = 0x4, offset = 0x4, fixed_abs, tag = 'smem constant byte address 0x4 - core index']
  #allocation1 [shape = 'u32[72,128]{1,0:T(1,128)}', space=vmem, size = 0x9000, scoped, tag = 'internal scratch']
  %s0 = inlined_call_operand.vmem [shape: f32[2,5,5,32], index: 0, kind: input, shape index: {}]
  %s1 = inlined_call_operand.vmem [shape: f32[4,32,16], index: 1, kind: input, shape index: {}]
  %s2 = inlined_call_operand.vmem [shape: f32[1,16], index: 2, kind: input, shape index: {}]
  %s3 = inlined_call_operand.vmem [shape: f32[2,1,4,4,16], index: 3, kind: output, shape index: {}]
  %s4 = sld [smem:[#allocation0]]
  $region45: #{forward.12} parent=0
    _
  %s6 = ssub.s32 1, %s4
  %s7 = scalar_select 0, %s6, %s4
  loop: start=0, step=1, limit=4
  $region2: #{forward.12} parent=0 // loop_pre_header
    _
  $region3: #{forward.12} parent=0 // loop_header
    %s9 = sphi 0, %s13
    %p10 = scmp.ge.s32.totalorder %s9, 4
    %s19 = sphi 0, %s21
    %s22 = sphi 0, %s19
    %s23 = sphi 0, %s22
    %s39 = sphi 0, %s23
    %s43 = sphi 0, %s43
    %s45 = sphi 0, %s43
    %s46 = sphi 0, %s45
    %s60 = sphi 0, %s46
    %s64 = sphi 0, %s64
    %s66 = sphi 0, %s64
    %s67 = sphi 0, %s66
    %s81 = sphi 0, %s67
    %s87 = sphi 0, %s89
    %s90 = sphi 0, %s87
    %s91 = sphi 0, %s90
    %s107 = sphi 0, %s91
  $region4: #{forward.12} parent=0 // loop_header_branch
    %12 = sbr.rel (%p10) target = $region8
  $region5: #{forward.12} parent=0 // loop_body
    %s14 = ssub.s32 %s9, 1
    %s15 = ssub.s32 %s9, 2
    %s16 = sadd.s32 %s9, 1
    %s17 = ssub.s32 %s9, %s16
    %p18 = scmp.eq.s32.totalorder %s17, 0
    %s20 = sadd.s32 %s19, 1
    %s21 = scalar_select %p18, %s19, %s20
    %p24 = pneg %p18
    %p25 = scmp.eq.s32.totalorder %s9, 1
    %p26 = por %p24, %p25
    %p27 = scmp.ne.s32.totalorder %s19, %s22
    %p28 = scmp.eq.s32.totalorder %s9, 0
    %p29 = por %p27, %p28
    %p30 = scmp.ne.s32.totalorder %s19, %s22
    %p31 = scmp.eq.s32.totalorder %s14, 1
    %p32 = por %p30, %p31
    %p33 = scmp.ne.s32.totalorder %s22, %s23
    %p34 = scmp.eq.s32.totalorder %s14, 0
    %p35 = por %p33, %p34
    %p36 = scmp.ne.s32.totalorder %s22, %s23
    %p37 = scmp.eq.s32.totalorder %s15, 1
    %p38 = por %p36, %p37
    %p40 = scmp.ne.s32.totalorder %s23, %s39
    %p41 = scmp.eq.s32.totalorder %s15, 0
    %p42 = por %p40, %p41
    %s44 = sadd.s32 %s43, 1
    %p47 = scmp.eq.s32.totalorder %s9, 1
    %p48 = scmp.ne.s32.totalorder %s43, %s45
    %p49 = scmp.eq.s32.totalorder %s9, 0
    %p50 = por %p48, %p49
    %p51 = scmp.ne.s32.totalorder %s43, %s45
    %p52 = scmp.eq.s32.totalorder %s14, 1
    %p53 = por %p51, %p52
    %p54 = scmp.ne.s32.totalorder %s45, %s46
    %p55 = scmp.eq.s32.totalorder %s14, 0
    %p56 = por %p54, %p55
    %p57 = scmp.ne.s32.totalorder %s45, %s46
    %p58 = scmp.eq.s32.totalorder %s15, 1
    %p59 = por %p57, %p58
    %p61 = scmp.ne.s32.totalorder %s46, %s60
    %p62 = scmp.eq.s32.totalorder %s15, 0
    %p63 = por %p61, %p62
    %s65 = sadd.s32 %s64, 1
    %p68 = scmp.eq.s32.totalorder %s9, 1
    %p69 = scmp.ne.s32.totalorder %s64, %s66
    %p70 = scmp.eq.s32.totalorder %s9, 0
    %p71 = por %p69, %p70
    %p72 = scmp.ne.s32.totalorder %s64, %s66
    %p73 = scmp.eq.s32.totalorder %s14, 1
    %p74 = por %p72, %p73
    %p75 = scmp.ne.s32.totalorder %s66, %s67
    %p76 = scmp.eq.s32.totalorder %s14, 0
    %p77 = por %p75, %p76
    %p78 = scmp.ne.s32.totalorder %s66, %s67
    %p79 = scmp.eq.s32.totalorder %s15, 1
    %p80 = por %p78, %p79
    %p82 = scmp.ne.s32.totalorder %s67, %s81
    %p83 = scmp.eq.s32.totalorder %s15, 0
    %p84 = por %p82, %p83
    %s85 = ssub.s32 %s9, %s16
    %p86 = scmp.eq.s32.totalorder %s85, 0
    %s88 = sadd.s32 %s87, 1
    %s89 = scalar_select %p86, %s87, %s88
    %p92 = pneg %p86
    %p93 = scmp.eq.s32.totalorder %s9, 1
    %p94 = por %p92, %p93
    %p95 = scmp.ne.s32.totalorder %s87, %s90
    %p96 = scmp.eq.s32.totalorder %s9, 0
    %p97 = por %p95, %p96
    %p98 = scmp.ne.s32.totalorder %s87, %s90
    %p99 = scmp.eq.s32.totalorder %s14, 1
    %p100 = por %p98, %p99
    %p101 = scmp.ne.s32.totalorder %s90, %s91
    %p102 = scmp.eq.s32.totalorder %s14, 0
    %p103 = por %p101, %p102
    %p104 = scmp.ne.s32.totalorder %s90, %s91
    %p105 = scmp.eq.s32.totalorder %s15, 1
    %p106 = por %p104, %p105
    %p108 = scmp.ne.s32.totalorder %s91, %s107
    %p109 = scmp.eq.s32.totalorder %s15, 0
    %p110 = por %p108, %p109
    %p111 = scmp.le.s32.totalorder 1, %s9
    %p112 = scmp.lt.s32.totalorder %s9, 3
    %p113 = pnand %p111, %p112
    %p114 = pneg %p113
    // Predicated region
    $region9: #{forward.12} parent=5 // pred_check
      _
    $region10: #{forward.12} parent=5 // pred_check_branch
      %116 = sbr.rel (%p113) target = $region12
    $region11: #{forward.12} parent=5 // pred_region
      %s117 = ssub.s32 %s9, 1
      // Predicated region
      $region13: #{forward.12} parent=11 // pred_check
        %p118 = pneg %p56
      $region14: #{forward.12} parent=11 // pred_check_branch
        %120 = sbr.rel (%p118) target = $region16
      $region15: #{forward.12} parent=11 // pred_region
        _
      $region16: #{forward.12} parent=11 // pred_fallthru
        _
      // Predicated region
      $region17: #{forward.12} parent=11 // pred_check
        %p121 = pneg %p77
      $region18: #{forward.12} parent=11 // pred_check_branch
        %123 = sbr.rel (%p121) target = $region20
      $region19: #{forward.12} parent=11 // pred_region
        _
      $region20: #{forward.12} parent=11 // pred_fallthru
        _
    $region12: #{forward.12} parent=5 // pred_fallthru
      _
    %p124 = scmp.lt.s32.totalorder %s9, 2
    // Predicated region
    $region21: #{forward.12} parent=5 // pred_check
      %p125 = pneg %p124
    $region22: #{forward.12} parent=5 // pred_check_branch
      %127 = sbr.rel (%p125) target = $region24
    $region23: #{forward.12} parent=5 // pred_region
      // Predicated region
      $region25: #{forward.12} parent=23 // pred_check
        %p128 = pneg %p29
      $region26: #{forward.12} parent=23 // pred_check_branch
        %130 = sbr.rel (%p128) target = $region28
      $region27: #{forward.12} parent=23 // pred_region
        %p131 = scmp.lt.s32.totalorder %s9, 1
        %s132 = scalar_select %p131, %s9, 1
        %s133 = smul.addr %s132, 5
        %s134 = smul.addr %s133, 8
        %s135 = scalar_lea.vmem %s0, %s134
      $region28: #{forward.12} parent=23 // pred_fallthru
        _
    $region24: #{forward.12} parent=5 // pred_fallthru
      _
    %p136 = scmp.le.s32.totalorder 1, %s9
    %p137 = scmp.lt.s32.totalorder %s9, 3
    %p138 = pnand %p136, %p137
    %p139 = pneg %p138
    // Predicated region
    $region29: #{forward.12} parent=5 // pred_check
      _
    $region30: #{forward.12} parent=5 // pred_check_branch
      %141 = sbr.rel (%p138) target = $region32
    $region31: #{forward.12} parent=5 // pred_region
      %s142 = ssub.s32 %s9, 1
      %p143 = scmp.lt.s32.totalorder %s14, 1
      %s144 = scalar_select %p143, %s14, 1
      %s145 = smul.addr %s144, 5
      %s146 = smul.addr %s145, 8
      %s147 = scalar_lea.vmem %s0, %s146
      %p148 = pneg %p35
      %p149 = pneg %p32
      %p150 = pneg %p56
      %p151 = pneg %p53
      %p152 = pneg %p77
      %p153 = pneg %p74
      %p154 = pneg %p103
      %p155 = pneg %p100
      %p156 = scmp.lt.s32.totalorder %s14, 1
      %s157 = scalar_select %p156, %s14, 1
      %s158 = smul.addr %s157, 4
      %s159 = smul.addr %s158, 4
      %s160 = scalar_lea.vmem %s3, %s159
      %p161 = scmp.lt.s32.totalorder %s14, 1
      %s162 = scalar_select %p161, %s14, 1
      %s163 = smul.addr %s162, 5
      %s164 = smul.addr %s163, 8
      %s165 = scalar_lea.vmem %s0, %s164
      %p166 = scmp.lt.s32.totalorder %s14, 1
      %s167 = scalar_select %p166, %s14, 1
      %s168 = smul.addr %s167, 4
      %s169 = smul.addr %s168, 4
      %s170 = scalar_lea.vmem %s3, %s169
      %v171 = vld [vmem:[%s2] sm:$0x1]
      %v172 = vld [vmem:[%s165] sm:$0x1f]
      %v173 = vld [vmem:[%s165 + $0x8] sm:$0x1f]
      %v174 = vld [vmem:[%s165 + $0x10] sm:$0x1f]
      %v175 = vld [vmem:[%s165 + $0x18] sm:$0x1f]
      %v176 = vld [vmem:[%s165 + $0x20] sm:$0x1f]
      %v178 = vperm.slane %v171, 0
      %v180 = vadd.f32 %v178, 0.0
      %v181 = vld [vmem:[%s1] sm:$0xff]
      %v182 = vld [vmem:[%s1 + $0x8] sm:$0xff]
      %v183 = vld [vmem:[%s1 + $0x10] sm:$0xff]
      %v184 = vld [vmem:[%s1 + $0x18] sm:$0xff]
      %vm185 = vcmask 261120
      %v187 = vsel %vm185, %v172, 0
      %189 = vmatpush.msra.mxu0 0.0
      %190 = vmatpush.msra.mxu0 0.0
      %191 = vmatpush.msra.mxu0 0.0
      %192 = vmatpush.msra.mxu0 0.0
      %193 = vmatpush.msra.mxu0 0.0
      %194 = vmatpush.msra.mxu0 0.0
      %195 = vmatpush.msra.mxu0 0.0
      %196 = vmatpush.msra.mxu0 0.0
      %197 = vmatpush.msra.mxu0 0.0
      %198 = vmatpush.msra.mxu0 0.0
      %199 = vmatpush.msra.mxu0 0.0
      %200 = vmatpush.msra.mxu0 0.0
      %201 = vmatpush.msra.mxu0 %v184
      %202 = vmatpush.msra.mxu0 %v183
      %203 = vmatpush.msra.mxu0 %v182
      %204 = vmatpush.msra.mxu0 %v181
      %205 = vmatmul.f32.gmra.mxu0 %v187
      %v206 = vpop.f32.mrf.mxu0
      %v207 = vadd.f32 0.0, %v206
      %208 = vdwg.mxu0
      %v210 = vsel %vm185, %v173, 0
      %212 = vmatpush.msra.mxu0 0.0
      %213 = vmatpush.msra.mxu0 0.0
      %214 = vmatpush.msra.mxu0 0.0
      %215 = vmatpush.msra.mxu0 0.0
      %216 = vmatpush.msra.mxu0 0.0
      %217 = vmatpush.msra.mxu0 0.0
      %218 = vmatpush.msra.mxu0 0.0
      %219 = vmatpush.msra.mxu0 0.0
      %220 = vmatpush.msra.mxu0 0.0
      %221 = vmatpush.msra.mxu0 0.0
      %222 = vmatpush.msra.mxu0 0.0
      %223 = vmatpush.msra.mxu0 0.0
      %224 = vmatpush.msra.mxu0 %v184
      %225 = vmatpush.msra.mxu0 %v183
      %226 = vmatpush.msra.mxu0 %v182
      %227 = vmatpush.msra.mxu0 %v181
      %228 = vmatmul.f32.gmra.mxu0 %v210
      %v229 = vpop.f32.mrf.mxu0
      %v230 = vadd.f32 0.0, %v229
      %231 = vdwg.mxu0
      %v233 = vsel %vm185, %v174, 0
      %235 = vmatpush.msra.mxu0 0.0
      %236 = vmatpush.msra.mxu0 0.0
      %237 = vmatpush.msra.mxu0 0.0
      %238 = vmatpush.msra.mxu0 0.0
      %239 = vmatpush.msra.mxu0 0.0
      %240 = vmatpush.msra.mxu0 0.0
      %241 = vmatpush.msra.mxu0 0.0
      %242 = vmatpush.msra.mxu0 0.0
      %243 = vmatpush.msra.mxu0 0.0
      %244 = vmatpush.msra.mxu0 0.0
      %245 = vmatpush.msra.mxu0 0.0
      %246 = vmatpush.msra.mxu0 0.0
      %247 = vmatpush.msra.mxu0 %v184
      %248 = vmatpush.msra.mxu0 %v183
      %249 = vmatpush.msra.mxu0 %v182
      %250 = vmatpush.msra.mxu0 %v181
      %251 = vmatmul.f32.gmra.mxu0 %v233
      %v252 = vpop.f32.mrf.mxu0
      %v253 = vadd.f32 0.0, %v252
      %254 = vdwg.mxu0
      %v256 = vsel %vm185, %v175, 0
      %258 = vmatpush.msra.mxu0 0.0
      %259 = vmatpush.msra.mxu0 0.0
      %260 = vmatpush.msra.mxu0 0.0
      %261 = vmatpush.msra.mxu0 0.0
      %262 = vmatpush.msra.mxu0 0.0
      %263 = vmatpush.msra.mxu0 0.0
      %264 = vmatpush.msra.mxu0 0.0
      %265 = vmatpush.msra.mxu0 0.0
      %266 = vmatpush.msra.mxu0 0.0
      %267 = vmatpush.msra.mxu0 0.0
      %268 = vmatpush.msra.mxu0 0.0
      %269 = vmatpush.msra.mxu0 0.0
      %270 = vmatpush.msra.mxu0 %v184
      %271 = vmatpush.msra.mxu0 %v183
      %272 = vmatpush.msra.mxu0 %v182
      %273 = vmatpush.msra.mxu0 %v181
      %274 = vmatmul.f32.gmra.mxu0 %v256
      %v275 = vpop.f32.mrf.mxu0
      %v276 = vadd.f32 0.0, %v275
      %277 = vdwg.mxu0
      %v278 = vadd.f32 %v180, %v207
      %v279 = vadd.f32 %v180, %v230
      %v280 = vadd.f32 %v180, %v253
      %v281 = vadd.f32 %v180, %v276
      %s282 = scalar_lea.vmem %s1, 32
      %v283 = vld [vmem:[%s282] sm:$0xff]
      %v284 = vld [vmem:[%s282 + $0x8] sm:$0xff]
      %v285 = vld [vmem:[%s282 + $0x10] sm:$0xff]
      %v286 = vld [vmem:[%s282 + $0x18] sm:$0xff]
      %v287 = vrot.slane %v172, 1
      %v288 = vsel %vm185, %v287, 0
      %290 = vmatpush.msra.mxu0 0.0
      %291 = vmatpush.msra.mxu0 0.0
      %292 = vmatpush.msra.mxu0 0.0
      %293 = vmatpush.msra.mxu0 0.0
      %294 = vmatpush.msra.mxu0 0.0
      %295 = vmatpush.msra.mxu0 0.0
      %296 = vmatpush.msra.mxu0 0.0
      %297 = vmatpush.msra.mxu0 0.0
      %298 = vmatpush.msra.mxu0 0.0
      %299 = vmatpush.msra.mxu0 0.0
      %300 = vmatpush.msra.mxu0 0.0
      %301 = vmatpush.msra.mxu0 0.0
      %302 = vmatpush.msra.mxu0 %v286
      %303 = vmatpush.msra.mxu0 %v285
      %304 = vmatpush.msra.mxu0 %v284
      %305 = vmatpush.msra.mxu0 %v283
      %306 = vmatmul.f32.gmra.mxu0 %v288
      %v307 = vpop.f32.mrf.mxu0
      %v308 = vadd.f32 0.0, %v307
      %309 = vdwg.mxu0
      %v310 = vrot.slane %v173, 1
      %v311 = vsel %vm185, %v310, 0
      %313 = vmatpush.msra.mxu0 0.0
      %314 = vmatpush.msra.mxu0 0.0
      %315 = vmatpush.msra.mxu0 0.0
      %316 = vmatpush.msra.mxu0 0.0
      %317 = vmatpush.msra.mxu0 0.0
      %318 = vmatpush.msra.mxu0 0.0
      %319 = vmatpush.msra.mxu0 0.0
      %320 = vmatpush.msra.mxu0 0.0
      %321 = vmatpush.msra.mxu0 0.0
      %322 = vmatpush.msra.mxu0 0.0
      %323 = vmatpush.msra.mxu0 0.0
      %324 = vmatpush.msra.mxu0 0.0
      %325 = vmatpush.msra.mxu0 %v286
      %326 = vmatpush.msra.mxu0 %v285
      %327 = vmatpush.msra.mxu0 %v284
      %328 = vmatpush.msra.mxu0 %v283
      %329 = vmatmul.f32.gmra.mxu0 %v311
      %v330 = vpop.f32.mrf.mxu0
      %v331 = vadd.f32 0.0, %v330
      %332 = vdwg.mxu0
      %v333 = vrot.slane %v174, 1
      %v334 = vsel %vm185, %v333, 0
      %336 = vmatpush.msra.mxu0 0.0
      %337 = vmatpush.msra.mxu0 0.0
      %338 = vmatpush.msra.mxu0 0.0
      %339 = vmatpush.msra.mxu0 0.0
      %340 = vmatpush.msra.mxu0 0.0
      %341 = vmatpush.msra.mxu0 0.0
      %342 = vmatpush.msra.mxu0 0.0
      %343 = vmatpush.msra.mxu0 0.0
      %344 = vmatpush.msra.mxu0 0.0
      %345 = vmatpush.msra.mxu0 0.0
      %346 = vmatpush.msra.mxu0 0.0
      %347 = vmatpush.msra.mxu0 0.0
      %348 = vmatpush.msra.mxu0 %v286
      %349 = vmatpush.msra.mxu0 %v285
      %350 = vmatpush.msra.mxu0 %v284
      %351 = vmatpush.msra.mxu0 %v283
      %352 = vmatmul.f32.gmra.mxu0 %v334
      %v353 = vpop.f32.mrf.mxu0
      %v354 = vadd.f32 0.0, %v353
      %355 = vdwg.mxu0
      %v356 = vrot.slane %v175, 1
      %v357 = vsel %vm185, %v356, 0
      %359 = vmatpush.msra.mxu0 0.0
      %360 = vmatpush.msra.mxu0 0.0
      %361 = vmatpush.msra.mxu0 0.0
      %362 = vmatpush.msra.mxu0 0.0
      %363 = vmatpush.msra.mxu0 0.0
      %364 = vmatpush.msra.mxu0 0.0
      %365 = vmatpush.msra.mxu0 0.0
      %366 = vmatpush.msra.mxu0 0.0
      %367 = vmatpush.msra.mxu0 0.0
      %368 = vmatpush.msra.mxu0 0.0
      %369 = vmatpush.msra.mxu0 0.0
      %370 = vmatpush.msra.mxu0 0.0
      %371 = vmatpush.msra.mxu0 %v286
      %372 = vmatpush.msra.mxu0 %v285
      %373 = vmatpush.msra.mxu0 %v284
      %374 = vmatpush.msra.mxu0 %v283
      %375 = vmatmul.f32.gmra.mxu0 %v357
      %v376 = vpop.f32.mrf.mxu0
      %v377 = vadd.f32 0.0, %v376
      %378 = vdwg.mxu0
      %v379 = vadd.f32 %v278, %v308
      %v380 = vadd.f32 %v279, %v331
      %v381 = vadd.f32 %v280, %v354
      %v382 = vadd.f32 %v281, %v377
      %s383 = scalar_lea.vmem %s1, 64
      %v384 = vld [vmem:[%s383] sm:$0xff]
      %v385 = vld [vmem:[%s383 + $0x8] sm:$0xff]
      %v386 = vld [vmem:[%s383 + $0x10] sm:$0xff]
      %v387 = vld [vmem:[%s383 + $0x18] sm:$0xff]
      %388 = vmatpush.msra.mxu0 0.0
      %389 = vmatpush.msra.mxu0 0.0
      %390 = vmatpush.msra.mxu0 0.0
      %391 = vmatpush.msra.mxu0 0.0
      %392 = vmatpush.msra.mxu0 0.0
      %393 = vmatpush.msra.mxu0 0.0
      %394 = vmatpush.msra.mxu0 0.0
      %395 = vmatpush.msra.mxu0 0.0
      %396 = vmatpush.msra.mxu0 0.0
      %397 = vmatpush.msra.mxu0 0.0
      %398 = vmatpush.msra.mxu0 0.0
      %399 = vmatpush.msra.mxu0 0.0
      %400 = vmatpush.msra.mxu0 %v387
      %401 = vmatpush.msra.mxu0 %v386
      %402 = vmatpush.msra.mxu0 %v385
      %403 = vmatpush.msra.mxu0 %v384
      %404 = vmatmul.f32.gmra.mxu0 %v210
      %v405 = vpop.f32.mrf.mxu0
      %v406 = vadd.f32 0.0, %v405
      %407 = vdwg.mxu0
      %408 = vmatpush.msra.mxu0 0.0
      %409 = vmatpush.msra.mxu0 0.0
      %410 = vmatpush.msra.mxu0 0.0
      %411 = vmatpush.msra.mxu0 0.0
      %412 = vmatpush.msra.mxu0 0.0
      %413 = vmatpush.msra.mxu0 0.0
      %414 = vmatpush.msra.mxu0 0.0
      %415 = vmatpush.msra.mxu0 0.0
      %416 = vmatpush.msra.mxu0 0.0
      %417 = vmatpush.msra.mxu0 0.0
      %418 = vmatpush.msra.mxu0 0.0
      %419 = vmatpush.msra.mxu0 0.0
      %420 = vmatpush.msra.mxu0 %v387
      %421 = vmatpush.msra.mxu0 %v386
      %422 = vmatpush.msra.mxu0 %v385
      %423 = vmatpush.msra.mxu0 %v384
      %424 = vmatmul.f32.gmra.mxu0 %v233
      %v425 = vpop.f32.mrf.mxu0
      %v426 = vadd.f32 0.0, %v425
      %427 = vdwg.mxu0
      %428 = vmatpush.msra.mxu0 0.0
      %429 = vmatpush.msra.mxu0 0.0
      %430 = vmatpush.msra.mxu0 0.0
      %431 = vmatpush.msra.mxu0 0.0
      %432 = vmatpush.msra.mxu0 0.0
      %433 = vmatpush.msra.mxu0 0.0
      %434 = vmatpush.msra.mxu0 0.0
      %435 = vmatpush.msra.mxu0 0.0
      %436 = vmatpush.msra.mxu0 0.0
      %437 = vmatpush.msra.mxu0 0.0
      %438 = vmatpush.msra.mxu0 0.0
      %439 = vmatpush.msra.mxu0 0.0
      %440 = vmatpush.msra.mxu0 %v387
      %441 = vmatpush.msra.mxu0 %v386
      %442 = vmatpush.msra.mxu0 %v385
      %443 = vmatpush.msra.mxu0 %v384
      %444 = vmatmul.f32.gmra.mxu0 %v256
      %v445 = vpop.f32.mrf.mxu0
      %v446 = vadd.f32 0.0, %v445
      %447 = vdwg.mxu0
      %v449 = vsel %vm185, %v176, 0
      %451 = vmatpush.msra.mxu0 0.0
      %452 = vmatpush.msra.mxu0 0.0
      %453 = vmatpush.msra.mxu0 0.0
      %454 = vmatpush.msra.mxu0 0.0
      %455 = vmatpush.msra.mxu0 0.0
      %456 = vmatpush.msra.mxu0 0.0
      %457 = vmatpush.msra.mxu0 0.0
      %458 = vmatpush.msra.mxu0 0.0
      %459 = vmatpush.msra.mxu0 0.0
      %460 = vmatpush.msra.mxu0 0.0
      %461 = vmatpush.msra.mxu0 0.0
      %462 = vmatpush.msra.mxu0 0.0
      %463 = vmatpush.msra.mxu0 %v387
      %464 = vmatpush.msra.mxu0 %v386
      %465 = vmatpush.msra.mxu0 %v385
      %466 = vmatpush.msra.mxu0 %v384
      %467 = vmatmul.f32.gmra.mxu0 %v449
      %v468 = vpop.f32.mrf.mxu0
      %v469 = vadd.f32 0.0, %v468
      %470 = vdwg.mxu0
      %v471 = vadd.f32 %v379, %v406
      %v472 = vadd.f32 %v380, %v426
      %v473 = vadd.f32 %v381, %v446
      %v474 = vadd.f32 %v382, %v469
      %s475 = scalar_lea.vmem %s1, 96
      %v476 = vld [vmem:[%s475] sm:$0xff]
      %v477 = vld [vmem:[%s475 + $0x8] sm:$0xff]
      %v478 = vld [vmem:[%s475 + $0x10] sm:$0xff]
      %v479 = vld [vmem:[%s475 + $0x18] sm:$0xff]
      %480 = vmatpush.msra.mxu0 0.0
      %481 = vmatpush.msra.mxu0 0.0
      %482 = vmatpush.msra.mxu0 0.0
      %483 = vmatpush.msra.mxu0 0.0
      %484 = vmatpush.msra.mxu0 0.0
      %485 = vmatpush.msra.mxu0 0.0
      %486 = vmatpush.msra.mxu0 0.0
      %487 = vmatpush.msra.mxu0 0.0
      %488 = vmatpush.msra.mxu0 0.0
      %489 = vmatpush.msra.mxu0 0.0
      %490 = vmatpush.msra.mxu0 0.0
      %491 = vmatpush.msra.mxu0 0.0
      %492 = vmatpush.msra.mxu0 %v479
      %493 = vmatpush.msra.mxu0 %v478
      %494 = vmatpush.msra.mxu0 %v477
      %495 = vmatpush.msra.mxu0 %v476
      %496 = vmatmul.f32.gmra.mxu0 %v311
      %v497 = vpop.f32.mrf.mxu0
      %v498 = vadd.f32 0.0, %v497
      %499 = vdwg.mxu0
      %500 = vmatpush.msra.mxu0 0.0
      %501 = vmatpush.msra.mxu0 0.0
      %502 = vmatpush.msra.mxu0 0.0
      %503 = vmatpush.msra.mxu0 0.0
      %504 = vmatpush.msra.mxu0 0.0
      %505 = vmatpush.msra.mxu0 0.0
      %506 = vmatpush.msra.mxu0 0.0
      %507 = vmatpush.msra.mxu0 0.0
      %508 = vmatpush.msra.mxu0 0.0
      %509 = vmatpush.msra.mxu0 0.0
      %510 = vmatpush.msra.mxu0 0.0
      %511 = vmatpush.msra.mxu0 0.0
      %512 = vmatpush.msra.mxu0 %v479
      %513 = vmatpush.msra.mxu0 %v478
      %514 = vmatpush.msra.mxu0 %v477
      %515 = vmatpush.msra.mxu0 %v476
      %516 = vmatmul.f32.gmra.mxu0 %v334
      %v517 = vpop.f32.mrf.mxu0
      %v518 = vadd.f32 0.0, %v517
      %519 = vdwg.mxu0
      %520 = vmatpush.msra.mxu0 0.0
      %521 = vmatpush.msra.mxu0 0.0
      %522 = vmatpush.msra.mxu0 0.0
      %523 = vmatpush.msra.mxu0 0.0
      %524 = vmatpush.msra.mxu0 0.0
      %525 = vmatpush.msra.mxu0 0.0
      %526 = vmatpush.msra.mxu0 0.0
      %527 = vmatpush.msra.mxu0 0.0
      %528 = vmatpush.msra.mxu0 0.0
      %529 = vmatpush.msra.mxu0 0.0
      %530 = vmatpush.msra.mxu0 0.0
      %531 = vmatpush.msra.mxu0 0.0
      %532 = vmatpush.msra.mxu0 %v479
      %533 = vmatpush.msra.mxu0 %v478
      %534 = vmatpush.msra.mxu0 %v477
      %535 = vmatpush.msra.mxu0 %v476
      %536 = vmatmul.f32.gmra.mxu0 %v357
      %v537 = vpop.f32.mrf.mxu0
      %v538 = vadd.f32 0.0, %v537
      %539 = vdwg.mxu0
      %v540 = vrot.slane %v176, 1
      %v541 = vsel %vm185, %v540, 0
      %543 = vmatpush.msra.mxu0 0.0
      %544 = vmatpush.msra.mxu0 0.0
      %545 = vmatpush.msra.mxu0 0.0
      %546 = vmatpush.msra.mxu0 0.0
      %547 = vmatpush.msra.mxu0 0.0
      %548 = vmatpush.msra.mxu0 0.0
      %549 = vmatpush.msra.mxu0 0.0
      %550 = vmatpush.msra.mxu0 0.0
      %551 = vmatpush.msra.mxu0 0.0
      %552 = vmatpush.msra.mxu0 0.0
      %553 = vmatpush.msra.mxu0 0.0
      %554 = vmatpush.msra.mxu0 0.0
      %555 = vmatpush.msra.mxu0 %v479
      %556 = vmatpush.msra.mxu0 %v478
      %557 = vmatpush.msra.mxu0 %v477
      %558 = vmatpush.msra.mxu0 %v476
      %559 = vmatmul.f32.gmra.mxu0 %v541
      %v560 = vpop.f32.mrf.mxu0
      %v561 = vadd.f32 0.0, %v560
      %562 = vdwg.mxu0
      %v563 = vadd.f32 %v471, %v498
      %v564 = vadd.f32 %v472, %v518
      %v565 = vadd.f32 %v473, %v538
      %v566 = vadd.f32 %v474, %v561
      %v567 = vmax.f32 %v563, 0.0
      %v568 = vmax.f32 %v564, 0.0
      %v569 = vmax.f32 %v565, 0.0
      %v570 = vmax.f32 %v566, 0.0
      %vm571 = vcmask 125952
      %572 = vst.msk [vmem:[%s170] sm:$0xf] %vm571, %v567
      %573 = vst.msk [vmem:[%s170 + $0x4] sm:$0xf] %vm571, %v568
      %574 = vst.msk [vmem:[%s170 + $0x8] sm:$0xf] %vm571, %v569
      %575 = vst.msk [vmem:[%s170 + $0xc] sm:$0xf] %vm571, %v570
      %p576 = scmp.lt.s32.totalorder %s14, 1
      %s577 = scalar_select %p576, %s14, 1
      %s578 = smul.addr %s577, 4
      %s579 = smul.addr %s578, 4
      %s580 = scalar_lea.vmem %s3, %s579
      // Predicated region
      $region33: #{forward.12} parent=31 // pred_check
        %p581 = pneg %p100
      $region34: #{forward.12} parent=31 // pred_check_branch
        %583 = sbr.rel (%p581) target = $region36
      $region35: #{forward.12} parent=31 // pred_region
        _
      $region36: #{forward.12} parent=31 // pred_fallthru
        _
    $region32: #{forward.12} parent=5 // pred_fallthru
      _
    %p584 = scmp.le.s32.totalorder 2, %s9
    // Predicated region
    $region37: #{forward.12} parent=5 // pred_check
      %p585 = pneg %p584
    $region38: #{forward.12} parent=5 // pred_check_branch
      %587 = sbr.rel (%p585) target = $region40
    $region39: #{forward.12} parent=5 // pred_region
      %s588 = ssub.s32 %s9, 2
      // Predicated region
      $region41: #{forward.12} parent=39 // pred_check
        %p589 = pneg %p106
      $region42: #{forward.12} parent=39 // pred_check_branch
        %591 = sbr.rel (%p589) target = $region44
      $region43: #{forward.12} parent=39 // pred_region
        %p592 = scmp.lt.s32.totalorder %s15, 1
        %s593 = scalar_select %p592, %s15, 1
        %s594 = smul.addr %s593, 4
        %s595 = smul.addr %s594, 4
        %s596 = scalar_lea.vmem %s3, %s595
      $region44: #{forward.12} parent=39 // pred_fallthru
        _
    $region40: #{forward.12} parent=5 // pred_fallthru
      _
  $region6: #{forward.12} parent=0 // loop_footer
    %s13 = sadd.s32 1, %s9
  $region7: #{forward.12} parent=0 // loop_footer_branch
    %8 = sbr.rel target = $region3
  $region8: #{forward.12} parent=0 // loop_exit
    _

// kernel: forward.13
$region0: #{forward.13}
  #allocation0 [shape = 'u32[]', space=smem, size = 0x4, offset = 0x4, fixed_abs, tag = 'smem constant byte address 0x4 - core index']
  #allocation1 [shape = 'u32[72,128]{1,0:T(1,128)}', space=vmem, size = 0x9000, scoped, tag = 'internal scratch']
  %s0 = inlined_call_operand.vmem [shape: f32[2,4,64], index: 0, kind: input, shape index: {}]
  %s1 = inlined_call_operand.vmem [shape: f32[64,192], index: 1, kind: input, shape index: {}]
  %s2 = inlined_call_operand.vmem [shape: f32[1,192], index: 2, kind: input, shape index: {}]
  %s3 = inlined_call_operand.vmem [shape: f32[64,64], index: 3, kind: input, shape index: {}]
  %s4 = inlined_call_operand.vmem [shape: f32[1,64], index: 4, kind: input, shape index: {}]
  %s5 = inlined_call_operand.vmem [shape: f32[1,64], index: 5, kind: input, shape index: {}]
  %s6 = inlined_call_operand.vmem [shape: f32[1,64], index: 6, kind: input, shape index: {}]
  %s7 = inlined_call_operand.vmem [shape: f32[2,4,64], index: 7, kind: output, shape index: {}]
  %s8 = sld [smem:[#allocation0]]
  $region61: #{forward.13} parent=0
    _
  %s10 = ssub.s32 1, %s8
  %s11 = scalar_select 0, %s10, %s8
  loop: start=0, step=1, limit=4
  $region2: #{forward.13} parent=0 // loop_pre_header
    _
  $region3: #{forward.13} parent=0 // loop_header
    %s13 = sphi 0, %s17
    %p14 = scmp.ge.s32.totalorder %s13, 4
    %s23 = sphi 0, %s25
    %s26 = sphi 0, %s23
    %s27 = sphi 0, %s26
    %s43 = sphi 0, %s27
    %s47 = sphi 0, %s47
    %s49 = sphi 0, %s47
    %s50 = sphi 0, %s49
    %s64 = sphi 0, %s50
    %s68 = sphi 0, %s68
    %s70 = sphi 0, %s68
    %s71 = sphi 0, %s70
    %s85 = sphi 0, %s71
    %s89 = sphi 0, %s89
    %s91 = sphi 0, %s89
    %s92 = sphi 0, %s91
    %s106 = sphi 0, %s92
    %s110 = sphi 0, %s110
    %s112 = sphi 0, %s110
    %s113 = sphi 0, %s112
    %s127 = sphi 0, %s113
    %s131 = sphi 0, %s131
    %s133 = sphi 0, %s131
    %s134 = sphi 0, %s133
    %s148 = sphi 0, %s134
    %s152 = sphi 0, %s152
    %s154 = sphi 0, %s152
    %s155 = sphi 0, %s154
    %s169 = sphi 0, %s155
    %s175 = sphi 0, %s177
    %s178 = sphi 0, %s175
    %s179 = sphi 0, %s178
    %s195 = sphi 0, %s179
  $region4: #{forward.13} parent=0 // loop_header_branch
    %16 = sbr.rel (%p14) target = $region8
  $region5: #{forward.13} parent=0 // loop_body
    %s18 = ssub.s32 %s13, 1
    %s19 = ssub.s32 %s13, 2
    %s20 = sadd.s32 %s13, 1
    %s21 = ssub.s32 %s13, %s20
    %p22 = scmp.eq.s32.totalorder %s21, 0
    %s24 = sadd.s32 %s23, 1
    %s25 = scalar_select %p22, %s23, %s24
    %p28 = pneg %p22
    %p29 = scmp.eq.s32.totalorder %s13, 1
    %p30 = por %p28, %p29
    %p31 = scmp.ne.s32.totalorder %s23, %s26
    %p32 = scmp.eq.s32.totalorder %s13, 0
    %p33 = por %p31, %p32
    %p34 = scmp.ne.s32.totalorder %s23, %s26
    %p35 = scmp.eq.s32.totalorder %s18, 1
    %p36 = por %p34, %p35
    %p37 = scmp.ne.s32.totalorder %s26, %s27
    %p38 = scmp.eq.s32.totalorder %s18, 0
    %p39 = por %p37, %p38
    %p40 = scmp.ne.s32.totalorder %s26, %s27
    %p41 = scmp.eq.s32.totalorder %s19, 1
    %p42 = por %p40, %p41
    %p44 = scmp.ne.s32.totalorder %s27, %s43
    %p45 = scmp.eq.s32.totalorder %s19, 0
    %p46 = por %p44, %p45
    %s48 = sadd.s32 %s47, 1
    %p51 = scmp.eq.s32.totalorder %s13, 1
    %p52 = scmp.ne.s32.totalorder %s47, %s49
    %p53 = scmp.eq.s32.totalorder %s13, 0
    %p54 = por %p52, %p53
    %p55 = scmp.ne.s32.totalorder %s47, %s49
    %p56 = scmp.eq.s32.totalorder %s18, 1
    %p57 = por %p55, %p56
    %p58 = scmp.ne.s32.totalorder %s49, %s50
    %p59 = scmp.eq.s32.totalorder %s18, 0
    %p60 = por %p58, %p59
    %p61 = scmp.ne.s32.totalorder %s49, %s50
    %p62 = scmp.eq.s32.totalorder %s19, 1
    %p63 = por %p61, %p62
    %p65 = scmp.ne.s32.totalorder %s50, %s64
    %p66 = scmp.eq.s32.totalorder %s19, 0
    %p67 = por %p65, %p66
    %s69 = sadd.s32 %s68, 1
    %p72 = scmp.eq.s32.totalorder %s13, 1
    %p73 = scmp.ne.s32.totalorder %s68, %s70
    %p74 = scmp.eq.s32.totalorder %s13, 0
    %p75 = por %p73, %p74
    %p76 = scmp.ne.s32.totalorder %s68, %s70
    %p77 = scmp.eq.s32.totalorder %s18, 1
    %p78 = por %p76, %p77
    %p79 = scmp.ne.s32.totalorder %s70, %s71
    %p80 = scmp.eq.s32.totalorder %s18, 0
    %p81 = por %p79, %p80
    %p82 = scmp.ne.s32.totalorder %s70, %s71
    %p83 = scmp.eq.s32.totalorder %s19, 1
    %p84 = por %p82, %p83
    %p86 = scmp.ne.s32.totalorder %s71, %s85
    %p87 = scmp.eq.s32.totalorder %s19, 0
    %p88 = por %p86, %p87
    %s90 = sadd.s32 %s89, 1
    %p93 = scmp.eq.s32.totalorder %s13, 1
    %p94 = scmp.ne.s32.totalorder %s89, %s91
    %p95 = scmp.eq.s32.totalorder %s13, 0
    %p96 = por %p94, %p95
    %p97 = scmp.ne.s32.totalorder %s89, %s91
    %p98 = scmp.eq.s32.totalorder %s18, 1
    %p99 = por %p97, %p98
    %p100 = scmp.ne.s32.totalorder %s91, %s92
    %p101 = scmp.eq.s32.totalorder %s18, 0
    %p102 = por %p100, %p101
    %p103 = scmp.ne.s32.totalorder %s91, %s92
    %p104 = scmp.eq.s32.totalorder %s19, 1
    %p105 = por %p103, %p104
    %p107 = scmp.ne.s32.totalorder %s92, %s106
    %p108 = scmp.eq.s32.totalorder %s19, 0
    %p109 = por %p107, %p108
    %s111 = sadd.s32 %s110, 1
    %p114 = scmp.eq.s32.totalorder %s13, 1
    %p115 = scmp.ne.s32.totalorder %s110, %s112
    %p116 = scmp.eq.s32.totalorder %s13, 0
    %p117 = por %p115, %p116
    %p118 = scmp.ne.s32.totalorder %s110, %s112
    %p119 = scmp.eq.s32.totalorder %s18, 1
    %p120 = por %p118, %p119
    %p121 = scmp.ne.s32.totalorder %s112, %s113
    %p122 = scmp.eq.s32.totalorder %s18, 0
    %p123 = por %p121, %p122
    %p124 = scmp.ne.s32.totalorder %s112, %s113
    %p125 = scmp.eq.s32.totalorder %s19, 1
    %p126 = por %p124, %p125
    %p128 = scmp.ne.s32.totalorder %s113, %s127
    %p129 = scmp.eq.s32.totalorder %s19, 0
    %p130 = por %p128, %p129
    %s132 = sadd.s32 %s131, 1
    %p135 = scmp.eq.s32.totalorder %s13, 1
    %p136 = scmp.ne.s32.totalorder %s131, %s133
    %p137 = scmp.eq.s32.totalorder %s13, 0
    %p138 = por %p136, %p137
    %p139 = scmp.ne.s32.totalorder %s131, %s133
    %p140 = scmp.eq.s32.totalorder %s18, 1
    %p141 = por %p139, %p140
    %p142 = scmp.ne.s32.totalorder %s133, %s134
    %p143 = scmp.eq.s32.totalorder %s18, 0
    %p144 = por %p142, %p143
    %p145 = scmp.ne.s32.totalorder %s133, %s134
    %p146 = scmp.eq.s32.totalorder %s19, 1
    %p147 = por %p145, %p146
    %p149 = scmp.ne.s32.totalorder %s134, %s148
    %p150 = scmp.eq.s32.totalorder %s19, 0
    %p151 = por %p149, %p150
    %s153 = sadd.s32 %s152, 1
    %p156 = scmp.eq.s32.totalorder %s13, 1
    %p157 = scmp.ne.s32.totalorder %s152, %s154
    %p158 = scmp.eq.s32.totalorder %s13, 0
    %p159 = por %p157, %p158
    %p160 = scmp.ne.s32.totalorder %s152, %s154
    %p161 = scmp.eq.s32.totalorder %s18, 1
    %p162 = por %p160, %p161
    %p163 = scmp.ne.s32.totalorder %s154, %s155
    %p164 = scmp.eq.s32.totalorder %s18, 0
    %p165 = por %p163, %p164
    %p166 = scmp.ne.s32.totalorder %s154, %s155
    %p167 = scmp.eq.s32.totalorder %s19, 1
    %p168 = por %p166, %p167
    %p170 = scmp.ne.s32.totalorder %s155, %s169
    %p171 = scmp.eq.s32.totalorder %s19, 0
    %p172 = por %p170, %p171
    %s173 = ssub.s32 %s13, %s20
    %p174 = scmp.eq.s32.totalorder %s173, 0
    %s176 = sadd.s32 %s175, 1
    %s177 = scalar_select %p174, %s175, %s176
    %p180 = pneg %p174
    %p181 = scmp.eq.s32.totalorder %s13, 1
    %p182 = por %p180, %p181
    %p183 = scmp.ne.s32.totalorder %s175, %s178
    %p184 = scmp.eq.s32.totalorder %s13, 0
    %p185 = por %p183, %p184
    %p186 = scmp.ne.s32.totalorder %s175, %s178
    %p187 = scmp.eq.s32.totalorder %s18, 1
    %p188 = por %p186, %p187
    %p189 = scmp.ne.s32.totalorder %s178, %s179
    %p190 = scmp.eq.s32.totalorder %s18, 0
    %p191 = por %p189, %p190
    %p192 = scmp.ne.s32.totalorder %s178, %s179
    %p193 = scmp.eq.s32.totalorder %s19, 1
    %p194 = por %p192, %p193
    %p196 = scmp.ne.s32.totalorder %s179, %s195
    %p197 = scmp.eq.s32.totalorder %s19, 0
    %p198 = por %p196, %p197
    %p199 = scmp.le.s32.totalorder 1, %s13
    %p200 = scmp.lt.s32.totalorder %s13, 3
    %p201 = pnand %p199, %p200
    %p202 = pneg %p201
    // Predicated region
    $region9: #{forward.13} parent=5 // pred_check
      _
    $region10: #{forward.13} parent=5 // pred_check_branch
      %204 = sbr.rel (%p201) target = $region12
    $region11: #{forward.13} parent=5 // pred_region
      %s205 = ssub.s32 %s13, 1
      // Predicated region
      $region13: #{forward.13} parent=11 // pred_check
        %p206 = pneg %p60
      $region14: #{forward.13} parent=11 // pred_check_branch
        %208 = sbr.rel (%p206) target = $region16
      $region15: #{forward.13} parent=11 // pred_region
        _
      $region16: #{forward.13} parent=11 // pred_fallthru
        _
      // Predicated region
      $region17: #{forward.13} parent=11 // pred_check
        %p209 = pneg %p81
      $region18: #{forward.13} parent=11 // pred_check_branch
        %211 = sbr.rel (%p209) target = $region20
      $region19: #{forward.13} parent=11 // pred_region
        _
      $region20: #{forward.13} parent=11 // pred_fallthru
        _
      // Predicated region
      $region21: #{forward.13} parent=11 // pred_check
        %p212 = pneg %p102
      $region22: #{forward.13} parent=11 // pred_check_branch
        %214 = sbr.rel (%p212) target = $region24
      $region23: #{forward.13} parent=11 // pred_region
        _
      $region24: #{forward.13} parent=11 // pred_fallthru
        _
      // Predicated region
      $region25: #{forward.13} parent=11 // pred_check
        %p215 = pneg %p123
      $region26: #{forward.13} parent=11 // pred_check_branch
        %217 = sbr.rel (%p215) target = $region28
      $region27: #{forward.13} parent=11 // pred_region
        _
      $region28: #{forward.13} parent=11 // pred_fallthru
        _
      // Predicated region
      $region29: #{forward.13} parent=11 // pred_check
        %p218 = pneg %p144
      $region30: #{forward.13} parent=11 // pred_check_branch
        %220 = sbr.rel (%p218) target = $region32
      $region31: #{forward.13} parent=11 // pred_region
        _
      $region32: #{forward.13} parent=11 // pred_fallthru
        _
      // Predicated region
      $region33: #{forward.13} parent=11 // pred_check
        %p221 = pneg %p165
      $region34: #{forward.13} parent=11 // pred_check_branch
        %223 = sbr.rel (%p221) target = $region36
      $region35: #{forward.13} parent=11 // pred_region
        _
      $region36: #{forward.13} parent=11 // pred_fallthru
        _
    $region12: #{forward.13} parent=5 // pred_fallthru
      _
    %p224 = scmp.lt.s32.totalorder %s13, 2
    // Predicated region
    $region37: #{forward.13} parent=5 // pred_check
      %p225 = pneg %p224
    $region38: #{forward.13} parent=5 // pred_check_branch
      %227 = sbr.rel (%p225) target = $region40
    $region39: #{forward.13} parent=5 // pred_region
      // Predicated region
      $region41: #{forward.13} parent=39 // pred_check
        %p228 = pneg %p33
      $region42: #{forward.13} parent=39 // pred_check_branch
        %230 = sbr.rel (%p228) target = $region44
      $region43: #{forward.13} parent=39 // pred_region
        %p231 = scmp.lt.s32.totalorder %s13, 1
        %s232 = scalar_select %p231, %s13, 1
        %s233 = smul.addr %s232, 4
        %s234 = scalar_lea.vmem %s0, %s233
      $region44: #{forward.13} parent=39 // pred_fallthru
        _
    $region40: #{forward.13} parent=5 // pred_fallthru
      _
    %p235 = scmp.le.s32.totalorder 1, %s13
    %p236 = scmp.lt.s32.totalorder %s13, 3
    %p237 = pnand %p235, %p236
    %p238 = pneg %p237
    // Predicated region
    $region45: #{forward.13} parent=5 // pred_check
      _
    $region46: #{forward.13} parent=5 // pred_check_branch
      %240 = sbr.rel (%p237) target = $region48
    $region47: #{forward.13} parent=5 // pred_region
      %s241 = ssub.s32 %s13, 1
      %p242 = scmp.lt.s32.totalorder %s18, 1
      %s243 = scalar_select %p242, %s18, 1
      %s244 = smul.addr %s243, 4
      %s245 = scalar_lea.vmem %s0, %s244
      %p246 = pneg %p39
      %p247 = pneg %p36
      %p248 = pneg %p60
      %p249 = pneg %p57
      %p250 = pneg %p81
      %p251 = pneg %p78
      %p252 = pneg %p102
      %p253 = pneg %p99
      %p254 = pneg %p123
      %p255 = pneg %p120
      %p256 = pneg %p144
      %p257 = pneg %p141
      %p258 = pneg %p165
      %p259 = pneg %p162
      %p260 = pneg %p191
      %p261 = pneg %p188
      %p262 = scmp.lt.s32.totalorder %s18, 1
      %s263 = scalar_select %p262, %s18, 1
      %s264 = smul.addr %s263, 4
      %s265 = scalar_lea.vmem %s7, %s264
      %p266 = scmp.lt.s32.totalorder %s18, 1
      %s267 = scalar_select %p266, %s18, 1
      %s268 = smul.addr %s267, 4
      %s269 = scalar_lea.vmem %s0, %s268
      %p270 = scmp.lt.s32.totalorder %s18, 1
      %s271 = scalar_select %p270, %s18, 1
      %s272 = smul.addr %s271, 4
      %s273 = scalar_lea.vmem %s7, %s272
      %v274 = vld [vmem:[%s269] sm:$0xf]
      %v275 = vld [vmem:[%s1] sm:$0xff]
      %v276 = vld [vmem:[%s1 + $0x8] sm:$0xff]
      %v277 = vld [vmem:[%s1 + $0x10] sm:$0xff]
      %v278 = vld [vmem:[%s1 + $0x18] sm:$0xff]
      %v279 = vld [vmem:[%s1 + $0x20] sm:$0xff]
      %v280 = vld [vmem:[%s1 + $0x28] sm:$0xff]
      %v281 = vld [vmem:[%s1 + $0x30] sm:$0xff]
      %v282 = vld [vmem:[%s1 + $0x38] sm:$0xff]
      %v283 = vld [vmem:[%s1 + $0x40] sm:$0xff]
      %v284 = vld [vmem:[%s1 + $0x48] sm:$0xff]
      %v285 = vld [vmem:[%s1 + $0x50] sm:$0xff]
      %v286 = vld [vmem:[%s1 + $0x58] sm:$0xff]
      %v287 = vld [vmem:[%s1 + $0x60] sm:$0xff]
      %v288 = vld [vmem:[%s1 + $0x68] sm:$0xff]
      %v289 = vld [vmem:[%s1 + $0x70] sm:$0xff]
      %v290 = vld [vmem:[%s1 + $0x78] sm:$0xff]
      %v291 = vld [vmem:[%s2] sm:$0x3]
      %v293 = vperm.slane %v291, 0
      %v294 = vperm.slane %v291, 1
      %vm297 = vcmask 523264
      %v299 = vsel %vm297, %v274, 0
      %301 = vmatpush.msra.mxu0 0.0
      %302 = vmatpush.msra.mxu0 0.0
      %303 = vmatpush.msra.mxu0 0.0
      %304 = vmatpush.msra.mxu0 0.0
      %305 = vmatpush.msra.mxu0 0.0
      %306 = vmatpush.msra.mxu0 0.0
      %307 = vmatpush.msra.mxu0 0.0
      %308 = vmatpush.msra.mxu0 0.0
      %309 = vmatpush.msra.mxu0 %v289
      %310 = vmatpush.msra.mxu0 %v287
      %311 = vmatpush.msra.mxu0 %v285
      %312 = vmatpush.msra.mxu0 %v283
      %313 = vmatpush.msra.mxu0 %v281
      %314 = vmatpush.msra.mxu0 %v279
      %315 = vmatpush.msra.mxu0 %v277
      %316 = vmatpush.msra.mxu0 %v275
      %317 = vmatmul.f32.gmra.mxu0 %v299
      %v318 = vpop.f32.mrf.mxu0
      %v319 = vadd.f32 %v293, %v318
      %320 = vdwg.mxu0
      %321 = vmatpush.msra.mxu0 0.0
      %322 = vmatpush.msra.mxu0 0.0
      %323 = vmatpush.msra.mxu0 0.0
      %324 = vmatpush.msra.mxu0 0.0
      %325 = vmatpush.msra.mxu0 0.0
      %326 = vmatpush.msra.mxu0 0.0
      %327 = vmatpush.msra.mxu0 0.0
      %328 = vmatpush.msra.mxu0 0.0
      %329 = vmatpush.msra.mxu0 %v290
      %330 = vmatpush.msra.mxu0 %v288
      %331 = vmatpush.msra.mxu0 %v286
      %332 = vmatpush.msra.mxu0 %v284
      %333 = vmatpush.msra.mxu0 %v282
      %334 = vmatpush.msra.mxu0 %v280
      %335 = vmatpush.msra.mxu0 %v278
      %336 = vmatpush.msra.mxu0 %v276
      %337 = vmatmul.f32.gmra.mxu0 %v299
      %v338 = vpop.f32.mrf.mxu0
      %v339 = vadd.f32 %v294, %v338
      %340 = vdwg.mxu0
      %342 = vrot.lane.b32.xlu0 %v319, 64
      %v343 = vpop.permute.xlu0 %342
      %vm344 = vcmask 130048
      %v345 = vsel %vm344, %v319, 0
      %v347 = vsel %vm344, %v343, 0
      %349 = vmatpush.xpose.msra.mxu0 0.0
      %350 = vmatpush.xpose.msra.mxu0 0.0
      %351 = vmatpush.xpose.msra.mxu0 0.0
      %352 = vmatpush.xpose.msra.mxu0 0.0
      %353 = vmatpush.xpose.msra.mxu0 0.0
      %354 = vmatpush.xpose.msra.mxu0 0.0
      %355 = vmatpush.xpose.msra.mxu0 0.0
      %356 = vmatpush.xpose.msra.mxu0 0.0
      %357 = vmatpush.xpose.msra.mxu0 0.0
      %358 = vmatpush.xpose.msra.mxu0 0.0
      %359 = vmatpush.xpose.msra.mxu0 0.0
      %360 = vmatpush.xpose.msra.mxu0 0.0
      %361 = vmatpush.xpose.msra.mxu0 0.0
      %362 = vmatpush.xpose.msra.mxu0 0.0
      %363 = vmatpush.xpose.msra.mxu0 0.0
      %364 = vmatpush.xpose.msra.mxu0 %v347
      %365 = vmatmul.f32.gmra.mxu0 %v345
      %v366 = vpop.f32.mrf.mxu0
      %v367 = vadd.f32 0.0, %v366
      %368 = vdwg.mxu0
      %v369 = vmul.f32 %v367, 0.25
      %vm370 = vcmask 27648
      %v371 = vsel %vm370, %v369, -inf
      %372 = vmax.xlane.f32.xlu0 %v371
      %v373 = vpop.xlane.xlu0 %372
      %v374 = vsub.f32 %v369, %v373
      %v375 = vmul.f32 %v374, 1.442695
      %v376 = vpow.pop %v375
      %v377 = vsel %vm370, %v376, 0.0
      %378 = vadd.xlane.f32.xlu0 %v377
      %v379 = vpop.xlane.xlu0 %378
      %v380 = vrcp.pop %v379
      %v381 = vmul.f32 %v376, %v380
      %vm382 = vcmask 31744
      %v384 = vsel %vm382, %v381, 0
      %vm386 = vcmask 1043456
      %v388 = vsel %vm386, %v339, 0
      %390 = vmatpush.msra.mxu0 0.0
      %391 = vmatpush.msra.mxu0 0.0
      %392 = vmatpush.msra.mxu0 0.0
      %393 = vmatpush.msra.mxu0 0.0
      %394 = vmatpush.msra.mxu0 0.0
      %395 = vmatpush.msra.mxu0 0.0
      %396 = vmatpush.msra.mxu0 0.0
      %397 = vmatpush.msra.mxu0 0.0
      %398 = vmatpush.msra.mxu0 0.0
      %399 = vmatpush.msra.mxu0 0.0
      %400 = vmatpush.msra.mxu0 0.0
      %401 = vmatpush.msra.mxu0 0.0
      %402 = vmatpush.msra.mxu0 0.0
      %403 = vmatpush.msra.mxu0 0.0
      %404 = vmatpush.msra.mxu0 0.0
      %405 = vmatpush.msra.mxu0 %v388
      %406 = vmatmul.f32.gmra.mxu0 %v384
      %v407 = vpop.f32.mrf.mxu0
      %v408 = vadd.f32 0.0, %v407
      %409 = vdwg.mxu0
      %410 = vrot.lane.b32.xlu0 %v319, 112
      %v411 = vpop.permute.xlu0 %410
      %412 = vrot.lane.b32.xlu0 %v319, 48
      %v413 = vpop.permute.xlu0 %412
      %v414 = vsel %vm344, %v411, 0
      %v416 = vsel %vm344, %v413, 0
      %418 = vmatpush.xpose.msra.mxu0 0.0
      %419 = vmatpush.xpose.msra.mxu0 0.0
      %420 = vmatpush.xpose.msra.mxu0 0.0
      %421 = vmatpush.xpose.msra.mxu0 0.0
      %422 = vmatpush.xpose.msra.mxu0 0.0
      %423 = vmatpush.xpose.msra.mxu0 0.0
      %424 = vmatpush.xpose.msra.mxu0 0.0
      %425 = vmatpush.xpose.msra.mxu0 0.0
      %426 = vmatpush.xpose.msra.mxu0 0.0
      %427 = vmatpush.xpose.msra.mxu0 0.0
      %428 = vmatpush.xpose.msra.mxu0 0.0
      %429 = vmatpush.xpose.msra.mxu0 0.0
      %430 = vmatpush.xpose.msra.mxu0 0.0
      %431 = vmatpush.xpose.msra.mxu0 0.0
      %432 = vmatpush.xpose.msra.mxu0 0.0
      %433 = vmatpush.xpose.msra.mxu0 %v416
      %434 = vmatmul.f32.gmra.mxu0 %v414
      %v435 = vpop.f32.mrf.mxu0
      %v436 = vadd.f32 0.0, %v435
      %437 = vdwg.mxu0
      %v438 = vmul.f32 %v436, 0.25
      %v439 = vsel %vm370, %v438, -inf
      %440 = vmax.xlane.f32.xlu0 %v439
      %v441 = vpop.xlane.xlu0 %440
      %v442 = vsub.f32 %v438, %v441
      %v443 = vmul.f32 %v442, 1.442695
      %v444 = vpow.pop %v443
      %v445 = vsel %vm370, %v444, 0.0
      %446 = vadd.xlane.f32.xlu0 %v445
      %v447 = vpop.xlane.xlu0 %446
      %v448 = vrcp.pop %v447
      %v449 = vmul.f32 %v444, %v448
      %450 = vrot.lane.b32.xlu0 %v339, 112
      %v451 = vpop.permute.xlu0 %450
      %v453 = vsel %vm382, %v449, 0
      %v455 = vsel %vm386, %v451, 0
      %457 = vmatpush.msra.mxu0 0.0
      %458 = vmatpush.msra.mxu0 0.0
      %459 = vmatpush.msra.mxu0 0.0
      %460 = vmatpush.msra.mxu0 0.0
      %461 = vmatpush.msra.mxu0 0.0
      %462 = vmatpush.msra.mxu0 0.0
      %463 = vmatpush.msra.mxu0 0.0
      %464 = vmatpush.msra.mxu0 0.0
      %465 = vmatpush.msra.mxu0 0.0
      %466 = vmatpush.msra.mxu0 0.0
      %467 = vmatpush.msra.mxu0 0.0
      %468 = vmatpush.msra.mxu0 0.0
      %469 = vmatpush.msra.mxu0 0.0
      %470 = vmatpush.msra.mxu0 0.0
      %471 = vmatpush.msra.mxu0 0.0
      %472 = vmatpush.msra.mxu0 %v455
      %473 = vmatmul.f32.gmra.mxu0 %v453
      %v474 = vpop.f32.mrf.mxu0
      %v475 = vadd.f32 0.0, %v474
      %476 = vdwg.mxu0
      %477 = vrot.lane.b32.xlu0 %v319, 96
      %v478 = vpop.permute.xlu0 %477
      %479 = vrot.lane.b32.xlu0 %v319, 32
      %v480 = vpop.permute.xlu0 %479
      %v481 = vsel %vm344, %v478, 0
      %v483 = vsel %vm344, %v480, 0
      %485 = vmatpush.xpose.msra.mxu0 0.0
      %486 = vmatpush.xpose.msra.mxu0 0.0
      %487 = vmatpush.xpose.msra.mxu0 0.0
      %488 = vmatpush.xpose.msra.mxu0 0.0
      %489 = vmatpush.xpose.msra.mxu0 0.0
      %490 = vmatpush.xpose.msra.mxu0 0.0
      %491 = vmatpush.xpose.msra.mxu0 0.0
      %492 = vmatpush.xpose.msra.mxu0 0.0
      %493 = vmatpush.xpose.msra.mxu0 0.0
      %494 = vmatpush.xpose.msra.mxu0 0.0
      %495 = vmatpush.xpose.msra.mxu0 0.0
      %496 = vmatpush.xpose.msra.mxu0 0.0
      %497 = vmatpush.xpose.msra.mxu0 0.0
      %498 = vmatpush.xpose.msra.mxu0 0.0
      %499 = vmatpush.xpose.msra.mxu0 0.0
      %500 = vmatpush.xpose.msra.mxu0 %v483
      %501 = vmatmul.f32.gmra.mxu0 %v481
      %v502 = vpop.f32.mrf.mxu0
      %v503 = vadd.f32 0.0, %v502
      %504 = vdwg.mxu0
      %v505 = vmul.f32 %v503, 0.25
      %v506 = vsel %vm370, %v505, -inf
      %507 = vmax.xlane.f32.xlu0 %v506
      %v508 = vpop.xlane.xlu0 %507
      %v509 = vsub.f32 %v505, %v508
      %v510 = vmul.f32 %v509, 1.442695
      %v511 = vpow.pop %v510
      %v512 = vsel %vm370, %v511, 0.0
      %513 = vadd.xlane.f32.xlu0 %v512
      %v514 = vpop.xlane.xlu0 %513
      %v515 = vrcp.pop %v514
      %v516 = vmul.f32 %v511, %v515
      %517 = vrot.lane.b32.xlu0 %v339, 96
      %v518 = vpop.permute.xlu0 %517
      %v520 = vsel %vm382, %v516, 0
      %v522 = vsel %vm386, %v518, 0
      %524 = vmatpush.msra.mxu0 0.0
      %525 = vmatpush.msra.mxu0 0.0
      %526 = vmatpush.msra.mxu0 0.0
      %527 = vmatpush.msra.mxu0 0.0
      %528 = vmatpush.msra.mxu0 0.0
      %529 = vmatpush.msra.mxu0 0.0
      %530 = vmatpush.msra.mxu0 0.0
      %531 = vmatpush.msra.mxu0 0.0
      %532 = vmatpush.msra.mxu0 0.0
      %533 = vmatpush.msra.mxu0 0.0
      %534 = vmatpush.msra.mxu0 0.0
      %535 = vmatpush.msra.mxu0 0.0
      %536 = vmatpush.msra.mxu0 0.0
      %537 = vmatpush.msra.mxu0 0.0
      %538 = vmatpush.msra.mxu0 0.0
      %539 = vmatpush.msra.mxu0 %v522
      %540 = vmatmul.f32.gmra.mxu0 %v520
      %v541 = vpop.f32.mrf.mxu0
      %v542 = vadd.f32 0.0, %v541
      %543 = vdwg.mxu0
      %544 = vrot.lane.b32.xlu0 %v319, 80
      %v545 = vpop.permute.xlu0 %544
      %546 = vrot.lane.b32.xlu0 %v319, 16
      %v547 = vpop.permute.xlu0 %546
      %v548 = vsel %vm344, %v545, 0
      %v550 = vsel %vm344, %v547, 0
      %552 = vmatpush.xpose.msra.mxu0 0.0
      %553 = vmatpush.xpose.msra.mxu0 0.0
      %554 = vmatpush.xpose.msra.mxu0 0.0
      %555 = vmatpush.xpose.msra.mxu0 0.0
      %556 = vmatpush.xpose.msra.mxu0 0.0
      %557 = vmatpush.xpose.msra.mxu0 0.0
      %558 = vmatpush.xpose.msra.mxu0 0.0
      %559 = vmatpush.xpose.msra.mxu0 0.0
      %560 = vmatpush.xpose.msra.mxu0 0.0
      %561 = vmatpush.xpose.msra.mxu0 0.0
      %562 = vmatpush.xpose.msra.mxu0 0.0
      %563 = vmatpush.xpose.msra.mxu0 0.0
      %564 = vmatpush.xpose.msra.mxu0 0.0
      %565 = vmatpush.xpose.msra.mxu0 0.0
      %566 = vmatpush.xpose.msra.mxu0 0.0
      %567 = vmatpush.xpose.msra.mxu0 %v550
      %568 = vmatmul.f32.gmra.mxu0 %v548
      %v569 = vpop.f32.mrf.mxu0
      %v570 = vadd.f32 0.0, %v569
      %571 = vdwg.mxu0
      %v572 = vmul.f32 %v570, 0.25
      %v573 = vsel %vm370, %v572, -inf
      %574 = vmax.xlane.f32.xlu0 %v573
      %v575 = vpop.xlane.xlu0 %574
      %v576 = vsub.f32 %v572, %v575
      %v577 = vmul.f32 %v576, 1.442695
      %v578 = vpow.pop %v577
      %v579 = vsel %vm370, %v578, 0.0
      %580 = vadd.xlane.f32.xlu0 %v579
      %v581 = vpop.xlane.xlu0 %580
      %v582 = vrcp.pop %v581
      %v583 = vmul.f32 %v578, %v582
      %584 = vrot.lane.b32.xlu0 %v339, 80
      %v585 = vpop.permute.xlu0 %584
      %v587 = vsel %vm382, %v583, 0
      %v589 = vsel %vm386, %v585, 0
      %591 = vmatpush.msra.mxu0 0.0
      %592 = vmatpush.msra.mxu0 0.0
      %593 = vmatpush.msra.mxu0 0.0
      %594 = vmatpush.msra.mxu0 0.0
      %595 = vmatpush.msra.mxu0 0.0
      %596 = vmatpush.msra.mxu0 0.0
      %597 = vmatpush.msra.mxu0 0.0
      %598 = vmatpush.msra.mxu0 0.0
      %599 = vmatpush.msra.mxu0 0.0
      %600 = vmatpush.msra.mxu0 0.0
      %601 = vmatpush.msra.mxu0 0.0
      %602 = vmatpush.msra.mxu0 0.0
      %603 = vmatpush.msra.mxu0 0.0
      %604 = vmatpush.msra.mxu0 0.0
      %605 = vmatpush.msra.mxu0 0.0
      %606 = vmatpush.msra.mxu0 %v589
      %607 = vmatmul.f32.gmra.mxu0 %v587
      %v608 = vpop.f32.mrf.mxu0
      %v609 = vadd.f32 0.0, %v608
      %610 = vdwg.mxu0
      %612 = vrot.lane.b32.xlu0 %v475, 16
      %v613 = vpop.permute.xlu0 %612
      %616 = vrot.lane.b32.xlu0 %v542, 32
      %v617 = vpop.permute.xlu0 %616
      %620 = vrot.lane.b32.xlu0 %v609, 48
      %v621 = vpop.permute.xlu0 %620
      %v623 = vsel %vm344, %v408, %v613
      %vm624 = vcmask 261120
      %v625 = vsel %vm624, %v623, %v617
      %vm626 = vcmask 392192
      %v627 = vsel %vm626, %v625, %v621
      %v628 = vld [vmem:[%s3] sm:$0xff]
      %v629 = vld [vmem:[%s3 + $0x8] sm:$0xff]
      %v630 = vld [vmem:[%s3 + $0x10] sm:$0xff]
      %v631 = vld [vmem:[%s3 + $0x18] sm:$0xff]
      %v632 = vld [vmem:[%s3 + $0x20] sm:$0xff]
      %v633 = vld [vmem:[%s3 + $0x28] sm:$0xff]
      %v634 = vld [vmem:[%s3 + $0x30] sm:$0xff]
      %v635 = vld [vmem:[%s3 + $0x38] sm:$0xff]
      %v636 = vld [vmem:[%s4] sm:$0x1]
      %v638 = vperm.slane %v636, 0
      %v641 = vsel %vm297, %v627, 0
      %643 = vmatpush.msra.mxu0 0.0
      %644 = vmatpush.msra.mxu0 0.0
      %645 = vmatpush.msra.mxu0 0.0
      %646 = vmatpush.msra.mxu0 0.0
      %647 = vmatpush.msra.mxu0 0.0
      %648 = vmatpush.msra.mxu0 0.0
      %649 = vmatpush.msra.mxu0 0.0
      %650 = vmatpush.msra.mxu0 0.0
      %651 = vmatpush.msra.mxu0 %v635
      %652 = vmatpush.msra.mxu0 %v634
      %653 = vmatpush.msra.mxu0 %v633
      %654 = vmatpush.msra.mxu0 %v632
      %655 = vmatpush.msra.mxu0 %v631
      %656 = vmatpush.msra.mxu0 %v630
      %657 = vmatpush.msra.mxu0 %v629
      %658 = vmatpush.msra.mxu0 %v628
      %659 = vmatmul.f32.gmra.mxu0 %v641
      %v660 = vpop.f32.mrf.mxu0
      %v661 = vadd.f32 %v638, %v660
      %662 = vdwg.mxu0
      %v663 = vadd.f32 %v274, %v661
      %vm664 = vcmask 519168
      %v665 = vsel %vm664, %v663, 0.0
      %666 = vadd.xlane.f32.xlu0 %v665
      %v667 = vpop.xlane.xlu0 %666
      %v668 = vrcp.pop 64.0
      %v669 = vmul.f32 64.0, %v668
      %v670 = vsub.f32 1.0, %v669
      %v671 = vmul.f32 %v668, %v670
      %v672 = vadd.f32 %v668, %v671
      %vm673 = vweird.f32 %v668
      %v674 = vsel %vm673, %v668, %v672
      %v675 = vmul.f32 %v667, %v674
      %v676 = vsub.f32 %v663, %v675
      %v677 = vmul.f32 %v676, %v676
      %v678 = vsel %vm664, %v677, 0.0
      %679 = vadd.xlane.f32.xlu0 %v678
      %v680 = vpop.xlane.xlu0 %679
      %v681 = vmul.f32 %v680, %v674
      %v682 = vadd.f32 %v681, 1e-05
      %v683 = vrsqrt.pop %v682
      %v684 = vmul.f32 %v683, %v682
      %v685 = vmul.f32 %v684, %v683
      %v686 = vmul.f32 0.5, %v685
      %v687 = vsub.f32 1.5, %v686
      %v688 = vmul.f32 %v683, %v687
      %vm689 = vweird.f32 %v682
      %vm690 = vweird.f32 %v683
      %vm691 = vmor %vm689, %vm690
      %v692 = vsel %vm691, %v683, %v688
      %v693 = vmul.f32 %v676, %v692
      %v694 = vld [vmem:[%s5] sm:$0x1]
      %v696 = vperm.slane %v694, 0
      %v698 = vmul.f32 %v693, %v696
      %v699 = vld [vmem:[%s6] sm:$0x1]
      %v701 = vperm.slane %v699, 0
      %v703 = vadd.f32 %v698, %v701
      %704 = vst.msk [vmem:[%s273] sm:$0xf] %vm664, %v703
      %p705 = scmp.lt.s32.totalorder %s18, 1
      %s706 = scalar_select %p705, %s18, 1
      %s707 = smul.addr %s706, 4
      %s708 = scalar_lea.vmem %s7, %s707
      // Predicated region
      $region49: #{forward.13} parent=47 // pred_check
        %p709 = pneg %p188
      $region50: #{forward.13} parent=47 // pred_check_branch
        %711 = sbr.rel (%p709) target = $region52
      $region51: #{forward.13} parent=47 // pred_region
        _
      $region52: #{forward.13} parent=47 // pred_fallthru
        _
    $region48: #{forward.13} parent=5 // pred_fallthru
      _
    %p712 = scmp.le.s32.totalorder 2, %s13
    // Predicated region
    $region53: #{forward.13} parent=5 // pred_check
      %p713 = pneg %p712
    $region54: #{forward.13} parent=5 // pred_check_branch
      %715 = sbr.rel (%p713) target = $region56
    $region55: #{forward.13} parent=5 // pred_region
      %s716 = ssub.s32 %s13, 2
      // Predicated region
      $region57: #{forward.13} parent=55 // pred_check
        %p717 = pneg %p194
      $region58: #{forward.13} parent=55 // pred_check_branch
        %719 = sbr.rel (%p717) target = $region60
      $region59: #{forward.13} parent=55 // pred_region
        %p720 = scmp.lt.s32.totalorder %s19, 1
        %s721 = scalar_select %p720, %s19, 1
        %s722 = smul.addr %s721, 4
        %s723 = scalar_lea.vmem %s7, %s722
      $region60: #{forward.13} parent=55 // pred_fallthru
        _
    $region56: #{forward.13} parent=5 // pred_fallthru
      _
  $region6: #{forward.13} parent=0 // loop_footer
    %s17 = sadd.s32 1, %s13
  $region7: #{forward.13} parent=0 // loop_footer_branch
    %12 = sbr.rel target = $region3
  $region8: #{forward.13} parent=0 // loop_exit
    _

// kernel: forward.14
$region0: #{forward.14}
  #allocation0 [shape = 'u32[]', space=smem, size = 0x4, offset = 0x4, fixed_abs, tag = 'smem constant byte address 0x4 - core index']
  #allocation1 [shape = 'u32[72,128]{1,0:T(1,128)}', space=vmem, size = 0x9000, scoped, tag = 'internal scratch']
  #allocation2 [shape = 'f32[2,32]{1,0:T(2,128)}', space=vmem, size = 0x400, scoped, tag = 'scratch operand']
  %s0 = inlined_call_operand.vmem [shape: f32[2,256], index: 0, kind: input, shape index: {}]
  %s1 = inlined_call_operand.vmem [shape: f32[256,32], index: 1, kind: input, shape index: {}]
  %s2 = inlined_call_operand.vmem [shape: f32[1,32], index: 2, kind: input, shape index: {}]
  %s3 = inlined_call_operand.vmem [shape: f32[2,32], index: 3, kind: output, shape index: {}]
  %s4 = sld [smem:[#allocation0]]
  $region30: #{forward.14} parent=0
    _
  %s6 = ssub.s32 1, %s4
  %s7 = scalar_select 0, %s6, %s4
  // Predicated region
  $region2: #{forward.14} parent=0 // pred_check
    _
  $region3: #{forward.14} parent=0 // pred_check_branch
    %9 = sbr.rel (0) target = $region5
  $region4: #{forward.14} parent=0 // pred_region
    _
  $region5: #{forward.14} parent=0 // pred_fallthru
    _
  // Predicated region
  $region6: #{forward.14} parent=0 // pred_check
    _
  $region7: #{forward.14} parent=0 // pred_check_branch
    %11 = sbr.rel (0) target = $region9
  $region8: #{forward.14} parent=0 // pred_region
    _
  $region9: #{forward.14} parent=0 // pred_fallthru
    _
  // Predicated region
  $region10: #{forward.14} parent=0 // pred_check
    _
  $region11: #{forward.14} parent=0 // pred_check_branch
    %13 = sbr.rel (0) target = $region13
  $region12: #{forward.14} parent=0 // pred_region
    _
  $region13: #{forward.14} parent=0 // pred_fallthru
    _
  %p14 = scmp.eq.s32.totalorder 0, 0
  // Predicated region
  $region14: #{forward.14} parent=0 // pred_check
    %p15 = pneg %p14
  $region15: #{forward.14} parent=0 // pred_check_branch
    %17 = sbr.rel (%p15) target = $region17
  $region16: #{forward.14} parent=0 // pred_region
    %vm18 = vcmask 254976
    %19 = vst.msk [vmem:[#allocation2] sm:$0x3] %vm18, 0.0
  $region17: #{forward.14} parent=0 // pred_fallthru
    _
  %v20 = vld [vmem:[#allocation2] sm:$0x3]
  %v21 = vld [vmem:[%s0] sm:$0xf]
  %v22 = vld [vmem:[%s1] sm:$0xff]
  %v23 = vld [vmem:[%s1 + $0x8] sm:$0xff]
  %v24 = vld [vmem:[%s1 + $0x10] sm:$0xff]
  %v25 = vld [vmem:[%s1 + $0x18] sm:$0xff]
  %v26 = vld [vmem:[%s1 + $0x20] sm:$0xff]
  %v27 = vld [vmem:[%s1 + $0x28] sm:$0xff]
  %v28 = vld [vmem:[%s1 + $0x30] sm:$0xff]
  %v29 = vld [vmem:[%s1 + $0x38] sm:$0xff]
  %v30 = vld [vmem:[%s1 + $0x40] sm:$0xff]
  %v31 = vld [vmem:[%s1 + $0x48] sm:$0xff]
  %v32 = vld [vmem:[%s1 + $0x50] sm:$0xff]
  %v33 = vld [vmem:[%s1 + $0x58] sm:$0xff]
  %v34 = vld [vmem:[%s1 + $0x60] sm:$0xff]
  %v35 = vld [vmem:[%s1 + $0x68] sm:$0xff]
  %v36 = vld [vmem:[%s1 + $0x70] sm:$0xff]
  %v37 = vld [vmem:[%s1 + $0x78] sm:$0xff]
  %v38 = vld [vmem:[%s1 + $0x80] sm:$0xff]
  %v39 = vld [vmem:[%s1 + $0x88] sm:$0xff]
  %v40 = vld [vmem:[%s1 + $0x90] sm:$0xff]
  %v41 = vld [vmem:[%s1 + $0x98] sm:$0xff]
  %v42 = vld [vmem:[%s1 + $0xa0] sm:$0xff]
  %v43 = vld [vmem:[%s1 + $0xa8] sm:$0xff]
  %v44 = vld [vmem:[%s1 + $0xb0] sm:$0xff]
  %v45 = vld [vmem:[%s1 + $0xb8] sm:$0xff]
  %v46 = vld [vmem:[%s1 + $0xc0] sm:$0xff]
  %v47 = vld [vmem:[%s1 + $0xc8] sm:$0xff]
  %v48 = vld [vmem:[%s1 + $0xd0] sm:$0xff]
  %v49 = vld [vmem:[%s1 + $0xd8] sm:$0xff]
  %v50 = vld [vmem:[%s1 + $0xe0] sm:$0xff]
  %v51 = vld [vmem:[%s1 + $0xe8] sm:$0xff]
  %v52 = vld [vmem:[%s1 + $0xf0] sm:$0xff]
  %v53 = vld [vmem:[%s1 + $0xf8] sm:$0xff]
  %55 = vst [vmem:[#allocation1] ss:$4 sm:$0xff] %v21
  %v56 = vld.sshfl [vmem:[#allocation1] sm:$0xff pattern:$0x73625140]
  %v57 = vld.sshfl [vmem:[#allocation1 + $0x8] sm:$0xff pattern:$0x73625140]
  %60 = vmatpush.msra.mxu0 %v37
  %61 = vmatpush.msra.mxu0 %v36
  %62 = vmatpush.msra.mxu0 %v35
  %63 = vmatpush.msra.mxu0 %v34
  %64 = vmatpush.msra.mxu0 %v33
  %65 = vmatpush.msra.mxu0 %v32
  %66 = vmatpush.msra.mxu0 %v31
  %67 = vmatpush.msra.mxu0 %v30
  %68 = vmatpush.msra.mxu0 %v29
  %69 = vmatpush.msra.mxu0 %v28
  %70 = vmatpush.msra.mxu0 %v27
  %71 = vmatpush.msra.mxu0 %v26
  %72 = vmatpush.msra.mxu0 %v25
  %73 = vmatpush.msra.mxu0 %v24
  %74 = vmatpush.msra.mxu0 %v23
  %75 = vmatpush.msra.mxu0 %v22
  %76 = vmatmul.f32.gmra.mxu0 %v56
  %v77 = vpop.f32.mrf.mxu0
  %v78 = vadd.f32 0.0, %v77
  %79 = vdwg.mxu0
  %80 = vmatpush.msra.mxu0 %v53
  %81 = vmatpush.msra.mxu0 %v52
  %82 = vmatpush.msra.mxu0 %v51
  %83 = vmatpush.msra.mxu0 %v50
  %84 = vmatpush.msra.mxu0 %v49
  %85 = vmatpush.msra.mxu0 %v48
  %86 = vmatpush.msra.mxu0 %v47
  %87 = vmatpush.msra.mxu0 %v46
  %88 = vmatpush.msra.mxu0 %v45
  %89 = vmatpush.msra.mxu0 %v44
  %90 = vmatpush.msra.mxu0 %v43
  %91 = vmatpush.msra.mxu0 %v42
  %92 = vmatpush.msra.mxu0 %v41
  %93 = vmatpush.msra.mxu0 %v40
  %94 = vmatpush.msra.mxu0 %v39
  %95 = vmatpush.msra.mxu0 %v38
  %96 = vmatmul.f32.gmra.mxu0 %v57
  %v97 = vpop.f32.mrf.mxu0
  %v98 = vadd.f32 %v78, %v97
  %99 = vdwg.mxu0
  %v100 = vadd.f32 %v20, %v98
  %vm101 = vcmask 254976
  %102 = vst.msk [vmem:[#allocation2] sm:$0x3] %vm101, %v100
  // Predicated region
  $region18: #{forward.14} parent=0 // pred_check
    %p103 = pneg %p14
  $region19: #{forward.14} parent=0 // pred_check_branch
    %105 = sbr.rel (%p103) target = $region21
  $region20: #{forward.14} parent=0 // pred_region
    %v106 = vld [vmem:[#allocation2] sm:$0x3]
    %v107 = vld [vmem:[%s2] sm:$0x1]
    %v109 = vperm.slane %v107, 0
    %v111 = vadd.f32 %v106, %v109
    %112 = vst.msk [vmem:[%s3] sm:$0x3] %vm101, %v111
  $region21: #{forward.14} parent=0 // pred_fallthru
    _
  // Predicated region
  $region22: #{forward.14} parent=0 // pred_check
    _
  $region23: #{forward.14} parent=0 // pred_check_branch
    %114 = sbr.rel (0) target = $region25
  $region24: #{forward.14} parent=0 // pred_region
    _
  $region25: #{forward.14} parent=0 // pred_fallthru
    _
  // Predicated region
  $region26: #{forward.14} parent=0 // pred_check
    _
  $region27: #{forward.14} parent=0 // pred_check_branch
    %116 = sbr.rel (0) target = $region29
  $region28: #{forward.14} parent=0 // pred_region
    _
  $region29: #{forward.14} parent=0 // pred_fallthru
    _

// kernel: forward.15
$region0: #{forward.15}
  #allocation0 [shape = 'u32[]', space=smem, size = 0x4, offset = 0x4, fixed_abs, tag = 'smem constant byte address 0x4 - core index']
  #allocation1 [shape = 'u32[72,128]{1,0:T(1,128)}', space=vmem, size = 0x9000, scoped, tag = 'internal scratch']
  #allocation2 [shape = 'f32[2,256]{1,0:T(2,128)}', space=vmem, size = 0x800, scoped, tag = 'scratch operand']
  %s0 = inlined_call_operand.vmem [shape: f32[2,16], index: 0, kind: input, shape index: {}]
  %s1 = inlined_call_operand.vmem [shape: f32[16,256], index: 1, kind: input, shape index: {}]
  %s2 = inlined_call_operand.vmem [shape: f32[1,256], index: 2, kind: input, shape index: {}]
  %s3 = inlined_call_operand.vmem [shape: f32[2,256], index: 3, kind: output, shape index: {}]
  %s4 = sld [smem:[#allocation0]]
  $region30: #{forward.15} parent=0
    _
  %s6 = ssub.s32 1, %s4
  %s7 = scalar_select 0, %s6, %s4
  // Predicated region
  $region2: #{forward.15} parent=0 // pred_check
    _
  $region3: #{forward.15} parent=0 // pred_check_branch
    %9 = sbr.rel (0) target = $region5
  $region4: #{forward.15} parent=0 // pred_region
    _
  $region5: #{forward.15} parent=0 // pred_fallthru
    _
  // Predicated region
  $region6: #{forward.15} parent=0 // pred_check
    _
  $region7: #{forward.15} parent=0 // pred_check_branch
    %11 = sbr.rel (0) target = $region9
  $region8: #{forward.15} parent=0 // pred_region
    _
  $region9: #{forward.15} parent=0 // pred_fallthru
    _
  // Predicated region
  $region10: #{forward.15} parent=0 // pred_check
    _
  $region11: #{forward.15} parent=0 // pred_check_branch
    %13 = sbr.rel (0) target = $region13
  $region12: #{forward.15} parent=0 // pred_region
    _
  $region13: #{forward.15} parent=0 // pred_fallthru
    _
  %p14 = scmp.eq.s32.totalorder 0, 0
  // Predicated region
  $region14: #{forward.15} parent=0 // pred_check
    %p15 = pneg %p14
  $region15: #{forward.15} parent=0 // pred_check_branch
    %17 = sbr.rel (%p15) target = $region17
  $region16: #{forward.15} parent=0 // pred_region
    %18 = vst [vmem:[#allocation2] sm:$0xf] 0.0
  $region17: #{forward.15} parent=0 // pred_fallthru
    _
  %v19 = vld [vmem:[#allocation2] sm:$0xf]
  %v20 = vld [vmem:[%s0] sm:$0x3]
  %v21 = vld [vmem:[%s1] sm:$0xff]
  %v22 = vld [vmem:[%s1 + $0x8] sm:$0xff]
  %v23 = vld [vmem:[%s1 + $0x10] sm:$0xff]
  %v24 = vld [vmem:[%s1 + $0x18] sm:$0xff]
  %vm25 = vcmask 130048
  %v27 = vsel %vm25, %v20, 0
  %29 = vmatpush.msra.mxu0 0.0
  %30 = vmatpush.msra.mxu0 0.0
  %31 = vmatpush.msra.mxu0 0.0
  %32 = vmatpush.msra.mxu0 0.0
  %33 = vmatpush.msra.mxu0 0.0
  %34 = vmatpush.msra.mxu0 0.0
  %35 = vmatpush.msra.mxu0 0.0
  %36 = vmatpush.msra.mxu0 0.0
  %37 = vmatpush.msra.mxu0 0.0
  %38 = vmatpush.msra.mxu0 0.0
  %39 = vmatpush.msra.mxu0 0.0
  %40 = vmatpush.msra.mxu0 0.0
  %41 = vmatpush.msra.mxu0 0.0
  %42 = vmatpush.msra.mxu0 0.0
  %43 = vmatpush.msra.mxu0 %v23
  %44 = vmatpush.msra.mxu0 %v21
  %45 = vmatmul.f32.gmra.mxu0 %v27
  %v46 = vpop.f32.mrf.mxu0
  %v47 = vadd.f32 0.0, %v46
  %48 = vdwg.mxu0
  %49 = vmatpush.msra.mxu0 0.0
  %50 = vmatpush.msra.mxu0 0.0
  %51 = vmatpush.msra.mxu0 0.0
  %52 = vmatpush.msra.mxu0 0.0
  %53 = vmatpush.msra.mxu0 0.0
  %54 = vmatpush.msra.mxu0 0.0
  %55 = vmatpush.msra.mxu0 0.0
  %56 = vmatpush.msra.mxu0 0.0
  %57 = vmatpush.msra.mxu0 0.0
  %58 = vmatpush.msra.mxu0 0.0
  %59 = vmatpush.msra.mxu0 0.0
  %60 = vmatpush.msra.mxu0 0.0
  %61 = vmatpush.msra.mxu0 0.0
  %62 = vmatpush.msra.mxu0 0.0
  %63 = vmatpush.msra.mxu0 %v24
  %64 = vmatpush.msra.mxu0 %v22
  %65 = vmatmul.f32.gmra.mxu0 %v27
  %v66 = vpop.f32.mrf.mxu0
  %v67 = vadd.f32 0.0, %v66
  %68 = vdwg.mxu0
  %v71 = vrot.slane %v67, 6
  %vm72 = vcmask 1041408
  %v73 = vsel %vm72, %v47, %v71
  %v75 = vadd.f32 %v19, %v73
  %76 = vst [vmem:[#allocation2] sm:$0xf] %v75
  // Predicated region
  $region18: #{forward.15} parent=0 // pred_check
    %p77 = pneg %p14
  $region19: #{forward.15} parent=0 // pred_check_branch
    %79 = sbr.rel (%p77) target = $region21
  $region20: #{forward.15} parent=0 // pred_region
    %v80 = vld [vmem:[#allocation2] sm:$0xf]
    %v81 = vld [vmem:[%s2] sm:$0x3]
    %v83 = vperm.slane %v81, 0
    %v84 = vperm.slane %v81, 1
    %v85 = vrot.slane %v84, 6
    %v86 = vsel %vm72, %v83, %v85
    %v88 = vadd.f32 %v80, %v86
    %89 = vst [vmem:[%s3] sm:$0xf] %v88
  $region21: #{forward.15} parent=0 // pred_fallthru
    _
  // Predicated region
  $region22: #{forward.15} parent=0 // pred_check
    _
  $region23: #{forward.15} parent=0 // pred_check_branch
    %91 = sbr.rel (0) target = $region25
  $region24: #{forward.15} parent=0 // pred_region
    _
  $region25: #{forward.15} parent=0 // pred_fallthru
    _
  // Predicated region
  $region26: #{forward.15} parent=0 // pred_check
    _
  $region27: #{forward.15} parent=0 // pred_check_branch
    %93 = sbr.rel (0) target = $region29
  $region28: #{forward.15} parent=0 // pred_region
    _
  $region29: #{forward.15} parent=0 // pred_fallthru
    _

// kernel: forward.16
$region0: #{forward.16}
  #allocation0 [shape = 'u32[]', space=smem, size = 0x4, offset = 0x4, fixed_abs, tag = 'smem constant byte address 0x4 - core index']
  #allocation1 [shape = 'u32[72,128]{1,0:T(1,128)}', space=vmem, size = 0x9000, scoped, tag = 'internal scratch']
  %s0 = inlined_call_operand.vmem [shape: f32[2,6,6,16], index: 0, kind: input, shape index: {}]
  %s1 = inlined_call_operand.vmem [shape: f32[16,16,8], index: 1, kind: input, shape index: {}]
  %s2 = inlined_call_operand.vmem [shape: f32[1,8], index: 2, kind: input, shape index: {}]
  %s3 = inlined_call_operand.vmem [shape: f32[2,4,4,4,8], index: 3, kind: output, shape index: {}]
  %s4 = sld [smem:[#allocation0]]
  $region45: #{forward.16} parent=0
    _
  %s6 = ssub.s32 1, %s4
  %s7 = scalar_select 0, %s6, %s4
  loop: start=0, step=1, limit=4
  $region2: #{forward.16} parent=0 // loop_pre_header
    _
  $region3: #{forward.16} parent=0 // loop_header
    %s9 = sphi 0, %s13
    %p10 = scmp.ge.s32.totalorder %s9, 4
    %s19 = sphi 0, %s21
    %s22 = sphi 0, %s19
    %s23 = sphi 0, %s22
    %s39 = sphi 0, %s23
    %s43 = sphi 0, %s43
    %s45 = sphi 0, %s43
    %s46 = sphi 0, %s45
    %s60 = sphi 0, %s46
    %s64 = sphi 0, %s64
    %s66 = sphi 0, %s64
    %s67 = sphi 0, %s66
    %s81 = sphi 0, %s67
    %s87 = sphi 0, %s89
    %s90 = sphi 0, %s87
    %s91 = sphi 0, %s90
    %s107 = sphi 0, %s91
  $region4: #{forward.16} parent=0 // loop_header_branch
    %12 = sbr.rel (%p10) target = $region8
  $region5: #{forward.16} parent=0 // loop_body
    %s14 = ssub.s32 %s9, 1
    %s15 = ssub.s32 %s9, 2
    %s16 = sadd.s32 %s9, 1
    %s17 = ssub.s32 %s9, %s16
    %p18 = scmp.eq.s32.totalorder %s17, 0
    %s20 = sadd.s32 %s19, 1
    %s21 = scalar_select %p18, %s19, %s20
    %p24 = pneg %p18
    %p25 = scmp.eq.s32.totalorder %s9, 1
    %p26 = por %p24, %p25
    %p27 = scmp.ne.s32.totalorder %s19, %s22
    %p28 = scmp.eq.s32.totalorder %s9, 0
    %p29 = por %p27, %p28
    %p30 = scmp.ne.s32.totalorder %s19, %s22
    %p31 = scmp.eq.s32.totalorder %s14, 1
    %p32 = por %p30, %p31
    %p33 = scmp.ne.s32.totalorder %s22, %s23
    %p34 = scmp.eq.s32.totalorder %s14, 0
    %p35 = por %p33, %p34
    %p36 = scmp.ne.s32.totalorder %s22, %s23
    %p37 = scmp.eq.s32.totalorder %s15, 1
    %p38 = por %p36, %p37
    %p40 = scmp.ne.s32.totalorder %s23, %s39
    %p41 = scmp.eq.s32.totalorder %s15, 0
    %p42 = por %p40, %p41
    %s44 = sadd.s32 %s43, 1
    %p47 = scmp.eq.s32.totalorder %s9, 1
    %p48 = scmp.ne.s32.totalorder %s43, %s45
    %p49 = scmp.eq.s32.totalorder %s9, 0
    %p50 = por %p48, %p49
    %p51 = scmp.ne.s32.totalorder %s43, %s45
    %p52 = scmp.eq.s32.totalorder %s14, 1
    %p53 = por %p51, %p52
    %p54 = scmp.ne.s32.totalorder %s45, %s46
    %p55 = scmp.eq.s32.totalorder %s14, 0
    %p56 = por %p54, %p55
    %p57 = scmp.ne.s32.totalorder %s45, %s46
    %p58 = scmp.eq.s32.totalorder %s15, 1
    %p59 = por %p57, %p58
    %p61 = scmp.ne.s32.totalorder %s46, %s60
    %p62 = scmp.eq.s32.totalorder %s15, 0
    %p63 = por %p61, %p62
    %s65 = sadd.s32 %s64, 1
    %p68 = scmp.eq.s32.totalorder %s9, 1
    %p69 = scmp.ne.s32.totalorder %s64, %s66
    %p70 = scmp.eq.s32.totalorder %s9, 0
    %p71 = por %p69, %p70
    %p72 = scmp.ne.s32.totalorder %s64, %s66
    %p73 = scmp.eq.s32.totalorder %s14, 1
    %p74 = por %p72, %p73
    %p75 = scmp.ne.s32.totalorder %s66, %s67
    %p76 = scmp.eq.s32.totalorder %s14, 0
    %p77 = por %p75, %p76
    %p78 = scmp.ne.s32.totalorder %s66, %s67
    %p79 = scmp.eq.s32.totalorder %s15, 1
    %p80 = por %p78, %p79
    %p82 = scmp.ne.s32.totalorder %s67, %s81
    %p83 = scmp.eq.s32.totalorder %s15, 0
    %p84 = por %p82, %p83
    %s85 = ssub.s32 %s9, %s16
    %p86 = scmp.eq.s32.totalorder %s85, 0
    %s88 = sadd.s32 %s87, 1
    %s89 = scalar_select %p86, %s87, %s88
    %p92 = pneg %p86
    %p93 = scmp.eq.s32.totalorder %s9, 1
    %p94 = por %p92, %p93
    %p95 = scmp.ne.s32.totalorder %s87, %s90
    %p96 = scmp.eq.s32.totalorder %s9, 0
    %p97 = por %p95, %p96
    %p98 = scmp.ne.s32.totalorder %s87, %s90
    %p99 = scmp.eq.s32.totalorder %s14, 1
    %p100 = por %p98, %p99
    %p101 = scmp.ne.s32.totalorder %s90, %s91
    %p102 = scmp.eq.s32.totalorder %s14, 0
    %p103 = por %p101, %p102
    %p104 = scmp.ne.s32.totalorder %s90, %s91
    %p105 = scmp.eq.s32.totalorder %s15, 1
    %p106 = por %p104, %p105
    %p108 = scmp.ne.s32.totalorder %s91, %s107
    %p109 = scmp.eq.s32.totalorder %s15, 0
    %p110 = por %p108, %p109
    %p111 = scmp.le.s32.totalorder 1, %s9
    %p112 = scmp.lt.s32.totalorder %s9, 3
    %p113 = pnand %p111, %p112
    %p114 = pneg %p113
    // Predicated region
    $region9: #{forward.16} parent=5 // pred_check
      _
    $region10: #{forward.16} parent=5 // pred_check_branch
      %116 = sbr.rel (%p113) target = $region12
    $region11: #{forward.16} parent=5 // pred_region
      %s117 = ssub.s32 %s9, 1
      // Predicated region
      $region13: #{forward.16} parent=11 // pred_check
        %p118 = pneg %p56
      $region14: #{forward.16} parent=11 // pred_check_branch
        %120 = sbr.rel (%p118) target = $region16
      $region15: #{forward.16} parent=11 // pred_region
        _
      $region16: #{forward.16} parent=11 // pred_fallthru
        _
      // Predicated region
      $region17: #{forward.16} parent=11 // pred_check
        %p121 = pneg %p77
      $region18: #{forward.16} parent=11 // pred_check_branch
        %123 = sbr.rel (%p121) target = $region20
      $region19: #{forward.16} parent=11 // pred_region
        _
      $region20: #{forward.16} parent=11 // pred_fallthru
        _
    $region12: #{forward.16} parent=5 // pred_fallthru
      _
    %p124 = scmp.lt.s32.totalorder %s9, 2
    // Predicated region
    $region21: #{forward.16} parent=5 // pred_check
      %p125 = pneg %p124
    $region22: #{forward.16} parent=5 // pred_check_branch
      %127 = sbr.rel (%p125) target = $region24
    $region23: #{forward.16} parent=5 // pred_region
      // Predicated region
      $region25: #{forward.16} parent=23 // pred_check
        %p128 = pneg %p29
      $region26: #{forward.16} parent=23 // pred_check_branch
        %130 = sbr.rel (%p128) target = $region28
      $region27: #{forward.16} parent=23 // pred_region
        %p131 = scmp.lt.s32.totalorder %s9, 1
        %s132 = scalar_select %p131, %s9, 1
        %s133 = smul.addr %s132, 6
        %s134 = smul.addr %s133, 8
        %s135 = scalar_lea.vmem %s0, %s134
      $region28: #{forward.16} parent=23 // pred_fallthru
        _
    $region24: #{forward.16} parent=5 // pred_fallthru
      _
    %p136 = scmp.le.s32.totalorder 1, %s9
    %p137 = scmp.lt.s32.totalorder %s9, 3
    %p138 = pnand %p136, %p137
    %p139 = pneg %p138
    // Predicated region
    $region29: #{forward.16} parent=5 // pred_check
      _
    $region30: #{forward.16} parent=5 // pred_check_branch
      %141 = sbr.rel (%p138) target = $region32
    $region31: #{forward.16} parent=5 // pred_region
      %s142 = ssub.s32 %s9, 1
      %p143 = scmp.lt.s32.totalorder %s14, 1
      %s144 = scalar_select %p143, %s14, 1
      %s145 = smul.addr %s144, 6
      %s146 = smul.addr %s145, 8
      %s147 = scalar_lea.vmem %s0, %s146
      %p148 = pneg %p35
      %p149 = pneg %p32
      %p150 = pneg %p56
      %p151 = pneg %p53
      %p152 = pneg %p77
      %p153 = pneg %p74
      %p154 = pneg %p103
      %p155 = pneg %p100
      %p156 = scmp.lt.s32.totalorder %s14, 1
      %s157 = scalar_select %p156, %s14, 1
      %s158 = smul.addr %s157, 16
      %s159 = smul.addr %s158, 4
      %s160 = scalar_lea.vmem %s3, %s159
      %p161 = scmp.lt.s32.totalorder %s14, 1
      %s162 = scalar_select %p161, %s14, 1
      %s163 = smul.addr %s162, 6
      %s164 = smul.addr %s163, 8
      %s165 = scalar_lea.vmem %s0, %s164
      %p166 = scmp.lt.s32.totalorder %s14, 1
      %s167 = scalar_select %p166, %s14, 1
      %s168 = smul.addr %s167, 16
      %s169 = smul.addr %s168, 4
      %s170 = scalar_lea.vmem %s3, %s169
      %v171 = vld [vmem:[%s2] sm:$0x1]
      %v172 = vld [vmem:[%s165] sm:$0x3f]
      %v173 = vld [vmem:[%s165 + $0x8] sm:$0x3f]
      %v174 = vld [vmem:[%s165 + $0x10] sm:$0x3f]
      %v175 = vld [vmem:[%s165 + $0x18] sm:$0x3f]
      %v176 = vld [vmem:[%s165 + $0x20] sm:$0x3f]
      %v177 = vld [vmem:[%s165 + $0x28] sm:$0x3f]
      %v179 = vperm.slane %v171, 0
      %v181 = vadd.f32 %v179, 0.0
      %v182 = vld [vmem:[%s1] sm:$0xff]
      %v183 = vld [vmem:[%s1 + $0x8] sm:$0xff]
      %vm184 = vcmask 130048
      %v186 = vsel %vm184, %v172, 0
      %188 = vmatpush.msra.mxu0 0.0
      %189 = vmatpush.msra.mxu0 0.0
      %190 = vmatpush.msra.mxu0 0.0
      %191 = vmatpush.msra.mxu0 0.0
      %192 = vmatpush.msra.mxu0 0.0
      %193 = vmatpush.msra.mxu0 0.0
      %194 = vmatpush.msra.mxu0 0.0
      %195 = vmatpush.msra.mxu0 0.0
      %196 = vmatpush.msra.mxu0 0.0
      %197 = vmatpush.msra.mxu0 0.0
      %198 = vmatpush.msra.mxu0 0.0
      %199 = vmatpush.msra.mxu0 0.0
      %200 = vmatpush.msra.mxu0 0.0
      %201 = vmatpush.msra.mxu0 0.0
      %202 = vmatpush.msra.mxu0 %v183
      %203 = vmatpush.msra.mxu0 %v182
      %204 = vmatmul.f32.gmra.mxu0 %v186
      %v205 = vpop.f32.mrf.mxu0
      %v206 = vadd.f32 0.0, %v205
      %207 = vdwg.mxu0
      %v209 = vsel %vm184, %v173, 0
      %211 = vmatpush.msra.mxu0 0.0
      %212 = vmatpush.msra.mxu0 0.0
      %213 = vmatpush.msra.mxu0 0.0
      %214 = vmatpush.msra.mxu0 0.0
      %215 = vmatpush.msra.mxu0 0.0
      %216 = vmatpush.msra.mxu0 0.0
      %217 = vmatpush.msra.mxu0 0.0
      %218 = vmatpush.msra.mxu0 0.0
      %219 = vmatpush.msra.mxu0 0.0
      %220 = vmatpush.msra.mxu0 0.0
      %221 = vmatpush.msra.mxu0 0.0
      %222 = vmatpush.msra.mxu0 0.0
      %223 = vmatpush.msra.mxu0 0.0
      %224 = vmatpush.msra.mxu0 0.0
      %225 = vmatpush.msra.mxu0 %v183
      %226 = vmatpush.msra.mxu0 %v182
      %227 = vmatmul.f32.gmra.mxu0 %v209
      %v228 = vpop.f32.mrf.mxu0
      %v229 = vadd.f32 0.0, %v228
      %230 = vdwg.mxu0
      %v232 = vsel %vm184, %v174, 0
      %234 = vmatpush.msra.mxu0 0.0
      %235 = vmatpush.msra.mxu0 0.0
      %236 = vmatpush.msra.mxu0 0.0
      %237 = vmatpush.msra.mxu0 0.0
      %238 = vmatpush.msra.mxu0 0.0
      %239 = vmatpush.msra.mxu0 0.0
      %240 = vmatpush.msra.mxu0 0.0
      %241 = vmatpush.msra.mxu0 0.0
      %242 = vmatpush.msra.mxu0 0.0
      %243 = vmatpush.msra.mxu0 0.0
      %244 = vmatpush.msra.mxu0 0.0
      %245 = vmatpush.msra.mxu0 0.0
      %246 = vmatpush.msra.mxu0 0.0
      %247 = vmatpush.msra.mxu0 0.0
      %248 = vmatpush.msra.mxu0 %v183
      %249 = vmatpush.msra.mxu0 %v182
      %250 = vmatmul.f32.gmra.mxu0 %v232
      %v251 = vpop.f32.mrf.mxu0
      %v252 = vadd.f32 0.0, %v251
      %253 = vdwg.mxu0
      %v255 = vsel %vm184, %v175, 0
      %257 = vmatpush.msra.mxu0 0.0
      %258 = vmatpush.msra.mxu0 0.0
      %259 = vmatpush.msra.mxu0 0.0
      %260 = vmatpush.msra.mxu0 0.0
      %261 = vmatpush.msra.mxu0 0.0
      %262 = vmatpush.msra.mxu0 0.0
      %263 = vmatpush.msra.mxu0 0.0
      %264 = vmatpush.msra.mxu0 0.0
      %265 = vmatpush.msra.mxu0 0.0
      %266 = vmatpush.msra.mxu0 0.0
      %267 = vmatpush.msra.mxu0 0.0
      %268 = vmatpush.msra.mxu0 0.0
      %269 = vmatpush.msra.mxu0 0.0
      %270 = vmatpush.msra.mxu0 0.0
      %271 = vmatpush.msra.mxu0 %v183
      %272 = vmatpush.msra.mxu0 %v182
      %273 = vmatmul.f32.gmra.mxu0 %v255
      %v274 = vpop.f32.mrf.mxu0
      %v275 = vadd.f32 0.0, %v274
      %276 = vdwg.mxu0
      %v277 = vadd.f32 %v181, %v206
      %v278 = vadd.f32 %v181, %v229
      %v279 = vadd.f32 %v181, %v252
      %v280 = vadd.f32 %v181, %v275
      %s281 = scalar_lea.vmem %s1, 16
      %v282 = vld [vmem:[%s281] sm:$0xff]
      %v283 = vld [vmem:[%s281 + $0x8] sm:$0xff]
      %v284 = vrot.slane %v172, 1
      %v285 = vsel %vm184, %v284, 0
      %287 = vmatpush.msra.mxu0 0.0
      %288 = vmatpush.msra.mxu0 0.0
      %289 = vmatpush.msra.mxu0 0.0
      %290 = vmatpush.msra.mxu0 0.0
      %291 = vmatpush.msra.mxu0 0.0
      %292 = vmatpush.msra.mxu0 0.0
      %293 = vmatpush.msra.mxu0 0.0
      %294 = vmatpush.msra.mxu0 0.0
      %295 = vmatpush.msra.mxu0 0.0
      %296 = vmatpush.msra.mxu0 0.0
      %297 = vmatpush.msra.mxu0 0.0
      %298 = vmatpush.msra.mxu0 0.0
      %299 = vmatpush.msra.mxu0 0.0
      %300 = vmatpush.msra.mxu0 0.0
      %301 = vmatpush.msra.mxu0 %v283
      %302 = vmatpush.msra.mxu0 %v282
      %303 = vmatmul.f32.gmra.mxu0 %v285
      %v304 = vpop.f32.mrf.mxu0
      %v305 = vadd.f32 0.0, %v304
      %306 = vdwg.mxu0
      %v307 = vrot.slane %v173, 1
      %v308 = vsel %vm184, %v307, 0
      %310 = vmatpush.msra.mxu0 0.0
      %311 = vmatpush.msra.mxu0 0.0
      %312 = vmatpush.msra.mxu0 0.0
      %313 = vmatpush.msra.mxu0 0.0
      %314 = vmatpush.msra.mxu0 0.0
      %315 = vmatpush.msra.mxu0 0.0
      %316 = vmatpush.msra.mxu0 0.0
      %317 = vmatpush.msra.mxu0 0.0
      %318 = vmatpush.msra.mxu0 0.0
      %319 = vmatpush.msra.mxu0 0.0
      %320 = vmatpush.msra.mxu0 0.0
      %321 = vmatpush.msra.mxu0 0.0
      %322 = vmatpush.msra.mxu0 0.0
      %323 = vmatpush.msra.mxu0 0.0
      %324 = vmatpush.msra.mxu0 %v283
      %325 = vmatpush.msra.mxu0 %v282
      %326 = vmatmul.f32.gmra.mxu0 %v308
      %v327 = vpop.f32.mrf.mxu0
      %v328 = vadd.f32 0.0, %v327
      %329 = vdwg.mxu0
      %v330 = vrot.slane %v174, 1
      %v331 = vsel %vm184, %v330, 0
      %333 = vmatpush.msra.mxu0 0.0
      %334 = vmatpush.msra.mxu0 0.0
      %335 = vmatpush.msra.mxu0 0.0
      %336 = vmatpush.msra.mxu0 0.0
      %337 = vmatpush.msra.mxu0 0.0
      %338 = vmatpush.msra.mxu0 0.0
      %339 = vmatpush.msra.mxu0 0.0
      %340 = vmatpush.msra.mxu0 0.0
      %341 = vmatpush.msra.mxu0 0.0
      %342 = vmatpush.msra.mxu0 0.0
      %343 = vmatpush.msra.mxu0 0.0
      %344 = vmatpush.msra.mxu0 0.0
      %345 = vmatpush.msra.mxu0 0.0
      %346 = vmatpush.msra.mxu0 0.0
      %347 = vmatpush.msra.mxu0 %v283
      %348 = vmatpush.msra.mxu0 %v282
      %349 = vmatmul.f32.gmra.mxu0 %v331
      %v350 = vpop.f32.mrf.mxu0
      %v351 = vadd.f32 0.0, %v350
      %352 = vdwg.mxu0
      %v353 = vrot.slane %v175, 1
      %v354 = vsel %vm184, %v353, 0
      %356 = vmatpush.msra.mxu0 0.0
      %357 = vmatpush.msra.mxu0 0.0
      %358 = vmatpush.msra.mxu0 0.0
      %359 = vmatpush.msra.mxu0 0.0
      %360 = vmatpush.msra.mxu0 0.0
      %361 = vmatpush.msra.mxu0 0.0
      %362 = vmatpush.msra.mxu0 0.0
      %363 = vmatpush.msra.mxu0 0.0
      %364 = vmatpush.msra.mxu0 0.0
      %365 = vmatpush.msra.mxu0 0.0
      %366 = vmatpush.msra.mxu0 0.0
      %367 = vmatpush.msra.mxu0 0.0
      %368 = vmatpush.msra.mxu0 0.0
      %369 = vmatpush.msra.mxu0 0.0
      %370 = vmatpush.msra.mxu0 %v283
      %371 = vmatpush.msra.mxu0 %v282
      %372 = vmatmul.f32.gmra.mxu0 %v354
      %v373 = vpop.f32.mrf.mxu0
      %v374 = vadd.f32 0.0, %v373
      %375 = vdwg.mxu0
      %v376 = vadd.f32 %v277, %v305
      %v377 = vadd.f32 %v278, %v328
      %v378 = vadd.f32 %v279, %v351
      %v379 = vadd.f32 %v280, %v374
      %s380 = scalar_lea.vmem %s1, 32
      %v381 = vld [vmem:[%s380] sm:$0xff]
      %v382 = vld [vmem:[%s380 + $0x8] sm:$0xff]
      %383 = vmatpush.msra.mxu0 0.0
      %384 = vmatpush.msra.mxu0 0.0
      %385 = vmatpush.msra.mxu0 0.0
      %386 = vmatpush.msra.mxu0 0.0
      %387 = vmatpush.msra.mxu0 0.0
      %388 = vmatpush.msra.mxu0 0.0
      %389 = vmatpush.msra.mxu0 0.0
      %390 = vmatpush.msra.mxu0 0.0
      %391 = vmatpush.msra.mxu0 0.0
      %392 = vmatpush.msra.mxu0 0.0
      %393 = vmatpush.msra.mxu0 0.0
      %394 = vmatpush.msra.mxu0 0.0
      %395 = vmatpush.msra.mxu0 0.0
      %396 = vmatpush.msra.mxu0 0.0
      %397 = vmatpush.msra.mxu0 %v382
      %398 = vmatpush.msra.mxu0 %v381
      %399 = vmatmul.f32.gmra.mxu0 %v209
      %v400 = vpop.f32.mrf.mxu0
      %v401 = vadd.f32 0.0, %v400
      %402 = vdwg.mxu0
      %403 = vmatpush.msra.mxu0 0.0
      %404 = vmatpush.msra.mxu0 0.0
      %405 = vmatpush.msra.mxu0 0.0
      %406 = vmatpush.msra.mxu0 0.0
      %407 = vmatpush.msra.mxu0 0.0
      %408 = vmatpush.msra.mxu0 0.0
      %409 = vmatpush.msra.mxu0 0.0
      %410 = vmatpush.msra.mxu0 0.0
      %411 = vmatpush.msra.mxu0 0.0
      %412 = vmatpush.msra.mxu0 0.0
      %413 = vmatpush.msra.mxu0 0.0
      %414 = vmatpush.msra.mxu0 0.0
      %415 = vmatpush.msra.mxu0 0.0
      %416 = vmatpush.msra.mxu0 0.0
      %417 = vmatpush.msra.mxu0 %v382
      %418 = vmatpush.msra.mxu0 %v381
      %419 = vmatmul.f32.gmra.mxu0 %v232
      %v420 = vpop.f32.mrf.mxu0
      %v421 = vadd.f32 0.0, %v420
      %422 = vdwg.mxu0
      %423 = vmatpush.msra.mxu0 0.0
      %424 = vmatpush.msra.mxu0 0.0
      %425 = vmatpush.msra.mxu0 0.0
      %426 = vmatpush.msra.mxu0 0.0
      %427 = vmatpush.msra.mxu0 0.0
      %428 = vmatpush.msra.mxu0 0.0
      %429 = vmatpush.msra.mxu0 0.0
      %430 = vmatpush.msra.mxu0 0.0
      %431 = vmatpush.msra.mxu0 0.0
      %432 = vmatpush.msra.mxu0 0.0
      %433 = vmatpush.msra.mxu0 0.0
      %434 = vmatpush.msra.mxu0 0.0
      %435 = vmatpush.msra.mxu0 0.0
      %436 = vmatpush.msra.mxu0 0.0
      %437 = vmatpush.msra.mxu0 %v382
      %438 = vmatpush.msra.mxu0 %v381
      %439 = vmatmul.f32.gmra.mxu0 %v255
      %v440 = vpop.f32.mrf.mxu0
      %v441 = vadd.f32 0.0, %v440
      %442 = vdwg.mxu0
      %v444 = vsel %vm184, %v176, 0
      %446 = vmatpush.msra.mxu0 0.0
      %447 = vmatpush.msra.mxu0 0.0
      %448 = vmatpush.msra.mxu0 0.0
      %449 = vmatpush.msra.mxu0 0.0
      %450 = vmatpush.msra.mxu0 0.0
      %451 = vmatpush.msra.mxu0 0.0
      %452 = vmatpush.msra.mxu0 0.0
      %453 = vmatpush.msra.mxu0 0.0
      %454 = vmatpush.msra.mxu0 0.0
      %455 = vmatpush.msra.mxu0 0.0
      %456 = vmatpush.msra.mxu0 0.0
      %457 = vmatpush.msra.mxu0 0.0
      %458 = vmatpush.msra.mxu0 0.0
      %459 = vmatpush.msra.mxu0 0.0
      %460 = vmatpush.msra.mxu0 %v382
      %461 = vmatpush.msra.mxu0 %v381
      %462 = vmatmul.f32.gmra.mxu0 %v444
      %v463 = vpop.f32.mrf.mxu0
      %v464 = vadd.f32 0.0, %v463
      %465 = vdwg.mxu0
      %v466 = vadd.f32 %v376, %v401
      %v467 = vadd.f32 %v377, %v421
      %v468 = vadd.f32 %v378, %v441
      %v469 = vadd.f32 %v379, %v464
      %s470 = scalar_lea.vmem %s1, 48
      %v471 = vld [vmem:[%s470] sm:$0xff]
      %v472 = vld [vmem:[%s470 + $0x8] sm:$0xff]
      %473 = vmatpush.msra.mxu0 0.0
      %474 = vmatpush.msra.mxu0 0.0
      %475 = vmatpush.msra.mxu0 0.0
      %476 = vmatpush.msra.mxu0 0.0
      %477 = vmatpush.msra.mxu0 0.0
      %478 = vmatpush.msra.mxu0 0.0
      %479 = vmatpush.msra.mxu0 0.0
      %480 = vmatpush.msra.mxu0 0.0
      %481 = vmatpush.msra.mxu0 0.0
      %482 = vmatpush.msra.mxu0 0.0
      %483 = vmatpush.msra.mxu0 0.0
      %484 = vmatpush.msra.mxu0 0.0
      %485 = vmatpush.msra.mxu0 0.0
      %486 = vmatpush.msra.mxu0 0.0
      %487 = vmatpush.msra.mxu0 %v472
      %488 = vmatpush.msra.mxu0 %v471
      %489 = vmatmul.f32.gmra.mxu0 %v308
      %v490 = vpop.f32.mrf.mxu0
      %v491 = vadd.f32 0.0, %v490
      %492 = vdwg.mxu0
      %493 = vmatpush.msra.mxu0 0.0
      %494 = vmatpush.msra.mxu0 0.0
      %495 = vmatpush.msra.mxu0 0.0
      %496 = vmatpush.msra.mxu0 0.0
      %497 = vmatpush.msra.mxu0 0.0
      %498 = vmatpush.msra.mxu0 0.0
      %499 = vmatpush.msra.mxu0 0.0
      %500 = vmatpush.msra.mxu0 0.0
      %501 = vmatpush.msra.mxu0 0.0
      %502 = vmatpush.msra.mxu0 0.0
      %503 = vmatpush.msra.mxu0 0.0
      %504 = vmatpush.msra.mxu0 0.0
      %505 = vmatpush.msra.mxu0 0.0
      %506 = vmatpush.msra.mxu0 0.0
      %507 = vmatpush.msra.mxu0 %v472
      %508 = vmatpush.msra.mxu0 %v471
      %509 = vmatmul.f32.gmra.mxu0 %v331
      %v510 = vpop.f32.mrf.mxu0
      %v511 = vadd.f32 0.0, %v510
      %512 = vdwg.mxu0
      %513 = vmatpush.msra.mxu0 0.0
      %514 = vmatpush.msra.mxu0 0.0
      %515 = vmatpush.msra.mxu0 0.0
      %516 = vmatpush.msra.mxu0 0.0
      %517 = vmatpush.msra.mxu0 0.0
      %518 = vmatpush.msra.mxu0 0.0
      %519 = vmatpush.msra.mxu0 0.0
      %520 = vmatpush.msra.mxu0 0.0
      %521 = vmatpush.msra.mxu0 0.0
      %522 = vmatpush.msra.mxu0 0.0
      %523 = vmatpush.msra.mxu0 0.0
      %524 = vmatpush.msra.mxu0 0.0
      %525 = vmatpush.msra.mxu0 0.0
      %526 = vmatpush.msra.mxu0 0.0
      %527 = vmatpush.msra.mxu0 %v472
      %528 = vmatpush.msra.mxu0 %v471
      %529 = vmatmul.f32.gmra.mxu0 %v354
      %v530 = vpop.f32.mrf.mxu0
      %v531 = vadd.f32 0.0, %v530
      %532 = vdwg.mxu0
      %v533 = vrot.slane %v176, 1
      %v534 = vsel %vm184, %v533, 0
      %536 = vmatpush.msra.mxu0 0.0
      %537 = vmatpush.msra.mxu0 0.0
      %538 = vmatpush.msra.mxu0 0.0
      %539 = vmatpush.msra.mxu0 0.0
      %540 = vmatpush.msra.mxu0 0.0
      %541 = vmatpush.msra.mxu0 0.0
      %542 = vmatpush.msra.mxu0 0.0
      %543 = vmatpush.msra.mxu0 0.0
      %544 = vmatpush.msra.mxu0 0.0
      %545 = vmatpush.msra.mxu0 0.0
      %546 = vmatpush.msra.mxu0 0.0
      %547 = vmatpush.msra.mxu0 0.0
      %548 = vmatpush.msra.mxu0 0.0
      %549 = vmatpush.msra.mxu0 0.0
      %550 = vmatpush.msra.mxu0 %v472
      %551 = vmatpush.msra.mxu0 %v471
      %552 = vmatmul.f32.gmra.mxu0 %v534
      %v553 = vpop.f32.mrf.mxu0
      %v554 = vadd.f32 0.0, %v553
      %555 = vdwg.mxu0
      %v556 = vadd.f32 %v466, %v491
      %v557 = vadd.f32 %v467, %v511
      %v558 = vadd.f32 %v468, %v531
      %v559 = vadd.f32 %v469, %v554
      %v560 = vmax.f32 %v556, 0.0
      %v561 = vmax.f32 %v557, 0.0
      %v562 = vmax.f32 %v558, 0.0
      %v563 = vmax.f32 %v559, 0.0
      %vm564 = vcmask 60416
      %565 = vst.msk [vmem:[%s170] sm:$0xf] %vm564, %v560
      %566 = vst.msk [vmem:[%s170 + $0x4] sm:$0xf] %vm564, %v561
      %567 = vst.msk [vmem:[%s170 + $0x8] sm:$0xf] %vm564, %v562
      %568 = vst.msk [vmem:[%s170 + $0xc] sm:$0xf] %vm564, %v563
      %s569 = scalar_lea.vmem %s1, 64
      %v570 = vld [vmem:[%s569] sm:$0xff]
      %v571 = vld [vmem:[%s569 + $0x8] sm:$0xff]
      %572 = vmatpush.msra.mxu0 0.0
      %573 = vmatpush.msra.mxu0 0.0
      %574 = vmatpush.msra.mxu0 0.0
      %575 = vmatpush.msra.mxu0 0.0
      %576 = vmatpush.msra.mxu0 0.0
      %577 = vmatpush.msra.mxu0 0.0
      %578 = vmatpush.msra.mxu0 0.0
      %579 = vmatpush.msra.mxu0 0.0
      %580 = vmatpush.msra.mxu0 0.0
      %581 = vmatpush.msra.mxu0 0.0
      %582 = vmatpush.msra.mxu0 0.0
      %583 = vmatpush.msra.mxu0 0.0
      %584 = vmatpush.msra.mxu0 0.0
      %585 = vmatpush.msra.mxu0 0.0
      %586 = vmatpush.msra.mxu0 %v571
      %587 = vmatpush.msra.mxu0 %v570
      %588 = vmatmul.f32.gmra.mxu0 %v285
      %v589 = vpop.f32.mrf.mxu0
      %v590 = vadd.f32 0.0, %v589
      %591 = vdwg.mxu0
      %592 = vmatpush.msra.mxu0 0.0
      %593 = vmatpush.msra.mxu0 0.0
      %594 = vmatpush.msra.mxu0 0.0
      %595 = vmatpush.msra.mxu0 0.0
      %596 = vmatpush.msra.mxu0 0.0
      %597 = vmatpush.msra.mxu0 0.0
      %598 = vmatpush.msra.mxu0 0.0
      %599 = vmatpush.msra.mxu0 0.0
      %600 = vmatpush.msra.mxu0 0.0
      %601 = vmatpush.msra.mxu0 0.0
      %602 = vmatpush.msra.mxu0 0.0
      %603 = vmatpush.msra.mxu0 0.0
      %604 = vmatpush.msra.mxu0 0.0
      %605 = vmatpush.msra.mxu0 0.0
      %606 = vmatpush.msra.mxu0 %v571
      %607 = vmatpush.msra.mxu0 %v570
      %608 = vmatmul.f32.gmra.mxu0 %v308
      %v609 = vpop.f32.mrf.mxu0
      %v610 = vadd.f32 0.0, %v609
      %611 = vdwg.mxu0
      %612 = vmatpush.msra.mxu0 0.0
      %613 = vmatpush.msra.mxu0 0.0
      %614 = vmatpush.msra.mxu0 0.0
      %615 = vmatpush.msra.mxu0 0.0
      %616 = vmatpush.msra.mxu0 0.0
      %617 = vmatpush.msra.mxu0 0.0
      %618 = vmatpush.msra.mxu0 0.0
      %619 = vmatpush.msra.mxu0 0.0
      %620 = vmatpush.msra.mxu0 0.0
      %621 = vmatpush.msra.mxu0 0.0
      %622 = vmatpush.msra.mxu0 0.0
      %623 = vmatpush.msra.mxu0 0.0
      %624 = vmatpush.msra.mxu0 0.0
      %625 = vmatpush.msra.mxu0 0.0
      %626 = vmatpush.msra.mxu0 %v571
      %627 = vmatpush.msra.mxu0 %v570
      %628 = vmatmul.f32.gmra.mxu0 %v331
      %v629 = vpop.f32.mrf.mxu0
      %v630 = vadd.f32 0.0, %v629
      %631 = vdwg.mxu0
      %632 = vmatpush.msra.mxu0 0.0
      %633 = vmatpush.msra.mxu0 0.0
      %634 = vmatpush.msra.mxu0 0.0
      %635 = vmatpush.msra.mxu0 0.0
      %636 = vmatpush.msra.mxu0 0.0
      %637 = vmatpush.msra.mxu0 0.0
      %638 = vmatpush.msra.mxu0 0.0
      %639 = vmatpush.msra.mxu0 0.0
      %640 = vmatpush.msra.mxu0 0.0
      %641 = vmatpush.msra.mxu0 0.0
      %642 = vmatpush.msra.mxu0 0.0
      %643 = vmatpush.msra.mxu0 0.0
      %644 = vmatpush.msra.mxu0 0.0
      %645 = vmatpush.msra.mxu0 0.0
      %646 = vmatpush.msra.mxu0 %v571
      %647 = vmatpush.msra.mxu0 %v570
      %648 = vmatmul.f32.gmra.mxu0 %v354
      %v649 = vpop.f32.mrf.mxu0
      %v650 = vadd.f32 0.0, %v649
      %651 = vdwg.mxu0
      %v652 = vadd.f32 %v181, %v590
      %v653 = vadd.f32 %v181, %v610
      %v654 = vadd.f32 %v181, %v630
      %v655 = vadd.f32 %v181, %v650
      %s656 = scalar_lea.vmem %s1, 80
      %v657 = vld [vmem:[%s656] sm:$0xff]
      %v658 = vld [vmem:[%s656 + $0x8] sm:$0xff]
      %v659 = vrot.slane %v172, 2
      %v660 = vsel %vm184, %v659, 0
      %662 = vmatpush.msra.mxu0 0.0
      %663 = vmatpush.msra.mxu0 0.0
      %664 = vmatpush.msra.mxu0 0.0
      %665 = vmatpush.msra.mxu0 0.0
      %666 = vmatpush.msra.mxu0 0.0
      %667 = vmatpush.msra.mxu0 0.0
      %668 = vmatpush.msra.mxu0 0.0
      %669 = vmatpush.msra.mxu0 0.0
      %670 = vmatpush.msra.mxu0 0.0
      %671 = vmatpush.msra.mxu0 0.0
      %672 = vmatpush.msra.mxu0 0.0
      %673 = vmatpush.msra.mxu0 0.0
      %674 = vmatpush.msra.mxu0 0.0
      %675 = vmatpush.msra.mxu0 0.0
      %676 = vmatpush.msra.mxu0 %v658
      %677 = vmatpush.msra.mxu0 %v657
      %678 = vmatmul.f32.gmra.mxu0 %v660
      %v679 = vpop.f32.mrf.mxu0
      %v680 = vadd.f32 0.0, %v679
      %681 = vdwg.mxu0
      %v682 = vrot.slane %v173, 2
      %v683 = vsel %vm184, %v682, 0
      %685 = vmatpush.msra.mxu0 0.0
      %686 = vmatpush.msra.mxu0 0.0
      %687 = vmatpush.msra.mxu0 0.0
      %688 = vmatpush.msra.mxu0 0.0
      %689 = vmatpush.msra.mxu0 0.0
      %690 = vmatpush.msra.mxu0 0.0
      %691 = vmatpush.msra.mxu0 0.0
      %692 = vmatpush.msra.mxu0 0.0
      %693 = vmatpush.msra.mxu0 0.0
      %694 = vmatpush.msra.mxu0 0.0
      %695 = vmatpush.msra.mxu0 0.0
      %696 = vmatpush.msra.mxu0 0.0
      %697 = vmatpush.msra.mxu0 0.0
      %698 = vmatpush.msra.mxu0 0.0
      %699 = vmatpush.msra.mxu0 %v658
      %700 = vmatpush.msra.mxu0 %v657
      %701 = vmatmul.f32.gmra.mxu0 %v683
      %v702 = vpop.f32.mrf.mxu0
      %v703 = vadd.f32 0.0, %v702
      %704 = vdwg.mxu0
      %v705 = vrot.slane %v174, 2
      %v706 = vsel %vm184, %v705, 0
      %708 = vmatpush.msra.mxu0 0.0
      %709 = vmatpush.msra.mxu0 0.0
      %710 = vmatpush.msra.mxu0 0.0
      %711 = vmatpush.msra.mxu0 0.0
      %712 = vmatpush.msra.mxu0 0.0
      %713 = vmatpush.msra.mxu0 0.0
      %714 = vmatpush.msra.mxu0 0.0
      %715 = vmatpush.msra.mxu0 0.0
      %716 = vmatpush.msra.mxu0 0.0
      %717 = vmatpush.msra.mxu0 0.0
      %718 = vmatpush.msra.mxu0 0.0
      %719 = vmatpush.msra.mxu0 0.0
      %720 = vmatpush.msra.mxu0 0.0
      %721 = vmatpush.msra.mxu0 0.0
      %722 = vmatpush.msra.mxu0 %v658
      %723 = vmatpush.msra.mxu0 %v657
      %724 = vmatmul.f32.gmra.mxu0 %v706
      %v725 = vpop.f32.mrf.mxu0
      %v726 = vadd.f32 0.0, %v725
      %727 = vdwg.mxu0
      %v728 = vrot.slane %v175, 2
      %v729 = vsel %vm184, %v728, 0
      %731 = vmatpush.msra.mxu0 0.0
      %732 = vmatpush.msra.mxu0 0.0
      %733 = vmatpush.msra.mxu0 0.0
      %734 = vmatpush.msra.mxu0 0.0
      %735 = vmatpush.msra.mxu0 0.0
      %736 = vmatpush.msra.mxu0 0.0
      %737 = vmatpush.msra.mxu0 0.0
      %738 = vmatpush.msra.mxu0 0.0
      %739 = vmatpush.msra.mxu0 0.0
      %740 = vmatpush.msra.mxu0 0.0
      %741 = vmatpush.msra.mxu0 0.0
      %742 = vmatpush.msra.mxu0 0.0
      %743 = vmatpush.msra.mxu0 0.0
      %744 = vmatpush.msra.mxu0 0.0
      %745 = vmatpush.msra.mxu0 %v658
      %746 = vmatpush.msra.mxu0 %v657
      %747 = vmatmul.f32.gmra.mxu0 %v729
      %v748 = vpop.f32.mrf.mxu0
      %v749 = vadd.f32 0.0, %v748
      %750 = vdwg.mxu0
      %v751 = vadd.f32 %v652, %v680
      %v752 = vadd.f32 %v653, %v703
      %v753 = vadd.f32 %v654, %v726
      %v754 = vadd.f32 %v655, %v749
      %s755 = scalar_lea.vmem %s1, 96
      %v756 = vld [vmem:[%s755] sm:$0xff]
      %v757 = vld [vmem:[%s755 + $0x8] sm:$0xff]
      %758 = vmatpush.msra.mxu0 0.0
      %759 = vmatpush.msra.mxu0 0.0
      %760 = vmatpush.msra.mxu0 0.0
      %761 = vmatpush.msra.mxu0 0.0
      %762 = vmatpush.msra.mxu0 0.0
      %763 = vmatpush.msra.mxu0 0.0
      %764 = vmatpush.msra.mxu0 0.0
      %765 = vmatpush.msra.mxu0 0.0
      %766 = vmatpush.msra.mxu0 0.0
      %767 = vmatpush.msra.mxu0 0.0
      %768 = vmatpush.msra.mxu0 0.0
      %769 = vmatpush.msra.mxu0 0.0
      %770 = vmatpush.msra.mxu0 0.0
      %771 = vmatpush.msra.mxu0 0.0
      %772 = vmatpush.msra.mxu0 %v757
      %773 = vmatpush.msra.mxu0 %v756
      %774 = vmatmul.f32.gmra.mxu0 %v308
      %v775 = vpop.f32.mrf.mxu0
      %v776 = vadd.f32 0.0, %v775
      %777 = vdwg.mxu0
      %778 = vmatpush.msra.mxu0 0.0
      %779 = vmatpush.msra.mxu0 0.0
      %780 = vmatpush.msra.mxu0 0.0
      %781 = vmatpush.msra.mxu0 0.0
      %782 = vmatpush.msra.mxu0 0.0
      %783 = vmatpush.msra.mxu0 0.0
      %784 = vmatpush.msra.mxu0 0.0
      %785 = vmatpush.msra.mxu0 0.0
      %786 = vmatpush.msra.mxu0 0.0
      %787 = vmatpush.msra.mxu0 0.0
      %788 = vmatpush.msra.mxu0 0.0
      %789 = vmatpush.msra.mxu0 0.0
      %790 = vmatpush.msra.mxu0 0.0
      %791 = vmatpush.msra.mxu0 0.0
      %792 = vmatpush.msra.mxu0 %v757
      %793 = vmatpush.msra.mxu0 %v756
      %794 = vmatmul.f32.gmra.mxu0 %v331
      %v795 = vpop.f32.mrf.mxu0
      %v796 = vadd.f32 0.0, %v795
      %797 = vdwg.mxu0
      %798 = vmatpush.msra.mxu0 0.0
      %799 = vmatpush.msra.mxu0 0.0
      %800 = vmatpush.msra.mxu0 0.0
      %801 = vmatpush.msra.mxu0 0.0
      %802 = vmatpush.msra.mxu0 0.0
      %803 = vmatpush.msra.mxu0 0.0
      %804 = vmatpush.msra.mxu0 0.0
      %805 = vmatpush.msra.mxu0 0.0
      %806 = vmatpush.msra.mxu0 0.0
      %807 = vmatpush.msra.mxu0 0.0
      %808 = vmatpush.msra.mxu0 0.0
      %809 = vmatpush.msra.mxu0 0.0
      %810 = vmatpush.msra.mxu0 0.0
      %811 = vmatpush.msra.mxu0 0.0
      %812 = vmatpush.msra.mxu0 %v757
      %813 = vmatpush.msra.mxu0 %v756
      %814 = vmatmul.f32.gmra.mxu0 %v354
      %v815 = vpop.f32.mrf.mxu0
      %v816 = vadd.f32 0.0, %v815
      %817 = vdwg.mxu0
      %818 = vmatpush.msra.mxu0 0.0
      %819 = vmatpush.msra.mxu0 0.0
      %820 = vmatpush.msra.mxu0 0.0
      %821 = vmatpush.msra.mxu0 0.0
      %822 = vmatpush.msra.mxu0 0.0
      %823 = vmatpush.msra.mxu0 0.0
      %824 = vmatpush.msra.mxu0 0.0
      %825 = vmatpush.msra.mxu0 0.0
      %826 = vmatpush.msra.mxu0 0.0
      %827 = vmatpush.msra.mxu0 0.0
      %828 = vmatpush.msra.mxu0 0.0
      %829 = vmatpush.msra.mxu0 0.0
      %830 = vmatpush.msra.mxu0 0.0
      %831 = vmatpush.msra.mxu0 0.0
      %832 = vmatpush.msra.mxu0 %v757
      %833 = vmatpush.msra.mxu0 %v756
      %834 = vmatmul.f32.gmra.mxu0 %v534
      %v835 = vpop.f32.mrf.mxu0
      %v836 = vadd.f32 0.0, %v835
      %837 = vdwg.mxu0
      %v838 = vadd.f32 %v751, %v776
      %v839 = vadd.f32 %v752, %v796
      %v840 = vadd.f32 %v753, %v816
      %v841 = vadd.f32 %v754, %v836
      %s842 = scalar_lea.vmem %s1, 112
      %v843 = vld [vmem:[%s842] sm:$0xff]
      %v844 = vld [vmem:[%s842 + $0x8] sm:$0xff]
      %845 = vmatpush.msra.mxu0 0.0
      %846 = vmatpush.msra.mxu0 0.0
      %847 = vmatpush.msra.mxu0 0.0
      %848 = vmatpush.msra.mxu0 0.0
      %849 = vmatpush.msra.mxu0 0.0
      %850 = vmatpush.msra.mxu0 0.0
      %851 = vmatpush.msra.mxu0 0.0
      %852 = vmatpush.msra.mxu0 0.0
      %853 = vmatpush.msra.mxu0 0.0
      %854 = vmatpush.msra.mxu0 0.0
      %855 = vmatpush.msra.mxu0 0.0
      %856 = vmatpush.msra.mxu0 0.0
      %857 = vmatpush.msra.mxu0 0.0
      %858 = vmatpush.msra.mxu0 0.0
      %859 = vmatpush.msra.mxu0 %v844
      %860 = vmatpush.msra.mxu0 %v843
      %861 = vmatmul.f32.gmra.mxu0 %v683
      %v862 = vpop.f32.mrf.mxu0
      %v863 = vadd.f32 0.0, %v862
      %864 = vdwg.mxu0
      %865 = vmatpush.msra.mxu0 0.0
      %866 = vmatpush.msra.mxu0 0.0
      %867 = vmatpush.msra.mxu0 0.0
      %868 = vmatpush.msra.mxu0 0.0
      %869 = vmatpush.msra.mxu0 0.0
      %870 = vmatpush.msra.mxu0 0.0
      %871 = vmatpush.msra.mxu0 0.0
      %872 = vmatpush.msra.mxu0 0.0
      %873 = vmatpush.msra.mxu0 0.0
      %874 = vmatpush.msra.mxu0 0.0
      %875 = vmatpush.msra.mxu0 0.0
      %876 = vmatpush.msra.mxu0 0.0
      %877 = vmatpush.msra.mxu0 0.0
      %878 = vmatpush.msra.mxu0 0.0
      %879 = vmatpush.msra.mxu0 %v844
      %880 = vmatpush.msra.mxu0 %v843
      %881 = vmatmul.f32.gmra.mxu0 %v706
      %v882 = vpop.f32.mrf.mxu0
      %v883 = vadd.f32 0.0, %v882
      %884 = vdwg.mxu0
      %885 = vmatpush.msra.mxu0 0.0
      %886 = vmatpush.msra.mxu0 0.0
      %887 = vmatpush.msra.mxu0 0.0
      %888 = vmatpush.msra.mxu0 0.0
      %889 = vmatpush.msra.mxu0 0.0
      %890 = vmatpush.msra.mxu0 0.0
      %891 = vmatpush.msra.mxu0 0.0
      %892 = vmatpush.msra.mxu0 0.0
      %893 = vmatpush.msra.mxu0 0.0
      %894 = vmatpush.msra.mxu0 0.0
      %895 = vmatpush.msra.mxu0 0.0
      %896 = vmatpush.msra.mxu0 0.0
      %897 = vmatpush.msra.mxu0 0.0
      %898 = vmatpush.msra.mxu0 0.0
      %899 = vmatpush.msra.mxu0 %v844
      %900 = vmatpush.msra.mxu0 %v843
      %901 = vmatmul.f32.gmra.mxu0 %v729
      %v902 = vpop.f32.mrf.mxu0
      %v903 = vadd.f32 0.0, %v902
      %904 = vdwg.mxu0
      %v905 = vrot.slane %v176, 2
      %v906 = vsel %vm184, %v905, 0
      %908 = vmatpush.msra.mxu0 0.0
      %909 = vmatpush.msra.mxu0 0.0
      %910 = vmatpush.msra.mxu0 0.0
      %911 = vmatpush.msra.mxu0 0.0
      %912 = vmatpush.msra.mxu0 0.0
      %913 = vmatpush.msra.mxu0 0.0
      %914 = vmatpush.msra.mxu0 0.0
      %915 = vmatpush.msra.mxu0 0.0
      %916 = vmatpush.msra.mxu0 0.0
      %917 = vmatpush.msra.mxu0 0.0
      %918 = vmatpush.msra.mxu0 0.0
      %919 = vmatpush.msra.mxu0 0.0
      %920 = vmatpush.msra.mxu0 0.0
      %921 = vmatpush.msra.mxu0 0.0
      %922 = vmatpush.msra.mxu0 %v844
      %923 = vmatpush.msra.mxu0 %v843
      %924 = vmatmul.f32.gmra.mxu0 %v906
      %v925 = vpop.f32.mrf.mxu0
      %v926 = vadd.f32 0.0, %v925
      %927 = vdwg.mxu0
      %v928 = vadd.f32 %v838, %v863
      %v929 = vadd.f32 %v839, %v883
      %v930 = vadd.f32 %v840, %v903
      %v931 = vadd.f32 %v841, %v926
      %v932 = vmax.f32 %v928, 0.0
      %v933 = vmax.f32 %v929, 0.0
      %v934 = vmax.f32 %v930, 0.0
      %v935 = vmax.f32 %v931, 0.0
      %s936 = scalar_lea.vmem %s170, 16
      %937 = vst.msk [vmem:[%s936] sm:$0xf] %vm564, %v932
      %938 = vst.msk [vmem:[%s936 + $0x4] sm:$0xf] %vm564, %v933
      %939 = vst.msk [vmem:[%s936 + $0x8] sm:$0xf] %vm564, %v934
      %940 = vst.msk [vmem:[%s936 + $0xc] sm:$0xf] %vm564, %v935
      %s941 = scalar_lea.vmem %s1, 128
      %v942 = vld [vmem:[%s941] sm:$0xff]
      %v943 = vld [vmem:[%s941 + $0x8] sm:$0xff]
      %944 = vmatpush.msra.mxu0 0.0
      %945 = vmatpush.msra.mxu0 0.0
      %946 = vmatpush.msra.mxu0 0.0
      %947 = vmatpush.msra.mxu0 0.0
      %948 = vmatpush.msra.mxu0 0.0
      %949 = vmatpush.msra.mxu0 0.0
      %950 = vmatpush.msra.mxu0 0.0
      %951 = vmatpush.msra.mxu0 0.0
      %952 = vmatpush.msra.mxu0 0.0
      %953 = vmatpush.msra.mxu0 0.0
      %954 = vmatpush.msra.mxu0 0.0
      %955 = vmatpush.msra.mxu0 0.0
      %956 = vmatpush.msra.mxu0 0.0
      %957 = vmatpush.msra.mxu0 0.0
      %958 = vmatpush.msra.mxu0 %v943
      %959 = vmatpush.msra.mxu0 %v942
      %960 = vmatmul.f32.gmra.mxu0 %v209
      %v961 = vpop.f32.mrf.mxu0
      %v962 = vadd.f32 0.0, %v961
      %963 = vdwg.mxu0
      %964 = vmatpush.msra.mxu0 0.0
      %965 = vmatpush.msra.mxu0 0.0
      %966 = vmatpush.msra.mxu0 0.0
      %967 = vmatpush.msra.mxu0 0.0
      %968 = vmatpush.msra.mxu0 0.0
      %969 = vmatpush.msra.mxu0 0.0
      %970 = vmatpush.msra.mxu0 0.0
      %971 = vmatpush.msra.mxu0 0.0
      %972 = vmatpush.msra.mxu0 0.0
      %973 = vmatpush.msra.mxu0 0.0
      %974 = vmatpush.msra.mxu0 0.0
      %975 = vmatpush.msra.mxu0 0.0
      %976 = vmatpush.msra.mxu0 0.0
      %977 = vmatpush.msra.mxu0 0.0
      %978 = vmatpush.msra.mxu0 %v943
      %979 = vmatpush.msra.mxu0 %v942
      %980 = vmatmul.f32.gmra.mxu0 %v232
      %v981 = vpop.f32.mrf.mxu0
      %v982 = vadd.f32 0.0, %v981
      %983 = vdwg.mxu0
      %984 = vmatpush.msra.mxu0 0.0
      %985 = vmatpush.msra.mxu0 0.0
      %986 = vmatpush.msra.mxu0 0.0
      %987 = vmatpush.msra.mxu0 0.0
      %988 = vmatpush.msra.mxu0 0.0
      %989 = vmatpush.msra.mxu0 0.0
      %990 = vmatpush.msra.mxu0 0.0
      %991 = vmatpush.msra.mxu0 0.0
      %992 = vmatpush.msra.mxu0 0.0
      %993 = vmatpush.msra.mxu0 0.0
      %994 = vmatpush.msra.mxu0 0.0
      %995 = vmatpush.msra.mxu0 0.0
      %996 = vmatpush.msra.mxu0 0.0
      %997 = vmatpush.msra.mxu0 0.0
      %998 = vmatpush.msra.mxu0 %v943
      %999 = vmatpush.msra.mxu0 %v942
      %1000 = vmatmul.f32.gmra.mxu0 %v255
      %v1001 = vpop.f32.mrf.mxu0
      %v1002 = vadd.f32 0.0, %v1001
      %1003 = vdwg.mxu0
      %1004 = vmatpush.msra.mxu0 0.0
      %1005 = vmatpush.msra.mxu0 0.0
      %1006 = vmatpush.msra.mxu0 0.0
      %1007 = vmatpush.msra.mxu0 0.0
      %1008 = vmatpush.msra.mxu0 0.0
      %1009 = vmatpush.msra.mxu0 0.0
      %1010 = vmatpush.msra.mxu0 0.0
      %1011 = vmatpush.msra.mxu0 0.0
      %1012 = vmatpush.msra.mxu0 0.0
      %1013 = vmatpush.msra.mxu0 0.0
      %1014 = vmatpush.msra.mxu0 0.0
      %1015 = vmatpush.msra.mxu0 0.0
      %1016 = vmatpush.msra.mxu0 0.0
      %1017 = vmatpush.msra.mxu0 0.0
      %1018 = vmatpush.msra.mxu0 %v943
      %1019 = vmatpush.msra.mxu0 %v942
      %1020 = vmatmul.f32.gmra.mxu0 %v444
      %v1021 = vpop.f32.mrf.mxu0
      %v1022 = vadd.f32 0.0, %v1021
      %1023 = vdwg.mxu0
      %v1024 = vadd.f32 %v181, %v962
      %v1025 = vadd.f32 %v181, %v982
      %v1026 = vadd.f32 %v181, %v1002
      %v1027 = vadd.f32 %v181, %v1022
      %s1028 = scalar_lea.vmem %s1, 144
      %v1029 = vld [vmem:[%s1028] sm:$0xff]
      %v1030 = vld [vmem:[%s1028 + $0x8] sm:$0xff]
      %1031 = vmatpush.msra.mxu0 0.0
      %1032 = vmatpush.msra.mxu0 0.0
      %1033 = vmatpush.msra.mxu0 0.0
      %1034 = vmatpush.msra.mxu0 0.0
      %1035 = vmatpush.msra.mxu0 0.0
      %1036 = vmatpush.msra.mxu0 0.0
      %1037 = vmatpush.msra.mxu0 0.0
      %1038 = vmatpush.msra.mxu0 0.0
      %1039 = vmatpush.msra.mxu0 0.0
      %1040 = vmatpush.msra.mxu0 0.0
      %1041 = vmatpush.msra.mxu0 0.0
      %1042 = vmatpush.msra.mxu0 0.0
      %1043 = vmatpush.msra.mxu0 0.0
      %1044 = vmatpush.msra.mxu0 0.0
      %1045 = vmatpush.msra.mxu0 %v1030
      %1046 = vmatpush.msra.mxu0 %v1029
      %1047 = vmatmul.f32.gmra.mxu0 %v308
      %v1048 = vpop.f32.mrf.mxu0
      %v1049 = vadd.f32 0.0, %v1048
      %1050 = vdwg.mxu0
      %1051 = vmatpush.msra.mxu0 0.0
      %1052 = vmatpush.msra.mxu0 0.0
      %1053 = vmatpush.msra.mxu0 0.0
      %1054 = vmatpush.msra.mxu0 0.0
      %1055 = vmatpush.msra.mxu0 0.0
      %1056 = vmatpush.msra.mxu0 0.0
      %1057 = vmatpush.msra.mxu0 0.0
      %1058 = vmatpush.msra.mxu0 0.0
      %1059 = vmatpush.msra.mxu0 0.0
      %1060 = vmatpush.msra.mxu0 0.0
      %1061 = vmatpush.msra.mxu0 0.0
      %1062 = vmatpush.msra.mxu0 0.0
      %1063 = vmatpush.msra.mxu0 0.0
      %1064 = vmatpush.msra.mxu0 0.0
      %1065 = vmatpush.msra.mxu0 %v1030
      %1066 = vmatpush.msra.mxu0 %v1029
      %1067 = vmatmul.f32.gmra.mxu0 %v331
      %v1068 = vpop.f32.mrf.mxu0
      %v1069 = vadd.f32 0.0, %v1068
      %1070 = vdwg.mxu0
      %1071 = vmatpush.msra.mxu0 0.0
      %1072 = vmatpush.msra.mxu0 0.0
      %1073 = vmatpush.msra.mxu0 0.0
      %1074 = vmatpush.msra.mxu0 0.0
      %1075 = vmatpush.msra.mxu0 0.0
      %1076 = vmatpush.msra.mxu0 0.0
      %1077 = vmatpush.msra.mxu0 0.0
      %1078 = vmatpush.msra.mxu0 0.0
      %1079 = vmatpush.msra.mxu0 0.0
      %1080 = vmatpush.msra.mxu0 0.0
      %1081 = vmatpush.msra.mxu0 0.0
      %1082 = vmatpush.msra.mxu0 0.0
      %1083 = vmatpush.msra.mxu0 0.0
      %1084 = vmatpush.msra.mxu0 0.0
      %1085 = vmatpush.msra.mxu0 %v1030
      %1086 = vmatpush.msra.mxu0 %v1029
      %1087 = vmatmul.f32.gmra.mxu0 %v354
      %v1088 = vpop.f32.mrf.mxu0
      %v1089 = vadd.f32 0.0, %v1088
      %1090 = vdwg.mxu0
      %1091 = vmatpush.msra.mxu0 0.0
      %1092 = vmatpush.msra.mxu0 0.0
      %1093 = vmatpush.msra.mxu0 0.0
      %1094 = vmatpush.msra.mxu0 0.0
      %1095 = vmatpush.msra.mxu0 0.0
      %1096 = vmatpush.msra.mxu0 0.0
      %1097 = vmatpush.msra.mxu0 0.0
      %1098 = vmatpush.msra.mxu0 0.0
      %1099 = vmatpush.msra.mxu0 0.0
      %1100 = vmatpush.msra.mxu0 0.0
      %1101 = vmatpush.msra.mxu0 0.0
      %1102 = vmatpush.msra.mxu0 0.0
      %1103 = vmatpush.msra.mxu0 0.0
      %1104 = vmatpush.msra.mxu0 0.0
      %1105 = vmatpush.msra.mxu0 %v1030
      %1106 = vmatpush.msra.mxu0 %v1029
      %1107 = vmatmul.f32.gmra.mxu0 %v534
      %v1108 = vpop.f32.mrf.mxu0
      %v1109 = vadd.f32 0.0, %v1108
      %1110 = vdwg.mxu0
      %v1111 = vadd.f32 %v1024, %v1049
      %v1112 = vadd.f32 %v1025, %v1069
      %v1113 = vadd.f32 %v1026, %v1089
      %v1114 = vadd.f32 %v1027, %v1109
      %s1115 = scalar_lea.vmem %s1, 160
      %v1116 = vld [vmem:[%s1115] sm:$0xff]
      %v1117 = vld [vmem:[%s1115 + $0x8] sm:$0xff]
      %1118 = vmatpush.msra.mxu0 0.0
      %1119 = vmatpush.msra.mxu0 0.0
      %1120 = vmatpush.msra.mxu0 0.0
      %1121 = vmatpush.msra.mxu0 0.0
      %1122 = vmatpush.msra.mxu0 0.0
      %1123 = vmatpush.msra.mxu0 0.0
      %1124 = vmatpush.msra.mxu0 0.0
      %1125 = vmatpush.msra.mxu0 0.0
      %1126 = vmatpush.msra.mxu0 0.0
      %1127 = vmatpush.msra.mxu0 0.0
      %1128 = vmatpush.msra.mxu0 0.0
      %1129 = vmatpush.msra.mxu0 0.0
      %1130 = vmatpush.msra.mxu0 0.0
      %1131 = vmatpush.msra.mxu0 0.0
      %1132 = vmatpush.msra.mxu0 %v1117
      %1133 = vmatpush.msra.mxu0 %v1116
      %1134 = vmatmul.f32.gmra.mxu0 %v232
      %v1135 = vpop.f32.mrf.mxu0
      %v1136 = vadd.f32 0.0, %v1135
      %1137 = vdwg.mxu0
      %1138 = vmatpush.msra.mxu0 0.0
      %1139 = vmatpush.msra.mxu0 0.0
      %1140 = vmatpush.msra.mxu0 0.0
      %1141 = vmatpush.msra.mxu0 0.0
      %1142 = vmatpush.msra.mxu0 0.0
      %1143 = vmatpush.msra.mxu0 0.0
      %1144 = vmatpush.msra.mxu0 0.0
      %1145 = vmatpush.msra.mxu0 0.0
      %1146 = vmatpush.msra.mxu0 0.0
      %1147 = vmatpush.msra.mxu0 0.0
      %1148 = vmatpush.msra.mxu0 0.0
      %1149 = vmatpush.msra.mxu0 0.0
      %1150 = vmatpush.msra.mxu0 0.0
      %1151 = vmatpush.msra.mxu0 0.0
      %1152 = vmatpush.msra.mxu0 %v1117
      %1153 = vmatpush.msra.mxu0 %v1116
      %1154 = vmatmul.f32.gmra.mxu0 %v255
      %v1155 = vpop.f32.mrf.mxu0
      %v1156 = vadd.f32 0.0, %v1155
      %1157 = vdwg.mxu0
      %1158 = vmatpush.msra.mxu0 0.0
      %1159 = vmatpush.msra.mxu0 0.0
      %1160 = vmatpush.msra.mxu0 0.0
      %1161 = vmatpush.msra.mxu0 0.0
      %1162 = vmatpush.msra.mxu0 0.0
      %1163 = vmatpush.msra.mxu0 0.0
      %1164 = vmatpush.msra.mxu0 0.0
      %1165 = vmatpush.msra.mxu0 0.0
      %1166 = vmatpush.msra.mxu0 0.0
      %1167 = vmatpush.msra.mxu0 0.0
      %1168 = vmatpush.msra.mxu0 0.0
      %1169 = vmatpush.msra.mxu0 0.0
      %1170 = vmatpush.msra.mxu0 0.0
      %1171 = vmatpush.msra.mxu0 0.0
      %1172 = vmatpush.msra.mxu0 %v1117
      %1173 = vmatpush.msra.mxu0 %v1116
      %1174 = vmatmul.f32.gmra.mxu0 %v444
      %v1175 = vpop.f32.mrf.mxu0
      %v1176 = vadd.f32 0.0, %v1175
      %1177 = vdwg.mxu0
      %v1179 = vsel %vm184, %v177, 0
      %1181 = vmatpush.msra.mxu0 0.0
      %1182 = vmatpush.msra.mxu0 0.0
      %1183 = vmatpush.msra.mxu0 0.0
      %1184 = vmatpush.msra.mxu0 0.0
      %1185 = vmatpush.msra.mxu0 0.0
      %1186 = vmatpush.msra.mxu0 0.0
      %1187 = vmatpush.msra.mxu0 0.0
      %1188 = vmatpush.msra.mxu0 0.0
      %1189 = vmatpush.msra.mxu0 0.0
      %1190 = vmatpush.msra.mxu0 0.0
      %1191 = vmatpush.msra.mxu0 0.0
      %1192 = vmatpush.msra.mxu0 0.0
      %1193 = vmatpush.msra.mxu0 0.0
      %1194 = vmatpush.msra.mxu0 0.0
      %1195 = vmatpush.msra.mxu0 %v1117
      %1196 = vmatpush.msra.mxu0 %v1116
      %1197 = vmatmul.f32.gmra.mxu0 %v1179
      %v1198 = vpop.f32.mrf.mxu0
      %v1199 = vadd.f32 0.0, %v1198
      %1200 = vdwg.mxu0
      %v1201 = vadd.f32 %v1111, %v1136
      %v1202 = vadd.f32 %v1112, %v1156
      %v1203 = vadd.f32 %v1113, %v1176
      %v1204 = vadd.f32 %v1114, %v1199
      %s1205 = scalar_lea.vmem %s1, 176
      %v1206 = vld [vmem:[%s1205] sm:$0xff]
      %v1207 = vld [vmem:[%s1205 + $0x8] sm:$0xff]
      %1208 = vmatpush.msra.mxu0 0.0
      %1209 = vmatpush.msra.mxu0 0.0
      %1210 = vmatpush.msra.mxu0 0.0
      %1211 = vmatpush.msra.mxu0 0.0
      %1212 = vmatpush.msra.mxu0 0.0
      %1213 = vmatpush.msra.mxu0 0.0
      %1214 = vmatpush.msra.mxu0 0.0
      %1215 = vmatpush.msra.mxu0 0.0
      %1216 = vmatpush.msra.mxu0 0.0
      %1217 = vmatpush.msra.mxu0 0.0
      %1218 = vmatpush.msra.mxu0 0.0
      %1219 = vmatpush.msra.mxu0 0.0
      %1220 = vmatpush.msra.mxu0 0.0
      %1221 = vmatpush.msra.mxu0 0.0
      %1222 = vmatpush.msra.mxu0 %v1207
      %1223 = vmatpush.msra.mxu0 %v1206
      %1224 = vmatmul.f32.gmra.mxu0 %v331
      %v1225 = vpop.f32.mrf.mxu0
      %v1226 = vadd.f32 0.0, %v1225
      %1227 = vdwg.mxu0
      %1228 = vmatpush.msra.mxu0 0.0
      %1229 = vmatpush.msra.mxu0 0.0
      %1230 = vmatpush.msra.mxu0 0.0
      %1231 = vmatpush.msra.mxu0 0.0
      %1232 = vmatpush.msra.mxu0 0.0
      %1233 = vmatpush.msra.mxu0 0.0
      %1234 = vmatpush.msra.mxu0 0.0
      %1235 = vmatpush.msra.mxu0 0.0
      %1236 = vmatpush.msra.mxu0 0.0
      %1237 = vmatpush.msra.mxu0 0.0
      %1238 = vmatpush.msra.mxu0 0.0
      %1239 = vmatpush.msra.mxu0 0.0
      %1240 = vmatpush.msra.mxu0 0.0
      %1241 = vmatpush.msra.mxu0 0.0
      %1242 = vmatpush.msra.mxu0 %v1207
      %1243 = vmatpush.msra.mxu0 %v1206
      %1244 = vmatmul.f32.gmra.mxu0 %v354
      %v1245 = vpop.f32.mrf.mxu0
      %v1246 = vadd.f32 0.0, %v1245
      %1247 = vdwg.mxu0
      %1248 = vmatpush.msra.mxu0 0.0
      %1249 = vmatpush.msra.mxu0 0.0
      %1250 = vmatpush.msra.mxu0 0.0
      %1251 = vmatpush.msra.mxu0 0.0
      %1252 = vmatpush.msra.mxu0 0.0
      %1253 = vmatpush.msra.mxu0 0.0
      %1254 = vmatpush.msra.mxu0 0.0
      %1255 = vmatpush.msra.mxu0 0.0
      %1256 = vmatpush.msra.mxu0 0.0
      %1257 = vmatpush.msra.mxu0 0.0
      %1258 = vmatpush.msra.mxu0 0.0
      %1259 = vmatpush.msra.mxu0 0.0
      %1260 = vmatpush.msra.mxu0 0.0
      %1261 = vmatpush.msra.mxu0 0.0
      %1262 = vmatpush.msra.mxu0 %v1207
      %1263 = vmatpush.msra.mxu0 %v1206
      %1264 = vmatmul.f32.gmra.mxu0 %v534
      %v1265 = vpop.f32.mrf.mxu0
      %v1266 = vadd.f32 0.0, %v1265
      %1267 = vdwg.mxu0
      %v1268 = vrot.slane %v177, 1
      %v1269 = vsel %vm184, %v1268, 0
      %1271 = vmatpush.msra.mxu0 0.0
      %1272 = vmatpush.msra.mxu0 0.0
      %1273 = vmatpush.msra.mxu0 0.0
      %1274 = vmatpush.msra.mxu0 0.0
      %1275 = vmatpush.msra.mxu0 0.0
      %1276 = vmatpush.msra.mxu0 0.0
      %1277 = vmatpush.msra.mxu0 0.0
      %1278 = vmatpush.msra.mxu0 0.0
      %1279 = vmatpush.msra.mxu0 0.0
      %1280 = vmatpush.msra.mxu0 0.0
      %1281 = vmatpush.msra.mxu0 0.0
      %1282 = vmatpush.msra.mxu0 0.0
      %1283 = vmatpush.msra.mxu0 0.0
      %1284 = vmatpush.msra.mxu0 0.0
      %1285 = vmatpush.msra.mxu0 %v1207
      %1286 = vmatpush.msra.mxu0 %v1206
      %1287 = vmatmul.f32.gmra.mxu0 %v1269
      %v1288 = vpop.f32.mrf.mxu0
      %v1289 = vadd.f32 0.0, %v1288
      %1290 = vdwg.mxu0
      %v1291 = vadd.f32 %v1201, %v1226
      %v1292 = vadd.f32 %v1202, %v1246
      %v1293 = vadd.f32 %v1203, %v1266
      %v1294 = vadd.f32 %v1204, %v1289
      %v1295 = vmax.f32 %v1291, 0.0
      %v1296 = vmax.f32 %v1292, 0.0
      %v1297 = vmax.f32 %v1293, 0.0
      %v1298 = vmax.f32 %v1294, 0.0
      %s1299 = scalar_lea.vmem %s170, 32
      %1300 = vst.msk [vmem:[%s1299] sm:$0xf] %vm564, %v1295
      %1301 = vst.msk [vmem:[%s1299 + $0x4] sm:$0xf] %vm564, %v1296
      %1302 = vst.msk [vmem:[%s1299 + $0x8] sm:$0xf] %vm564, %v1297
      %1303 = vst.msk [vmem:[%s1299 + $0xc] sm:$0xf] %vm564, %v1298
      %s1304 = scalar_lea.vmem %s1, 192
      %v1305 = vld [vmem:[%s1304] sm:$0xff]
      %v1306 = vld [vmem:[%s1304 + $0x8] sm:$0xff]
      %1307 = vmatpush.msra.mxu0 0.0
      %1308 = vmatpush.msra.mxu0 0.0
      %1309 = vmatpush.msra.mxu0 0.0
      %1310 = vmatpush.msra.mxu0 0.0
      %1311 = vmatpush.msra.mxu0 0.0
      %1312 = vmatpush.msra.mxu0 0.0
      %1313 = vmatpush.msra.mxu0 0.0
      %1314 = vmatpush.msra.mxu0 0.0
      %1315 = vmatpush.msra.mxu0 0.0
      %1316 = vmatpush.msra.mxu0 0.0
      %1317 = vmatpush.msra.mxu0 0.0
      %1318 = vmatpush.msra.mxu0 0.0
      %1319 = vmatpush.msra.mxu0 0.0
      %1320 = vmatpush.msra.mxu0 0.0
      %1321 = vmatpush.msra.mxu0 %v1306
      %1322 = vmatpush.msra.mxu0 %v1305
      %1323 = vmatmul.f32.gmra.mxu0 %v308
      %v1324 = vpop.f32.mrf.mxu0
      %v1325 = vadd.f32 0.0, %v1324
      %1326 = vdwg.mxu0
      %1327 = vmatpush.msra.mxu0 0.0
      %1328 = vmatpush.msra.mxu0 0.0
      %1329 = vmatpush.msra.mxu0 0.0
      %1330 = vmatpush.msra.mxu0 0.0
      %1331 = vmatpush.msra.mxu0 0.0
      %1332 = vmatpush.msra.mxu0 0.0
      %1333 = vmatpush.msra.mxu0 0.0
      %1334 = vmatpush.msra.mxu0 0.0
      %1335 = vmatpush.msra.mxu0 0.0
      %1336 = vmatpush.msra.mxu0 0.0
      %1337 = vmatpush.msra.mxu0 0.0
      %1338 = vmatpush.msra.mxu0 0.0
      %1339 = vmatpush.msra.mxu0 0.0
      %1340 = vmatpush.msra.mxu0 0.0
      %1341 = vmatpush.msra.mxu0 %v1306
      %1342 = vmatpush.msra.mxu0 %v1305
      %1343 = vmatmul.f32.gmra.mxu0 %v331
      %v1344 = vpop.f32.mrf.mxu0
      %v1345 = vadd.f32 0.0, %v1344
      %1346 = vdwg.mxu0
      %1347 = vmatpush.msra.mxu0 0.0
      %1348 = vmatpush.msra.mxu0 0.0
      %1349 = vmatpush.msra.mxu0 0.0
      %1350 = vmatpush.msra.mxu0 0.0
      %1351 = vmatpush.msra.mxu0 0.0
      %1352 = vmatpush.msra.mxu0 0.0
      %1353 = vmatpush.msra.mxu0 0.0
      %1354 = vmatpush.msra.mxu0 0.0
      %1355 = vmatpush.msra.mxu0 0.0
      %1356 = vmatpush.msra.mxu0 0.0
      %1357 = vmatpush.msra.mxu0 0.0
      %1358 = vmatpush.msra.mxu0 0.0
      %1359 = vmatpush.msra.mxu0 0.0
      %1360 = vmatpush.msra.mxu0 0.0
      %1361 = vmatpush.msra.mxu0 %v1306
      %1362 = vmatpush.msra.mxu0 %v1305
      %1363 = vmatmul.f32.gmra.mxu0 %v354
      %v1364 = vpop.f32.mrf.mxu0
      %v1365 = vadd.f32 0.0, %v1364
      %1366 = vdwg.mxu0
      %1367 = vmatpush.msra.mxu0 0.0
      %1368 = vmatpush.msra.mxu0 0.0
      %1369 = vmatpush.msra.mxu0 0.0
      %1370 = vmatpush.msra.mxu0 0.0
      %1371 = vmatpush.msra.mxu0 0.0
      %1372 = vmatpush.msra.mxu0 0.0
      %1373 = vmatpush.msra.mxu0 0.0
      %1374 = vmatpush.msra.mxu0 0.0
      %1375 = vmatpush.msra.mxu0 0.0
      %1376 = vmatpush.msra.mxu0 0.0
      %1377 = vmatpush.msra.mxu0 0.0
      %1378 = vmatpush.msra.mxu0 0.0
      %1379 = vmatpush.msra.mxu0 0.0
      %1380 = vmatpush.msra.mxu0 0.0
      %1381 = vmatpush.msra.mxu0 %v1306
      %1382 = vmatpush.msra.mxu0 %v1305
      %1383 = vmatmul.f32.gmra.mxu0 %v534
      %v1384 = vpop.f32.mrf.mxu0
      %v1385 = vadd.f32 0.0, %v1384
      %1386 = vdwg.mxu0
      %v1387 = vadd.f32 %v181, %v1325
      %v1388 = vadd.f32 %v181, %v1345
      %v1389 = vadd.f32 %v181, %v1365
      %v1390 = vadd.f32 %v181, %v1385
      %s1391 = scalar_lea.vmem %s1, 208
      %v1392 = vld [vmem:[%s1391] sm:$0xff]
      %v1393 = vld [vmem:[%s1391 + $0x8] sm:$0xff]
      %1394 = vmatpush.msra.mxu0 0.0
      %1395 = vmatpush.msra.mxu0 0.0
      %1396 = vmatpush.msra.mxu0 0.0
      %1397 = vmatpush.msra.mxu0 0.0
      %1398 = vmatpush.msra.mxu0 0.0
      %1399 = vmatpush.msra.mxu0 0.0
      %1400 = vmatpush.msra.mxu0 0.0
      %1401 = vmatpush.msra.mxu0 0.0
      %1402 = vmatpush.msra.mxu0 0.0
      %1403 = vmatpush.msra.mxu0 0.0
      %1404 = vmatpush.msra.mxu0 0.0
      %1405 = vmatpush.msra.mxu0 0.0
      %1406 = vmatpush.msra.mxu0 0.0
      %1407 = vmatpush.msra.mxu0 0.0
      %1408 = vmatpush.msra.mxu0 %v1393
      %1409 = vmatpush.msra.mxu0 %v1392
      %1410 = vmatmul.f32.gmra.mxu0 %v683
      %v1411 = vpop.f32.mrf.mxu0
      %v1412 = vadd.f32 0.0, %v1411
      %1413 = vdwg.mxu0
      %1414 = vmatpush.msra.mxu0 0.0
      %1415 = vmatpush.msra.mxu0 0.0
      %1416 = vmatpush.msra.mxu0 0.0
      %1417 = vmatpush.msra.mxu0 0.0
      %1418 = vmatpush.msra.mxu0 0.0
      %1419 = vmatpush.msra.mxu0 0.0
      %1420 = vmatpush.msra.mxu0 0.0
      %1421 = vmatpush.msra.mxu0 0.0
      %1422 = vmatpush.msra.mxu0 0.0
      %1423 = vmatpush.msra.mxu0 0.0
      %1424 = vmatpush.msra.mxu0 0.0
      %1425 = vmatpush.msra.mxu0 0.0
      %1426 = vmatpush.msra.mxu0 0.0
      %1427 = vmatpush.msra.mxu0 0.0
      %1428 = vmatpush.msra.mxu0 %v1393
      %1429 = vmatpush.msra.mxu0 %v1392
      %1430 = vmatmul.f32.gmra.mxu0 %v706
      %v1431 = vpop.f32.mrf.mxu0
      %v1432 = vadd.f32 0.0, %v1431
      %1433 = vdwg.mxu0
      %1434 = vmatpush.msra.mxu0 0.0
      %1435 = vmatpush.msra.mxu0 0.0
      %1436 = vmatpush.msra.mxu0 0.0
      %1437 = vmatpush.msra.mxu0 0.0
      %1438 = vmatpush.msra.mxu0 0.0
      %1439 = vmatpush.msra.mxu0 0.0
      %1440 = vmatpush.msra.mxu0 0.0
      %1441 = vmatpush.msra.mxu0 0.0
      %1442 = vmatpush.msra.mxu0 0.0
      %1443 = vmatpush.msra.mxu0 0.0
      %1444 = vmatpush.msra.mxu0 0.0
      %1445 = vmatpush.msra.mxu0 0.0
      %1446 = vmatpush.msra.mxu0 0.0
      %1447 = vmatpush.msra.mxu0 0.0
      %1448 = vmatpush.msra.mxu0 %v1393
      %1449 = vmatpush.msra.mxu0 %v1392
      %1450 = vmatmul.f32.gmra.mxu0 %v729
      %v1451 = vpop.f32.mrf.mxu0
      %v1452 = vadd.f32 0.0, %v1451
      %1453 = vdwg.mxu0
      %1454 = vmatpush.msra.mxu0 0.0
      %1455 = vmatpush.msra.mxu0 0.0
      %1456 = vmatpush.msra.mxu0 0.0
      %1457 = vmatpush.msra.mxu0 0.0
      %1458 = vmatpush.msra.mxu0 0.0
      %1459 = vmatpush.msra.mxu0 0.0
      %1460 = vmatpush.msra.mxu0 0.0
      %1461 = vmatpush.msra.mxu0 0.0
      %1462 = vmatpush.msra.mxu0 0.0
      %1463 = vmatpush.msra.mxu0 0.0
      %1464 = vmatpush.msra.mxu0 0.0
      %1465 = vmatpush.msra.mxu0 0.0
      %1466 = vmatpush.msra.mxu0 0.0
      %1467 = vmatpush.msra.mxu0 0.0
      %1468 = vmatpush.msra.mxu0 %v1393
      %1469 = vmatpush.msra.mxu0 %v1392
      %1470 = vmatmul.f32.gmra.mxu0 %v906
      %v1471 = vpop.f32.mrf.mxu0
      %v1472 = vadd.f32 0.0, %v1471
      %1473 = vdwg.mxu0
      %v1474 = vadd.f32 %v1387, %v1412
      %v1475 = vadd.f32 %v1388, %v1432
      %v1476 = vadd.f32 %v1389, %v1452
      %v1477 = vadd.f32 %v1390, %v1472
      %s1478 = scalar_lea.vmem %s1, 224
      %v1479 = vld [vmem:[%s1478] sm:$0xff]
      %v1480 = vld [vmem:[%s1478 + $0x8] sm:$0xff]
      %1481 = vmatpush.msra.mxu0 0.0
      %1482 = vmatpush.msra.mxu0 0.0
      %1483 = vmatpush.msra.mxu0 0.0
      %1484 = vmatpush.msra.mxu0 0.0
      %1485 = vmatpush.msra.mxu0 0.0
      %1486 = vmatpush.msra.mxu0 0.0
      %1487 = vmatpush.msra.mxu0 0.0
      %1488 = vmatpush.msra.mxu0 0.0
      %1489 = vmatpush.msra.mxu0 0.0
      %1490 = vmatpush.msra.mxu0 0.0
      %1491 = vmatpush.msra.mxu0 0.0
      %1492 = vmatpush.msra.mxu0 0.0
      %1493 = vmatpush.msra.mxu0 0.0
      %1494 = vmatpush.msra.mxu0 0.0
      %1495 = vmatpush.msra.mxu0 %v1480
      %1496 = vmatpush.msra.mxu0 %v1479
      %1497 = vmatmul.f32.gmra.mxu0 %v331
      %v1498 = vpop.f32.mrf.mxu0
      %v1499 = vadd.f32 0.0, %v1498
      %1500 = vdwg.mxu0
      %1501 = vmatpush.msra.mxu0 0.0
      %1502 = vmatpush.msra.mxu0 0.0
      %1503 = vmatpush.msra.mxu0 0.0
      %1504 = vmatpush.msra.mxu0 0.0
      %1505 = vmatpush.msra.mxu0 0.0
      %1506 = vmatpush.msra.mxu0 0.0
      %1507 = vmatpush.msra.mxu0 0.0
      %1508 = vmatpush.msra.mxu0 0.0
      %1509 = vmatpush.msra.mxu0 0.0
      %1510 = vmatpush.msra.mxu0 0.0
      %1511 = vmatpush.msra.mxu0 0.0
      %1512 = vmatpush.msra.mxu0 0.0
      %1513 = vmatpush.msra.mxu0 0.0
      %1514 = vmatpush.msra.mxu0 0.0
      %1515 = vmatpush.msra.mxu0 %v1480
      %1516 = vmatpush.msra.mxu0 %v1479
      %1517 = vmatmul.f32.gmra.mxu0 %v354
      %v1518 = vpop.f32.mrf.mxu0
      %v1519 = vadd.f32 0.0, %v1518
      %1520 = vdwg.mxu0
      %1521 = vmatpush.msra.mxu0 0.0
      %1522 = vmatpush.msra.mxu0 0.0
      %1523 = vmatpush.msra.mxu0 0.0
      %1524 = vmatpush.msra.mxu0 0.0
      %1525 = vmatpush.msra.mxu0 0.0
      %1526 = vmatpush.msra.mxu0 0.0
      %1527 = vmatpush.msra.mxu0 0.0
      %1528 = vmatpush.msra.mxu0 0.0
      %1529 = vmatpush.msra.mxu0 0.0
      %1530 = vmatpush.msra.mxu0 0.0
      %1531 = vmatpush.msra.mxu0 0.0
      %1532 = vmatpush.msra.mxu0 0.0
      %1533 = vmatpush.msra.mxu0 0.0
      %1534 = vmatpush.msra.mxu0 0.0
      %1535 = vmatpush.msra.mxu0 %v1480
      %1536 = vmatpush.msra.mxu0 %v1479
      %1537 = vmatmul.f32.gmra.mxu0 %v534
      %v1538 = vpop.f32.mrf.mxu0
      %v1539 = vadd.f32 0.0, %v1538
      %1540 = vdwg.mxu0
      %1541 = vmatpush.msra.mxu0 0.0
      %1542 = vmatpush.msra.mxu0 0.0
      %1543 = vmatpush.msra.mxu0 0.0
      %1544 = vmatpush.msra.mxu0 0.0
      %1545 = vmatpush.msra.mxu0 0.0
      %1546 = vmatpush.msra.mxu0 0.0
      %1547 = vmatpush.msra.mxu0 0.0
      %1548 = vmatpush.msra.mxu0 0.0
      %1549 = vmatpush.msra.mxu0 0.0
      %1550 = vmatpush.msra.mxu0 0.0
      %1551 = vmatpush.msra.mxu0 0.0
      %1552 = vmatpush.msra.mxu0 0.0
      %1553 = vmatpush.msra.mxu0 0.0
      %1554 = vmatpush.msra.mxu0 0.0
      %1555 = vmatpush.msra.mxu0 %v1480
      %1556 = vmatpush.msra.mxu0 %v1479
      %1557 = vmatmul.f32.gmra.mxu0 %v1269
      %v1558 = vpop.f32.mrf.mxu0
      %v1559 = vadd.f32 0.0, %v1558
      %1560 = vdwg.mxu0
      %v1561 = vadd.f32 %v1474, %v1499
      %v1562 = vadd.f32 %v1475, %v1519
      %v1563 = vadd.f32 %v1476, %v1539
      %v1564 = vadd.f32 %v1477, %v1559
      %s1565 = scalar_lea.vmem %s1, 240
      %v1566 = vld [vmem:[%s1565] sm:$0xff]
      %v1567 = vld [vmem:[%s1565 + $0x8] sm:$0xff]
      %1568 = vmatpush.msra.mxu0 0.0
      %1569 = vmatpush.msra.mxu0 0.0
      %1570 = vmatpush.msra.mxu0 0.0
      %1571 = vmatpush.msra.mxu0 0.0
      %1572 = vmatpush.msra.mxu0 0.0
      %1573 = vmatpush.msra.mxu0 0.0
      %1574 = vmatpush.msra.mxu0 0.0
      %1575 = vmatpush.msra.mxu0 0.0
      %1576 = vmatpush.msra.mxu0 0.0
      %1577 = vmatpush.msra.mxu0 0.0
      %1578 = vmatpush.msra.mxu0 0.0
      %1579 = vmatpush.msra.mxu0 0.0
      %1580 = vmatpush.msra.mxu0 0.0
      %1581 = vmatpush.msra.mxu0 0.0
      %1582 = vmatpush.msra.mxu0 %v1567
      %1583 = vmatpush.msra.mxu0 %v1566
      %1584 = vmatmul.f32.gmra.mxu0 %v706
      %v1585 = vpop.f32.mrf.mxu0
      %v1586 = vadd.f32 0.0, %v1585
      %1587 = vdwg.mxu0
      %1588 = vmatpush.msra.mxu0 0.0
      %1589 = vmatpush.msra.mxu0 0.0
      %1590 = vmatpush.msra.mxu0 0.0
      %1591 = vmatpush.msra.mxu0 0.0
      %1592 = vmatpush.msra.mxu0 0.0
      %1593 = vmatpush.msra.mxu0 0.0
      %1594 = vmatpush.msra.mxu0 0.0
      %1595 = vmatpush.msra.mxu0 0.0
      %1596 = vmatpush.msra.mxu0 0.0
      %1597 = vmatpush.msra.mxu0 0.0
      %1598 = vmatpush.msra.mxu0 0.0
      %1599 = vmatpush.msra.mxu0 0.0
      %1600 = vmatpush.msra.mxu0 0.0
      %1601 = vmatpush.msra.mxu0 0.0
      %1602 = vmatpush.msra.mxu0 %v1567
      %1603 = vmatpush.msra.mxu0 %v1566
      %1604 = vmatmul.f32.gmra.mxu0 %v729
      %v1605 = vpop.f32.mrf.mxu0
      %v1606 = vadd.f32 0.0, %v1605
      %1607 = vdwg.mxu0
      %1608 = vmatpush.msra.mxu0 0.0
      %1609 = vmatpush.msra.mxu0 0.0
      %1610 = vmatpush.msra.mxu0 0.0
      %1611 = vmatpush.msra.mxu0 0.0
      %1612 = vmatpush.msra.mxu0 0.0
      %1613 = vmatpush.msra.mxu0 0.0
      %1614 = vmatpush.msra.mxu0 0.0
      %1615 = vmatpush.msra.mxu0 0.0
      %1616 = vmatpush.msra.mxu0 0.0
      %1617 = vmatpush.msra.mxu0 0.0
      %1618 = vmatpush.msra.mxu0 0.0
      %1619 = vmatpush.msra.mxu0 0.0
      %1620 = vmatpush.msra.mxu0 0.0
      %1621 = vmatpush.msra.mxu0 0.0
      %1622 = vmatpush.msra.mxu0 %v1567
      %1623 = vmatpush.msra.mxu0 %v1566
      %1624 = vmatmul.f32.gmra.mxu0 %v906
      %v1625 = vpop.f32.mrf.mxu0
      %v1626 = vadd.f32 0.0, %v1625
      %1627 = vdwg.mxu0
      %v1628 = vrot.slane %v177, 2
      %v1629 = vsel %vm184, %v1628, 0
      %1631 = vmatpush.msra.mxu0 0.0
      %1632 = vmatpush.msra.mxu0 0.0
      %1633 = vmatpush.msra.mxu0 0.0
      %1634 = vmatpush.msra.mxu0 0.0
      %1635 = vmatpush.msra.mxu0 0.0
      %1636 = vmatpush.msra.mxu0 0.0
      %1637 = vmatpush.msra.mxu0 0.0
      %1638 = vmatpush.msra.mxu0 0.0
      %1639 = vmatpush.msra.mxu0 0.0
      %1640 = vmatpush.msra.mxu0 0.0
      %1641 = vmatpush.msra.mxu0 0.0
      %1642 = vmatpush.msra.mxu0 0.0
      %1643 = vmatpush.msra.mxu0 0.0
      %1644 = vmatpush.msra.mxu0 0.0
      %1645 = vmatpush.msra.mxu0 %v1567
      %1646 = vmatpush.msra.mxu0 %v1566
      %1647 = vmatmul.f32.gmra.mxu0 %v1629
      %v1648 = vpop.f32.mrf.mxu0
      %v1649 = vadd.f32 0.0, %v1648
      %1650 = vdwg.mxu0
      %v1651 = vadd.f32 %v1561, %v1586
      %v1652 = vadd.f32 %v1562, %v1606
      %v1653 = vadd.f32 %v1563, %v1626
      %v1654 = vadd.f32 %v1564, %v1649
      %v1655 = vmax.f32 %v1651, 0.0
      %v1656 = vmax.f32 %v1652, 0.0
      %v1657 = vmax.f32 %v1653, 0.0
      %v1658 = vmax.f32 %v1654, 0.0
      %s1659 = scalar_lea.vmem %s170, 48
      %1660 = vst.msk [vmem:[%s1659] sm:$0xf] %vm564, %v1655
      %1661 = vst.msk [vmem:[%s1659 + $0x4] sm:$0xf] %vm564, %v1656
      %1662 = vst.msk [vmem:[%s1659 + $0x8] sm:$0xf] %vm564, %v1657
      %1663 = vst.msk [vmem:[%s1659 + $0xc] sm:$0xf] %vm564, %v1658
      %p1664 = scmp.lt.s32.totalorder %s14, 1
      %s1665 = scalar_select %p1664, %s14, 1
      %s1666 = smul.addr %s1665, 16
      %s1667 = smul.addr %s1666, 4
      %s1668 = scalar_lea.vmem %s3, %s1667
      // Predicated region
      $region33: #{forward.16} parent=31 // pred_check
        %p1669 = pneg %p100
      $region34: #{forward.16} parent=31 // pred_check_branch
        %1671 = sbr.rel (%p1669) target = $region36
      $region35: #{forward.16} parent=31 // pred_region
        _
      $region36: #{forward.16} parent=31 // pred_fallthru
        _
    $region32: #{forward.16} parent=5 // pred_fallthru
      _
    %p1672 = scmp.le.s32.totalorder 2, %s9
    // Predicated region
    $region37: #{forward.16} parent=5 // pred_check
      %p1673 = pneg %p1672
    $region38: #{forward.16} parent=5 // pred_check_branch
      %1675 = sbr.rel (%p1673) target = $region40
    $region39: #{forward.16} parent=5 // pred_region
      %s1676 = ssub.s32 %s9, 2
      // Predicated region
      $region41: #{forward.16} parent=39 // pred_check
        %p1677 = pneg %p106
      $region42: #{forward.16} parent=39 // pred_check_branch
        %1679 = sbr.rel (%p1677) target = $region44
      $region43: #{forward.16} parent=39 // pred_region
        %p1680 = scmp.lt.s32.totalorder %s15, 1
        %s1681 = scalar_select %p1680, %s15, 1
        %s1682 = smul.addr %s1681, 16
        %s1683 = smul.addr %s1682, 4
        %s1684 = scalar_lea.vmem %s3, %s1683
      $region44: #{forward.16} parent=39 // pred_fallthru
        _
    $region40: #{forward.16} parent=5 // pred_fallthru
      _
  $region6: #{forward.16} parent=0 // loop_footer
    %s13 = sadd.s32 1, %s9
  $region7: #{forward.16} parent=0 // loop_footer_branch
    %8 = sbr.rel target = $region3
  $region8: #{forward.16} parent=0 // loop_exit
    _

// kernel: forward.19
$region0: #{forward.19}
  #allocation0 [shape = 'u32[]', space=smem, size = 0x4, offset = 0x4, fixed_abs, tag = 'smem constant byte address 0x4 - core index']
  #allocation1 [shape = 'u32[72,128]{1,0:T(1,128)}', space=vmem, size = 0x9000, scoped, tag = 'internal scratch']
  %s0 = inlined_call_operand.vmem [shape: f32[2,64,4], index: 0, kind: input, shape index: {}]
  %s1 = inlined_call_operand.vmem [shape: f32[4,12], index: 1, kind: input, shape index: {}]
  %s2 = inlined_call_operand.vmem [shape: f32[1,12], index: 2, kind: input, shape index: {}]
  %s3 = inlined_call_operand.vmem [shape: f32[4,4], index: 3, kind: input, shape index: {}]
  %s4 = inlined_call_operand.vmem [shape: f32[1,4], index: 4, kind: input, shape index: {}]
  %s5 = inlined_call_operand.vmem [shape: f32[1,4], index: 5, kind: input, shape index: {}]
  %s6 = inlined_call_operand.vmem [shape: f32[1,4], index: 6, kind: input, shape index: {}]
  %s7 = inlined_call_operand.vmem [shape: f32[2,64,4], index: 7, kind: output, shape index: {}]
  %s8 = sld [smem:[#allocation0]]
  $region61: #{forward.19} parent=0
    _
  %s10 = ssub.s32 1, %s8
  %s11 = scalar_select 0, %s10, %s8
  loop: start=0, step=1, limit=4
  $region2: #{forward.19} parent=0 // loop_pre_header
    _
  $region3: #{forward.19} parent=0 // loop_header
    %s13 = sphi 0, %s17
    %p14 = scmp.ge.s32.totalorder %s13, 4
    %s23 = sphi 0, %s25
    %s26 = sphi 0, %s23
    %s27 = sphi 0, %s26
    %s43 = sphi 0, %s27
    %s47 = sphi 0, %s47
    %s49 = sphi 0, %s47
    %s50 = sphi 0, %s49
    %s64 = sphi 0, %s50
    %s68 = sphi 0, %s68
    %s70 = sphi 0, %s68
    %s71 = sphi 0, %s70
    %s85 = sphi 0, %s71
    %s89 = sphi 0, %s89
    %s91 = sphi 0, %s89
    %s92 = sphi 0, %s91
    %s106 = sphi 0, %s92
    %s110 = sphi 0, %s110
    %s112 = sphi 0, %s110
    %s113 = sphi 0, %s112
    %s127 = sphi 0, %s113
    %s131 = sphi 0, %s131
    %s133 = sphi 0, %s131
    %s134 = sphi 0, %s133
    %s148 = sphi 0, %s134
    %s152 = sphi 0, %s152
    %s154 = sphi 0, %s152
    %s155 = sphi 0, %s154
    %s169 = sphi 0, %s155
    %s175 = sphi 0, %s177
    %s178 = sphi 0, %s175
    %s179 = sphi 0, %s178
    %s195 = sphi 0, %s179
  $region4: #{forward.19} parent=0 // loop_header_branch
    %16 = sbr.rel (%p14) target = $region8
  $region5: #{forward.19} parent=0 // loop_body
    %s18 = ssub.s32 %s13, 1
    %s19 = ssub.s32 %s13, 2
    %s20 = sadd.s32 %s13, 1
    %s21 = ssub.s32 %s13, %s20
    %p22 = scmp.eq.s32.totalorder %s21, 0
    %s24 = sadd.s32 %s23, 1
    %s25 = scalar_select %p22, %s23, %s24
    %p28 = pneg %p22
    %p29 = scmp.eq.s32.totalorder %s13, 1
    %p30 = por %p28, %p29
    %p31 = scmp.ne.s32.totalorder %s23, %s26
    %p32 = scmp.eq.s32.totalorder %s13, 0
    %p33 = por %p31, %p32
    %p34 = scmp.ne.s32.totalorder %s23, %s26
    %p35 = scmp.eq.s32.totalorder %s18, 1
    %p36 = por %p34, %p35
    %p37 = scmp.ne.s32.totalorder %s26, %s27
    %p38 = scmp.eq.s32.totalorder %s18, 0
    %p39 = por %p37, %p38
    %p40 = scmp.ne.s32.totalorder %s26, %s27
    %p41 = scmp.eq.s32.totalorder %s19, 1
    %p42 = por %p40, %p41
    %p44 = scmp.ne.s32.totalorder %s27, %s43
    %p45 = scmp.eq.s32.totalorder %s19, 0
    %p46 = por %p44, %p45
    %s48 = sadd.s32 %s47, 1
    %p51 = scmp.eq.s32.totalorder %s13, 1
    %p52 = scmp.ne.s32.totalorder %s47, %s49
    %p53 = scmp.eq.s32.totalorder %s13, 0
    %p54 = por %p52, %p53
    %p55 = scmp.ne.s32.totalorder %s47, %s49
    %p56 = scmp.eq.s32.totalorder %s18, 1
    %p57 = por %p55, %p56
    %p58 = scmp.ne.s32.totalorder %s49, %s50
    %p59 = scmp.eq.s32.totalorder %s18, 0
    %p60 = por %p58, %p59
    %p61 = scmp.ne.s32.totalorder %s49, %s50
    %p62 = scmp.eq.s32.totalorder %s19, 1
    %p63 = por %p61, %p62
    %p65 = scmp.ne.s32.totalorder %s50, %s64
    %p66 = scmp.eq.s32.totalorder %s19, 0
    %p67 = por %p65, %p66
    %s69 = sadd.s32 %s68, 1
    %p72 = scmp.eq.s32.totalorder %s13, 1
    %p73 = scmp.ne.s32.totalorder %s68, %s70
    %p74 = scmp.eq.s32.totalorder %s13, 0
    %p75 = por %p73, %p74
    %p76 = scmp.ne.s32.totalorder %s68, %s70
    %p77 = scmp.eq.s32.totalorder %s18, 1
    %p78 = por %p76, %p77
    %p79 = scmp.ne.s32.totalorder %s70, %s71
    %p80 = scmp.eq.s32.totalorder %s18, 0
    %p81 = por %p79, %p80
    %p82 = scmp.ne.s32.totalorder %s70, %s71
    %p83 = scmp.eq.s32.totalorder %s19, 1
    %p84 = por %p82, %p83
    %p86 = scmp.ne.s32.totalorder %s71, %s85
    %p87 = scmp.eq.s32.totalorder %s19, 0
    %p88 = por %p86, %p87
    %s90 = sadd.s32 %s89, 1
    %p93 = scmp.eq.s32.totalorder %s13, 1
    %p94 = scmp.ne.s32.totalorder %s89, %s91
    %p95 = scmp.eq.s32.totalorder %s13, 0
    %p96 = por %p94, %p95
    %p97 = scmp.ne.s32.totalorder %s89, %s91
    %p98 = scmp.eq.s32.totalorder %s18, 1
    %p99 = por %p97, %p98
    %p100 = scmp.ne.s32.totalorder %s91, %s92
    %p101 = scmp.eq.s32.totalorder %s18, 0
    %p102 = por %p100, %p101
    %p103 = scmp.ne.s32.totalorder %s91, %s92
    %p104 = scmp.eq.s32.totalorder %s19, 1
    %p105 = por %p103, %p104
    %p107 = scmp.ne.s32.totalorder %s92, %s106
    %p108 = scmp.eq.s32.totalorder %s19, 0
    %p109 = por %p107, %p108
    %s111 = sadd.s32 %s110, 1
    %p114 = scmp.eq.s32.totalorder %s13, 1
    %p115 = scmp.ne.s32.totalorder %s110, %s112
    %p116 = scmp.eq.s32.totalorder %s13, 0
    %p117 = por %p115, %p116
    %p118 = scmp.ne.s32.totalorder %s110, %s112
    %p119 = scmp.eq.s32.totalorder %s18, 1
    %p120 = por %p118, %p119
    %p121 = scmp.ne.s32.totalorder %s112, %s113
    %p122 = scmp.eq.s32.totalorder %s18, 0
    %p123 = por %p121, %p122
    %p124 = scmp.ne.s32.totalorder %s112, %s113
    %p125 = scmp.eq.s32.totalorder %s19, 1
    %p126 = por %p124, %p125
    %p128 = scmp.ne.s32.totalorder %s113, %s127
    %p129 = scmp.eq.s32.totalorder %s19, 0
    %p130 = por %p128, %p129
    %s132 = sadd.s32 %s131, 1
    %p135 = scmp.eq.s32.totalorder %s13, 1
    %p136 = scmp.ne.s32.totalorder %s131, %s133
    %p137 = scmp.eq.s32.totalorder %s13, 0
    %p138 = por %p136, %p137
    %p139 = scmp.ne.s32.totalorder %s131, %s133
    %p140 = scmp.eq.s32.totalorder %s18, 1
    %p141 = por %p139, %p140
    %p142 = scmp.ne.s32.totalorder %s133, %s134
    %p143 = scmp.eq.s32.totalorder %s18, 0
    %p144 = por %p142, %p143
    %p145 = scmp.ne.s32.totalorder %s133, %s134
    %p146 = scmp.eq.s32.totalorder %s19, 1
    %p147 = por %p145, %p146
    %p149 = scmp.ne.s32.totalorder %s134, %s148
    %p150 = scmp.eq.s32.totalorder %s19, 0
    %p151 = por %p149, %p150
    %s153 = sadd.s32 %s152, 1
    %p156 = scmp.eq.s32.totalorder %s13, 1
    %p157 = scmp.ne.s32.totalorder %s152, %s154
    %p158 = scmp.eq.s32.totalorder %s13, 0
    %p159 = por %p157, %p158
    %p160 = scmp.ne.s32.totalorder %s152, %s154
    %p161 = scmp.eq.s32.totalorder %s18, 1
    %p162 = por %p160, %p161
    %p163 = scmp.ne.s32.totalorder %s154, %s155
    %p164 = scmp.eq.s32.totalorder %s18, 0
    %p165 = por %p163, %p164
    %p166 = scmp.ne.s32.totalorder %s154, %s155
    %p167 = scmp.eq.s32.totalorder %s19, 1
    %p168 = por %p166, %p167
    %p170 = scmp.ne.s32.totalorder %s155, %s169
    %p171 = scmp.eq.s32.totalorder %s19, 0
    %p172 = por %p170, %p171
    %s173 = ssub.s32 %s13, %s20
    %p174 = scmp.eq.s32.totalorder %s173, 0
    %s176 = sadd.s32 %s175, 1
    %s177 = scalar_select %p174, %s175, %s176
    %p180 = pneg %p174
    %p181 = scmp.eq.s32.totalorder %s13, 1
    %p182 = por %p180, %p181
    %p183 = scmp.ne.s32.totalorder %s175, %s178
    %p184 = scmp.eq.s32.totalorder %s13, 0
    %p185 = por %p183, %p184
    %p186 = scmp.ne.s32.totalorder %s175, %s178
    %p187 = scmp.eq.s32.totalorder %s18, 1
    %p188 = por %p186, %p187
    %p189 = scmp.ne.s32.totalorder %s178, %s179
    %p190 = scmp.eq.s32.totalorder %s18, 0
    %p191 = por %p189, %p190
    %p192 = scmp.ne.s32.totalorder %s178, %s179
    %p193 = scmp.eq.s32.totalorder %s19, 1
    %p194 = por %p192, %p193
    %p196 = scmp.ne.s32.totalorder %s179, %s195
    %p197 = scmp.eq.s32.totalorder %s19, 0
    %p198 = por %p196, %p197
    %p199 = scmp.le.s32.totalorder 1, %s13
    %p200 = scmp.lt.s32.totalorder %s13, 3
    %p201 = pnand %p199, %p200
    %p202 = pneg %p201
    // Predicated region
    $region9: #{forward.19} parent=5 // pred_check
      _
    $region10: #{forward.19} parent=5 // pred_check_branch
      %204 = sbr.rel (%p201) target = $region12
    $region11: #{forward.19} parent=5 // pred_region
      %s205 = ssub.s32 %s13, 1
      // Predicated region
      $region13: #{forward.19} parent=11 // pred_check
        %p206 = pneg %p60
      $region14: #{forward.19} parent=11 // pred_check_branch
        %208 = sbr.rel (%p206) target = $region16
      $region15: #{forward.19} parent=11 // pred_region
        _
      $region16: #{forward.19} parent=11 // pred_fallthru
        _
      // Predicated region
      $region17: #{forward.19} parent=11 // pred_check
        %p209 = pneg %p81
      $region18: #{forward.19} parent=11 // pred_check_branch
        %211 = sbr.rel (%p209) target = $region20
      $region19: #{forward.19} parent=11 // pred_region
        _
      $region20: #{forward.19} parent=11 // pred_fallthru
        _
      // Predicated region
      $region21: #{forward.19} parent=11 // pred_check
        %p212 = pneg %p102
      $region22: #{forward.19} parent=11 // pred_check_branch
        %214 = sbr.rel (%p212) target = $region24
      $region23: #{forward.19} parent=11 // pred_region
        _
      $region24: #{forward.19} parent=11 // pred_fallthru
        _
      // Predicated region
      $region25: #{forward.19} parent=11 // pred_check
        %p215 = pneg %p123
      $region26: #{forward.19} parent=11 // pred_check_branch
        %217 = sbr.rel (%p215) target = $region28
      $region27: #{forward.19} parent=11 // pred_region
        _
      $region28: #{forward.19} parent=11 // pred_fallthru
        _
      // Predicated region
      $region29: #{forward.19} parent=11 // pred_check
        %p218 = pneg %p144
      $region30: #{forward.19} parent=11 // pred_check_branch
        %220 = sbr.rel (%p218) target = $region32
      $region31: #{forward.19} parent=11 // pred_region
        _
      $region32: #{forward.19} parent=11 // pred_fallthru
        _
      // Predicated region
      $region33: #{forward.19} parent=11 // pred_check
        %p221 = pneg %p165
      $region34: #{forward.19} parent=11 // pred_check_branch
        %223 = sbr.rel (%p221) target = $region36
      $region35: #{forward.19} parent=11 // pred_region
        _
      $region36: #{forward.19} parent=11 // pred_fallthru
        _
    $region12: #{forward.19} parent=5 // pred_fallthru
      _
    %p224 = scmp.lt.s32.totalorder %s13, 2
    // Predicated region
    $region37: #{forward.19} parent=5 // pred_check
      %p225 = pneg %p224
    $region38: #{forward.19} parent=5 // pred_check_branch
      %227 = sbr.rel (%p225) target = $region40
    $region39: #{forward.19} parent=5 // pred_region
      // Predicated region
      $region41: #{forward.19} parent=39 // pred_check
        %p228 = pneg %p33
      $region42: #{forward.19} parent=39 // pred_check_branch
        %230 = sbr.rel (%p228) target = $region44
      $region43: #{forward.19} parent=39 // pred_region
        %p231 = scmp.lt.s32.totalorder %s13, 1
        %s232 = scalar_select %p231, %s13, 1
        %s233 = smul.addr %s232, 8
        %s234 = smul.addr %s233, 8
        %s235 = scalar_lea.vmem %s0, %s234
      $region44: #{forward.19} parent=39 // pred_fallthru
        _
    $region40: #{forward.19} parent=5 // pred_fallthru
      _
    %p236 = scmp.le.s32.totalorder 1, %s13
    %p237 = scmp.lt.s32.totalorder %s13, 3
    %p238 = pnand %p236, %p237
    %p239 = pneg %p238
    // Predicated region
    $region45: #{forward.19} parent=5 // pred_check
      _
    $region46: #{forward.19} parent=5 // pred_check_branch
      %241 = sbr.rel (%p238) target = $region48
    $region47: #{forward.19} parent=5 // pred_region
      %s242 = ssub.s32 %s13, 1
      %p243 = scmp.lt.s32.totalorder %s18, 1
      %s244 = scalar_select %p243, %s18, 1
      %s245 = smul.addr %s244, 8
      %s246 = smul.addr %s245, 8
      %s247 = scalar_lea.vmem %s0, %s246
      %p248 = pneg %p39
      %p249 = pneg %p36
      %p250 = pneg %p60
      %p251 = pneg %p57
      %p252 = pneg %p81
      %p253 = pneg %p78
      %p254 = pneg %p102
      %p255 = pneg %p99
      %p256 = pneg %p123
      %p257 = pneg %p120
      %p258 = pneg %p144
      %p259 = pneg %p141
      %p260 = pneg %p165
      %p261 = pneg %p162
      %p262 = pneg %p191
      %p263 = pneg %p188
      %p264 = scmp.lt.s32.totalorder %s18, 1
      %s265 = scalar_select %p264, %s18, 1
      %s266 = smul.addr %s265, 8
      %s267 = smul.addr %s266, 8
      %s268 = scalar_lea.vmem %s7, %s267
      %p269 = scmp.lt.s32.totalorder %s18, 1
      %s270 = scalar_select %p269, %s18, 1
      %s271 = smul.addr %s270, 8
      %s272 = smul.addr %s271, 8
      %s273 = scalar_lea.vmem %s0, %s272
      %p274 = scmp.lt.s32.totalorder %s18, 1
      %s275 = scalar_select %p274, %s18, 1
      %s276 = smul.addr %s275, 8
      %s277 = smul.addr %s276, 8
      %s278 = scalar_lea.vmem %s7, %s277
      %v279 = vld [vmem:[%s273] sm:$0xff]
      %v280 = vld [vmem:[%s273 + $0x8] sm:$0xff]
      %v281 = vld [vmem:[%s273 + $0x10] sm:$0xff]
      %v282 = vld [vmem:[%s273 + $0x18] sm:$0xff]
      %v283 = vld [vmem:[%s273 + $0x20] sm:$0xff]
      %v284 = vld [vmem:[%s273 + $0x28] sm:$0xff]
      %v285 = vld [vmem:[%s273 + $0x30] sm:$0xff]
      %v286 = vld [vmem:[%s273 + $0x38] sm:$0xff]
      %v287 = vld [vmem:[%s1] sm:$0xf]
      %v288 = vld [vmem:[%s2] sm:$0x1]
      %v290 = vperm.slane %v288, 0
      %vm292 = vcmask 31744
      %v294 = vsel %vm292, %v279, 0
      %v297 = vsel %vm292, %v280, 0
      %v300 = vsel %vm292, %v281, 0
      %v303 = vsel %vm292, %v282, 0
      %v306 = vsel %vm292, %v283, 0
      %v309 = vsel %vm292, %v284, 0
      %v312 = vsel %vm292, %v285, 0
      %v315 = vsel %vm292, %v286, 0
      %vm317 = vcmask 1043456
      %v319 = vsel %vm317, %v287, 0
      %321 = vmatpush.msra.mxu0 0.0
      %322 = vmatpush.msra.mxu0 0.0
      %323 = vmatpush.msra.mxu0 0.0
      %324 = vmatpush.msra.mxu0 0.0
      %325 = vmatpush.msra.mxu0 0.0
      %326 = vmatpush.msra.mxu0 0.0
      %327 = vmatpush.msra.mxu0 0.0
      %328 = vmatpush.msra.mxu0 0.0
      %329 = vmatpush.msra.mxu0 0.0
      %330 = vmatpush.msra.mxu0 0.0
      %331 = vmatpush.msra.mxu0 0.0
      %332 = vmatpush.msra.mxu0 0.0
      %333 = vmatpush.msra.mxu0 0.0
      %334 = vmatpush.msra.mxu0 0.0
      %335 = vmatpush.msra.mxu0 0.0
      %336 = vmatpush.msra.mxu0 %v319
      %337 = vmatmul.f32.gmra.mxu0 %v294
      %v338 = vpop.f32.mrf.mxu0
      %v339 = vadd.f32 %v290, %v338
      %340 = vmatmul.f32.gmra.mxu0 %v297
      %v341 = vpop.f32.mrf.mxu0
      %v342 = vadd.f32 %v290, %v341
      %343 = vmatmul.f32.gmra.mxu0 %v300
      %v344 = vpop.f32.mrf.mxu0
      %v345 = vadd.f32 %v290, %v344
      %346 = vmatmul.f32.gmra.mxu0 %v303
      %v347 = vpop.f32.mrf.mxu0
      %v348 = vadd.f32 %v290, %v347
      %349 = vmatmul.f32.gmra.mxu0 %v306
      %v350 = vpop.f32.mrf.mxu0
      %v351 = vadd.f32 %v290, %v350
      %352 = vmatmul.f32.gmra.mxu0 %v309
      %v353 = vpop.f32.mrf.mxu0
      %v354 = vadd.f32 %v290, %v353
      %355 = vmatmul.f32.gmra.mxu0 %v312
      %v356 = vpop.f32.mrf.mxu0
      %v357 = vadd.f32 %v290, %v356
      %358 = vmatmul.f32.gmra.mxu0 %v315
      %v359 = vpop.f32.mrf.mxu0
      %v360 = vadd.f32 %v290, %v359
      %361 = vdwg.mxu0
      %370 = vrot.lane.b32.xlu0 %v339, 124
      %v371 = vpop.permute.xlu0 %370
      %372 = vrot.lane.b32.xlu0 %v342, 124
      %v373 = vpop.permute.xlu0 %372
      %374 = vrot.lane.b32.xlu0 %v345, 124
      %v375 = vpop.permute.xlu0 %374
      %376 = vrot.lane.b32.xlu0 %v348, 124
      %v377 = vpop.permute.xlu0 %376
      %378 = vrot.lane.b32.xlu0 %v351, 124
      %v379 = vpop.permute.xlu0 %378
      %380 = vrot.lane.b32.xlu0 %v354, 124
      %v381 = vpop.permute.xlu0 %380
      %382 = vrot.lane.b32.xlu0 %v357, 124
      %v383 = vpop.permute.xlu0 %382
      %384 = vrot.lane.b32.xlu0 %v360, 124
      %v385 = vpop.permute.xlu0 %384
      %vm386 = vcmask 15360
      %v387 = vsel %vm386, %v339, 0
      %v389 = vsel %vm386, %v342, 0
      %v391 = vsel %vm386, %v345, 0
      %v393 = vsel %vm386, %v348, 0
      %v395 = vsel %vm386, %v351, 0
      %v397 = vsel %vm386, %v354, 0
      %v399 = vsel %vm386, %v357, 0
      %v401 = vsel %vm386, %v360, 0
      %v403 = vsel %vm386, %v371, 0
      %v405 = vsel %vm386, %v373, 0
      %v407 = vsel %vm386, %v375, 0
      %v409 = vsel %vm386, %v377, 0
      %v411 = vsel %vm386, %v379, 0
      %v413 = vsel %vm386, %v381, 0
      %v415 = vsel %vm386, %v383, 0
      %v417 = vsel %vm386, %v385, 0
      %419 = vmatpush.xpose.msra.mxu0 0.0
      %420 = vmatpush.xpose.msra.mxu0 0.0
      %421 = vmatpush.xpose.msra.mxu0 0.0
      %422 = vmatpush.xpose.msra.mxu0 0.0
      %423 = vmatpush.xpose.msra.mxu0 0.0
      %424 = vmatpush.xpose.msra.mxu0 0.0
      %425 = vmatpush.xpose.msra.mxu0 0.0
      %426 = vmatpush.xpose.msra.mxu0 0.0
      %427 = vmatpush.xpose.msra.mxu0 %v417
      %428 = vmatpush.xpose.msra.mxu0 %v415
      %429 = vmatpush.xpose.msra.mxu0 %v413
      %430 = vmatpush.xpose.msra.mxu0 %v411
      %431 = vmatpush.xpose.msra.mxu0 %v409
      %432 = vmatpush.xpose.msra.mxu0 %v407
      %433 = vmatpush.xpose.msra.mxu0 %v405
      %434 = vmatpush.xpose.msra.mxu0 %v403
      %435 = vmatmul.f32.gmra.mxu0 %v387
      %v436 = vpop.f32.mrf.mxu0
      %v437 = vadd.f32 0.0, %v436
      %438 = vmatmul.f32.gmra.mxu0 %v389
      %v439 = vpop.f32.mrf.mxu0
      %v440 = vadd.f32 0.0, %v439
      %441 = vmatmul.f32.gmra.mxu0 %v391
      %v442 = vpop.f32.mrf.mxu0
      %v443 = vadd.f32 0.0, %v442
      %444 = vmatmul.f32.gmra.mxu0 %v393
      %v445 = vpop.f32.mrf.mxu0
      %v446 = vadd.f32 0.0, %v445
      %447 = vmatmul.f32.gmra.mxu0 %v395
      %v448 = vpop.f32.mrf.mxu0
      %v449 = vadd.f32 0.0, %v448
      %450 = vmatmul.f32.gmra.mxu0 %v397
      %v451 = vpop.f32.mrf.mxu0
      %v452 = vadd.f32 0.0, %v451
      %453 = vmatmul.f32.gmra.mxu0 %v399
      %v454 = vpop.f32.mrf.mxu0
      %v455 = vadd.f32 0.0, %v454
      %456 = vmatmul.f32.gmra.mxu0 %v401
      %v457 = vpop.f32.mrf.mxu0
      %v458 = vadd.f32 0.0, %v457
      %459 = vdwg.mxu0
      %v460 = vmul.f32 %v437, 0.70710677
      %v461 = vmul.f32 %v440, 0.70710677
      %v462 = vmul.f32 %v443, 0.70710677
      %v463 = vmul.f32 %v446, 0.70710677
      %v464 = vmul.f32 %v449, 0.70710677
      %v465 = vmul.f32 %v452, 0.70710677
      %v466 = vmul.f32 %v455, 0.70710677
      %v467 = vmul.f32 %v458, 0.70710677
      %vm468 = vcmask 523264
      %v469 = vsel %vm468, %v460, -inf
      %470 = vmax.xlane.f32.xlu0 %v469
      %v471 = vpop.xlane.xlu0 %470
      %v472 = vsel %vm468, %v461, -inf
      %473 = vmax.xlane.f32.xlu0 %v472
      %v474 = vpop.xlane.xlu0 %473
      %v475 = vsel %vm468, %v462, -inf
      %476 = vmax.xlane.f32.xlu0 %v475
      %v477 = vpop.xlane.xlu0 %476
      %v478 = vsel %vm468, %v463, -inf
      %479 = vmax.xlane.f32.xlu0 %v478
      %v480 = vpop.xlane.xlu0 %479
      %v481 = vsel %vm468, %v464, -inf
      %482 = vmax.xlane.f32.xlu0 %v481
      %v483 = vpop.xlane.xlu0 %482
      %v484 = vsel %vm468, %v465, -inf
      %485 = vmax.xlane.f32.xlu0 %v484
      %v486 = vpop.xlane.xlu0 %485
      %v487 = vsel %vm468, %v466, -inf
      %488 = vmax.xlane.f32.xlu0 %v487
      %v489 = vpop.xlane.xlu0 %488
      %v490 = vsel %vm468, %v467, -inf
      %491 = vmax.xlane.f32.xlu0 %v490
      %v492 = vpop.xlane.xlu0 %491
      %v493 = vsub.f32 %v460, %v471
      %v494 = vsub.f32 %v461, %v474
      %v495 = vsub.f32 %v462, %v477
      %v496 = vsub.f32 %v463, %v480
      %v497 = vsub.f32 %v464, %v483
      %v498 = vsub.f32 %v465, %v486
      %v499 = vsub.f32 %v466, %v489
      %v500 = vsub.f32 %v467, %v492
      %v501 = vmul.f32 %v493, 1.442695
      %v502 = vpow.pop %v501
      %v503 = vmul.f32 %v494, 1.442695
      %v504 = vpow.pop %v503
      %v505 = vmul.f32 %v495, 1.442695
      %v506 = vpow.pop %v505
      %v507 = vmul.f32 %v496, 1.442695
      %v508 = vpow.pop %v507
      %v509 = vmul.f32 %v497, 1.442695
      %v510 = vpow.pop %v509
      %v511 = vmul.f32 %v498, 1.442695
      %v512 = vpow.pop %v511
      %v513 = vmul.f32 %v499, 1.442695
      %v514 = vpow.pop %v513
      %v515 = vmul.f32 %v500, 1.442695
      %v516 = vpow.pop %v515
      %v517 = vsel %vm468, %v502, 0.0
      %518 = vadd.xlane.f32.xlu0 %v517
      %v519 = vpop.xlane.xlu0 %518
      %v520 = vsel %vm468, %v504, 0.0
      %521 = vadd.xlane.f32.xlu0 %v520
      %v522 = vpop.xlane.xlu0 %521
      %v523 = vsel %vm468, %v506, 0.0
      %524 = vadd.xlane.f32.xlu0 %v523
      %v525 = vpop.xlane.xlu0 %524
      %v526 = vsel %vm468, %v508, 0.0
      %527 = vadd.xlane.f32.xlu0 %v526
      %v528 = vpop.xlane.xlu0 %527
      %v529 = vsel %vm468, %v510, 0.0
      %530 = vadd.xlane.f32.xlu0 %v529
      %v531 = vpop.xlane.xlu0 %530
      %v532 = vsel %vm468, %v512, 0.0
      %533 = vadd.xlane.f32.xlu0 %v532
      %v534 = vpop.xlane.xlu0 %533
      %v535 = vsel %vm468, %v514, 0.0
      %536 = vadd.xlane.f32.xlu0 %v535
      %v537 = vpop.xlane.xlu0 %536
      %v538 = vsel %vm468, %v516, 0.0
      %539 = vadd.xlane.f32.xlu0 %v538
      %v540 = vpop.xlane.xlu0 %539
      %v541 = vrcp.pop %v519
      %v542 = vrcp.pop %v522
      %v543 = vrcp.pop %v525
      %v544 = vrcp.pop %v528
      %v545 = vrcp.pop %v531
      %v546 = vrcp.pop %v534
      %v547 = vrcp.pop %v537
      %v548 = vrcp.pop %v540
      %v549 = vmul.f32 %v502, %v541
      %v550 = vmul.f32 %v504, %v542
      %v551 = vmul.f32 %v506, %v543
      %v552 = vmul.f32 %v508, %v544
      %v553 = vmul.f32 %v510, %v545
      %v554 = vmul.f32 %v512, %v546
      %v555 = vmul.f32 %v514, %v547
      %v556 = vmul.f32 %v516, %v548
      %557 = vrot.lane.b32.xlu0 %v339, 120
      %v558 = vpop.permute.xlu0 %557
      %559 = vrot.lane.b32.xlu0 %v342, 120
      %v560 = vpop.permute.xlu0 %559
      %561 = vrot.lane.b32.xlu0 %v345, 120
      %v562 = vpop.permute.xlu0 %561
      %563 = vrot.lane.b32.xlu0 %v348, 120
      %v564 = vpop.permute.xlu0 %563
      %565 = vrot.lane.b32.xlu0 %v351, 120
      %v566 = vpop.permute.xlu0 %565
      %567 = vrot.lane.b32.xlu0 %v354, 120
      %v568 = vpop.permute.xlu0 %567
      %569 = vrot.lane.b32.xlu0 %v357, 120
      %v570 = vpop.permute.xlu0 %569
      %571 = vrot.lane.b32.xlu0 %v360, 120
      %v572 = vpop.permute.xlu0 %571
      %v582 = vsel %vm468, %v549, 0
      %v585 = vsel %vm468, %v550, 0
      %v588 = vsel %vm468, %v551, 0
      %v591 = vsel %vm468, %v552, 0
      %v594 = vsel %vm468, %v553, 0
      %v597 = vsel %vm468, %v554, 0
      %v600 = vsel %vm468, %v555, 0
      %v603 = vsel %vm468, %v556, 0
      %605 = vmatpush.msra.mxu0 0.0
      %606 = vmatpush.msra.mxu0 0.0
      %607 = vmatpush.msra.mxu0 0.0
      %608 = vmatpush.msra.mxu0 0.0
      %609 = vmatpush.msra.mxu0 0.0
      %610 = vmatpush.msra.mxu0 0.0
      %611 = vmatpush.msra.mxu0 0.0
      %612 = vmatpush.msra.mxu0 0.0
      %613 = vmatpush.msra.mxu0 %v572
      %614 = vmatpush.msra.mxu0 %v570
      %615 = vmatpush.msra.mxu0 %v568
      %616 = vmatpush.msra.mxu0 %v566
      %617 = vmatpush.msra.mxu0 %v564
      %618 = vmatpush.msra.mxu0 %v562
      %619 = vmatpush.msra.mxu0 %v560
      %620 = vmatpush.msra.mxu0 %v558
      %621 = vmatmul.f32.gmra.mxu0 %v582
      %v622 = vpop.f32.mrf.mxu0
      %v623 = vadd.f32 0.0, %v622
      %624 = vmatmul.f32.gmra.mxu0 %v585
      %v625 = vpop.f32.mrf.mxu0
      %v626 = vadd.f32 0.0, %v625
      %627 = vmatmul.f32.gmra.mxu0 %v588
      %v628 = vpop.f32.mrf.mxu0
      %v629 = vadd.f32 0.0, %v628
      %630 = vmatmul.f32.gmra.mxu0 %v591
      %v631 = vpop.f32.mrf.mxu0
      %v632 = vadd.f32 0.0, %v631
      %633 = vmatmul.f32.gmra.mxu0 %v594
      %v634 = vpop.f32.mrf.mxu0
      %v635 = vadd.f32 0.0, %v634
      %636 = vmatmul.f32.gmra.mxu0 %v597
      %v637 = vpop.f32.mrf.mxu0
      %v638 = vadd.f32 0.0, %v637
      %639 = vmatmul.f32.gmra.mxu0 %v600
      %v640 = vpop.f32.mrf.mxu0
      %v641 = vadd.f32 0.0, %v640
      %642 = vmatmul.f32.gmra.mxu0 %v603
      %v643 = vpop.f32.mrf.mxu0
      %v644 = vadd.f32 0.0, %v643
      %645 = vdwg.mxu0
      %646 = vrot.lane.b32.xlu0 %v339, 126
      %v647 = vpop.permute.xlu0 %646
      %648 = vrot.lane.b32.xlu0 %v342, 126
      %v649 = vpop.permute.xlu0 %648
      %650 = vrot.lane.b32.xlu0 %v345, 126
      %v651 = vpop.permute.xlu0 %650
      %652 = vrot.lane.b32.xlu0 %v348, 126
      %v653 = vpop.permute.xlu0 %652
      %654 = vrot.lane.b32.xlu0 %v351, 126
      %v655 = vpop.permute.xlu0 %654
      %656 = vrot.lane.b32.xlu0 %v354, 126
      %v657 = vpop.permute.xlu0 %656
      %658 = vrot.lane.b32.xlu0 %v357, 126
      %v659 = vpop.permute.xlu0 %658
      %660 = vrot.lane.b32.xlu0 %v360, 126
      %v661 = vpop.permute.xlu0 %660
      %662 = vrot.lane.b32.xlu0 %v339, 122
      %v663 = vpop.permute.xlu0 %662
      %664 = vrot.lane.b32.xlu0 %v342, 122
      %v665 = vpop.permute.xlu0 %664
      %666 = vrot.lane.b32.xlu0 %v345, 122
      %v667 = vpop.permute.xlu0 %666
      %668 = vrot.lane.b32.xlu0 %v348, 122
      %v669 = vpop.permute.xlu0 %668
      %670 = vrot.lane.b32.xlu0 %v351, 122
      %v671 = vpop.permute.xlu0 %670
      %672 = vrot.lane.b32.xlu0 %v354, 122
      %v673 = vpop.permute.xlu0 %672
      %674 = vrot.lane.b32.xlu0 %v357, 122
      %v675 = vpop.permute.xlu0 %674
      %676 = vrot.lane.b32.xlu0 %v360, 122
      %v677 = vpop.permute.xlu0 %676
      %v678 = vsel %vm386, %v647, 0
      %v680 = vsel %vm386, %v649, 0
      %v682 = vsel %vm386, %v651, 0
      %v684 = vsel %vm386, %v653, 0
      %v686 = vsel %vm386, %v655, 0
      %v688 = vsel %vm386, %v657, 0
      %v690 = vsel %vm386, %v659, 0
      %v692 = vsel %vm386, %v661, 0
      %v694 = vsel %vm386, %v663, 0
      %v696 = vsel %vm386, %v665, 0
      %v698 = vsel %vm386, %v667, 0
      %v700 = vsel %vm386, %v669, 0
      %v702 = vsel %vm386, %v671, 0
      %v704 = vsel %vm386, %v673, 0
      %v706 = vsel %vm386, %v675, 0
      %v708 = vsel %vm386, %v677, 0
      %710 = vmatpush.xpose.msra.mxu0 0.0
      %711 = vmatpush.xpose.msra.mxu0 0.0
      %712 = vmatpush.xpose.msra.mxu0 0.0
      %713 = vmatpush.xpose.msra.mxu0 0.0
      %714 = vmatpush.xpose.msra.mxu0 0.0
      %715 = vmatpush.xpose.msra.mxu0 0.0
      %716 = vmatpush.xpose.msra.mxu0 0.0
      %717 = vmatpush.xpose.msra.mxu0 0.0
      %718 = vmatpush.xpose.msra.mxu0 %v708
      %719 = vmatpush.xpose.msra.mxu0 %v706
      %720 = vmatpush.xpose.msra.mxu0 %v704
      %721 = vmatpush.xpose.msra.mxu0 %v702
      %722 = vmatpush.xpose.msra.mxu0 %v700
      %723 = vmatpush.xpose.msra.mxu0 %v698
      %724 = vmatpush.xpose.msra.mxu0 %v696
      %725 = vmatpush.xpose.msra.mxu0 %v694
      %726 = vmatmul.f32.gmra.mxu0 %v678
      %v727 = vpop.f32.mrf.mxu0
      %v728 = vadd.f32 0.0, %v727
      %729 = vmatmul.f32.gmra.mxu0 %v680
      %v730 = vpop.f32.mrf.mxu0
      %v731 = vadd.f32 0.0, %v730
      %732 = vmatmul.f32.gmra.mxu0 %v682
      %v733 = vpop.f32.mrf.mxu0
      %v734 = vadd.f32 0.0, %v733
      %735 = vmatmul.f32.gmra.mxu0 %v684
      %v736 = vpop.f32.mrf.mxu0
      %v737 = vadd.f32 0.0, %v736
      %738 = vmatmul.f32.gmra.mxu0 %v686
      %v739 = vpop.f32.mrf.mxu0
      %v740 = vadd.f32 0.0, %v739
      %741 = vmatmul.f32.gmra.mxu0 %v688
      %v742 = vpop.f32.mrf.mxu0
      %v743 = vadd.f32 0.0, %v742
      %744 = vmatmul.f32.gmra.mxu0 %v690
      %v745 = vpop.f32.mrf.mxu0
      %v746 = vadd.f32 0.0, %v745
      %747 = vmatmul.f32.gmra.mxu0 %v692
      %v748 = vpop.f32.mrf.mxu0
      %v749 = vadd.f32 0.0, %v748
      %750 = vdwg.mxu0
      %v751 = vmul.f32 %v728, 0.70710677
      %v752 = vmul.f32 %v731, 0.70710677
      %v753 = vmul.f32 %v734, 0.70710677
      %v754 = vmul.f32 %v737, 0.70710677
      %v755 = vmul.f32 %v740, 0.70710677
      %v756 = vmul.f32 %v743, 0.70710677
      %v757 = vmul.f32 %v746, 0.70710677
      %v758 = vmul.f32 %v749, 0.70710677
      %v759 = vsel %vm468, %v751, -inf
      %760 = vmax.xlane.f32.xlu0 %v759
      %v761 = vpop.xlane.xlu0 %760
      %v762 = vsel %vm468, %v752, -inf
      %763 = vmax.xlane.f32.xlu0 %v762
      %v764 = vpop.xlane.xlu0 %763
      %v765 = vsel %vm468, %v753, -inf
      %766 = vmax.xlane.f32.xlu0 %v765
      %v767 = vpop.xlane.xlu0 %766
      %v768 = vsel %vm468, %v754, -inf
      %769 = vmax.xlane.f32.xlu0 %v768
      %v770 = vpop.xlane.xlu0 %769
      %v771 = vsel %vm468, %v755, -inf
      %772 = vmax.xlane.f32.xlu0 %v771
      %v773 = vpop.xlane.xlu0 %772
      %v774 = vsel %vm468, %v756, -inf
      %775 = vmax.xlane.f32.xlu0 %v774
      %v776 = vpop.xlane.xlu0 %775
      %v777 = vsel %vm468, %v757, -inf
      %778 = vmax.xlane.f32.xlu0 %v777
      %v779 = vpop.xlane.xlu0 %778
      %v780 = vsel %vm468, %v758, -inf
      %781 = vmax.xlane.f32.xlu0 %v780
      %v782 = vpop.xlane.xlu0 %781
      %v783 = vsub.f32 %v751, %v761
      %v784 = vsub.f32 %v752, %v764
      %v785 = vsub.f32 %v753, %v767
      %v786 = vsub.f32 %v754, %v770
      %v787 = vsub.f32 %v755, %v773
      %v788 = vsub.f32 %v756, %v776
      %v789 = vsub.f32 %v757, %v779
      %v790 = vsub.f32 %v758, %v782
      %v791 = vmul.f32 %v783, 1.442695
      %v792 = vpow.pop %v791
      %v793 = vmul.f32 %v784, 1.442695
      %v794 = vpow.pop %v793
      %v795 = vmul.f32 %v785, 1.442695
      %v796 = vpow.pop %v795
      %v797 = vmul.f32 %v786, 1.442695
      %v798 = vpow.pop %v797
      %v799 = vmul.f32 %v787, 1.442695
      %v800 = vpow.pop %v799
      %v801 = vmul.f32 %v788, 1.442695
      %v802 = vpow.pop %v801
      %v803 = vmul.f32 %v789, 1.442695
      %v804 = vpow.pop %v803
      %v805 = vmul.f32 %v790, 1.442695
      %v806 = vpow.pop %v805
      %v807 = vsel %vm468, %v792, 0.0
      %808 = vadd.xlane.f32.xlu0 %v807
      %v809 = vpop.xlane.xlu0 %808
      %v810 = vsel %vm468, %v794, 0.0
      %811 = vadd.xlane.f32.xlu0 %v810
      %v812 = vpop.xlane.xlu0 %811
      %v813 = vsel %vm468, %v796, 0.0
      %814 = vadd.xlane.f32.xlu0 %v813
      %v815 = vpop.xlane.xlu0 %814
      %v816 = vsel %vm468, %v798, 0.0
      %817 = vadd.xlane.f32.xlu0 %v816
      %v818 = vpop.xlane.xlu0 %817
      %v819 = vsel %vm468, %v800, 0.0
      %820 = vadd.xlane.f32.xlu0 %v819
      %v821 = vpop.xlane.xlu0 %820
      %v822 = vsel %vm468, %v802, 0.0
      %823 = vadd.xlane.f32.xlu0 %v822
      %v824 = vpop.xlane.xlu0 %823
      %v825 = vsel %vm468, %v804, 0.0
      %826 = vadd.xlane.f32.xlu0 %v825
      %v827 = vpop.xlane.xlu0 %826
      %v828 = vsel %vm468, %v806, 0.0
      %829 = vadd.xlane.f32.xlu0 %v828
      %v830 = vpop.xlane.xlu0 %829
      %v831 = vrcp.pop %v809
      %v832 = vrcp.pop %v812
      %v833 = vrcp.pop %v815
      %v834 = vrcp.pop %v818
      %v835 = vrcp.pop %v821
      %v836 = vrcp.pop %v824
      %v837 = vrcp.pop %v827
      %v838 = vrcp.pop %v830
      %v839 = vmul.f32 %v792, %v831
      %v840 = vmul.f32 %v794, %v832
      %v841 = vmul.f32 %v796, %v833
      %v842 = vmul.f32 %v798, %v834
      %v843 = vmul.f32 %v800, %v835
      %v844 = vmul.f32 %v802, %v836
      %v845 = vmul.f32 %v804, %v837
      %v846 = vmul.f32 %v806, %v838
      %847 = vrot.lane.b32.xlu0 %v339, 118
      %v848 = vpop.permute.xlu0 %847
      %849 = vrot.lane.b32.xlu0 %v342, 118
      %v850 = vpop.permute.xlu0 %849
      %851 = vrot.lane.b32.xlu0 %v345, 118
      %v852 = vpop.permute.xlu0 %851
      %853 = vrot.lane.b32.xlu0 %v348, 118
      %v854 = vpop.permute.xlu0 %853
      %855 = vrot.lane.b32.xlu0 %v351, 118
      %v856 = vpop.permute.xlu0 %855
      %857 = vrot.lane.b32.xlu0 %v354, 118
      %v858 = vpop.permute.xlu0 %857
      %859 = vrot.lane.b32.xlu0 %v357, 118
      %v860 = vpop.permute.xlu0 %859
      %861 = vrot.lane.b32.xlu0 %v360, 118
      %v862 = vpop.permute.xlu0 %861
      %v872 = vsel %vm468, %v839, 0
      %v875 = vsel %vm468, %v840, 0
      %v878 = vsel %vm468, %v841, 0
      %v881 = vsel %vm468, %v842, 0
      %v884 = vsel %vm468, %v843, 0
      %v887 = vsel %vm468, %v844, 0
      %v890 = vsel %vm468, %v845, 0
      %v893 = vsel %vm468, %v846, 0
      %895 = vmatpush.msra.mxu0 0.0
      %896 = vmatpush.msra.mxu0 0.0
      %897 = vmatpush.msra.mxu0 0.0
      %898 = vmatpush.msra.mxu0 0.0
      %899 = vmatpush.msra.mxu0 0.0
      %900 = vmatpush.msra.mxu0 0.0
      %901 = vmatpush.msra.mxu0 0.0
      %902 = vmatpush.msra.mxu0 0.0
      %903 = vmatpush.msra.mxu0 %v862
      %904 = vmatpush.msra.mxu0 %v860
      %905 = vmatpush.msra.mxu0 %v858
      %906 = vmatpush.msra.mxu0 %v856
      %907 = vmatpush.msra.mxu0 %v854
      %908 = vmatpush.msra.mxu0 %v852
      %909 = vmatpush.msra.mxu0 %v850
      %910 = vmatpush.msra.mxu0 %v848
      %911 = vmatmul.f32.gmra.mxu0 %v872
      %v912 = vpop.f32.mrf.mxu0
      %v913 = vadd.f32 0.0, %v912
      %914 = vmatmul.f32.gmra.mxu0 %v875
      %v915 = vpop.f32.mrf.mxu0
      %v916 = vadd.f32 0.0, %v915
      %917 = vmatmul.f32.gmra.mxu0 %v878
      %v918 = vpop.f32.mrf.mxu0
      %v919 = vadd.f32 0.0, %v918
      %920 = vmatmul.f32.gmra.mxu0 %v881
      %v921 = vpop.f32.mrf.mxu0
      %v922 = vadd.f32 0.0, %v921
      %923 = vmatmul.f32.gmra.mxu0 %v884
      %v924 = vpop.f32.mrf.mxu0
      %v925 = vadd.f32 0.0, %v924
      %926 = vmatmul.f32.gmra.mxu0 %v887
      %v927 = vpop.f32.mrf.mxu0
      %v928 = vadd.f32 0.0, %v927
      %929 = vmatmul.f32.gmra.mxu0 %v890
      %v930 = vpop.f32.mrf.mxu0
      %v931 = vadd.f32 0.0, %v930
      %932 = vmatmul.f32.gmra.mxu0 %v893
      %v933 = vpop.f32.mrf.mxu0
      %v934 = vadd.f32 0.0, %v933
      %935 = vdwg.mxu0
      %944 = vrot.lane.b32.xlu0 %v913, 2
      %v945 = vpop.permute.xlu0 %944
      %946 = vrot.lane.b32.xlu0 %v916, 2
      %v947 = vpop.permute.xlu0 %946
      %948 = vrot.lane.b32.xlu0 %v919, 2
      %v949 = vpop.permute.xlu0 %948
      %950 = vrot.lane.b32.xlu0 %v922, 2
      %v951 = vpop.permute.xlu0 %950
      %952 = vrot.lane.b32.xlu0 %v925, 2
      %v953 = vpop.permute.xlu0 %952
      %954 = vrot.lane.b32.xlu0 %v928, 2
      %v955 = vpop.permute.xlu0 %954
      %956 = vrot.lane.b32.xlu0 %v931, 2
      %v957 = vpop.permute.xlu0 %956
      %958 = vrot.lane.b32.xlu0 %v934, 2
      %v959 = vpop.permute.xlu0 %958
      %v968 = vsel %vm386, %v623, %v945
      %v969 = vsel %vm386, %v626, %v947
      %v970 = vsel %vm386, %v629, %v949
      %v971 = vsel %vm386, %v632, %v951
      %v972 = vsel %vm386, %v635, %v953
      %v973 = vsel %vm386, %v638, %v955
      %v974 = vsel %vm386, %v641, %v957
      %v975 = vsel %vm386, %v644, %v959
      %v976 = vld [vmem:[%s3] sm:$0xf]
      %v977 = vld [vmem:[%s4] sm:$0x1]
      %v979 = vperm.slane %v977, 0
      %v982 = vsel %vm292, %v968, 0
      %v985 = vsel %vm292, %v969, 0
      %v988 = vsel %vm292, %v970, 0
      %v991 = vsel %vm292, %v971, 0
      %v994 = vsel %vm292, %v972, 0
      %v997 = vsel %vm292, %v973, 0
      %v1000 = vsel %vm292, %v974, 0
      %v1003 = vsel %vm292, %v975, 0
      %v1006 = vsel %vm317, %v976, 0
      %1008 = vmatpush.msra.mxu0 0.0
      %1009 = vmatpush.msra.mxu0 0.0
      %1010 = vmatpush.msra.mxu0 0.0
      %1011 = vmatpush.msra.mxu0 0.0
      %1012 = vmatpush.msra.mxu0 0.0
      %1013 = vmatpush.msra.mxu0 0.0
      %1014 = vmatpush.msra.mxu0 0.0
      %1015 = vmatpush.msra.mxu0 0.0
      %1016 = vmatpush.msra.mxu0 0.0
      %1017 = vmatpush.msra.mxu0 0.0
      %1018 = vmatpush.msra.mxu0 0.0
      %1019 = vmatpush.msra.mxu0 0.0
      %1020 = vmatpush.msra.mxu0 0.0
      %1021 = vmatpush.msra.mxu0 0.0
      %1022 = vmatpush.msra.mxu0 0.0
      %1023 = vmatpush.msra.mxu0 %v1006
      %1024 = vmatmul.f32.gmra.mxu0 %v982
      %v1025 = vpop.f32.mrf.mxu0
      %v1026 = vadd.f32 %v979, %v1025
      %1027 = vmatmul.f32.gmra.mxu0 %v985
      %v1028 = vpop.f32.mrf.mxu0
      %v1029 = vadd.f32 %v979, %v1028
      %1030 = vmatmul.f32.gmra.mxu0 %v988
      %v1031 = vpop.f32.mrf.mxu0
      %v1032 = vadd.f32 %v979, %v1031
      %1033 = vmatmul.f32.gmra.mxu0 %v991
      %v1034 = vpop.f32.mrf.mxu0
      %v1035 = vadd.f32 %v979, %v1034
      %1036 = vmatmul.f32.gmra.mxu0 %v994
      %v1037 = vpop.f32.mrf.mxu0
      %v1038 = vadd.f32 %v979, %v1037
      %1039 = vmatmul.f32.gmra.mxu0 %v997
      %v1040 = vpop.f32.mrf.mxu0
      %v1041 = vadd.f32 %v979, %v1040
      %1042 = vmatmul.f32.gmra.mxu0 %v1000
      %v1043 = vpop.f32.mrf.mxu0
      %v1044 = vadd.f32 %v979, %v1043
      %1045 = vmatmul.f32.gmra.mxu0 %v1003
      %v1046 = vpop.f32.mrf.mxu0
      %v1047 = vadd.f32 %v979, %v1046
      %1048 = vdwg.mxu0
      %v1049 = vadd.f32 %v279, %v1026
      %v1050 = vadd.f32 %v280, %v1029
      %v1051 = vadd.f32 %v281, %v1032
      %v1052 = vadd.f32 %v282, %v1035
      %v1053 = vadd.f32 %v283, %v1038
      %v1054 = vadd.f32 %v284, %v1041
      %v1055 = vadd.f32 %v285, %v1044
      %v1056 = vadd.f32 %v286, %v1047
      %v1057 = vsel %vm292, %v1049, 0.0
      %1058 = vadd.xlane.f32.xlu0 %v1057
      %v1059 = vpop.xlane.xlu0 %1058
      %v1060 = vsel %vm292, %v1050, 0.0
      %1061 = vadd.xlane.f32.xlu0 %v1060
      %v1062 = vpop.xlane.xlu0 %1061
      %v1063 = vsel %vm292, %v1051, 0.0
      %1064 = vadd.xlane.f32.xlu0 %v1063
      %v1065 = vpop.xlane.xlu0 %1064
      %v1066 = vsel %vm292, %v1052, 0.0
      %1067 = vadd.xlane.f32.xlu0 %v1066
      %v1068 = vpop.xlane.xlu0 %1067
      %v1069 = vsel %vm292, %v1053, 0.0
      %1070 = vadd.xlane.f32.xlu0 %v1069
      %v1071 = vpop.xlane.xlu0 %1070
      %v1072 = vsel %vm292, %v1054, 0.0
      %1073 = vadd.xlane.f32.xlu0 %v1072
      %v1074 = vpop.xlane.xlu0 %1073
      %v1075 = vsel %vm292, %v1055, 0.0
      %1076 = vadd.xlane.f32.xlu0 %v1075
      %v1077 = vpop.xlane.xlu0 %1076
      %v1078 = vsel %vm292, %v1056, 0.0
      %1079 = vadd.xlane.f32.xlu0 %v1078
      %v1080 = vpop.xlane.xlu0 %1079
      %v1081 = vrcp.pop 4.0
      %v1082 = vmul.f32 4.0, %v1081
      %v1083 = vsub.f32 1.0, %v1082
      %v1084 = vmul.f32 %v1081, %v1083
      %v1085 = vadd.f32 %v1081, %v1084
      %vm1086 = vweird.f32 %v1081
      %v1087 = vsel %vm1086, %v1081, %v1085
      %v1088 = vmul.f32 %v1059, %v1087
      %v1089 = vmul.f32 %v1062, %v1087
      %v1090 = vmul.f32 %v1065, %v1087
      %v1091 = vmul.f32 %v1068, %v1087
      %v1092 = vmul.f32 %v1071, %v1087
      %v1093 = vmul.f32 %v1074, %v1087
      %v1094 = vmul.f32 %v1077, %v1087
      %v1095 = vmul.f32 %v1080, %v1087
      %v1096 = vsub.f32 %v1049, %v1088
      %v1097 = vsub.f32 %v1050, %v1089
      %v1098 = vsub.f32 %v1051, %v1090
      %v1099 = vsub.f32 %v1052, %v1091
      %v1100 = vsub.f32 %v1053, %v1092
      %v1101 = vsub.f32 %v1054, %v1093
      %v1102 = vsub.f32 %v1055, %v1094
      %v1103 = vsub.f32 %v1056, %v1095
      %v1104 = vmul.f32 %v1096, %v1096
      %v1105 = vmul.f32 %v1097, %v1097
      %v1106 = vmul.f32 %v1098, %v1098
      %v1107 = vmul.f32 %v1099, %v1099
      %v1108 = vmul.f32 %v1100, %v1100
      %v1109 = vmul.f32 %v1101, %v1101
      %v1110 = vmul.f32 %v1102, %v1102
      %v1111 = vmul.f32 %v1103, %v1103
      %v1112 = vsel %vm292, %v1104, 0.0
      %1113 = vadd.xlane.f32.xlu0 %v1112
      %v1114 = vpop.xlane.xlu0 %1113
      %v1115 = vsel %vm292, %v1105, 0.0
      %1116 = vadd.xlane.f32.xlu0 %v1115
      %v1117 = vpop.xlane.xlu0 %1116
      %v1118 = vsel %vm292, %v1106, 0.0
      %1119 = vadd.xlane.f32.xlu0 %v1118
      %v1120 = vpop.xlane.xlu0 %1119
      %v1121 = vsel %vm292, %v1107, 0.0
      %1122 = vadd.xlane.f32.xlu0 %v1121
      %v1123 = vpop.xlane.xlu0 %1122
      %v1124 = vsel %vm292, %v1108, 0.0
      %1125 = vadd.xlane.f32.xlu0 %v1124
      %v1126 = vpop.xlane.xlu0 %1125
      %v1127 = vsel %vm292, %v1109, 0.0
      %1128 = vadd.xlane.f32.xlu0 %v1127
      %v1129 = vpop.xlane.xlu0 %1128
      %v1130 = vsel %vm292, %v1110, 0.0
      %1131 = vadd.xlane.f32.xlu0 %v1130
      %v1132 = vpop.xlane.xlu0 %1131
      %v1133 = vsel %vm292, %v1111, 0.0
      %1134 = vadd.xlane.f32.xlu0 %v1133
      %v1135 = vpop.xlane.xlu0 %1134
      %v1136 = vmul.f32 %v1114, %v1087
      %v1137 = vmul.f32 %v1117, %v1087
      %v1138 = vmul.f32 %v1120, %v1087
      %v1139 = vmul.f32 %v1123, %v1087
      %v1140 = vmul.f32 %v1126, %v1087
      %v1141 = vmul.f32 %v1129, %v1087
      %v1142 = vmul.f32 %v1132, %v1087
      %v1143 = vmul.f32 %v1135, %v1087
      %v1144 = vadd.f32 %v1136, 1e-05
      %v1145 = vadd.f32 %v1137, 1e-05
      %v1146 = vadd.f32 %v1138, 1e-05
      %v1147 = vadd.f32 %v1139, 1e-05
      %v1148 = vadd.f32 %v1140, 1e-05
      %v1149 = vadd.f32 %v1141, 1e-05
      %v1150 = vadd.f32 %v1142, 1e-05
      %v1151 = vadd.f32 %v1143, 1e-05
      %v1152 = vrsqrt.pop %v1144
      %v1153 = vmul.f32 %v1152, %v1144
      %v1154 = vmul.f32 %v1153, %v1152
      %v1155 = vmul.f32 0.5, %v1154
      %v1156 = vsub.f32 1.5, %v1155
      %v1157 = vmul.f32 %v1152, %v1156
      %vm1158 = vweird.f32 %v1144
      %vm1159 = vweird.f32 %v1152
      %vm1160 = vmor %vm1158, %vm1159
      %v1161 = vsel %vm1160, %v1152, %v1157
      %v1162 = vrsqrt.pop %v1145
      %v1163 = vmul.f32 %v1162, %v1145
      %v1164 = vmul.f32 %v1163, %v1162
      %v1165 = vmul.f32 0.5, %v1164
      %v1166 = vsub.f32 1.5, %v1165
      %v1167 = vmul.f32 %v1162, %v1166
      %vm1168 = vweird.f32 %v1145
      %vm1169 = vweird.f32 %v1162
      %vm1170 = vmor %vm1168, %vm1169
      %v1171 = vsel %vm1170, %v1162, %v1167
      %v1172 = vrsqrt.pop %v1146
      %v1173 = vmul.f32 %v1172, %v1146
      %v1174 = vmul.f32 %v1173, %v1172
      %v1175 = vmul.f32 0.5, %v1174
      %v1176 = vsub.f32 1.5, %v1175
      %v1177 = vmul.f32 %v1172, %v1176
      %vm1178 = vweird.f32 %v1146
      %vm1179 = vweird.f32 %v1172
      %vm1180 = vmor %vm1178, %vm1179
      %v1181 = vsel %vm1180, %v1172, %v1177
      %v1182 = vrsqrt.pop %v1147
      %v1183 = vmul.f32 %v1182, %v1147
      %v1184 = vmul.f32 %v1183, %v1182
      %v1185 = vmul.f32 0.5, %v1184
      %v1186 = vsub.f32 1.5, %v1185
      %v1187 = vmul.f32 %v1182, %v1186
      %vm1188 = vweird.f32 %v1147
      %vm1189 = vweird.f32 %v1182
      %vm1190 = vmor %vm1188, %vm1189
      %v1191 = vsel %vm1190, %v1182, %v1187
      %v1192 = vrsqrt.pop %v1148
      %v1193 = vmul.f32 %v1192, %v1148
      %v1194 = vmul.f32 %v1193, %v1192
      %v1195 = vmul.f32 0.5, %v1194
      %v1196 = vsub.f32 1.5, %v1195
      %v1197 = vmul.f32 %v1192, %v1196
      %vm1198 = vweird.f32 %v1148
      %vm1199 = vweird.f32 %v1192
      %vm1200 = vmor %vm1198, %vm1199
      %v1201 = vsel %vm1200, %v1192, %v1197
      %v1202 = vrsqrt.pop %v1149
      %v1203 = vmul.f32 %v1202, %v1149
      %v1204 = vmul.f32 %v1203, %v1202
      %v1205 = vmul.f32 0.5, %v1204
      %v1206 = vsub.f32 1.5, %v1205
      %v1207 = vmul.f32 %v1202, %v1206
      %vm1208 = vweird.f32 %v1149
      %vm1209 = vweird.f32 %v1202
      %vm1210 = vmor %vm1208, %vm1209
      %v1211 = vsel %vm1210, %v1202, %v1207
      %v1212 = vrsqrt.pop %v1150
      %v1213 = vmul.f32 %v1212, %v1150
      %v1214 = vmul.f32 %v1213, %v1212
      %v1215 = vmul.f32 0.5, %v1214
      %v1216 = vsub.f32 1.5, %v1215
      %v1217 = vmul.f32 %v1212, %v1216
      %vm1218 = vweird.f32 %v1150
      %vm1219 = vweird.f32 %v1212
      %vm1220 = vmor %vm1218, %vm1219
      %v1221 = vsel %vm1220, %v1212, %v1217
      %v1222 = vrsqrt.pop %v1151
      %v1223 = vmul.f32 %v1222, %v1151
      %v1224 = vmul.f32 %v1223, %v1222
      %v1225 = vmul.f32 0.5, %v1224
      %v1226 = vsub.f32 1.5, %v1225
      %v1227 = vmul.f32 %v1222, %v1226
      %vm1228 = vweird.f32 %v1151
      %vm1229 = vweird.f32 %v1222
      %vm1230 = vmor %vm1228, %vm1229
      %v1231 = vsel %vm1230, %v1222, %v1227
      %v1232 = vmul.f32 %v1096, %v1161
      %v1233 = vmul.f32 %v1097, %v1171
      %v1234 = vmul.f32 %v1098, %v1181
      %v1235 = vmul.f32 %v1099, %v1191
      %v1236 = vmul.f32 %v1100, %v1201
      %v1237 = vmul.f32 %v1101, %v1211
      %v1238 = vmul.f32 %v1102, %v1221
      %v1239 = vmul.f32 %v1103, %v1231
      %v1240 = vld [vmem:[%s5] sm:$0x1]
      %v1242 = vperm.slane %v1240, 0
      %v1244 = vmul.f32 %v1232, %v1242
      %v1245 = vmul.f32 %v1233, %v1242
      %v1246 = vmul.f32 %v1234, %v1242
      %v1247 = vmul.f32 %v1235, %v1242
      %v1248 = vmul.f32 %v1236, %v1242
      %v1249 = vmul.f32 %v1237, %v1242
      %v1250 = vmul.f32 %v1238, %v1242
      %v1251 = vmul.f32 %v1239, %v1242
      %v1252 = vld [vmem:[%s6] sm:$0x1]
      %v1254 = vperm.slane %v1252, 0
      %v1256 = vadd.f32 %v1244, %v1254
      %v1257 = vadd.f32 %v1245, %v1254
      %v1258 = vadd.f32 %v1246, %v1254
      %v1259 = vadd.f32 %v1247, %v1254
      %v1260 = vadd.f32 %v1248, %v1254
      %v1261 = vadd.f32 %v1249, %v1254
      %v1262 = vadd.f32 %v1250, %v1254
      %v1263 = vadd.f32 %v1251, %v1254
      %1264 = vst.msk [vmem:[%s278] sm:$0xff] %vm292, %v1256
      %1265 = vst.msk [vmem:[%s278 + $0x8] sm:$0xff] %vm292, %v1257
      %1266 = vst.msk [vmem:[%s278 + $0x10] sm:$0xff] %vm292, %v1258
      %1267 = vst.msk [vmem:[%s278 + $0x18] sm:$0xff] %vm292, %v1259
      %1268 = vst.msk [vmem:[%s278 + $0x20] sm:$0xff] %vm292, %v1260
      %1269 = vst.msk [vmem:[%s278 + $0x28] sm:$0xff] %vm292, %v1261
      %1270 = vst.msk [vmem:[%s278 + $0x30] sm:$0xff] %vm292, %v1262
      %1271 = vst.msk [vmem:[%s278 + $0x38] sm:$0xff] %vm292, %v1263
      %p1272 = scmp.lt.s32.totalorder %s18, 1
      %s1273 = scalar_select %p1272, %s18, 1
      %s1274 = smul.addr %s1273, 8
      %s1275 = smul.addr %s1274, 8
      %s1276 = scalar_lea.vmem %s7, %s1275
      // Predicated region
      $region49: #{forward.19} parent=47 // pred_check
        %p1277 = pneg %p188
      $region50: #{forward.19} parent=47 // pred_check_branch
        %1279 = sbr.rel (%p1277) target = $region52
      $region51: #{forward.19} parent=47 // pred_region
        _
      $region52: #{forward.19} parent=47 // pred_fallthru
        _
    $region48: #{forward.19} parent=5 // pred_fallthru
      _
    %p1280 = scmp.le.s32.totalorder 2, %s13
    // Predicated region
    $region53: #{forward.19} parent=5 // pred_check
      %p1281 = pneg %p1280
    $region54: #{forward.19} parent=5 // pred_check_branch
      %1283 = sbr.rel (%p1281) target = $region56
    $region55: #{forward.19} parent=5 // pred_region
      %s1284 = ssub.s32 %s13, 2
      // Predicated region
      $region57: #{forward.19} parent=55 // pred_check
        %p1285 = pneg %p194
      $region58: #{forward.19} parent=55 // pred_check_branch
        %1287 = sbr.rel (%p1285) target = $region60
      $region59: #{forward.19} parent=55 // pred_region
        %p1288 = scmp.lt.s32.totalorder %s19, 1
        %s1289 = scalar_select %p1288, %s19, 1
        %s1290 = smul.addr %s1289, 8
        %s1291 = smul.addr %s1290, 8
        %s1292 = scalar_lea.vmem %s7, %s1291
      $region60: #{forward.19} parent=55 // pred_fallthru
        _
    $region56: #{forward.19} parent=5 // pred_fallthru
      _
  $region6: #{forward.19} parent=0 // loop_footer
    %s17 = sadd.s32 1, %s13
  $region7: #{forward.19} parent=0 // loop_footer_branch
    %12 = sbr.rel target = $region3
  $region8: #{forward.19} parent=0 // loop_exit
    _

// kernel: forward.18
$region0: #{forward.18}
  #allocation0 [shape = 'u32[]', space=smem, size = 0x4, offset = 0x4, fixed_abs, tag = 'smem constant byte address 0x4 - core index']
  #allocation1 [shape = 'u32[72,128]{1,0:T(1,128)}', space=vmem, size = 0x9000, scoped, tag = 'internal scratch']
  #allocation2 [shape = 'f32[1,1]{1,0:T(1,128)S(1)}', space=vmem, size = 0x200, scoped, tag = 'scoped memory for forward.18']
  %s0 = inlined_call_operand.vmem [shape: f32[2,10,10,8], index: 0, kind: input, shape index: {}]
  %s1 = inlined_call_operand.vmem [shape: f32[16,8,1], index: 1, kind: input, shape index: {}]
  %s2 = inlined_call_operand.<no memory space> [shape: f32[1,1], index: 2, kind: input, shape index: {}]
  %s3 = inlined_call_operand.vmem [shape: f32[2,4,8,8,1], index: 3, kind: output, shape index: {}]
  %s4 = sld [smem:[#allocation0]]
  $region45: #{forward.18} parent=0
    _
  %s6 = ssub.s32 1, %s4
  %s7 = scalar_select 0, %s6, %s4
  %v8 = vstv %s2
  %9 = vst [vmem:[#allocation2] sm:$0x1] %v8
  loop: start=0, step=1, limit=4
  $region2: #{forward.18} parent=0 // loop_pre_header
    _
  $region3: #{forward.18} parent=0 // loop_header
    %s11 = sphi 0, %s15
    %p12 = scmp.ge.s32.totalorder %s11, 4
    %s21 = sphi 0, %s23
    %s24 = sphi 0, %s21
    %s25 = sphi 0, %s24
    %s41 = sphi 0, %s25
    %s45 = sphi 0, %s45
    %s47 = sphi 0, %s45
    %s48 = sphi 0, %s47
    %s62 = sphi 0, %s48
    %s66 = sphi 0, %s66
    %s68 = sphi 0, %s66
    %s69 = sphi 0, %s68
    %s83 = sphi 0, %s69
    %s89 = sphi 0, %s91
    %s92 = sphi 0, %s89
    %s93 = sphi 0, %s92
    %s109 = sphi 0, %s93
  $region4: #{forward.18} parent=0 // loop_header_branch
    %14 = sbr.rel (%p12) target = $region8
  $region5: #{forward.18} parent=0 // loop_body
    %s16 = ssub.s32 %s11, 1
    %s17 = ssub.s32 %s11, 2
    %s18 = sadd.s32 %s11, 1
    %s19 = ssub.s32 %s11, %s18
    %p20 = scmp.eq.s32.totalorder %s19, 0
    %s22 = sadd.s32 %s21, 1
    %s23 = scalar_select %p20, %s21, %s22
    %p26 = pneg %p20
    %p27 = scmp.eq.s32.totalorder %s11, 1
    %p28 = por %p26, %p27
    %p29 = scmp.ne.s32.totalorder %s21, %s24
    %p30 = scmp.eq.s32.totalorder %s11, 0
    %p31 = por %p29, %p30
    %p32 = scmp.ne.s32.totalorder %s21, %s24
    %p33 = scmp.eq.s32.totalorder %s16, 1
    %p34 = por %p32, %p33
    %p35 = scmp.ne.s32.totalorder %s24, %s25
    %p36 = scmp.eq.s32.totalorder %s16, 0
    %p37 = por %p35, %p36
    %p38 = scmp.ne.s32.totalorder %s24, %s25
    %p39 = scmp.eq.s32.totalorder %s17, 1
    %p40 = por %p38, %p39
    %p42 = scmp.ne.s32.totalorder %s25, %s41
    %p43 = scmp.eq.s32.totalorder %s17, 0
    %p44 = por %p42, %p43
    %s46 = sadd.s32 %s45, 1
    %p49 = scmp.eq.s32.totalorder %s11, 1
    %p50 = scmp.ne.s32.totalorder %s45, %s47
    %p51 = scmp.eq.s32.totalorder %s11, 0
    %p52 = por %p50, %p51
    %p53 = scmp.ne.s32.totalorder %s45, %s47
    %p54 = scmp.eq.s32.totalorder %s16, 1
    %p55 = por %p53, %p54
    %p56 = scmp.ne.s32.totalorder %s47, %s48
    %p57 = scmp.eq.s32.totalorder %s16, 0
    %p58 = por %p56, %p57
    %p59 = scmp.ne.s32.totalorder %s47, %s48
    %p60 = scmp.eq.s32.totalorder %s17, 1
    %p61 = por %p59, %p60
    %p63 = scmp.ne.s32.totalorder %s48, %s62
    %p64 = scmp.eq.s32.totalorder %s17, 0
    %p65 = por %p63, %p64
    %s67 = sadd.s32 %s66, 1
    %p70 = scmp.eq.s32.totalorder %s11, 1
    %p71 = scmp.ne.s32.totalorder %s66, %s68
    %p72 = scmp.eq.s32.totalorder %s11, 0
    %p73 = por %p71, %p72
    %p74 = scmp.ne.s32.totalorder %s66, %s68
    %p75 = scmp.eq.s32.totalorder %s16, 1
    %p76 = por %p74, %p75
    %p77 = scmp.ne.s32.totalorder %s68, %s69
    %p78 = scmp.eq.s32.totalorder %s16, 0
    %p79 = por %p77, %p78
    %p80 = scmp.ne.s32.totalorder %s68, %s69
    %p81 = scmp.eq.s32.totalorder %s17, 1
    %p82 = por %p80, %p81
    %p84 = scmp.ne.s32.totalorder %s69, %s83
    %p85 = scmp.eq.s32.totalorder %s17, 0
    %p86 = por %p84, %p85
    %s87 = ssub.s32 %s11, %s18
    %p88 = scmp.eq.s32.totalorder %s87, 0
    %s90 = sadd.s32 %s89, 1
    %s91 = scalar_select %p88, %s89, %s90
    %p94 = pneg %p88
    %p95 = scmp.eq.s32.totalorder %s11, 1
    %p96 = por %p94, %p95
    %p97 = scmp.ne.s32.totalorder %s89, %s92
    %p98 = scmp.eq.s32.totalorder %s11, 0
    %p99 = por %p97, %p98
    %p100 = scmp.ne.s32.totalorder %s89, %s92
    %p101 = scmp.eq.s32.totalorder %s16, 1
    %p102 = por %p100, %p101
    %p103 = scmp.ne.s32.totalorder %s92, %s93
    %p104 = scmp.eq.s32.totalorder %s16, 0
    %p105 = por %p103, %p104
    %p106 = scmp.ne.s32.totalorder %s92, %s93
    %p107 = scmp.eq.s32.totalorder %s17, 1
    %p108 = por %p106, %p107
    %p110 = scmp.ne.s32.totalorder %s93, %s109
    %p111 = scmp.eq.s32.totalorder %s17, 0
    %p112 = por %p110, %p111
    %p113 = scmp.le.s32.totalorder 1, %s11
    %p114 = scmp.lt.s32.totalorder %s11, 3
    %p115 = pnand %p113, %p114
    %p116 = pneg %p115
    // Predicated region
    $region9: #{forward.18} parent=5 // pred_check
      _
    $region10: #{forward.18} parent=5 // pred_check_branch
      %118 = sbr.rel (%p115) target = $region12
    $region11: #{forward.18} parent=5 // pred_region
      %s119 = ssub.s32 %s11, 1
      // Predicated region
      $region13: #{forward.18} parent=11 // pred_check
        %p120 = pneg %p58
      $region14: #{forward.18} parent=11 // pred_check_branch
        %122 = sbr.rel (%p120) target = $region16
      $region15: #{forward.18} parent=11 // pred_region
        _
      $region16: #{forward.18} parent=11 // pred_fallthru
        _
      // Predicated region
      $region17: #{forward.18} parent=11 // pred_check
        %p123 = pneg %p79
      $region18: #{forward.18} parent=11 // pred_check_branch
        %125 = sbr.rel (%p123) target = $region20
      $region19: #{forward.18} parent=11 // pred_region
        _
      $region20: #{forward.18} parent=11 // pred_fallthru
        _
    $region12: #{forward.18} parent=5 // pred_fallthru
      _
    %p126 = scmp.lt.s32.totalorder %s11, 2
    // Predicated region
    $region21: #{forward.18} parent=5 // pred_check
      %p127 = pneg %p126
    $region22: #{forward.18} parent=5 // pred_check_branch
      %129 = sbr.rel (%p127) target = $region24
    $region23: #{forward.18} parent=5 // pred_region
      // Predicated region
      $region25: #{forward.18} parent=23 // pred_check
        %p130 = pneg %p31
      $region26: #{forward.18} parent=23 // pred_check_branch
        %132 = sbr.rel (%p130) target = $region28
      $region27: #{forward.18} parent=23 // pred_region
        %p133 = scmp.lt.s32.totalorder %s11, 1
        %s134 = scalar_select %p133, %s11, 1
        %s135 = smul.addr %s134, 20
        %s136 = smul.addr %s135, 8
        %s137 = scalar_lea.vmem %s0, %s136
      $region28: #{forward.18} parent=23 // pred_fallthru
        _
    $region24: #{forward.18} parent=5 // pred_fallthru
      _
    %p138 = scmp.le.s32.totalorder 1, %s11
    %p139 = scmp.lt.s32.totalorder %s11, 3
    %p140 = pnand %p138, %p139
    %p141 = pneg %p140
    // Predicated region
    $region29: #{forward.18} parent=5 // pred_check
      _
    $region30: #{forward.18} parent=5 // pred_check_branch
      %143 = sbr.rel (%p140) target = $region32
    $region31: #{forward.18} parent=5 // pred_region
      %s144 = ssub.s32 %s11, 1
      %p145 = scmp.lt.s32.totalorder %s16, 1
      %s146 = scalar_select %p145, %s16, 1
      %s147 = smul.addr %s146, 20
      %s148 = smul.addr %s147, 8
      %s149 = scalar_lea.vmem %s0, %s148
      %p150 = pneg %p37
      %p151 = pneg %p34
      %p152 = pneg %p58
      %p153 = pneg %p55
      %p154 = pneg %p79
      %p155 = pneg %p76
      %p156 = pneg %p105
      %p157 = pneg %p102
      %p158 = scmp.lt.s32.totalorder %s16, 1
      %s159 = scalar_select %p158, %s16, 1
      %s160 = smul.addr %s159, 32
      %s161 = smul.addr %s160, 8
      %s162 = scalar_lea.vmem %s3, %s161
      %p163 = scmp.lt.s32.totalorder %s16, 1
      %s164 = scalar_select %p163, %s16, 1
      %s165 = smul.addr %s164, 20
      %s166 = smul.addr %s165, 8
      %s167 = scalar_lea.vmem %s0, %s166
      %p168 = scmp.lt.s32.totalorder %s16, 1
      %s169 = scalar_select %p168, %s16, 1
      %s170 = smul.addr %s169, 32
      %s171 = smul.addr %s170, 8
      %s172 = scalar_lea.vmem %s3, %s171
      %v173 = vld [vmem:[#allocation2] sm:$0x1]
      %v174 = vld [vmem:[%s167] sm:$0xff]
      %v175 = vld [vmem:[%s167 + $0x8] sm:$0x3]
      %v176 = vld [vmem:[%s167 + $0x10] sm:$0xff]
      %v177 = vld [vmem:[%s167 + $0x18] sm:$0x3]
      %v178 = vld [vmem:[%s167 + $0x20] sm:$0xff]
      %v179 = vld [vmem:[%s167 + $0x28] sm:$0x3]
      %v180 = vld [vmem:[%s167 + $0x30] sm:$0xff]
      %v181 = vld [vmem:[%s167 + $0x38] sm:$0x3]
      %v182 = vld [vmem:[%s167 + $0x40] sm:$0xff]
      %v183 = vld [vmem:[%s167 + $0x48] sm:$0x3]
      %v184 = vld [vmem:[%s167 + $0x50] sm:$0xff]
      %v185 = vld [vmem:[%s167 + $0x58] sm:$0x3]
      %v186 = vld [vmem:[%s167 + $0x60] sm:$0xff]
      %v187 = vld [vmem:[%s167 + $0x68] sm:$0x3]
      %v188 = vld [vmem:[%s167 + $0x70] sm:$0xff]
      %v189 = vld [vmem:[%s167 + $0x78] sm:$0x3]
      %v190 = vld [vmem:[%s167 + $0x80] sm:$0xff]
      %v191 = vld [vmem:[%s167 + $0x88] sm:$0x3]
      %v192 = vld [vmem:[%s167 + $0x90] sm:$0xff]
      %v193 = vld [vmem:[%s167 + $0x98] sm:$0x3]
      %v195 = vperm.slane %v173, 0
      %v197 = vadd.f32 %v195, 0.0
      %v198 = vld [vmem:[%s1] sm:$0xff]
      %vm199 = vcmask 64512
      %v201 = vsel %vm199, %v174, 0
      %203 = vmatpush.msra.mxu0 0.0
      %204 = vmatpush.msra.mxu0 0.0
      %205 = vmatpush.msra.mxu0 0.0
      %206 = vmatpush.msra.mxu0 0.0
      %207 = vmatpush.msra.mxu0 0.0
      %208 = vmatpush.msra.mxu0 0.0
      %209 = vmatpush.msra.mxu0 0.0
      %210 = vmatpush.msra.mxu0 0.0
      %211 = vmatpush.msra.mxu0 0.0
      %212 = vmatpush.msra.mxu0 0.0
      %213 = vmatpush.msra.mxu0 0.0
      %214 = vmatpush.msra.mxu0 0.0
      %215 = vmatpush.msra.mxu0 0.0
      %216 = vmatpush.msra.mxu0 0.0
      %217 = vmatpush.msra.mxu0 0.0
      %218 = vmatpush.msra.mxu0 %v198
      %219 = vmatmul.f32.gmra.mxu0 %v201
      %v220 = vpop.f32.mrf.mxu0
      %v221 = vadd.f32 0.0, %v220
      %222 = vdwg.mxu0
      %v224 = vsel %vm199, %v176, 0
      %226 = vmatpush.msra.mxu0 0.0
      %227 = vmatpush.msra.mxu0 0.0
      %228 = vmatpush.msra.mxu0 0.0
      %229 = vmatpush.msra.mxu0 0.0
      %230 = vmatpush.msra.mxu0 0.0
      %231 = vmatpush.msra.mxu0 0.0
      %232 = vmatpush.msra.mxu0 0.0
      %233 = vmatpush.msra.mxu0 0.0
      %234 = vmatpush.msra.mxu0 0.0
      %235 = vmatpush.msra.mxu0 0.0
      %236 = vmatpush.msra.mxu0 0.0
      %237 = vmatpush.msra.mxu0 0.0
      %238 = vmatpush.msra.mxu0 0.0
      %239 = vmatpush.msra.mxu0 0.0
      %240 = vmatpush.msra.mxu0 0.0
      %241 = vmatpush.msra.mxu0 %v198
      %242 = vmatmul.f32.gmra.mxu0 %v224
      %v243 = vpop.f32.mrf.mxu0
      %v244 = vadd.f32 0.0, %v243
      %245 = vdwg.mxu0
      %v247 = vsel %vm199, %v178, 0
      %249 = vmatpush.msra.mxu0 0.0
      %250 = vmatpush.msra.mxu0 0.0
      %251 = vmatpush.msra.mxu0 0.0
      %252 = vmatpush.msra.mxu0 0.0
      %253 = vmatpush.msra.mxu0 0.0
      %254 = vmatpush.msra.mxu0 0.0
      %255 = vmatpush.msra.mxu0 0.0
      %256 = vmatpush.msra.mxu0 0.0
      %257 = vmatpush.msra.mxu0 0.0
      %258 = vmatpush.msra.mxu0 0.0
      %259 = vmatpush.msra.mxu0 0.0
      %260 = vmatpush.msra.mxu0 0.0
      %261 = vmatpush.msra.mxu0 0.0
      %262 = vmatpush.msra.mxu0 0.0
      %263 = vmatpush.msra.mxu0 0.0
      %264 = vmatpush.msra.mxu0 %v198
      %265 = vmatmul.f32.gmra.mxu0 %v247
      %v266 = vpop.f32.mrf.mxu0
      %v267 = vadd.f32 0.0, %v266
      %268 = vdwg.mxu0
      %v270 = vsel %vm199, %v180, 0
      %272 = vmatpush.msra.mxu0 0.0
      %273 = vmatpush.msra.mxu0 0.0
      %274 = vmatpush.msra.mxu0 0.0
      %275 = vmatpush.msra.mxu0 0.0
      %276 = vmatpush.msra.mxu0 0.0
      %277 = vmatpush.msra.mxu0 0.0
      %278 = vmatpush.msra.mxu0 0.0
      %279 = vmatpush.msra.mxu0 0.0
      %280 = vmatpush.msra.mxu0 0.0
      %281 = vmatpush.msra.mxu0 0.0
      %282 = vmatpush.msra.mxu0 0.0
      %283 = vmatpush.msra.mxu0 0.0
      %284 = vmatpush.msra.mxu0 0.0
      %285 = vmatpush.msra.mxu0 0.0
      %286 = vmatpush.msra.mxu0 0.0
      %287 = vmatpush.msra.mxu0 %v198
      %288 = vmatmul.f32.gmra.mxu0 %v270
      %v289 = vpop.f32.mrf.mxu0
      %v290 = vadd.f32 0.0, %v289
      %291 = vdwg.mxu0
      %v293 = vsel %vm199, %v182, 0
      %295 = vmatpush.msra.mxu0 0.0
      %296 = vmatpush.msra.mxu0 0.0
      %297 = vmatpush.msra.mxu0 0.0
      %298 = vmatpush.msra.mxu0 0.0
      %299 = vmatpush.msra.mxu0 0.0
      %300 = vmatpush.msra.mxu0 0.0
      %301 = vmatpush.msra.mxu0 0.0
      %302 = vmatpush.msra.mxu0 0.0
      %303 = vmatpush.msra.mxu0 0.0
      %304 = vmatpush.msra.mxu0 0.0
      %305 = vmatpush.msra.mxu0 0.0
      %306 = vmatpush.msra.mxu0 0.0
      %307 = vmatpush.msra.mxu0 0.0
      %308 = vmatpush.msra.mxu0 0.0
      %309 = vmatpush.msra.mxu0 0.0
      %310 = vmatpush.msra.mxu0 %v198
      %311 = vmatmul.f32.gmra.mxu0 %v293
      %v312 = vpop.f32.mrf.mxu0
      %v313 = vadd.f32 0.0, %v312
      %314 = vdwg.mxu0
      %v316 = vsel %vm199, %v184, 0
      %318 = vmatpush.msra.mxu0 0.0
      %319 = vmatpush.msra.mxu0 0.0
      %320 = vmatpush.msra.mxu0 0.0
      %321 = vmatpush.msra.mxu0 0.0
      %322 = vmatpush.msra.mxu0 0.0
      %323 = vmatpush.msra.mxu0 0.0
      %324 = vmatpush.msra.mxu0 0.0
      %325 = vmatpush.msra.mxu0 0.0
      %326 = vmatpush.msra.mxu0 0.0
      %327 = vmatpush.msra.mxu0 0.0
      %328 = vmatpush.msra.mxu0 0.0
      %329 = vmatpush.msra.mxu0 0.0
      %330 = vmatpush.msra.mxu0 0.0
      %331 = vmatpush.msra.mxu0 0.0
      %332 = vmatpush.msra.mxu0 0.0
      %333 = vmatpush.msra.mxu0 %v198
      %334 = vmatmul.f32.gmra.mxu0 %v316
      %v335 = vpop.f32.mrf.mxu0
      %v336 = vadd.f32 0.0, %v335
      %337 = vdwg.mxu0
      %v339 = vsel %vm199, %v186, 0
      %341 = vmatpush.msra.mxu0 0.0
      %342 = vmatpush.msra.mxu0 0.0
      %343 = vmatpush.msra.mxu0 0.0
      %344 = vmatpush.msra.mxu0 0.0
      %345 = vmatpush.msra.mxu0 0.0
      %346 = vmatpush.msra.mxu0 0.0
      %347 = vmatpush.msra.mxu0 0.0
      %348 = vmatpush.msra.mxu0 0.0
      %349 = vmatpush.msra.mxu0 0.0
      %350 = vmatpush.msra.mxu0 0.0
      %351 = vmatpush.msra.mxu0 0.0
      %352 = vmatpush.msra.mxu0 0.0
      %353 = vmatpush.msra.mxu0 0.0
      %354 = vmatpush.msra.mxu0 0.0
      %355 = vmatpush.msra.mxu0 0.0
      %356 = vmatpush.msra.mxu0 %v198
      %357 = vmatmul.f32.gmra.mxu0 %v339
      %v358 = vpop.f32.mrf.mxu0
      %v359 = vadd.f32 0.0, %v358
      %360 = vdwg.mxu0
      %v362 = vsel %vm199, %v188, 0
      %364 = vmatpush.msra.mxu0 0.0
      %365 = vmatpush.msra.mxu0 0.0
      %366 = vmatpush.msra.mxu0 0.0
      %367 = vmatpush.msra.mxu0 0.0
      %368 = vmatpush.msra.mxu0 0.0
      %369 = vmatpush.msra.mxu0 0.0
      %370 = vmatpush.msra.mxu0 0.0
      %371 = vmatpush.msra.mxu0 0.0
      %372 = vmatpush.msra.mxu0 0.0
      %373 = vmatpush.msra.mxu0 0.0
      %374 = vmatpush.msra.mxu0 0.0
      %375 = vmatpush.msra.mxu0 0.0
      %376 = vmatpush.msra.mxu0 0.0
      %377 = vmatpush.msra.mxu0 0.0
      %378 = vmatpush.msra.mxu0 0.0
      %379 = vmatpush.msra.mxu0 %v198
      %380 = vmatmul.f32.gmra.mxu0 %v362
      %v381 = vpop.f32.mrf.mxu0
      %v382 = vadd.f32 0.0, %v381
      %383 = vdwg.mxu0
      %v384 = vadd.f32 %v197, %v221
      %v385 = vadd.f32 %v197, %v244
      %v386 = vadd.f32 %v197, %v267
      %v387 = vadd.f32 %v197, %v290
      %v388 = vadd.f32 %v197, %v313
      %v389 = vadd.f32 %v197, %v336
      %v390 = vadd.f32 %v197, %v359
      %v391 = vadd.f32 %v197, %v382
      %s392 = scalar_lea.vmem %s1, 8
      %v393 = vld [vmem:[%s392] sm:$0xff]
      %vm395 = vcmask 1046528
      %v396 = vrot.slane %v174, 1
      %v397 = vrot.slane %v175, 1
      %v398 = vsel %vm395, %v396, %v397
      %v399 = vsel %vm199, %v398, 0
      %401 = vmatpush.msra.mxu0 0.0
      %402 = vmatpush.msra.mxu0 0.0
      %403 = vmatpush.msra.mxu0 0.0
      %404 = vmatpush.msra.mxu0 0.0
      %405 = vmatpush.msra.mxu0 0.0
      %406 = vmatpush.msra.mxu0 0.0
      %407 = vmatpush.msra.mxu0 0.0
      %408 = vmatpush.msra.mxu0 0.0
      %409 = vmatpush.msra.mxu0 0.0
      %410 = vmatpush.msra.mxu0 0.0
      %411 = vmatpush.msra.mxu0 0.0
      %412 = vmatpush.msra.mxu0 0.0
      %413 = vmatpush.msra.mxu0 0.0
      %414 = vmatpush.msra.mxu0 0.0
      %415 = vmatpush.msra.mxu0 0.0
      %416 = vmatpush.msra.mxu0 %v393
      %417 = vmatmul.f32.gmra.mxu0 %v399
      %v418 = vpop.f32.mrf.mxu0
      %v419 = vadd.f32 0.0, %v418
      %420 = vdwg.mxu0
      %v422 = vrot.slane %v176, 1
      %v423 = vrot.slane %v177, 1
      %v424 = vsel %vm395, %v422, %v423
      %v425 = vsel %vm199, %v424, 0
      %427 = vmatpush.msra.mxu0 0.0
      %428 = vmatpush.msra.mxu0 0.0
      %429 = vmatpush.msra.mxu0 0.0
      %430 = vmatpush.msra.mxu0 0.0
      %431 = vmatpush.msra.mxu0 0.0
      %432 = vmatpush.msra.mxu0 0.0
      %433 = vmatpush.msra.mxu0 0.0
      %434 = vmatpush.msra.mxu0 0.0
      %435 = vmatpush.msra.mxu0 0.0
      %436 = vmatpush.msra.mxu0 0.0
      %437 = vmatpush.msra.mxu0 0.0
      %438 = vmatpush.msra.mxu0 0.0
      %439 = vmatpush.msra.mxu0 0.0
      %440 = vmatpush.msra.mxu0 0.0
      %441 = vmatpush.msra.mxu0 0.0
      %442 = vmatpush.msra.mxu0 %v393
      %443 = vmatmul.f32.gmra.mxu0 %v425
      %v444 = vpop.f32.mrf.mxu0
      %v445 = vadd.f32 0.0, %v444
      %446 = vdwg.mxu0
      %v448 = vrot.slane %v178, 1
      %v449 = vrot.slane %v179, 1
      %v450 = vsel %vm395, %v448, %v449
      %v451 = vsel %vm199, %v450, 0
      %453 = vmatpush.msra.mxu0 0.0
      %454 = vmatpush.msra.mxu0 0.0
      %455 = vmatpush.msra.mxu0 0.0
      %456 = vmatpush.msra.mxu0 0.0
      %457 = vmatpush.msra.mxu0 0.0
      %458 = vmatpush.msra.mxu0 0.0
      %459 = vmatpush.msra.mxu0 0.0
      %460 = vmatpush.msra.mxu0 0.0
      %461 = vmatpush.msra.mxu0 0.0
      %462 = vmatpush.msra.mxu0 0.0
      %463 = vmatpush.msra.mxu0 0.0
      %464 = vmatpush.msra.mxu0 0.0
      %465 = vmatpush.msra.mxu0 0.0
      %466 = vmatpush.msra.mxu0 0.0
      %467 = vmatpush.msra.mxu0 0.0
      %468 = vmatpush.msra.mxu0 %v393
      %469 = vmatmul.f32.gmra.mxu0 %v451
      %v470 = vpop.f32.mrf.mxu0
      %v471 = vadd.f32 0.0, %v470
      %472 = vdwg.mxu0
      %v474 = vrot.slane %v180, 1
      %v475 = vrot.slane %v181, 1
      %v476 = vsel %vm395, %v474, %v475
      %v477 = vsel %vm199, %v476, 0
      %479 = vmatpush.msra.mxu0 0.0
      %480 = vmatpush.msra.mxu0 0.0
      %481 = vmatpush.msra.mxu0 0.0
      %482 = vmatpush.msra.mxu0 0.0
      %483 = vmatpush.msra.mxu0 0.0
      %484 = vmatpush.msra.mxu0 0.0
      %485 = vmatpush.msra.mxu0 0.0
      %486 = vmatpush.msra.mxu0 0.0
      %487 = vmatpush.msra.mxu0 0.0
      %488 = vmatpush.msra.mxu0 0.0
      %489 = vmatpush.msra.mxu0 0.0
      %490 = vmatpush.msra.mxu0 0.0
      %491 = vmatpush.msra.mxu0 0.0
      %492 = vmatpush.msra.mxu0 0.0
      %493 = vmatpush.msra.mxu0 0.0
      %494 = vmatpush.msra.mxu0 %v393
      %495 = vmatmul.f32.gmra.mxu0 %v477
      %v496 = vpop.f32.mrf.mxu0
      %v497 = vadd.f32 0.0, %v496
      %498 = vdwg.mxu0
      %v500 = vrot.slane %v182, 1
      %v501 = vrot.slane %v183, 1
      %v502 = vsel %vm395, %v500, %v501
      %v503 = vsel %vm199, %v502, 0
      %505 = vmatpush.msra.mxu0 0.0
      %506 = vmatpush.msra.mxu0 0.0
      %507 = vmatpush.msra.mxu0 0.0
      %508 = vmatpush.msra.mxu0 0.0
      %509 = vmatpush.msra.mxu0 0.0
      %510 = vmatpush.msra.mxu0 0.0
      %511 = vmatpush.msra.mxu0 0.0
      %512 = vmatpush.msra.mxu0 0.0
      %513 = vmatpush.msra.mxu0 0.0
      %514 = vmatpush.msra.mxu0 0.0
      %515 = vmatpush.msra.mxu0 0.0
      %516 = vmatpush.msra.mxu0 0.0
      %517 = vmatpush.msra.mxu0 0.0
      %518 = vmatpush.msra.mxu0 0.0
      %519 = vmatpush.msra.mxu0 0.0
      %520 = vmatpush.msra.mxu0 %v393
      %521 = vmatmul.f32.gmra.mxu0 %v503
      %v522 = vpop.f32.mrf.mxu0
      %v523 = vadd.f32 0.0, %v522
      %524 = vdwg.mxu0
      %v526 = vrot.slane %v184, 1
      %v527 = vrot.slane %v185, 1
      %v528 = vsel %vm395, %v526, %v527
      %v529 = vsel %vm199, %v528, 0
      %531 = vmatpush.msra.mxu0 0.0
      %532 = vmatpush.msra.mxu0 0.0
      %533 = vmatpush.msra.mxu0 0.0
      %534 = vmatpush.msra.mxu0 0.0
      %535 = vmatpush.msra.mxu0 0.0
      %536 = vmatpush.msra.mxu0 0.0
      %537 = vmatpush.msra.mxu0 0.0
      %538 = vmatpush.msra.mxu0 0.0
      %539 = vmatpush.msra.mxu0 0.0
      %540 = vmatpush.msra.mxu0 0.0
      %541 = vmatpush.msra.mxu0 0.0
      %542 = vmatpush.msra.mxu0 0.0
      %543 = vmatpush.msra.mxu0 0.0
      %544 = vmatpush.msra.mxu0 0.0
      %545 = vmatpush.msra.mxu0 0.0
      %546 = vmatpush.msra.mxu0 %v393
      %547 = vmatmul.f32.gmra.mxu0 %v529
      %v548 = vpop.f32.mrf.mxu0
      %v549 = vadd.f32 0.0, %v548
      %550 = vdwg.mxu0
      %v552 = vrot.slane %v186, 1
      %v553 = vrot.slane %v187, 1
      %v554 = vsel %vm395, %v552, %v553
      %v555 = vsel %vm199, %v554, 0
      %557 = vmatpush.msra.mxu0 0.0
      %558 = vmatpush.msra.mxu0 0.0
      %559 = vmatpush.msra.mxu0 0.0
      %560 = vmatpush.msra.mxu0 0.0
      %561 = vmatpush.msra.mxu0 0.0
      %562 = vmatpush.msra.mxu0 0.0
      %563 = vmatpush.msra.mxu0 0.0
      %564 = vmatpush.msra.mxu0 0.0
      %565 = vmatpush.msra.mxu0 0.0
      %566 = vmatpush.msra.mxu0 0.0
      %567 = vmatpush.msra.mxu0 0.0
      %568 = vmatpush.msra.mxu0 0.0
      %569 = vmatpush.msra.mxu0 0.0
      %570 = vmatpush.msra.mxu0 0.0
      %571 = vmatpush.msra.mxu0 0.0
      %572 = vmatpush.msra.mxu0 %v393
      %573 = vmatmul.f32.gmra.mxu0 %v555
      %v574 = vpop.f32.mrf.mxu0
      %v575 = vadd.f32 0.0, %v574
      %576 = vdwg.mxu0
      %v578 = vrot.slane %v188, 1
      %v579 = vrot.slane %v189, 1
      %v580 = vsel %vm395, %v578, %v579
      %v581 = vsel %vm199, %v580, 0
      %583 = vmatpush.msra.mxu0 0.0
      %584 = vmatpush.msra.mxu0 0.0
      %585 = vmatpush.msra.mxu0 0.0
      %586 = vmatpush.msra.mxu0 0.0
      %587 = vmatpush.msra.mxu0 0.0
      %588 = vmatpush.msra.mxu0 0.0
      %589 = vmatpush.msra.mxu0 0.0
      %590 = vmatpush.msra.mxu0 0.0
      %591 = vmatpush.msra.mxu0 0.0
      %592 = vmatpush.msra.mxu0 0.0
      %593 = vmatpush.msra.mxu0 0.0
      %594 = vmatpush.msra.mxu0 0.0
      %595 = vmatpush.msra.mxu0 0.0
      %596 = vmatpush.msra.mxu0 0.0
      %597 = vmatpush.msra.mxu0 0.0
      %598 = vmatpush.msra.mxu0 %v393
      %599 = vmatmul.f32.gmra.mxu0 %v581
      %v600 = vpop.f32.mrf.mxu0
      %v601 = vadd.f32 0.0, %v600
      %602 = vdwg.mxu0
      %v603 = vadd.f32 %v384, %v419
      %v604 = vadd.f32 %v385, %v445
      %v605 = vadd.f32 %v386, %v471
      %v606 = vadd.f32 %v387, %v497
      %v607 = vadd.f32 %v388, %v523
      %v608 = vadd.f32 %v389, %v549
      %v609 = vadd.f32 %v390, %v575
      %v610 = vadd.f32 %v391, %v601
      %s611 = scalar_lea.vmem %s1, 16
      %v612 = vld [vmem:[%s611] sm:$0xff]
      %613 = vmatpush.msra.mxu0 0.0
      %614 = vmatpush.msra.mxu0 0.0
      %615 = vmatpush.msra.mxu0 0.0
      %616 = vmatpush.msra.mxu0 0.0
      %617 = vmatpush.msra.mxu0 0.0
      %618 = vmatpush.msra.mxu0 0.0
      %619 = vmatpush.msra.mxu0 0.0
      %620 = vmatpush.msra.mxu0 0.0
      %621 = vmatpush.msra.mxu0 0.0
      %622 = vmatpush.msra.mxu0 0.0
      %623 = vmatpush.msra.mxu0 0.0
      %624 = vmatpush.msra.mxu0 0.0
      %625 = vmatpush.msra.mxu0 0.0
      %626 = vmatpush.msra.mxu0 0.0
      %627 = vmatpush.msra.mxu0 0.0
      %628 = vmatpush.msra.mxu0 %v612
      %629 = vmatmul.f32.gmra.mxu0 %v224
      %v630 = vpop.f32.mrf.mxu0
      %v631 = vadd.f32 0.0, %v630
      %632 = vdwg.mxu0
      %633 = vmatpush.msra.mxu0 0.0
      %634 = vmatpush.msra.mxu0 0.0
      %635 = vmatpush.msra.mxu0 0.0
      %636 = vmatpush.msra.mxu0 0.0
      %637 = vmatpush.msra.mxu0 0.0
      %638 = vmatpush.msra.mxu0 0.0
      %639 = vmatpush.msra.mxu0 0.0
      %640 = vmatpush.msra.mxu0 0.0
      %641 = vmatpush.msra.mxu0 0.0
      %642 = vmatpush.msra.mxu0 0.0
      %643 = vmatpush.msra.mxu0 0.0
      %644 = vmatpush.msra.mxu0 0.0
      %645 = vmatpush.msra.mxu0 0.0
      %646 = vmatpush.msra.mxu0 0.0
      %647 = vmatpush.msra.mxu0 0.0
      %648 = vmatpush.msra.mxu0 %v612
      %649 = vmatmul.f32.gmra.mxu0 %v247
      %v650 = vpop.f32.mrf.mxu0
      %v651 = vadd.f32 0.0, %v650
      %652 = vdwg.mxu0
      %653 = vmatpush.msra.mxu0 0.0
      %654 = vmatpush.msra.mxu0 0.0
      %655 = vmatpush.msra.mxu0 0.0
      %656 = vmatpush.msra.mxu0 0.0
      %657 = vmatpush.msra.mxu0 0.0
      %658 = vmatpush.msra.mxu0 0.0
      %659 = vmatpush.msra.mxu0 0.0
      %660 = vmatpush.msra.mxu0 0.0
      %661 = vmatpush.msra.mxu0 0.0
      %662 = vmatpush.msra.mxu0 0.0
      %663 = vmatpush.msra.mxu0 0.0
      %664 = vmatpush.msra.mxu0 0.0
      %665 = vmatpush.msra.mxu0 0.0
      %666 = vmatpush.msra.mxu0 0.0
      %667 = vmatpush.msra.mxu0 0.0
      %668 = vmatpush.msra.mxu0 %v612
      %669 = vmatmul.f32.gmra.mxu0 %v270
      %v670 = vpop.f32.mrf.mxu0
      %v671 = vadd.f32 0.0, %v670
      %672 = vdwg.mxu0
      %673 = vmatpush.msra.mxu0 0.0
      %674 = vmatpush.msra.mxu0 0.0
      %675 = vmatpush.msra.mxu0 0.0
      %676 = vmatpush.msra.mxu0 0.0
      %677 = vmatpush.msra.mxu0 0.0
      %678 = vmatpush.msra.mxu0 0.0
      %679 = vmatpush.msra.mxu0 0.0
      %680 = vmatpush.msra.mxu0 0.0
      %681 = vmatpush.msra.mxu0 0.0
      %682 = vmatpush.msra.mxu0 0.0
      %683 = vmatpush.msra.mxu0 0.0
      %684 = vmatpush.msra.mxu0 0.0
      %685 = vmatpush.msra.mxu0 0.0
      %686 = vmatpush.msra.mxu0 0.0
      %687 = vmatpush.msra.mxu0 0.0
      %688 = vmatpush.msra.mxu0 %v612
      %689 = vmatmul.f32.gmra.mxu0 %v293
      %v690 = vpop.f32.mrf.mxu0
      %v691 = vadd.f32 0.0, %v690
      %692 = vdwg.mxu0
      %693 = vmatpush.msra.mxu0 0.0
      %694 = vmatpush.msra.mxu0 0.0
      %695 = vmatpush.msra.mxu0 0.0
      %696 = vmatpush.msra.mxu0 0.0
      %697 = vmatpush.msra.mxu0 0.0
      %698 = vmatpush.msra.mxu0 0.0
      %699 = vmatpush.msra.mxu0 0.0
      %700 = vmatpush.msra.mxu0 0.0
      %701 = vmatpush.msra.mxu0 0.0
      %702 = vmatpush.msra.mxu0 0.0
      %703 = vmatpush.msra.mxu0 0.0
      %704 = vmatpush.msra.mxu0 0.0
      %705 = vmatpush.msra.mxu0 0.0
      %706 = vmatpush.msra.mxu0 0.0
      %707 = vmatpush.msra.mxu0 0.0
      %708 = vmatpush.msra.mxu0 %v612
      %709 = vmatmul.f32.gmra.mxu0 %v316
      %v710 = vpop.f32.mrf.mxu0
      %v711 = vadd.f32 0.0, %v710
      %712 = vdwg.mxu0
      %713 = vmatpush.msra.mxu0 0.0
      %714 = vmatpush.msra.mxu0 0.0
      %715 = vmatpush.msra.mxu0 0.0
      %716 = vmatpush.msra.mxu0 0.0
      %717 = vmatpush.msra.mxu0 0.0
      %718 = vmatpush.msra.mxu0 0.0
      %719 = vmatpush.msra.mxu0 0.0
      %720 = vmatpush.msra.mxu0 0.0
      %721 = vmatpush.msra.mxu0 0.0
      %722 = vmatpush.msra.mxu0 0.0
      %723 = vmatpush.msra.mxu0 0.0
      %724 = vmatpush.msra.mxu0 0.0
      %725 = vmatpush.msra.mxu0 0.0
      %726 = vmatpush.msra.mxu0 0.0
      %727 = vmatpush.msra.mxu0 0.0
      %728 = vmatpush.msra.mxu0 %v612
      %729 = vmatmul.f32.gmra.mxu0 %v339
      %v730 = vpop.f32.mrf.mxu0
      %v731 = vadd.f32 0.0, %v730
      %732 = vdwg.mxu0
      %733 = vmatpush.msra.mxu0 0.0
      %734 = vmatpush.msra.mxu0 0.0
      %735 = vmatpush.msra.mxu0 0.0
      %736 = vmatpush.msra.mxu0 0.0
      %737 = vmatpush.msra.mxu0 0.0
      %738 = vmatpush.msra.mxu0 0.0
      %739 = vmatpush.msra.mxu0 0.0
      %740 = vmatpush.msra.mxu0 0.0
      %741 = vmatpush.msra.mxu0 0.0
      %742 = vmatpush.msra.mxu0 0.0
      %743 = vmatpush.msra.mxu0 0.0
      %744 = vmatpush.msra.mxu0 0.0
      %745 = vmatpush.msra.mxu0 0.0
      %746 = vmatpush.msra.mxu0 0.0
      %747 = vmatpush.msra.mxu0 0.0
      %748 = vmatpush.msra.mxu0 %v612
      %749 = vmatmul.f32.gmra.mxu0 %v362
      %v750 = vpop.f32.mrf.mxu0
      %v751 = vadd.f32 0.0, %v750
      %752 = vdwg.mxu0
      %v754 = vsel %vm199, %v190, 0
      %756 = vmatpush.msra.mxu0 0.0
      %757 = vmatpush.msra.mxu0 0.0
      %758 = vmatpush.msra.mxu0 0.0
      %759 = vmatpush.msra.mxu0 0.0
      %760 = vmatpush.msra.mxu0 0.0
      %761 = vmatpush.msra.mxu0 0.0
      %762 = vmatpush.msra.mxu0 0.0
      %763 = vmatpush.msra.mxu0 0.0
      %764 = vmatpush.msra.mxu0 0.0
      %765 = vmatpush.msra.mxu0 0.0
      %766 = vmatpush.msra.mxu0 0.0
      %767 = vmatpush.msra.mxu0 0.0
      %768 = vmatpush.msra.mxu0 0.0
      %769 = vmatpush.msra.mxu0 0.0
      %770 = vmatpush.msra.mxu0 0.0
      %771 = vmatpush.msra.mxu0 %v612
      %772 = vmatmul.f32.gmra.mxu0 %v754
      %v773 = vpop.f32.mrf.mxu0
      %v774 = vadd.f32 0.0, %v773
      %775 = vdwg.mxu0
      %v776 = vadd.f32 %v603, %v631
      %v777 = vadd.f32 %v604, %v651
      %v778 = vadd.f32 %v605, %v671
      %v779 = vadd.f32 %v606, %v691
      %v780 = vadd.f32 %v607, %v711
      %v781 = vadd.f32 %v608, %v731
      %v782 = vadd.f32 %v609, %v751
      %v783 = vadd.f32 %v610, %v774
      %s784 = scalar_lea.vmem %s1, 24
      %v785 = vld [vmem:[%s784] sm:$0xff]
      %786 = vmatpush.msra.mxu0 0.0
      %787 = vmatpush.msra.mxu0 0.0
      %788 = vmatpush.msra.mxu0 0.0
      %789 = vmatpush.msra.mxu0 0.0
      %790 = vmatpush.msra.mxu0 0.0
      %791 = vmatpush.msra.mxu0 0.0
      %792 = vmatpush.msra.mxu0 0.0
      %793 = vmatpush.msra.mxu0 0.0
      %794 = vmatpush.msra.mxu0 0.0
      %795 = vmatpush.msra.mxu0 0.0
      %796 = vmatpush.msra.mxu0 0.0
      %797 = vmatpush.msra.mxu0 0.0
      %798 = vmatpush.msra.mxu0 0.0
      %799 = vmatpush.msra.mxu0 0.0
      %800 = vmatpush.msra.mxu0 0.0
      %801 = vmatpush.msra.mxu0 %v785
      %802 = vmatmul.f32.gmra.mxu0 %v425
      %v803 = vpop.f32.mrf.mxu0
      %v804 = vadd.f32 0.0, %v803
      %805 = vdwg.mxu0
      %806 = vmatpush.msra.mxu0 0.0
      %807 = vmatpush.msra.mxu0 0.0
      %808 = vmatpush.msra.mxu0 0.0
      %809 = vmatpush.msra.mxu0 0.0
      %810 = vmatpush.msra.mxu0 0.0
      %811 = vmatpush.msra.mxu0 0.0
      %812 = vmatpush.msra.mxu0 0.0
      %813 = vmatpush.msra.mxu0 0.0
      %814 = vmatpush.msra.mxu0 0.0
      %815 = vmatpush.msra.mxu0 0.0
      %816 = vmatpush.msra.mxu0 0.0
      %817 = vmatpush.msra.mxu0 0.0
      %818 = vmatpush.msra.mxu0 0.0
      %819 = vmatpush.msra.mxu0 0.0
      %820 = vmatpush.msra.mxu0 0.0
      %821 = vmatpush.msra.mxu0 %v785
      %822 = vmatmul.f32.gmra.mxu0 %v451
      %v823 = vpop.f32.mrf.mxu0
      %v824 = vadd.f32 0.0, %v823
      %825 = vdwg.mxu0
      %826 = vmatpush.msra.mxu0 0.0
      %827 = vmatpush.msra.mxu0 0.0
      %828 = vmatpush.msra.mxu0 0.0
      %829 = vmatpush.msra.mxu0 0.0
      %830 = vmatpush.msra.mxu0 0.0
      %831 = vmatpush.msra.mxu0 0.0
      %832 = vmatpush.msra.mxu0 0.0
      %833 = vmatpush.msra.mxu0 0.0
      %834 = vmatpush.msra.mxu0 0.0
      %835 = vmatpush.msra.mxu0 0.0
      %836 = vmatpush.msra.mxu0 0.0
      %837 = vmatpush.msra.mxu0 0.0
      %838 = vmatpush.msra.mxu0 0.0
      %839 = vmatpush.msra.mxu0 0.0
      %840 = vmatpush.msra.mxu0 0.0
      %841 = vmatpush.msra.mxu0 %v785
      %842 = vmatmul.f32.gmra.mxu0 %v477
      %v843 = vpop.f32.mrf.mxu0
      %v844 = vadd.f32 0.0, %v843
      %845 = vdwg.mxu0
      %846 = vmatpush.msra.mxu0 0.0
      %847 = vmatpush.msra.mxu0 0.0
      %848 = vmatpush.msra.mxu0 0.0
      %849 = vmatpush.msra.mxu0 0.0
      %850 = vmatpush.msra.mxu0 0.0
      %851 = vmatpush.msra.mxu0 0.0
      %852 = vmatpush.msra.mxu0 0.0
      %853 = vmatpush.msra.mxu0 0.0
      %854 = vmatpush.msra.mxu0 0.0
      %855 = vmatpush.msra.mxu0 0.0
      %856 = vmatpush.msra.mxu0 0.0
      %857 = vmatpush.msra.mxu0 0.0
      %858 = vmatpush.msra.mxu0 0.0
      %859 = vmatpush.msra.mxu0 0.0
      %860 = vmatpush.msra.mxu0 0.0
      %861 = vmatpush.msra.mxu0 %v785
      %862 = vmatmul.f32.gmra.mxu0 %v503
      %v863 = vpop.f32.mrf.mxu0
      %v864 = vadd.f32 0.0, %v863
      %865 = vdwg.mxu0
      %866 = vmatpush.msra.mxu0 0.0
      %867 = vmatpush.msra.mxu0 0.0
      %868 = vmatpush.msra.mxu0 0.0
      %869 = vmatpush.msra.mxu0 0.0
      %870 = vmatpush.msra.mxu0 0.0
      %871 = vmatpush.msra.mxu0 0.0
      %872 = vmatpush.msra.mxu0 0.0
      %873 = vmatpush.msra.mxu0 0.0
      %874 = vmatpush.msra.mxu0 0.0
      %875 = vmatpush.msra.mxu0 0.0
      %876 = vmatpush.msra.mxu0 0.0
      %877 = vmatpush.msra.mxu0 0.0
      %878 = vmatpush.msra.mxu0 0.0
      %879 = vmatpush.msra.mxu0 0.0
      %880 = vmatpush.msra.mxu0 0.0
      %881 = vmatpush.msra.mxu0 %v785
      %882 = vmatmul.f32.gmra.mxu0 %v529
      %v883 = vpop.f32.mrf.mxu0
      %v884 = vadd.f32 0.0, %v883
      %885 = vdwg.mxu0
      %886 = vmatpush.msra.mxu0 0.0
      %887 = vmatpush.msra.mxu0 0.0
      %888 = vmatpush.msra.mxu0 0.0
      %889 = vmatpush.msra.mxu0 0.0
      %890 = vmatpush.msra.mxu0 0.0
      %891 = vmatpush.msra.mxu0 0.0
      %892 = vmatpush.msra.mxu0 0.0
      %893 = vmatpush.msra.mxu0 0.0
      %894 = vmatpush.msra.mxu0 0.0
      %895 = vmatpush.msra.mxu0 0.0
      %896 = vmatpush.msra.mxu0 0.0
      %897 = vmatpush.msra.mxu0 0.0
      %898 = vmatpush.msra.mxu0 0.0
      %899 = vmatpush.msra.mxu0 0.0
      %900 = vmatpush.msra.mxu0 0.0
      %901 = vmatpush.msra.mxu0 %v785
      %902 = vmatmul.f32.gmra.mxu0 %v555
      %v903 = vpop.f32.mrf.mxu0
      %v904 = vadd.f32 0.0, %v903
      %905 = vdwg.mxu0
      %906 = vmatpush.msra.mxu0 0.0
      %907 = vmatpush.msra.mxu0 0.0
      %908 = vmatpush.msra.mxu0 0.0
      %909 = vmatpush.msra.mxu0 0.0
      %910 = vmatpush.msra.mxu0 0.0
      %911 = vmatpush.msra.mxu0 0.0
      %912 = vmatpush.msra.mxu0 0.0
      %913 = vmatpush.msra.mxu0 0.0
      %914 = vmatpush.msra.mxu0 0.0
      %915 = vmatpush.msra.mxu0 0.0
      %916 = vmatpush.msra.mxu0 0.0
      %917 = vmatpush.msra.mxu0 0.0
      %918 = vmatpush.msra.mxu0 0.0
      %919 = vmatpush.msra.mxu0 0.0
      %920 = vmatpush.msra.mxu0 0.0
      %921 = vmatpush.msra.mxu0 %v785
      %922 = vmatmul.f32.gmra.mxu0 %v581
      %v923 = vpop.f32.mrf.mxu0
      %v924 = vadd.f32 0.0, %v923
      %925 = vdwg.mxu0
      %v927 = vrot.slane %v190, 1
      %v928 = vrot.slane %v191, 1
      %v929 = vsel %vm395, %v927, %v928
      %v930 = vsel %vm199, %v929, 0
      %932 = vmatpush.msra.mxu0 0.0
      %933 = vmatpush.msra.mxu0 0.0
      %934 = vmatpush.msra.mxu0 0.0
      %935 = vmatpush.msra.mxu0 0.0
      %936 = vmatpush.msra.mxu0 0.0
      %937 = vmatpush.msra.mxu0 0.0
      %938 = vmatpush.msra.mxu0 0.0
      %939 = vmatpush.msra.mxu0 0.0
      %940 = vmatpush.msra.mxu0 0.0
      %941 = vmatpush.msra.mxu0 0.0
      %942 = vmatpush.msra.mxu0 0.0
      %943 = vmatpush.msra.mxu0 0.0
      %944 = vmatpush.msra.mxu0 0.0
      %945 = vmatpush.msra.mxu0 0.0
      %946 = vmatpush.msra.mxu0 0.0
      %947 = vmatpush.msra.mxu0 %v785
      %948 = vmatmul.f32.gmra.mxu0 %v930
      %v949 = vpop.f32.mrf.mxu0
      %v950 = vadd.f32 0.0, %v949
      %951 = vdwg.mxu0
      %v952 = vadd.f32 %v776, %v804
      %v953 = vadd.f32 %v777, %v824
      %v954 = vadd.f32 %v778, %v844
      %v955 = vadd.f32 %v779, %v864
      %v956 = vadd.f32 %v780, %v884
      %v957 = vadd.f32 %v781, %v904
      %v958 = vadd.f32 %v782, %v924
      %v959 = vadd.f32 %v783, %v950
      %v960 = vmax.f32 %v952, 0.0
      %v961 = vmax.f32 %v953, 0.0
      %v962 = vmax.f32 %v954, 0.0
      %v963 = vmax.f32 %v955, 0.0
      %v964 = vmax.f32 %v956, 0.0
      %v965 = vmax.f32 %v957, 0.0
      %v966 = vmax.f32 %v958, 0.0
      %v967 = vmax.f32 %v959, 0.0
      %vm968 = vcmask 7168
      %969 = vst.msk [vmem:[%s172] sm:$0xff] %vm968, %v960
      %970 = vst.msk [vmem:[%s172 + $0x8] sm:$0xff] %vm968, %v961
      %971 = vst.msk [vmem:[%s172 + $0x10] sm:$0xff] %vm968, %v962
      %972 = vst.msk [vmem:[%s172 + $0x18] sm:$0xff] %vm968, %v963
      %973 = vst.msk [vmem:[%s172 + $0x20] sm:$0xff] %vm968, %v964
      %974 = vst.msk [vmem:[%s172 + $0x28] sm:$0xff] %vm968, %v965
      %975 = vst.msk [vmem:[%s172 + $0x30] sm:$0xff] %vm968, %v966
      %976 = vst.msk [vmem:[%s172 + $0x38] sm:$0xff] %vm968, %v967
      %s977 = scalar_lea.vmem %s1, 32
      %v978 = vld [vmem:[%s977] sm:$0xff]
      %979 = vmatpush.msra.mxu0 0.0
      %980 = vmatpush.msra.mxu0 0.0
      %981 = vmatpush.msra.mxu0 0.0
      %982 = vmatpush.msra.mxu0 0.0
      %983 = vmatpush.msra.mxu0 0.0
      %984 = vmatpush.msra.mxu0 0.0
      %985 = vmatpush.msra.mxu0 0.0
      %986 = vmatpush.msra.mxu0 0.0
      %987 = vmatpush.msra.mxu0 0.0
      %988 = vmatpush.msra.mxu0 0.0
      %989 = vmatpush.msra.mxu0 0.0
      %990 = vmatpush.msra.mxu0 0.0
      %991 = vmatpush.msra.mxu0 0.0
      %992 = vmatpush.msra.mxu0 0.0
      %993 = vmatpush.msra.mxu0 0.0
      %994 = vmatpush.msra.mxu0 %v978
      %995 = vmatmul.f32.gmra.mxu0 %v399
      %v996 = vpop.f32.mrf.mxu0
      %v997 = vadd.f32 0.0, %v996
      %998 = vdwg.mxu0
      %999 = vmatpush.msra.mxu0 0.0
      %1000 = vmatpush.msra.mxu0 0.0
      %1001 = vmatpush.msra.mxu0 0.0
      %1002 = vmatpush.msra.mxu0 0.0
      %1003 = vmatpush.msra.mxu0 0.0
      %1004 = vmatpush.msra.mxu0 0.0
      %1005 = vmatpush.msra.mxu0 0.0
      %1006 = vmatpush.msra.mxu0 0.0
      %1007 = vmatpush.msra.mxu0 0.0
      %1008 = vmatpush.msra.mxu0 0.0
      %1009 = vmatpush.msra.mxu0 0.0
      %1010 = vmatpush.msra.mxu0 0.0
      %1011 = vmatpush.msra.mxu0 0.0
      %1012 = vmatpush.msra.mxu0 0.0
      %1013 = vmatpush.msra.mxu0 0.0
      %1014 = vmatpush.msra.mxu0 %v978
      %1015 = vmatmul.f32.gmra.mxu0 %v425
      %v1016 = vpop.f32.mrf.mxu0
      %v1017 = vadd.f32 0.0, %v1016
      %1018 = vdwg.mxu0
      %1019 = vmatpush.msra.mxu0 0.0
      %1020 = vmatpush.msra.mxu0 0.0
      %1021 = vmatpush.msra.mxu0 0.0
      %1022 = vmatpush.msra.mxu0 0.0
      %1023 = vmatpush.msra.mxu0 0.0
      %1024 = vmatpush.msra.mxu0 0.0
      %1025 = vmatpush.msra.mxu0 0.0
      %1026 = vmatpush.msra.mxu0 0.0
      %1027 = vmatpush.msra.mxu0 0.0
      %1028 = vmatpush.msra.mxu0 0.0
      %1029 = vmatpush.msra.mxu0 0.0
      %1030 = vmatpush.msra.mxu0 0.0
      %1031 = vmatpush.msra.mxu0 0.0
      %1032 = vmatpush.msra.mxu0 0.0
      %1033 = vmatpush.msra.mxu0 0.0
      %1034 = vmatpush.msra.mxu0 %v978
      %1035 = vmatmul.f32.gmra.mxu0 %v451
      %v1036 = vpop.f32.mrf.mxu0
      %v1037 = vadd.f32 0.0, %v1036
      %1038 = vdwg.mxu0
      %1039 = vmatpush.msra.mxu0 0.0
      %1040 = vmatpush.msra.mxu0 0.0
      %1041 = vmatpush.msra.mxu0 0.0
      %1042 = vmatpush.msra.mxu0 0.0
      %1043 = vmatpush.msra.mxu0 0.0
      %1044 = vmatpush.msra.mxu0 0.0
      %1045 = vmatpush.msra.mxu0 0.0
      %1046 = vmatpush.msra.mxu0 0.0
      %1047 = vmatpush.msra.mxu0 0.0
      %1048 = vmatpush.msra.mxu0 0.0
      %1049 = vmatpush.msra.mxu0 0.0
      %1050 = vmatpush.msra.mxu0 0.0
      %1051 = vmatpush.msra.mxu0 0.0
      %1052 = vmatpush.msra.mxu0 0.0
      %1053 = vmatpush.msra.mxu0 0.0
      %1054 = vmatpush.msra.mxu0 %v978
      %1055 = vmatmul.f32.gmra.mxu0 %v477
      %v1056 = vpop.f32.mrf.mxu0
      %v1057 = vadd.f32 0.0, %v1056
      %1058 = vdwg.mxu0
      %1059 = vmatpush.msra.mxu0 0.0
      %1060 = vmatpush.msra.mxu0 0.0
      %1061 = vmatpush.msra.mxu0 0.0
      %1062 = vmatpush.msra.mxu0 0.0
      %1063 = vmatpush.msra.mxu0 0.0
      %1064 = vmatpush.msra.mxu0 0.0
      %1065 = vmatpush.msra.mxu0 0.0
      %1066 = vmatpush.msra.mxu0 0.0
      %1067 = vmatpush.msra.mxu0 0.0
      %1068 = vmatpush.msra.mxu0 0.0
      %1069 = vmatpush.msra.mxu0 0.0
      %1070 = vmatpush.msra.mxu0 0.0
      %1071 = vmatpush.msra.mxu0 0.0
      %1072 = vmatpush.msra.mxu0 0.0
      %1073 = vmatpush.msra.mxu0 0.0
      %1074 = vmatpush.msra.mxu0 %v978
      %1075 = vmatmul.f32.gmra.mxu0 %v503
      %v1076 = vpop.f32.mrf.mxu0
      %v1077 = vadd.f32 0.0, %v1076
      %1078 = vdwg.mxu0
      %1079 = vmatpush.msra.mxu0 0.0
      %1080 = vmatpush.msra.mxu0 0.0
      %1081 = vmatpush.msra.mxu0 0.0
      %1082 = vmatpush.msra.mxu0 0.0
      %1083 = vmatpush.msra.mxu0 0.0
      %1084 = vmatpush.msra.mxu0 0.0
      %1085 = vmatpush.msra.mxu0 0.0
      %1086 = vmatpush.msra.mxu0 0.0
      %1087 = vmatpush.msra.mxu0 0.0
      %1088 = vmatpush.msra.mxu0 0.0
      %1089 = vmatpush.msra.mxu0 0.0
      %1090 = vmatpush.msra.mxu0 0.0
      %1091 = vmatpush.msra.mxu0 0.0
      %1092 = vmatpush.msra.mxu0 0.0
      %1093 = vmatpush.msra.mxu0 0.0
      %1094 = vmatpush.msra.mxu0 %v978
      %1095 = vmatmul.f32.gmra.mxu0 %v529
      %v1096 = vpop.f32.mrf.mxu0
      %v1097 = vadd.f32 0.0, %v1096
      %1098 = vdwg.mxu0
      %1099 = vmatpush.msra.mxu0 0.0
      %1100 = vmatpush.msra.mxu0 0.0
      %1101 = vmatpush.msra.mxu0 0.0
      %1102 = vmatpush.msra.mxu0 0.0
      %1103 = vmatpush.msra.mxu0 0.0
      %1104 = vmatpush.msra.mxu0 0.0
      %1105 = vmatpush.msra.mxu0 0.0
      %1106 = vmatpush.msra.mxu0 0.0
      %1107 = vmatpush.msra.mxu0 0.0
      %1108 = vmatpush.msra.mxu0 0.0
      %1109 = vmatpush.msra.mxu0 0.0
      %1110 = vmatpush.msra.mxu0 0.0
      %1111 = vmatpush.msra.mxu0 0.0
      %1112 = vmatpush.msra.mxu0 0.0
      %1113 = vmatpush.msra.mxu0 0.0
      %1114 = vmatpush.msra.mxu0 %v978
      %1115 = vmatmul.f32.gmra.mxu0 %v555
      %v1116 = vpop.f32.mrf.mxu0
      %v1117 = vadd.f32 0.0, %v1116
      %1118 = vdwg.mxu0
      %1119 = vmatpush.msra.mxu0 0.0
      %1120 = vmatpush.msra.mxu0 0.0
      %1121 = vmatpush.msra.mxu0 0.0
      %1122 = vmatpush.msra.mxu0 0.0
      %1123 = vmatpush.msra.mxu0 0.0
      %1124 = vmatpush.msra.mxu0 0.0
      %1125 = vmatpush.msra.mxu0 0.0
      %1126 = vmatpush.msra.mxu0 0.0
      %1127 = vmatpush.msra.mxu0 0.0
      %1128 = vmatpush.msra.mxu0 0.0
      %1129 = vmatpush.msra.mxu0 0.0
      %1130 = vmatpush.msra.mxu0 0.0
      %1131 = vmatpush.msra.mxu0 0.0
      %1132 = vmatpush.msra.mxu0 0.0
      %1133 = vmatpush.msra.mxu0 0.0
      %1134 = vmatpush.msra.mxu0 %v978
      %1135 = vmatmul.f32.gmra.mxu0 %v581
      %v1136 = vpop.f32.mrf.mxu0
      %v1137 = vadd.f32 0.0, %v1136
      %1138 = vdwg.mxu0
      %v1139 = vadd.f32 %v197, %v997
      %v1140 = vadd.f32 %v197, %v1017
      %v1141 = vadd.f32 %v197, %v1037
      %v1142 = vadd.f32 %v197, %v1057
      %v1143 = vadd.f32 %v197, %v1077
      %v1144 = vadd.f32 %v197, %v1097
      %v1145 = vadd.f32 %v197, %v1117
      %v1146 = vadd.f32 %v197, %v1137
      %s1147 = scalar_lea.vmem %s1, 40
      %v1148 = vld [vmem:[%s1147] sm:$0xff]
      %vm1149 = vcmask 1045504
      %v1150 = vrot.slane %v174, 2
      %v1151 = vrot.slane %v175, 2
      %v1152 = vsel %vm1149, %v1150, %v1151
      %v1153 = vsel %vm199, %v1152, 0
      %1155 = vmatpush.msra.mxu0 0.0
      %1156 = vmatpush.msra.mxu0 0.0
      %1157 = vmatpush.msra.mxu0 0.0
      %1158 = vmatpush.msra.mxu0 0.0
      %1159 = vmatpush.msra.mxu0 0.0
      %1160 = vmatpush.msra.mxu0 0.0
      %1161 = vmatpush.msra.mxu0 0.0
      %1162 = vmatpush.msra.mxu0 0.0
      %1163 = vmatpush.msra.mxu0 0.0
      %1164 = vmatpush.msra.mxu0 0.0
      %1165 = vmatpush.msra.mxu0 0.0
      %1166 = vmatpush.msra.mxu0 0.0
      %1167 = vmatpush.msra.mxu0 0.0
      %1168 = vmatpush.msra.mxu0 0.0
      %1169 = vmatpush.msra.mxu0 0.0
      %1170 = vmatpush.msra.mxu0 %v1148
      %1171 = vmatmul.f32.gmra.mxu0 %v1153
      %v1172 = vpop.f32.mrf.mxu0
      %v1173 = vadd.f32 0.0, %v1172
      %1174 = vdwg.mxu0
      %v1175 = vrot.slane %v176, 2
      %v1176 = vrot.slane %v177, 2
      %v1177 = vsel %vm1149, %v1175, %v1176
      %v1178 = vsel %vm199, %v1177, 0
      %1180 = vmatpush.msra.mxu0 0.0
      %1181 = vmatpush.msra.mxu0 0.0
      %1182 = vmatpush.msra.mxu0 0.0
      %1183 = vmatpush.msra.mxu0 0.0
      %1184 = vmatpush.msra.mxu0 0.0
      %1185 = vmatpush.msra.mxu0 0.0
      %1186 = vmatpush.msra.mxu0 0.0
      %1187 = vmatpush.msra.mxu0 0.0
      %1188 = vmatpush.msra.mxu0 0.0
      %1189 = vmatpush.msra.mxu0 0.0
      %1190 = vmatpush.msra.mxu0 0.0
      %1191 = vmatpush.msra.mxu0 0.0
      %1192 = vmatpush.msra.mxu0 0.0
      %1193 = vmatpush.msra.mxu0 0.0
      %1194 = vmatpush.msra.mxu0 0.0
      %1195 = vmatpush.msra.mxu0 %v1148
      %1196 = vmatmul.f32.gmra.mxu0 %v1178
      %v1197 = vpop.f32.mrf.mxu0
      %v1198 = vadd.f32 0.0, %v1197
      %1199 = vdwg.mxu0
      %v1200 = vrot.slane %v178, 2
      %v1201 = vrot.slane %v179, 2
      %v1202 = vsel %vm1149, %v1200, %v1201
      %v1203 = vsel %vm199, %v1202, 0
      %1205 = vmatpush.msra.mxu0 0.0
      %1206 = vmatpush.msra.mxu0 0.0
      %1207 = vmatpush.msra.mxu0 0.0
      %1208 = vmatpush.msra.mxu0 0.0
      %1209 = vmatpush.msra.mxu0 0.0
      %1210 = vmatpush.msra.mxu0 0.0
      %1211 = vmatpush.msra.mxu0 0.0
      %1212 = vmatpush.msra.mxu0 0.0
      %1213 = vmatpush.msra.mxu0 0.0
      %1214 = vmatpush.msra.mxu0 0.0
      %1215 = vmatpush.msra.mxu0 0.0
      %1216 = vmatpush.msra.mxu0 0.0
      %1217 = vmatpush.msra.mxu0 0.0
      %1218 = vmatpush.msra.mxu0 0.0
      %1219 = vmatpush.msra.mxu0 0.0
      %1220 = vmatpush.msra.mxu0 %v1148
      %1221 = vmatmul.f32.gmra.mxu0 %v1203
      %v1222 = vpop.f32.mrf.mxu0
      %v1223 = vadd.f32 0.0, %v1222
      %1224 = vdwg.mxu0
      %v1225 = vrot.slane %v180, 2
      %v1226 = vrot.slane %v181, 2
      %v1227 = vsel %vm1149, %v1225, %v1226
      %v1228 = vsel %vm199, %v1227, 0
      %1230 = vmatpush.msra.mxu0 0.0
      %1231 = vmatpush.msra.mxu0 0.0
      %1232 = vmatpush.msra.mxu0 0.0
      %1233 = vmatpush.msra.mxu0 0.0
      %1234 = vmatpush.msra.mxu0 0.0
      %1235 = vmatpush.msra.mxu0 0.0
      %1236 = vmatpush.msra.mxu0 0.0
      %1237 = vmatpush.msra.mxu0 0.0
      %1238 = vmatpush.msra.mxu0 0.0
      %1239 = vmatpush.msra.mxu0 0.0
      %1240 = vmatpush.msra.mxu0 0.0
      %1241 = vmatpush.msra.mxu0 0.0
      %1242 = vmatpush.msra.mxu0 0.0
      %1243 = vmatpush.msra.mxu0 0.0
      %1244 = vmatpush.msra.mxu0 0.0
      %1245 = vmatpush.msra.mxu0 %v1148
      %1246 = vmatmul.f32.gmra.mxu0 %v1228
      %v1247 = vpop.f32.mrf.mxu0
      %v1248 = vadd.f32 0.0, %v1247
      %1249 = vdwg.mxu0
      %v1250 = vrot.slane %v182, 2
      %v1251 = vrot.slane %v183, 2
      %v1252 = vsel %vm1149, %v1250, %v1251
      %v1253 = vsel %vm199, %v1252, 0
      %1255 = vmatpush.msra.mxu0 0.0
      %1256 = vmatpush.msra.mxu0 0.0
      %1257 = vmatpush.msra.mxu0 0.0
      %1258 = vmatpush.msra.mxu0 0.0
      %1259 = vmatpush.msra.mxu0 0.0
      %1260 = vmatpush.msra.mxu0 0.0
      %1261 = vmatpush.msra.mxu0 0.0
      %1262 = vmatpush.msra.mxu0 0.0
      %1263 = vmatpush.msra.mxu0 0.0
      %1264 = vmatpush.msra.mxu0 0.0
      %1265 = vmatpush.msra.mxu0 0.0
      %1266 = vmatpush.msra.mxu0 0.0
      %1267 = vmatpush.msra.mxu0 0.0
      %1268 = vmatpush.msra.mxu0 0.0
      %1269 = vmatpush.msra.mxu0 0.0
      %1270 = vmatpush.msra.mxu0 %v1148
      %1271 = vmatmul.f32.gmra.mxu0 %v1253
      %v1272 = vpop.f32.mrf.mxu0
      %v1273 = vadd.f32 0.0, %v1272
      %1274 = vdwg.mxu0
      %v1275 = vrot.slane %v184, 2
      %v1276 = vrot.slane %v185, 2
      %v1277 = vsel %vm1149, %v1275, %v1276
      %v1278 = vsel %vm199, %v1277, 0
      %1280 = vmatpush.msra.mxu0 0.0
      %1281 = vmatpush.msra.mxu0 0.0
      %1282 = vmatpush.msra.mxu0 0.0
      %1283 = vmatpush.msra.mxu0 0.0
      %1284 = vmatpush.msra.mxu0 0.0
      %1285 = vmatpush.msra.mxu0 0.0
      %1286 = vmatpush.msra.mxu0 0.0
      %1287 = vmatpush.msra.mxu0 0.0
      %1288 = vmatpush.msra.mxu0 0.0
      %1289 = vmatpush.msra.mxu0 0.0
      %1290 = vmatpush.msra.mxu0 0.0
      %1291 = vmatpush.msra.mxu0 0.0
      %1292 = vmatpush.msra.mxu0 0.0
      %1293 = vmatpush.msra.mxu0 0.0
      %1294 = vmatpush.msra.mxu0 0.0
      %1295 = vmatpush.msra.mxu0 %v1148
      %1296 = vmatmul.f32.gmra.mxu0 %v1278
      %v1297 = vpop.f32.mrf.mxu0
      %v1298 = vadd.f32 0.0, %v1297
      %1299 = vdwg.mxu0
      %v1300 = vrot.slane %v186, 2
      %v1301 = vrot.slane %v187, 2
      %v1302 = vsel %vm1149, %v1300, %v1301
      %v1303 = vsel %vm199, %v1302, 0
      %1305 = vmatpush.msra.mxu0 0.0
      %1306 = vmatpush.msra.mxu0 0.0
      %1307 = vmatpush.msra.mxu0 0.0
      %1308 = vmatpush.msra.mxu0 0.0
      %1309 = vmatpush.msra.mxu0 0.0
      %1310 = vmatpush.msra.mxu0 0.0
      %1311 = vmatpush.msra.mxu0 0.0
      %1312 = vmatpush.msra.mxu0 0.0
      %1313 = vmatpush.msra.mxu0 0.0
      %1314 = vmatpush.msra.mxu0 0.0
      %1315 = vmatpush.msra.mxu0 0.0
      %1316 = vmatpush.msra.mxu0 0.0
      %1317 = vmatpush.msra.mxu0 0.0
      %1318 = vmatpush.msra.mxu0 0.0
      %1319 = vmatpush.msra.mxu0 0.0
      %1320 = vmatpush.msra.mxu0 %v1148
      %1321 = vmatmul.f32.gmra.mxu0 %v1303
      %v1322 = vpop.f32.mrf.mxu0
      %v1323 = vadd.f32 0.0, %v1322
      %1324 = vdwg.mxu0
      %v1325 = vrot.slane %v188, 2
      %v1326 = vrot.slane %v189, 2
      %v1327 = vsel %vm1149, %v1325, %v1326
      %v1328 = vsel %vm199, %v1327, 0
      %1330 = vmatpush.msra.mxu0 0.0
      %1331 = vmatpush.msra.mxu0 0.0
      %1332 = vmatpush.msra.mxu0 0.0
      %1333 = vmatpush.msra.mxu0 0.0
      %1334 = vmatpush.msra.mxu0 0.0
      %1335 = vmatpush.msra.mxu0 0.0
      %1336 = vmatpush.msra.mxu0 0.0
      %1337 = vmatpush.msra.mxu0 0.0
      %1338 = vmatpush.msra.mxu0 0.0
      %1339 = vmatpush.msra.mxu0 0.0
      %1340 = vmatpush.msra.mxu0 0.0
      %1341 = vmatpush.msra.mxu0 0.0
      %1342 = vmatpush.msra.mxu0 0.0
      %1343 = vmatpush.msra.mxu0 0.0
      %1344 = vmatpush.msra.mxu0 0.0
      %1345 = vmatpush.msra.mxu0 %v1148
      %1346 = vmatmul.f32.gmra.mxu0 %v1328
      %v1347 = vpop.f32.mrf.mxu0
      %v1348 = vadd.f32 0.0, %v1347
      %1349 = vdwg.mxu0
      %v1350 = vadd.f32 %v1139, %v1173
      %v1351 = vadd.f32 %v1140, %v1198
      %v1352 = vadd.f32 %v1141, %v1223
      %v1353 = vadd.f32 %v1142, %v1248
      %v1354 = vadd.f32 %v1143, %v1273
      %v1355 = vadd.f32 %v1144, %v1298
      %v1356 = vadd.f32 %v1145, %v1323
      %v1357 = vadd.f32 %v1146, %v1348
      %s1358 = scalar_lea.vmem %s1, 48
      %v1359 = vld [vmem:[%s1358] sm:$0xff]
      %1360 = vmatpush.msra.mxu0 0.0
      %1361 = vmatpush.msra.mxu0 0.0
      %1362 = vmatpush.msra.mxu0 0.0
      %1363 = vmatpush.msra.mxu0 0.0
      %1364 = vmatpush.msra.mxu0 0.0
      %1365 = vmatpush.msra.mxu0 0.0
      %1366 = vmatpush.msra.mxu0 0.0
      %1367 = vmatpush.msra.mxu0 0.0
      %1368 = vmatpush.msra.mxu0 0.0
      %1369 = vmatpush.msra.mxu0 0.0
      %1370 = vmatpush.msra.mxu0 0.0
      %1371 = vmatpush.msra.mxu0 0.0
      %1372 = vmatpush.msra.mxu0 0.0
      %1373 = vmatpush.msra.mxu0 0.0
      %1374 = vmatpush.msra.mxu0 0.0
      %1375 = vmatpush.msra.mxu0 %v1359
      %1376 = vmatmul.f32.gmra.mxu0 %v425
      %v1377 = vpop.f32.mrf.mxu0
      %v1378 = vadd.f32 0.0, %v1377
      %1379 = vdwg.mxu0
      %1380 = vmatpush.msra.mxu0 0.0
      %1381 = vmatpush.msra.mxu0 0.0
      %1382 = vmatpush.msra.mxu0 0.0
      %1383 = vmatpush.msra.mxu0 0.0
      %1384 = vmatpush.msra.mxu0 0.0
      %1385 = vmatpush.msra.mxu0 0.0
      %1386 = vmatpush.msra.mxu0 0.0
      %1387 = vmatpush.msra.mxu0 0.0
      %1388 = vmatpush.msra.mxu0 0.0
      %1389 = vmatpush.msra.mxu0 0.0
      %1390 = vmatpush.msra.mxu0 0.0
      %1391 = vmatpush.msra.mxu0 0.0
      %1392 = vmatpush.msra.mxu0 0.0
      %1393 = vmatpush.msra.mxu0 0.0
      %1394 = vmatpush.msra.mxu0 0.0
      %1395 = vmatpush.msra.mxu0 %v1359
      %1396 = vmatmul.f32.gmra.mxu0 %v451
      %v1397 = vpop.f32.mrf.mxu0
      %v1398 = vadd.f32 0.0, %v1397
      %1399 = vdwg.mxu0
      %1400 = vmatpush.msra.mxu0 0.0
      %1401 = vmatpush.msra.mxu0 0.0
      %1402 = vmatpush.msra.mxu0 0.0
      %1403 = vmatpush.msra.mxu0 0.0
      %1404 = vmatpush.msra.mxu0 0.0
      %1405 = vmatpush.msra.mxu0 0.0
      %1406 = vmatpush.msra.mxu0 0.0
      %1407 = vmatpush.msra.mxu0 0.0
      %1408 = vmatpush.msra.mxu0 0.0
      %1409 = vmatpush.msra.mxu0 0.0
      %1410 = vmatpush.msra.mxu0 0.0
      %1411 = vmatpush.msra.mxu0 0.0
      %1412 = vmatpush.msra.mxu0 0.0
      %1413 = vmatpush.msra.mxu0 0.0
      %1414 = vmatpush.msra.mxu0 0.0
      %1415 = vmatpush.msra.mxu0 %v1359
      %1416 = vmatmul.f32.gmra.mxu0 %v477
      %v1417 = vpop.f32.mrf.mxu0
      %v1418 = vadd.f32 0.0, %v1417
      %1419 = vdwg.mxu0
      %1420 = vmatpush.msra.mxu0 0.0
      %1421 = vmatpush.msra.mxu0 0.0
      %1422 = vmatpush.msra.mxu0 0.0
      %1423 = vmatpush.msra.mxu0 0.0
      %1424 = vmatpush.msra.mxu0 0.0
      %1425 = vmatpush.msra.mxu0 0.0
      %1426 = vmatpush.msra.mxu0 0.0
      %1427 = vmatpush.msra.mxu0 0.0
      %1428 = vmatpush.msra.mxu0 0.0
      %1429 = vmatpush.msra.mxu0 0.0
      %1430 = vmatpush.msra.mxu0 0.0
      %1431 = vmatpush.msra.mxu0 0.0
      %1432 = vmatpush.msra.mxu0 0.0
      %1433 = vmatpush.msra.mxu0 0.0
      %1434 = vmatpush.msra.mxu0 0.0
      %1435 = vmatpush.msra.mxu0 %v1359
      %1436 = vmatmul.f32.gmra.mxu0 %v503
      %v1437 = vpop.f32.mrf.mxu0
      %v1438 = vadd.f32 0.0, %v1437
      %1439 = vdwg.mxu0
      %1440 = vmatpush.msra.mxu0 0.0
      %1441 = vmatpush.msra.mxu0 0.0
      %1442 = vmatpush.msra.mxu0 0.0
      %1443 = vmatpush.msra.mxu0 0.0
      %1444 = vmatpush.msra.mxu0 0.0
      %1445 = vmatpush.msra.mxu0 0.0
      %1446 = vmatpush.msra.mxu0 0.0
      %1447 = vmatpush.msra.mxu0 0.0
      %1448 = vmatpush.msra.mxu0 0.0
      %1449 = vmatpush.msra.mxu0 0.0
      %1450 = vmatpush.msra.mxu0 0.0
      %1451 = vmatpush.msra.mxu0 0.0
      %1452 = vmatpush.msra.mxu0 0.0
      %1453 = vmatpush.msra.mxu0 0.0
      %1454 = vmatpush.msra.mxu0 0.0
      %1455 = vmatpush.msra.mxu0 %v1359
      %1456 = vmatmul.f32.gmra.mxu0 %v529
      %v1457 = vpop.f32.mrf.mxu0
      %v1458 = vadd.f32 0.0, %v1457
      %1459 = vdwg.mxu0
      %1460 = vmatpush.msra.mxu0 0.0
      %1461 = vmatpush.msra.mxu0 0.0
      %1462 = vmatpush.msra.mxu0 0.0
      %1463 = vmatpush.msra.mxu0 0.0
      %1464 = vmatpush.msra.mxu0 0.0
      %1465 = vmatpush.msra.mxu0 0.0
      %1466 = vmatpush.msra.mxu0 0.0
      %1467 = vmatpush.msra.mxu0 0.0
      %1468 = vmatpush.msra.mxu0 0.0
      %1469 = vmatpush.msra.mxu0 0.0
      %1470 = vmatpush.msra.mxu0 0.0
      %1471 = vmatpush.msra.mxu0 0.0
      %1472 = vmatpush.msra.mxu0 0.0
      %1473 = vmatpush.msra.mxu0 0.0
      %1474 = vmatpush.msra.mxu0 0.0
      %1475 = vmatpush.msra.mxu0 %v1359
      %1476 = vmatmul.f32.gmra.mxu0 %v555
      %v1477 = vpop.f32.mrf.mxu0
      %v1478 = vadd.f32 0.0, %v1477
      %1479 = vdwg.mxu0
      %1480 = vmatpush.msra.mxu0 0.0
      %1481 = vmatpush.msra.mxu0 0.0
      %1482 = vmatpush.msra.mxu0 0.0
      %1483 = vmatpush.msra.mxu0 0.0
      %1484 = vmatpush.msra.mxu0 0.0
      %1485 = vmatpush.msra.mxu0 0.0
      %1486 = vmatpush.msra.mxu0 0.0
      %1487 = vmatpush.msra.mxu0 0.0
      %1488 = vmatpush.msra.mxu0 0.0
      %1489 = vmatpush.msra.mxu0 0.0
      %1490 = vmatpush.msra.mxu0 0.0
      %1491 = vmatpush.msra.mxu0 0.0
      %1492 = vmatpush.msra.mxu0 0.0
      %1493 = vmatpush.msra.mxu0 0.0
      %1494 = vmatpush.msra.mxu0 0.0
      %1495 = vmatpush.msra.mxu0 %v1359
      %1496 = vmatmul.f32.gmra.mxu0 %v581
      %v1497 = vpop.f32.mrf.mxu0
      %v1498 = vadd.f32 0.0, %v1497
      %1499 = vdwg.mxu0
      %1500 = vmatpush.msra.mxu0 0.0
      %1501 = vmatpush.msra.mxu0 0.0
      %1502 = vmatpush.msra.mxu0 0.0
      %1503 = vmatpush.msra.mxu0 0.0
      %1504 = vmatpush.msra.mxu0 0.0
      %1505 = vmatpush.msra.mxu0 0.0
      %1506 = vmatpush.msra.mxu0 0.0
      %1507 = vmatpush.msra.mxu0 0.0
      %1508 = vmatpush.msra.mxu0 0.0
      %1509 = vmatpush.msra.mxu0 0.0
      %1510 = vmatpush.msra.mxu0 0.0
      %1511 = vmatpush.msra.mxu0 0.0
      %1512 = vmatpush.msra.mxu0 0.0
      %1513 = vmatpush.msra.mxu0 0.0
      %1514 = vmatpush.msra.mxu0 0.0
      %1515 = vmatpush.msra.mxu0 %v1359
      %1516 = vmatmul.f32.gmra.mxu0 %v930
      %v1517 = vpop.f32.mrf.mxu0
      %v1518 = vadd.f32 0.0, %v1517
      %1519 = vdwg.mxu0
      %v1520 = vadd.f32 %v1350, %v1378
      %v1521 = vadd.f32 %v1351, %v1398
      %v1522 = vadd.f32 %v1352, %v1418
      %v1523 = vadd.f32 %v1353, %v1438
      %v1524 = vadd.f32 %v1354, %v1458
      %v1525 = vadd.f32 %v1355, %v1478
      %v1526 = vadd.f32 %v1356, %v1498
      %v1527 = vadd.f32 %v1357, %v1518
      %s1528 = scalar_lea.vmem %s1, 56
      %v1529 = vld [vmem:[%s1528] sm:$0xff]
      %1530 = vmatpush.msra.mxu0 0.0
      %1531 = vmatpush.msra.mxu0 0.0
      %1532 = vmatpush.msra.mxu0 0.0
      %1533 = vmatpush.msra.mxu0 0.0
      %1534 = vmatpush.msra.mxu0 0.0
      %1535 = vmatpush.msra.mxu0 0.0
      %1536 = vmatpush.msra.mxu0 0.0
      %1537 = vmatpush.msra.mxu0 0.0
      %1538 = vmatpush.msra.mxu0 0.0
      %1539 = vmatpush.msra.mxu0 0.0
      %1540 = vmatpush.msra.mxu0 0.0
      %1541 = vmatpush.msra.mxu0 0.0
      %1542 = vmatpush.msra.mxu0 0.0
      %1543 = vmatpush.msra.mxu0 0.0
      %1544 = vmatpush.msra.mxu0 0.0
      %1545 = vmatpush.msra.mxu0 %v1529
      %1546 = vmatmul.f32.gmra.mxu0 %v1178
      %v1547 = vpop.f32.mrf.mxu0
      %v1548 = vadd.f32 0.0, %v1547
      %1549 = vdwg.mxu0
      %1550 = vmatpush.msra.mxu0 0.0
      %1551 = vmatpush.msra.mxu0 0.0
      %1552 = vmatpush.msra.mxu0 0.0
      %1553 = vmatpush.msra.mxu0 0.0
      %1554 = vmatpush.msra.mxu0 0.0
      %1555 = vmatpush.msra.mxu0 0.0
      %1556 = vmatpush.msra.mxu0 0.0
      %1557 = vmatpush.msra.mxu0 0.0
      %1558 = vmatpush.msra.mxu0 0.0
      %1559 = vmatpush.msra.mxu0 0.0
      %1560 = vmatpush.msra.mxu0 0.0
      %1561 = vmatpush.msra.mxu0 0.0
      %1562 = vmatpush.msra.mxu0 0.0
      %1563 = vmatpush.msra.mxu0 0.0
      %1564 = vmatpush.msra.mxu0 0.0
      %1565 = vmatpush.msra.mxu0 %v1529
      %1566 = vmatmul.f32.gmra.mxu0 %v1203
      %v1567 = vpop.f32.mrf.mxu0
      %v1568 = vadd.f32 0.0, %v1567
      %1569 = vdwg.mxu0
      %1570 = vmatpush.msra.mxu0 0.0
      %1571 = vmatpush.msra.mxu0 0.0
      %1572 = vmatpush.msra.mxu0 0.0
      %1573 = vmatpush.msra.mxu0 0.0
      %1574 = vmatpush.msra.mxu0 0.0
      %1575 = vmatpush.msra.mxu0 0.0
      %1576 = vmatpush.msra.mxu0 0.0
      %1577 = vmatpush.msra.mxu0 0.0
      %1578 = vmatpush.msra.mxu0 0.0
      %1579 = vmatpush.msra.mxu0 0.0
      %1580 = vmatpush.msra.mxu0 0.0
      %1581 = vmatpush.msra.mxu0 0.0
      %1582 = vmatpush.msra.mxu0 0.0
      %1583 = vmatpush.msra.mxu0 0.0
      %1584 = vmatpush.msra.mxu0 0.0
      %1585 = vmatpush.msra.mxu0 %v1529
      %1586 = vmatmul.f32.gmra.mxu0 %v1228
      %v1587 = vpop.f32.mrf.mxu0
      %v1588 = vadd.f32 0.0, %v1587
      %1589 = vdwg.mxu0
      %1590 = vmatpush.msra.mxu0 0.0
      %1591 = vmatpush.msra.mxu0 0.0
      %1592 = vmatpush.msra.mxu0 0.0
      %1593 = vmatpush.msra.mxu0 0.0
      %1594 = vmatpush.msra.mxu0 0.0
      %1595 = vmatpush.msra.mxu0 0.0
      %1596 = vmatpush.msra.mxu0 0.0
      %1597 = vmatpush.msra.mxu0 0.0
      %1598 = vmatpush.msra.mxu0 0.0
      %1599 = vmatpush.msra.mxu0 0.0
      %1600 = vmatpush.msra.mxu0 0.0
      %1601 = vmatpush.msra.mxu0 0.0
      %1602 = vmatpush.msra.mxu0 0.0
      %1603 = vmatpush.msra.mxu0 0.0
      %1604 = vmatpush.msra.mxu0 0.0
      %1605 = vmatpush.msra.mxu0 %v1529
      %1606 = vmatmul.f32.gmra.mxu0 %v1253
      %v1607 = vpop.f32.mrf.mxu0
      %v1608 = vadd.f32 0.0, %v1607
      %1609 = vdwg.mxu0
      %1610 = vmatpush.msra.mxu0 0.0
      %1611 = vmatpush.msra.mxu0 0.0
      %1612 = vmatpush.msra.mxu0 0.0
      %1613 = vmatpush.msra.mxu0 0.0
      %1614 = vmatpush.msra.mxu0 0.0
      %1615 = vmatpush.msra.mxu0 0.0
      %1616 = vmatpush.msra.mxu0 0.0
      %1617 = vmatpush.msra.mxu0 0.0
      %1618 = vmatpush.msra.mxu0 0.0
      %1619 = vmatpush.msra.mxu0 0.0
      %1620 = vmatpush.msra.mxu0 0.0
      %1621 = vmatpush.msra.mxu0 0.0
      %1622 = vmatpush.msra.mxu0 0.0
      %1623 = vmatpush.msra.mxu0 0.0
      %1624 = vmatpush.msra.mxu0 0.0
      %1625 = vmatpush.msra.mxu0 %v1529
      %1626 = vmatmul.f32.gmra.mxu0 %v1278
      %v1627 = vpop.f32.mrf.mxu0
      %v1628 = vadd.f32 0.0, %v1627
      %1629 = vdwg.mxu0
      %1630 = vmatpush.msra.mxu0 0.0
      %1631 = vmatpush.msra.mxu0 0.0
      %1632 = vmatpush.msra.mxu0 0.0
      %1633 = vmatpush.msra.mxu0 0.0
      %1634 = vmatpush.msra.mxu0 0.0
      %1635 = vmatpush.msra.mxu0 0.0
      %1636 = vmatpush.msra.mxu0 0.0
      %1637 = vmatpush.msra.mxu0 0.0
      %1638 = vmatpush.msra.mxu0 0.0
      %1639 = vmatpush.msra.mxu0 0.0
      %1640 = vmatpush.msra.mxu0 0.0
      %1641 = vmatpush.msra.mxu0 0.0
      %1642 = vmatpush.msra.mxu0 0.0
      %1643 = vmatpush.msra.mxu0 0.0
      %1644 = vmatpush.msra.mxu0 0.0
      %1645 = vmatpush.msra.mxu0 %v1529
      %1646 = vmatmul.f32.gmra.mxu0 %v1303
      %v1647 = vpop.f32.mrf.mxu0
      %v1648 = vadd.f32 0.0, %v1647
      %1649 = vdwg.mxu0
      %1650 = vmatpush.msra.mxu0 0.0
      %1651 = vmatpush.msra.mxu0 0.0
      %1652 = vmatpush.msra.mxu0 0.0
      %1653 = vmatpush.msra.mxu0 0.0
      %1654 = vmatpush.msra.mxu0 0.0
      %1655 = vmatpush.msra.mxu0 0.0
      %1656 = vmatpush.msra.mxu0 0.0
      %1657 = vmatpush.msra.mxu0 0.0
      %1658 = vmatpush.msra.mxu0 0.0
      %1659 = vmatpush.msra.mxu0 0.0
      %1660 = vmatpush.msra.mxu0 0.0
      %1661 = vmatpush.msra.mxu0 0.0
      %1662 = vmatpush.msra.mxu0 0.0
      %1663 = vmatpush.msra.mxu0 0.0
      %1664 = vmatpush.msra.mxu0 0.0
      %1665 = vmatpush.msra.mxu0 %v1529
      %1666 = vmatmul.f32.gmra.mxu0 %v1328
      %v1667 = vpop.f32.mrf.mxu0
      %v1668 = vadd.f32 0.0, %v1667
      %1669 = vdwg.mxu0
      %v1670 = vrot.slane %v190, 2
      %v1671 = vrot.slane %v191, 2
      %v1672 = vsel %vm1149, %v1670, %v1671
      %v1673 = vsel %vm199, %v1672, 0
      %1675 = vmatpush.msra.mxu0 0.0
      %1676 = vmatpush.msra.mxu0 0.0
      %1677 = vmatpush.msra.mxu0 0.0
      %1678 = vmatpush.msra.mxu0 0.0
      %1679 = vmatpush.msra.mxu0 0.0
      %1680 = vmatpush.msra.mxu0 0.0
      %1681 = vmatpush.msra.mxu0 0.0
      %1682 = vmatpush.msra.mxu0 0.0
      %1683 = vmatpush.msra.mxu0 0.0
      %1684 = vmatpush.msra.mxu0 0.0
      %1685 = vmatpush.msra.mxu0 0.0
      %1686 = vmatpush.msra.mxu0 0.0
      %1687 = vmatpush.msra.mxu0 0.0
      %1688 = vmatpush.msra.mxu0 0.0
      %1689 = vmatpush.msra.mxu0 0.0
      %1690 = vmatpush.msra.mxu0 %v1529
      %1691 = vmatmul.f32.gmra.mxu0 %v1673
      %v1692 = vpop.f32.mrf.mxu0
      %v1693 = vadd.f32 0.0, %v1692
      %1694 = vdwg.mxu0
      %v1695 = vadd.f32 %v1520, %v1548
      %v1696 = vadd.f32 %v1521, %v1568
      %v1697 = vadd.f32 %v1522, %v1588
      %v1698 = vadd.f32 %v1523, %v1608
      %v1699 = vadd.f32 %v1524, %v1628
      %v1700 = vadd.f32 %v1525, %v1648
      %v1701 = vadd.f32 %v1526, %v1668
      %v1702 = vadd.f32 %v1527, %v1693
      %v1703 = vmax.f32 %v1695, 0.0
      %v1704 = vmax.f32 %v1696, 0.0
      %v1705 = vmax.f32 %v1697, 0.0
      %v1706 = vmax.f32 %v1698, 0.0
      %v1707 = vmax.f32 %v1699, 0.0
      %v1708 = vmax.f32 %v1700, 0.0
      %v1709 = vmax.f32 %v1701, 0.0
      %v1710 = vmax.f32 %v1702, 0.0
      %s1711 = scalar_lea.vmem %s172, 64
      %1712 = vst.msk [vmem:[%s1711] sm:$0xff] %vm968, %v1703
      %1713 = vst.msk [vmem:[%s1711 + $0x8] sm:$0xff] %vm968, %v1704
      %1714 = vst.msk [vmem:[%s1711 + $0x10] sm:$0xff] %vm968, %v1705
      %1715 = vst.msk [vmem:[%s1711 + $0x18] sm:$0xff] %vm968, %v1706
      %1716 = vst.msk [vmem:[%s1711 + $0x20] sm:$0xff] %vm968, %v1707
      %1717 = vst.msk [vmem:[%s1711 + $0x28] sm:$0xff] %vm968, %v1708
      %1718 = vst.msk [vmem:[%s1711 + $0x30] sm:$0xff] %vm968, %v1709
      %1719 = vst.msk [vmem:[%s1711 + $0x38] sm:$0xff] %vm968, %v1710
      %s1720 = scalar_lea.vmem %s1, 64
      %v1721 = vld [vmem:[%s1720] sm:$0xff]
      %1722 = vmatpush.msra.mxu0 0.0
      %1723 = vmatpush.msra.mxu0 0.0
      %1724 = vmatpush.msra.mxu0 0.0
      %1725 = vmatpush.msra.mxu0 0.0
      %1726 = vmatpush.msra.mxu0 0.0
      %1727 = vmatpush.msra.mxu0 0.0
      %1728 = vmatpush.msra.mxu0 0.0
      %1729 = vmatpush.msra.mxu0 0.0
      %1730 = vmatpush.msra.mxu0 0.0
      %1731 = vmatpush.msra.mxu0 0.0
      %1732 = vmatpush.msra.mxu0 0.0
      %1733 = vmatpush.msra.mxu0 0.0
      %1734 = vmatpush.msra.mxu0 0.0
      %1735 = vmatpush.msra.mxu0 0.0
      %1736 = vmatpush.msra.mxu0 0.0
      %1737 = vmatpush.msra.mxu0 %v1721
      %1738 = vmatmul.f32.gmra.mxu0 %v224
      %v1739 = vpop.f32.mrf.mxu0
      %v1740 = vadd.f32 0.0, %v1739
      %1741 = vdwg.mxu0
      %1742 = vmatpush.msra.mxu0 0.0
      %1743 = vmatpush.msra.mxu0 0.0
      %1744 = vmatpush.msra.mxu0 0.0
      %1745 = vmatpush.msra.mxu0 0.0
      %1746 = vmatpush.msra.mxu0 0.0
      %1747 = vmatpush.msra.mxu0 0.0
      %1748 = vmatpush.msra.mxu0 0.0
      %1749 = vmatpush.msra.mxu0 0.0
      %1750 = vmatpush.msra.mxu0 0.0
      %1751 = vmatpush.msra.mxu0 0.0
      %1752 = vmatpush.msra.mxu0 0.0
      %1753 = vmatpush.msra.mxu0 0.0
      %1754 = vmatpush.msra.mxu0 0.0
      %1755 = vmatpush.msra.mxu0 0.0
      %1756 = vmatpush.msra.mxu0 0.0
      %1757 = vmatpush.msra.mxu0 %v1721
      %1758 = vmatmul.f32.gmra.mxu0 %v247
      %v1759 = vpop.f32.mrf.mxu0
      %v1760 = vadd.f32 0.0, %v1759
      %1761 = vdwg.mxu0
      %1762 = vmatpush.msra.mxu0 0.0
      %1763 = vmatpush.msra.mxu0 0.0
      %1764 = vmatpush.msra.mxu0 0.0
      %1765 = vmatpush.msra.mxu0 0.0
      %1766 = vmatpush.msra.mxu0 0.0
      %1767 = vmatpush.msra.mxu0 0.0
      %1768 = vmatpush.msra.mxu0 0.0
      %1769 = vmatpush.msra.mxu0 0.0
      %1770 = vmatpush.msra.mxu0 0.0
      %1771 = vmatpush.msra.mxu0 0.0
      %1772 = vmatpush.msra.mxu0 0.0
      %1773 = vmatpush.msra.mxu0 0.0
      %1774 = vmatpush.msra.mxu0 0.0
      %1775 = vmatpush.msra.mxu0 0.0
      %1776 = vmatpush.msra.mxu0 0.0
      %1777 = vmatpush.msra.mxu0 %v1721
      %1778 = vmatmul.f32.gmra.mxu0 %v270
      %v1779 = vpop.f32.mrf.mxu0
      %v1780 = vadd.f32 0.0, %v1779
      %1781 = vdwg.mxu0
      %1782 = vmatpush.msra.mxu0 0.0
      %1783 = vmatpush.msra.mxu0 0.0
      %1784 = vmatpush.msra.mxu0 0.0
      %1785 = vmatpush.msra.mxu0 0.0
      %1786 = vmatpush.msra.mxu0 0.0
      %1787 = vmatpush.msra.mxu0 0.0
      %1788 = vmatpush.msra.mxu0 0.0
      %1789 = vmatpush.msra.mxu0 0.0
      %1790 = vmatpush.msra.mxu0 0.0
      %1791 = vmatpush.msra.mxu0 0.0
      %1792 = vmatpush.msra.mxu0 0.0
      %1793 = vmatpush.msra.mxu0 0.0
      %1794 = vmatpush.msra.mxu0 0.0
      %1795 = vmatpush.msra.mxu0 0.0
      %1796 = vmatpush.msra.mxu0 0.0
      %1797 = vmatpush.msra.mxu0 %v1721
      %1798 = vmatmul.f32.gmra.mxu0 %v293
      %v1799 = vpop.f32.mrf.mxu0
      %v1800 = vadd.f32 0.0, %v1799
      %1801 = vdwg.mxu0
      %1802 = vmatpush.msra.mxu0 0.0
      %1803 = vmatpush.msra.mxu0 0.0
      %1804 = vmatpush.msra.mxu0 0.0
      %1805 = vmatpush.msra.mxu0 0.0
      %1806 = vmatpush.msra.mxu0 0.0
      %1807 = vmatpush.msra.mxu0 0.0
      %1808 = vmatpush.msra.mxu0 0.0
      %1809 = vmatpush.msra.mxu0 0.0
      %1810 = vmatpush.msra.mxu0 0.0
      %1811 = vmatpush.msra.mxu0 0.0
      %1812 = vmatpush.msra.mxu0 0.0
      %1813 = vmatpush.msra.mxu0 0.0
      %1814 = vmatpush.msra.mxu0 0.0
      %1815 = vmatpush.msra.mxu0 0.0
      %1816 = vmatpush.msra.mxu0 0.0
      %1817 = vmatpush.msra.mxu0 %v1721
      %1818 = vmatmul.f32.gmra.mxu0 %v316
      %v1819 = vpop.f32.mrf.mxu0
      %v1820 = vadd.f32 0.0, %v1819
      %1821 = vdwg.mxu0
      %1822 = vmatpush.msra.mxu0 0.0
      %1823 = vmatpush.msra.mxu0 0.0
      %1824 = vmatpush.msra.mxu0 0.0
      %1825 = vmatpush.msra.mxu0 0.0
      %1826 = vmatpush.msra.mxu0 0.0
      %1827 = vmatpush.msra.mxu0 0.0
      %1828 = vmatpush.msra.mxu0 0.0
      %1829 = vmatpush.msra.mxu0 0.0
      %1830 = vmatpush.msra.mxu0 0.0
      %1831 = vmatpush.msra.mxu0 0.0
      %1832 = vmatpush.msra.mxu0 0.0
      %1833 = vmatpush.msra.mxu0 0.0
      %1834 = vmatpush.msra.mxu0 0.0
      %1835 = vmatpush.msra.mxu0 0.0
      %1836 = vmatpush.msra.mxu0 0.0
      %1837 = vmatpush.msra.mxu0 %v1721
      %1838 = vmatmul.f32.gmra.mxu0 %v339
      %v1839 = vpop.f32.mrf.mxu0
      %v1840 = vadd.f32 0.0, %v1839
      %1841 = vdwg.mxu0
      %1842 = vmatpush.msra.mxu0 0.0
      %1843 = vmatpush.msra.mxu0 0.0
      %1844 = vmatpush.msra.mxu0 0.0
      %1845 = vmatpush.msra.mxu0 0.0
      %1846 = vmatpush.msra.mxu0 0.0
      %1847 = vmatpush.msra.mxu0 0.0
      %1848 = vmatpush.msra.mxu0 0.0
      %1849 = vmatpush.msra.mxu0 0.0
      %1850 = vmatpush.msra.mxu0 0.0
      %1851 = vmatpush.msra.mxu0 0.0
      %1852 = vmatpush.msra.mxu0 0.0
      %1853 = vmatpush.msra.mxu0 0.0
      %1854 = vmatpush.msra.mxu0 0.0
      %1855 = vmatpush.msra.mxu0 0.0
      %1856 = vmatpush.msra.mxu0 0.0
      %1857 = vmatpush.msra.mxu0 %v1721
      %1858 = vmatmul.f32.gmra.mxu0 %v362
      %v1859 = vpop.f32.mrf.mxu0
      %v1860 = vadd.f32 0.0, %v1859
      %1861 = vdwg.mxu0
      %1862 = vmatpush.msra.mxu0 0.0
      %1863 = vmatpush.msra.mxu0 0.0
      %1864 = vmatpush.msra.mxu0 0.0
      %1865 = vmatpush.msra.mxu0 0.0
      %1866 = vmatpush.msra.mxu0 0.0
      %1867 = vmatpush.msra.mxu0 0.0
      %1868 = vmatpush.msra.mxu0 0.0
      %1869 = vmatpush.msra.mxu0 0.0
      %1870 = vmatpush.msra.mxu0 0.0
      %1871 = vmatpush.msra.mxu0 0.0
      %1872 = vmatpush.msra.mxu0 0.0
      %1873 = vmatpush.msra.mxu0 0.0
      %1874 = vmatpush.msra.mxu0 0.0
      %1875 = vmatpush.msra.mxu0 0.0
      %1876 = vmatpush.msra.mxu0 0.0
      %1877 = vmatpush.msra.mxu0 %v1721
      %1878 = vmatmul.f32.gmra.mxu0 %v754
      %v1879 = vpop.f32.mrf.mxu0
      %v1880 = vadd.f32 0.0, %v1879
      %1881 = vdwg.mxu0
      %v1882 = vadd.f32 %v197, %v1740
      %v1883 = vadd.f32 %v197, %v1760
      %v1884 = vadd.f32 %v197, %v1780
      %v1885 = vadd.f32 %v197, %v1800
      %v1886 = vadd.f32 %v197, %v1820
      %v1887 = vadd.f32 %v197, %v1840
      %v1888 = vadd.f32 %v197, %v1860
      %v1889 = vadd.f32 %v197, %v1880
      %s1890 = scalar_lea.vmem %s1, 72
      %v1891 = vld [vmem:[%s1890] sm:$0xff]
      %1892 = vmatpush.msra.mxu0 0.0
      %1893 = vmatpush.msra.mxu0 0.0
      %1894 = vmatpush.msra.mxu0 0.0
      %1895 = vmatpush.msra.mxu0 0.0
      %1896 = vmatpush.msra.mxu0 0.0
      %1897 = vmatpush.msra.mxu0 0.0
      %1898 = vmatpush.msra.mxu0 0.0
      %1899 = vmatpush.msra.mxu0 0.0
      %1900 = vmatpush.msra.mxu0 0.0
      %1901 = vmatpush.msra.mxu0 0.0
      %1902 = vmatpush.msra.mxu0 0.0
      %1903 = vmatpush.msra.mxu0 0.0
      %1904 = vmatpush.msra.mxu0 0.0
      %1905 = vmatpush.msra.mxu0 0.0
      %1906 = vmatpush.msra.mxu0 0.0
      %1907 = vmatpush.msra.mxu0 %v1891
      %1908 = vmatmul.f32.gmra.mxu0 %v425
      %v1909 = vpop.f32.mrf.mxu0
      %v1910 = vadd.f32 0.0, %v1909
      %1911 = vdwg.mxu0
      %1912 = vmatpush.msra.mxu0 0.0
      %1913 = vmatpush.msra.mxu0 0.0
      %1914 = vmatpush.msra.mxu0 0.0
      %1915 = vmatpush.msra.mxu0 0.0
      %1916 = vmatpush.msra.mxu0 0.0
      %1917 = vmatpush.msra.mxu0 0.0
      %1918 = vmatpush.msra.mxu0 0.0
      %1919 = vmatpush.msra.mxu0 0.0
      %1920 = vmatpush.msra.mxu0 0.0
      %1921 = vmatpush.msra.mxu0 0.0
      %1922 = vmatpush.msra.mxu0 0.0
      %1923 = vmatpush.msra.mxu0 0.0
      %1924 = vmatpush.msra.mxu0 0.0
      %1925 = vmatpush.msra.mxu0 0.0
      %1926 = vmatpush.msra.mxu0 0.0
      %1927 = vmatpush.msra.mxu0 %v1891
      %1928 = vmatmul.f32.gmra.mxu0 %v451
      %v1929 = vpop.f32.mrf.mxu0
      %v1930 = vadd.f32 0.0, %v1929
      %1931 = vdwg.mxu0
      %1932 = vmatpush.msra.mxu0 0.0
      %1933 = vmatpush.msra.mxu0 0.0
      %1934 = vmatpush.msra.mxu0 0.0
      %1935 = vmatpush.msra.mxu0 0.0
      %1936 = vmatpush.msra.mxu0 0.0
      %1937 = vmatpush.msra.mxu0 0.0
      %1938 = vmatpush.msra.mxu0 0.0
      %1939 = vmatpush.msra.mxu0 0.0
      %1940 = vmatpush.msra.mxu0 0.0
      %1941 = vmatpush.msra.mxu0 0.0
      %1942 = vmatpush.msra.mxu0 0.0
      %1943 = vmatpush.msra.mxu0 0.0
      %1944 = vmatpush.msra.mxu0 0.0
      %1945 = vmatpush.msra.mxu0 0.0
      %1946 = vmatpush.msra.mxu0 0.0
      %1947 = vmatpush.msra.mxu0 %v1891
      %1948 = vmatmul.f32.gmra.mxu0 %v477
      %v1949 = vpop.f32.mrf.mxu0
      %v1950 = vadd.f32 0.0, %v1949
      %1951 = vdwg.mxu0
      %1952 = vmatpush.msra.mxu0 0.0
      %1953 = vmatpush.msra.mxu0 0.0
      %1954 = vmatpush.msra.mxu0 0.0
      %1955 = vmatpush.msra.mxu0 0.0
      %1956 = vmatpush.msra.mxu0 0.0
      %1957 = vmatpush.msra.mxu0 0.0
      %1958 = vmatpush.msra.mxu0 0.0
      %1959 = vmatpush.msra.mxu0 0.0
      %1960 = vmatpush.msra.mxu0 0.0
      %1961 = vmatpush.msra.mxu0 0.0
      %1962 = vmatpush.msra.mxu0 0.0
      %1963 = vmatpush.msra.mxu0 0.0
      %1964 = vmatpush.msra.mxu0 0.0
      %1965 = vmatpush.msra.mxu0 0.0
      %1966 = vmatpush.msra.mxu0 0.0
      %1967 = vmatpush.msra.mxu0 %v1891
      %1968 = vmatmul.f32.gmra.mxu0 %v503
      %v1969 = vpop.f32.mrf.mxu0
      %v1970 = vadd.f32 0.0, %v1969
      %1971 = vdwg.mxu0
      %1972 = vmatpush.msra.mxu0 0.0
      %1973 = vmatpush.msra.mxu0 0.0
      %1974 = vmatpush.msra.mxu0 0.0
      %1975 = vmatpush.msra.mxu0 0.0
      %1976 = vmatpush.msra.mxu0 0.0
      %1977 = vmatpush.msra.mxu0 0.0
      %1978 = vmatpush.msra.mxu0 0.0
      %1979 = vmatpush.msra.mxu0 0.0
      %1980 = vmatpush.msra.mxu0 0.0
      %1981 = vmatpush.msra.mxu0 0.0
      %1982 = vmatpush.msra.mxu0 0.0
      %1983 = vmatpush.msra.mxu0 0.0
      %1984 = vmatpush.msra.mxu0 0.0
      %1985 = vmatpush.msra.mxu0 0.0
      %1986 = vmatpush.msra.mxu0 0.0
      %1987 = vmatpush.msra.mxu0 %v1891
      %1988 = vmatmul.f32.gmra.mxu0 %v529
      %v1989 = vpop.f32.mrf.mxu0
      %v1990 = vadd.f32 0.0, %v1989
      %1991 = vdwg.mxu0
      %1992 = vmatpush.msra.mxu0 0.0
      %1993 = vmatpush.msra.mxu0 0.0
      %1994 = vmatpush.msra.mxu0 0.0
      %1995 = vmatpush.msra.mxu0 0.0
      %1996 = vmatpush.msra.mxu0 0.0
      %1997 = vmatpush.msra.mxu0 0.0
      %1998 = vmatpush.msra.mxu0 0.0
      %1999 = vmatpush.msra.mxu0 0.0
      %2000 = vmatpush.msra.mxu0 0.0
      %2001 = vmatpush.msra.mxu0 0.0
      %2002 = vmatpush.msra.mxu0 0.0
      %2003 = vmatpush.msra.mxu0 0.0
      %2004 = vmatpush.msra.mxu0 0.0
      %2005 = vmatpush.msra.mxu0 0.0
      %2006 = vmatpush.msra.mxu0 0.0
      %2007 = vmatpush.msra.mxu0 %v1891
      %2008 = vmatmul.f32.gmra.mxu0 %v555
      %v2009 = vpop.f32.mrf.mxu0
      %v2010 = vadd.f32 0.0, %v2009
      %2011 = vdwg.mxu0
      %2012 = vmatpush.msra.mxu0 0.0
      %2013 = vmatpush.msra.mxu0 0.0
      %2014 = vmatpush.msra.mxu0 0.0
      %2015 = vmatpush.msra.mxu0 0.0
      %2016 = vmatpush.msra.mxu0 0.0
      %2017 = vmatpush.msra.mxu0 0.0
      %2018 = vmatpush.msra.mxu0 0.0
      %2019 = vmatpush.msra.mxu0 0.0
      %2020 = vmatpush.msra.mxu0 0.0
      %2021 = vmatpush.msra.mxu0 0.0
      %2022 = vmatpush.msra.mxu0 0.0
      %2023 = vmatpush.msra.mxu0 0.0
      %2024 = vmatpush.msra.mxu0 0.0
      %2025 = vmatpush.msra.mxu0 0.0
      %2026 = vmatpush.msra.mxu0 0.0
      %2027 = vmatpush.msra.mxu0 %v1891
      %2028 = vmatmul.f32.gmra.mxu0 %v581
      %v2029 = vpop.f32.mrf.mxu0
      %v2030 = vadd.f32 0.0, %v2029
      %2031 = vdwg.mxu0
      %2032 = vmatpush.msra.mxu0 0.0
      %2033 = vmatpush.msra.mxu0 0.0
      %2034 = vmatpush.msra.mxu0 0.0
      %2035 = vmatpush.msra.mxu0 0.0
      %2036 = vmatpush.msra.mxu0 0.0
      %2037 = vmatpush.msra.mxu0 0.0
      %2038 = vmatpush.msra.mxu0 0.0
      %2039 = vmatpush.msra.mxu0 0.0
      %2040 = vmatpush.msra.mxu0 0.0
      %2041 = vmatpush.msra.mxu0 0.0
      %2042 = vmatpush.msra.mxu0 0.0
      %2043 = vmatpush.msra.mxu0 0.0
      %2044 = vmatpush.msra.mxu0 0.0
      %2045 = vmatpush.msra.mxu0 0.0
      %2046 = vmatpush.msra.mxu0 0.0
      %2047 = vmatpush.msra.mxu0 %v1891
      %2048 = vmatmul.f32.gmra.mxu0 %v930
      %v2049 = vpop.f32.mrf.mxu0
      %v2050 = vadd.f32 0.0, %v2049
      %2051 = vdwg.mxu0
      %v2052 = vadd.f32 %v1882, %v1910
      %v2053 = vadd.f32 %v1883, %v1930
      %v2054 = vadd.f32 %v1884, %v1950
      %v2055 = vadd.f32 %v1885, %v1970
      %v2056 = vadd.f32 %v1886, %v1990
      %v2057 = vadd.f32 %v1887, %v2010
      %v2058 = vadd.f32 %v1888, %v2030
      %v2059 = vadd.f32 %v1889, %v2050
      %s2060 = scalar_lea.vmem %s1, 80
      %v2061 = vld [vmem:[%s2060] sm:$0xff]
      %2062 = vmatpush.msra.mxu0 0.0
      %2063 = vmatpush.msra.mxu0 0.0
      %2064 = vmatpush.msra.mxu0 0.0
      %2065 = vmatpush.msra.mxu0 0.0
      %2066 = vmatpush.msra.mxu0 0.0
      %2067 = vmatpush.msra.mxu0 0.0
      %2068 = vmatpush.msra.mxu0 0.0
      %2069 = vmatpush.msra.mxu0 0.0
      %2070 = vmatpush.msra.mxu0 0.0
      %2071 = vmatpush.msra.mxu0 0.0
      %2072 = vmatpush.msra.mxu0 0.0
      %2073 = vmatpush.msra.mxu0 0.0
      %2074 = vmatpush.msra.mxu0 0.0
      %2075 = vmatpush.msra.mxu0 0.0
      %2076 = vmatpush.msra.mxu0 0.0
      %2077 = vmatpush.msra.mxu0 %v2061
      %2078 = vmatmul.f32.gmra.mxu0 %v247
      %v2079 = vpop.f32.mrf.mxu0
      %v2080 = vadd.f32 0.0, %v2079
      %2081 = vdwg.mxu0
      %2082 = vmatpush.msra.mxu0 0.0
      %2083 = vmatpush.msra.mxu0 0.0
      %2084 = vmatpush.msra.mxu0 0.0
      %2085 = vmatpush.msra.mxu0 0.0
      %2086 = vmatpush.msra.mxu0 0.0
      %2087 = vmatpush.msra.mxu0 0.0
      %2088 = vmatpush.msra.mxu0 0.0
      %2089 = vmatpush.msra.mxu0 0.0
      %2090 = vmatpush.msra.mxu0 0.0
      %2091 = vmatpush.msra.mxu0 0.0
      %2092 = vmatpush.msra.mxu0 0.0
      %2093 = vmatpush.msra.mxu0 0.0
      %2094 = vmatpush.msra.mxu0 0.0
      %2095 = vmatpush.msra.mxu0 0.0
      %2096 = vmatpush.msra.mxu0 0.0
      %2097 = vmatpush.msra.mxu0 %v2061
      %2098 = vmatmul.f32.gmra.mxu0 %v270
      %v2099 = vpop.f32.mrf.mxu0
      %v2100 = vadd.f32 0.0, %v2099
      %2101 = vdwg.mxu0
      %2102 = vmatpush.msra.mxu0 0.0
      %2103 = vmatpush.msra.mxu0 0.0
      %2104 = vmatpush.msra.mxu0 0.0
      %2105 = vmatpush.msra.mxu0 0.0
      %2106 = vmatpush.msra.mxu0 0.0
      %2107 = vmatpush.msra.mxu0 0.0
      %2108 = vmatpush.msra.mxu0 0.0
      %2109 = vmatpush.msra.mxu0 0.0
      %2110 = vmatpush.msra.mxu0 0.0
      %2111 = vmatpush.msra.mxu0 0.0
      %2112 = vmatpush.msra.mxu0 0.0
      %2113 = vmatpush.msra.mxu0 0.0
      %2114 = vmatpush.msra.mxu0 0.0
      %2115 = vmatpush.msra.mxu0 0.0
      %2116 = vmatpush.msra.mxu0 0.0
      %2117 = vmatpush.msra.mxu0 %v2061
      %2118 = vmatmul.f32.gmra.mxu0 %v293
      %v2119 = vpop.f32.mrf.mxu0
      %v2120 = vadd.f32 0.0, %v2119
      %2121 = vdwg.mxu0
      %2122 = vmatpush.msra.mxu0 0.0
      %2123 = vmatpush.msra.mxu0 0.0
      %2124 = vmatpush.msra.mxu0 0.0
      %2125 = vmatpush.msra.mxu0 0.0
      %2126 = vmatpush.msra.mxu0 0.0
      %2127 = vmatpush.msra.mxu0 0.0
      %2128 = vmatpush.msra.mxu0 0.0
      %2129 = vmatpush.msra.mxu0 0.0
      %2130 = vmatpush.msra.mxu0 0.0
      %2131 = vmatpush.msra.mxu0 0.0
      %2132 = vmatpush.msra.mxu0 0.0
      %2133 = vmatpush.msra.mxu0 0.0
      %2134 = vmatpush.msra.mxu0 0.0
      %2135 = vmatpush.msra.mxu0 0.0
      %2136 = vmatpush.msra.mxu0 0.0
      %2137 = vmatpush.msra.mxu0 %v2061
      %2138 = vmatmul.f32.gmra.mxu0 %v316
      %v2139 = vpop.f32.mrf.mxu0
      %v2140 = vadd.f32 0.0, %v2139
      %2141 = vdwg.mxu0
      %2142 = vmatpush.msra.mxu0 0.0
      %2143 = vmatpush.msra.mxu0 0.0
      %2144 = vmatpush.msra.mxu0 0.0
      %2145 = vmatpush.msra.mxu0 0.0
      %2146 = vmatpush.msra.mxu0 0.0
      %2147 = vmatpush.msra.mxu0 0.0
      %2148 = vmatpush.msra.mxu0 0.0
      %2149 = vmatpush.msra.mxu0 0.0
      %2150 = vmatpush.msra.mxu0 0.0
      %2151 = vmatpush.msra.mxu0 0.0
      %2152 = vmatpush.msra.mxu0 0.0
      %2153 = vmatpush.msra.mxu0 0.0
      %2154 = vmatpush.msra.mxu0 0.0
      %2155 = vmatpush.msra.mxu0 0.0
      %2156 = vmatpush.msra.mxu0 0.0
      %2157 = vmatpush.msra.mxu0 %v2061
      %2158 = vmatmul.f32.gmra.mxu0 %v339
      %v2159 = vpop.f32.mrf.mxu0
      %v2160 = vadd.f32 0.0, %v2159
      %2161 = vdwg.mxu0
      %2162 = vmatpush.msra.mxu0 0.0
      %2163 = vmatpush.msra.mxu0 0.0
      %2164 = vmatpush.msra.mxu0 0.0
      %2165 = vmatpush.msra.mxu0 0.0
      %2166 = vmatpush.msra.mxu0 0.0
      %2167 = vmatpush.msra.mxu0 0.0
      %2168 = vmatpush.msra.mxu0 0.0
      %2169 = vmatpush.msra.mxu0 0.0
      %2170 = vmatpush.msra.mxu0 0.0
      %2171 = vmatpush.msra.mxu0 0.0
      %2172 = vmatpush.msra.mxu0 0.0
      %2173 = vmatpush.msra.mxu0 0.0
      %2174 = vmatpush.msra.mxu0 0.0
      %2175 = vmatpush.msra.mxu0 0.0
      %2176 = vmatpush.msra.mxu0 0.0
      %2177 = vmatpush.msra.mxu0 %v2061
      %2178 = vmatmul.f32.gmra.mxu0 %v362
      %v2179 = vpop.f32.mrf.mxu0
      %v2180 = vadd.f32 0.0, %v2179
      %2181 = vdwg.mxu0
      %2182 = vmatpush.msra.mxu0 0.0
      %2183 = vmatpush.msra.mxu0 0.0
      %2184 = vmatpush.msra.mxu0 0.0
      %2185 = vmatpush.msra.mxu0 0.0
      %2186 = vmatpush.msra.mxu0 0.0
      %2187 = vmatpush.msra.mxu0 0.0
      %2188 = vmatpush.msra.mxu0 0.0
      %2189 = vmatpush.msra.mxu0 0.0
      %2190 = vmatpush.msra.mxu0 0.0
      %2191 = vmatpush.msra.mxu0 0.0
      %2192 = vmatpush.msra.mxu0 0.0
      %2193 = vmatpush.msra.mxu0 0.0
      %2194 = vmatpush.msra.mxu0 0.0
      %2195 = vmatpush.msra.mxu0 0.0
      %2196 = vmatpush.msra.mxu0 0.0
      %2197 = vmatpush.msra.mxu0 %v2061
      %2198 = vmatmul.f32.gmra.mxu0 %v754
      %v2199 = vpop.f32.mrf.mxu0
      %v2200 = vadd.f32 0.0, %v2199
      %2201 = vdwg.mxu0
      %v2203 = vsel %vm199, %v192, 0
      %2205 = vmatpush.msra.mxu0 0.0
      %2206 = vmatpush.msra.mxu0 0.0
      %2207 = vmatpush.msra.mxu0 0.0
      %2208 = vmatpush.msra.mxu0 0.0
      %2209 = vmatpush.msra.mxu0 0.0
      %2210 = vmatpush.msra.mxu0 0.0
      %2211 = vmatpush.msra.mxu0 0.0
      %2212 = vmatpush.msra.mxu0 0.0
      %2213 = vmatpush.msra.mxu0 0.0
      %2214 = vmatpush.msra.mxu0 0.0
      %2215 = vmatpush.msra.mxu0 0.0
      %2216 = vmatpush.msra.mxu0 0.0
      %2217 = vmatpush.msra.mxu0 0.0
      %2218 = vmatpush.msra.mxu0 0.0
      %2219 = vmatpush.msra.mxu0 0.0
      %2220 = vmatpush.msra.mxu0 %v2061
      %2221 = vmatmul.f32.gmra.mxu0 %v2203
      %v2222 = vpop.f32.mrf.mxu0
      %v2223 = vadd.f32 0.0, %v2222
      %2224 = vdwg.mxu0
      %v2225 = vadd.f32 %v2052, %v2080
      %v2226 = vadd.f32 %v2053, %v2100
      %v2227 = vadd.f32 %v2054, %v2120
      %v2228 = vadd.f32 %v2055, %v2140
      %v2229 = vadd.f32 %v2056, %v2160
      %v2230 = vadd.f32 %v2057, %v2180
      %v2231 = vadd.f32 %v2058, %v2200
      %v2232 = vadd.f32 %v2059, %v2223
      %s2233 = scalar_lea.vmem %s1, 88
      %v2234 = vld [vmem:[%s2233] sm:$0xff]
      %2235 = vmatpush.msra.mxu0 0.0
      %2236 = vmatpush.msra.mxu0 0.0
      %2237 = vmatpush.msra.mxu0 0.0
      %2238 = vmatpush.msra.mxu0 0.0
      %2239 = vmatpush.msra.mxu0 0.0
      %2240 = vmatpush.msra.mxu0 0.0
      %2241 = vmatpush.msra.mxu0 0.0
      %2242 = vmatpush.msra.mxu0 0.0
      %2243 = vmatpush.msra.mxu0 0.0
      %2244 = vmatpush.msra.mxu0 0.0
      %2245 = vmatpush.msra.mxu0 0.0
      %2246 = vmatpush.msra.mxu0 0.0
      %2247 = vmatpush.msra.mxu0 0.0
      %2248 = vmatpush.msra.mxu0 0.0
      %2249 = vmatpush.msra.mxu0 0.0
      %2250 = vmatpush.msra.mxu0 %v2234
      %2251 = vmatmul.f32.gmra.mxu0 %v451
      %v2252 = vpop.f32.mrf.mxu0
      %v2253 = vadd.f32 0.0, %v2252
      %2254 = vdwg.mxu0
      %2255 = vmatpush.msra.mxu0 0.0
      %2256 = vmatpush.msra.mxu0 0.0
      %2257 = vmatpush.msra.mxu0 0.0
      %2258 = vmatpush.msra.mxu0 0.0
      %2259 = vmatpush.msra.mxu0 0.0
      %2260 = vmatpush.msra.mxu0 0.0
      %2261 = vmatpush.msra.mxu0 0.0
      %2262 = vmatpush.msra.mxu0 0.0
      %2263 = vmatpush.msra.mxu0 0.0
      %2264 = vmatpush.msra.mxu0 0.0
      %2265 = vmatpush.msra.mxu0 0.0
      %2266 = vmatpush.msra.mxu0 0.0
      %2267 = vmatpush.msra.mxu0 0.0
      %2268 = vmatpush.msra.mxu0 0.0
      %2269 = vmatpush.msra.mxu0 0.0
      %2270 = vmatpush.msra.mxu0 %v2234
      %2271 = vmatmul.f32.gmra.mxu0 %v477
      %v2272 = vpop.f32.mrf.mxu0
      %v2273 = vadd.f32 0.0, %v2272
      %2274 = vdwg.mxu0
      %2275 = vmatpush.msra.mxu0 0.0
      %2276 = vmatpush.msra.mxu0 0.0
      %2277 = vmatpush.msra.mxu0 0.0
      %2278 = vmatpush.msra.mxu0 0.0
      %2279 = vmatpush.msra.mxu0 0.0
      %2280 = vmatpush.msra.mxu0 0.0
      %2281 = vmatpush.msra.mxu0 0.0
      %2282 = vmatpush.msra.mxu0 0.0
      %2283 = vmatpush.msra.mxu0 0.0
      %2284 = vmatpush.msra.mxu0 0.0
      %2285 = vmatpush.msra.mxu0 0.0
      %2286 = vmatpush.msra.mxu0 0.0
      %2287 = vmatpush.msra.mxu0 0.0
      %2288 = vmatpush.msra.mxu0 0.0
      %2289 = vmatpush.msra.mxu0 0.0
      %2290 = vmatpush.msra.mxu0 %v2234
      %2291 = vmatmul.f32.gmra.mxu0 %v503
      %v2292 = vpop.f32.mrf.mxu0
      %v2293 = vadd.f32 0.0, %v2292
      %2294 = vdwg.mxu0
      %2295 = vmatpush.msra.mxu0 0.0
      %2296 = vmatpush.msra.mxu0 0.0
      %2297 = vmatpush.msra.mxu0 0.0
      %2298 = vmatpush.msra.mxu0 0.0
      %2299 = vmatpush.msra.mxu0 0.0
      %2300 = vmatpush.msra.mxu0 0.0
      %2301 = vmatpush.msra.mxu0 0.0
      %2302 = vmatpush.msra.mxu0 0.0
      %2303 = vmatpush.msra.mxu0 0.0
      %2304 = vmatpush.msra.mxu0 0.0
      %2305 = vmatpush.msra.mxu0 0.0
      %2306 = vmatpush.msra.mxu0 0.0
      %2307 = vmatpush.msra.mxu0 0.0
      %2308 = vmatpush.msra.mxu0 0.0
      %2309 = vmatpush.msra.mxu0 0.0
      %2310 = vmatpush.msra.mxu0 %v2234
      %2311 = vmatmul.f32.gmra.mxu0 %v529
      %v2312 = vpop.f32.mrf.mxu0
      %v2313 = vadd.f32 0.0, %v2312
      %2314 = vdwg.mxu0
      %2315 = vmatpush.msra.mxu0 0.0
      %2316 = vmatpush.msra.mxu0 0.0
      %2317 = vmatpush.msra.mxu0 0.0
      %2318 = vmatpush.msra.mxu0 0.0
      %2319 = vmatpush.msra.mxu0 0.0
      %2320 = vmatpush.msra.mxu0 0.0
      %2321 = vmatpush.msra.mxu0 0.0
      %2322 = vmatpush.msra.mxu0 0.0
      %2323 = vmatpush.msra.mxu0 0.0
      %2324 = vmatpush.msra.mxu0 0.0
      %2325 = vmatpush.msra.mxu0 0.0
      %2326 = vmatpush.msra.mxu0 0.0
      %2327 = vmatpush.msra.mxu0 0.0
      %2328 = vmatpush.msra.mxu0 0.0
      %2329 = vmatpush.msra.mxu0 0.0
      %2330 = vmatpush.msra.mxu0 %v2234
      %2331 = vmatmul.f32.gmra.mxu0 %v555
      %v2332 = vpop.f32.mrf.mxu0
      %v2333 = vadd.f32 0.0, %v2332
      %2334 = vdwg.mxu0
      %2335 = vmatpush.msra.mxu0 0.0
      %2336 = vmatpush.msra.mxu0 0.0
      %2337 = vmatpush.msra.mxu0 0.0
      %2338 = vmatpush.msra.mxu0 0.0
      %2339 = vmatpush.msra.mxu0 0.0
      %2340 = vmatpush.msra.mxu0 0.0
      %2341 = vmatpush.msra.mxu0 0.0
      %2342 = vmatpush.msra.mxu0 0.0
      %2343 = vmatpush.msra.mxu0 0.0
      %2344 = vmatpush.msra.mxu0 0.0
      %2345 = vmatpush.msra.mxu0 0.0
      %2346 = vmatpush.msra.mxu0 0.0
      %2347 = vmatpush.msra.mxu0 0.0
      %2348 = vmatpush.msra.mxu0 0.0
      %2349 = vmatpush.msra.mxu0 0.0
      %2350 = vmatpush.msra.mxu0 %v2234
      %2351 = vmatmul.f32.gmra.mxu0 %v581
      %v2352 = vpop.f32.mrf.mxu0
      %v2353 = vadd.f32 0.0, %v2352
      %2354 = vdwg.mxu0
      %2355 = vmatpush.msra.mxu0 0.0
      %2356 = vmatpush.msra.mxu0 0.0
      %2357 = vmatpush.msra.mxu0 0.0
      %2358 = vmatpush.msra.mxu0 0.0
      %2359 = vmatpush.msra.mxu0 0.0
      %2360 = vmatpush.msra.mxu0 0.0
      %2361 = vmatpush.msra.mxu0 0.0
      %2362 = vmatpush.msra.mxu0 0.0
      %2363 = vmatpush.msra.mxu0 0.0
      %2364 = vmatpush.msra.mxu0 0.0
      %2365 = vmatpush.msra.mxu0 0.0
      %2366 = vmatpush.msra.mxu0 0.0
      %2367 = vmatpush.msra.mxu0 0.0
      %2368 = vmatpush.msra.mxu0 0.0
      %2369 = vmatpush.msra.mxu0 0.0
      %2370 = vmatpush.msra.mxu0 %v2234
      %2371 = vmatmul.f32.gmra.mxu0 %v930
      %v2372 = vpop.f32.mrf.mxu0
      %v2373 = vadd.f32 0.0, %v2372
      %2374 = vdwg.mxu0
      %v2376 = vrot.slane %v192, 1
      %v2377 = vrot.slane %v193, 1
      %v2378 = vsel %vm395, %v2376, %v2377
      %v2379 = vsel %vm199, %v2378, 0
      %2381 = vmatpush.msra.mxu0 0.0
      %2382 = vmatpush.msra.mxu0 0.0
      %2383 = vmatpush.msra.mxu0 0.0
      %2384 = vmatpush.msra.mxu0 0.0
      %2385 = vmatpush.msra.mxu0 0.0
      %2386 = vmatpush.msra.mxu0 0.0
      %2387 = vmatpush.msra.mxu0 0.0
      %2388 = vmatpush.msra.mxu0 0.0
      %2389 = vmatpush.msra.mxu0 0.0
      %2390 = vmatpush.msra.mxu0 0.0
      %2391 = vmatpush.msra.mxu0 0.0
      %2392 = vmatpush.msra.mxu0 0.0
      %2393 = vmatpush.msra.mxu0 0.0
      %2394 = vmatpush.msra.mxu0 0.0
      %2395 = vmatpush.msra.mxu0 0.0
      %2396 = vmatpush.msra.mxu0 %v2234
      %2397 = vmatmul.f32.gmra.mxu0 %v2379
      %v2398 = vpop.f32.mrf.mxu0
      %v2399 = vadd.f32 0.0, %v2398
      %2400 = vdwg.mxu0
      %v2401 = vadd.f32 %v2225, %v2253
      %v2402 = vadd.f32 %v2226, %v2273
      %v2403 = vadd.f32 %v2227, %v2293
      %v2404 = vadd.f32 %v2228, %v2313
      %v2405 = vadd.f32 %v2229, %v2333
      %v2406 = vadd.f32 %v2230, %v2353
      %v2407 = vadd.f32 %v2231, %v2373
      %v2408 = vadd.f32 %v2232, %v2399
      %v2409 = vmax.f32 %v2401, 0.0
      %v2410 = vmax.f32 %v2402, 0.0
      %v2411 = vmax.f32 %v2403, 0.0
      %v2412 = vmax.f32 %v2404, 0.0
      %v2413 = vmax.f32 %v2405, 0.0
      %v2414 = vmax.f32 %v2406, 0.0
      %v2415 = vmax.f32 %v2407, 0.0
      %v2416 = vmax.f32 %v2408, 0.0
      %s2417 = scalar_lea.vmem %s172, 128
      %2418 = vst.msk [vmem:[%s2417] sm:$0xff] %vm968, %v2409
      %2419 = vst.msk [vmem:[%s2417 + $0x8] sm:$0xff] %vm968, %v2410
      %2420 = vst.msk [vmem:[%s2417 + $0x10] sm:$0xff] %vm968, %v2411
      %2421 = vst.msk [vmem:[%s2417 + $0x18] sm:$0xff] %vm968, %v2412
      %2422 = vst.msk [vmem:[%s2417 + $0x20] sm:$0xff] %vm968, %v2413
      %2423 = vst.msk [vmem:[%s2417 + $0x28] sm:$0xff] %vm968, %v2414
      %2424 = vst.msk [vmem:[%s2417 + $0x30] sm:$0xff] %vm968, %v2415
      %2425 = vst.msk [vmem:[%s2417 + $0x38] sm:$0xff] %vm968, %v2416
      %s2426 = scalar_lea.vmem %s1, 96
      %v2427 = vld [vmem:[%s2426] sm:$0xff]
      %2428 = vmatpush.msra.mxu0 0.0
      %2429 = vmatpush.msra.mxu0 0.0
      %2430 = vmatpush.msra.mxu0 0.0
      %2431 = vmatpush.msra.mxu0 0.0
      %2432 = vmatpush.msra.mxu0 0.0
      %2433 = vmatpush.msra.mxu0 0.0
      %2434 = vmatpush.msra.mxu0 0.0
      %2435 = vmatpush.msra.mxu0 0.0
      %2436 = vmatpush.msra.mxu0 0.0
      %2437 = vmatpush.msra.mxu0 0.0
      %2438 = vmatpush.msra.mxu0 0.0
      %2439 = vmatpush.msra.mxu0 0.0
      %2440 = vmatpush.msra.mxu0 0.0
      %2441 = vmatpush.msra.mxu0 0.0
      %2442 = vmatpush.msra.mxu0 0.0
      %2443 = vmatpush.msra.mxu0 %v2427
      %2444 = vmatmul.f32.gmra.mxu0 %v425
      %v2445 = vpop.f32.mrf.mxu0
      %v2446 = vadd.f32 0.0, %v2445
      %2447 = vdwg.mxu0
      %2448 = vmatpush.msra.mxu0 0.0
      %2449 = vmatpush.msra.mxu0 0.0
      %2450 = vmatpush.msra.mxu0 0.0
      %2451 = vmatpush.msra.mxu0 0.0
      %2452 = vmatpush.msra.mxu0 0.0
      %2453 = vmatpush.msra.mxu0 0.0
      %2454 = vmatpush.msra.mxu0 0.0
      %2455 = vmatpush.msra.mxu0 0.0
      %2456 = vmatpush.msra.mxu0 0.0
      %2457 = vmatpush.msra.mxu0 0.0
      %2458 = vmatpush.msra.mxu0 0.0
      %2459 = vmatpush.msra.mxu0 0.0
      %2460 = vmatpush.msra.mxu0 0.0
      %2461 = vmatpush.msra.mxu0 0.0
      %2462 = vmatpush.msra.mxu0 0.0
      %2463 = vmatpush.msra.mxu0 %v2427
      %2464 = vmatmul.f32.gmra.mxu0 %v451
      %v2465 = vpop.f32.mrf.mxu0
      %v2466 = vadd.f32 0.0, %v2465
      %2467 = vdwg.mxu0
      %2468 = vmatpush.msra.mxu0 0.0
      %2469 = vmatpush.msra.mxu0 0.0
      %2470 = vmatpush.msra.mxu0 0.0
      %2471 = vmatpush.msra.mxu0 0.0
      %2472 = vmatpush.msra.mxu0 0.0
      %2473 = vmatpush.msra.mxu0 0.0
      %2474 = vmatpush.msra.mxu0 0.0
      %2475 = vmatpush.msra.mxu0 0.0
      %2476 = vmatpush.msra.mxu0 0.0
      %2477 = vmatpush.msra.mxu0 0.0
      %2478 = vmatpush.msra.mxu0 0.0
      %2479 = vmatpush.msra.mxu0 0.0
      %2480 = vmatpush.msra.mxu0 0.0
      %2481 = vmatpush.msra.mxu0 0.0
      %2482 = vmatpush.msra.mxu0 0.0
      %2483 = vmatpush.msra.mxu0 %v2427
      %2484 = vmatmul.f32.gmra.mxu0 %v477
      %v2485 = vpop.f32.mrf.mxu0
      %v2486 = vadd.f32 0.0, %v2485
      %2487 = vdwg.mxu0
      %2488 = vmatpush.msra.mxu0 0.0
      %2489 = vmatpush.msra.mxu0 0.0
      %2490 = vmatpush.msra.mxu0 0.0
      %2491 = vmatpush.msra.mxu0 0.0
      %2492 = vmatpush.msra.mxu0 0.0
      %2493 = vmatpush.msra.mxu0 0.0
      %2494 = vmatpush.msra.mxu0 0.0
      %2495 = vmatpush.msra.mxu0 0.0
      %2496 = vmatpush.msra.mxu0 0.0
      %2497 = vmatpush.msra.mxu0 0.0
      %2498 = vmatpush.msra.mxu0 0.0
      %2499 = vmatpush.msra.mxu0 0.0
      %2500 = vmatpush.msra.mxu0 0.0
      %2501 = vmatpush.msra.mxu0 0.0
      %2502 = vmatpush.msra.mxu0 0.0
      %2503 = vmatpush.msra.mxu0 %v2427
      %2504 = vmatmul.f32.gmra.mxu0 %v503
      %v2505 = vpop.f32.mrf.mxu0
      %v2506 = vadd.f32 0.0, %v2505
      %2507 = vdwg.mxu0
      %2508 = vmatpush.msra.mxu0 0.0
      %2509 = vmatpush.msra.mxu0 0.0
      %2510 = vmatpush.msra.mxu0 0.0
      %2511 = vmatpush.msra.mxu0 0.0
      %2512 = vmatpush.msra.mxu0 0.0
      %2513 = vmatpush.msra.mxu0 0.0
      %2514 = vmatpush.msra.mxu0 0.0
      %2515 = vmatpush.msra.mxu0 0.0
      %2516 = vmatpush.msra.mxu0 0.0
      %2517 = vmatpush.msra.mxu0 0.0
      %2518 = vmatpush.msra.mxu0 0.0
      %2519 = vmatpush.msra.mxu0 0.0
      %2520 = vmatpush.msra.mxu0 0.0
      %2521 = vmatpush.msra.mxu0 0.0
      %2522 = vmatpush.msra.mxu0 0.0
      %2523 = vmatpush.msra.mxu0 %v2427
      %2524 = vmatmul.f32.gmra.mxu0 %v529
      %v2525 = vpop.f32.mrf.mxu0
      %v2526 = vadd.f32 0.0, %v2525
      %2527 = vdwg.mxu0
      %2528 = vmatpush.msra.mxu0 0.0
      %2529 = vmatpush.msra.mxu0 0.0
      %2530 = vmatpush.msra.mxu0 0.0
      %2531 = vmatpush.msra.mxu0 0.0
      %2532 = vmatpush.msra.mxu0 0.0
      %2533 = vmatpush.msra.mxu0 0.0
      %2534 = vmatpush.msra.mxu0 0.0
      %2535 = vmatpush.msra.mxu0 0.0
      %2536 = vmatpush.msra.mxu0 0.0
      %2537 = vmatpush.msra.mxu0 0.0
      %2538 = vmatpush.msra.mxu0 0.0
      %2539 = vmatpush.msra.mxu0 0.0
      %2540 = vmatpush.msra.mxu0 0.0
      %2541 = vmatpush.msra.mxu0 0.0
      %2542 = vmatpush.msra.mxu0 0.0
      %2543 = vmatpush.msra.mxu0 %v2427
      %2544 = vmatmul.f32.gmra.mxu0 %v555
      %v2545 = vpop.f32.mrf.mxu0
      %v2546 = vadd.f32 0.0, %v2545
      %2547 = vdwg.mxu0
      %2548 = vmatpush.msra.mxu0 0.0
      %2549 = vmatpush.msra.mxu0 0.0
      %2550 = vmatpush.msra.mxu0 0.0
      %2551 = vmatpush.msra.mxu0 0.0
      %2552 = vmatpush.msra.mxu0 0.0
      %2553 = vmatpush.msra.mxu0 0.0
      %2554 = vmatpush.msra.mxu0 0.0
      %2555 = vmatpush.msra.mxu0 0.0
      %2556 = vmatpush.msra.mxu0 0.0
      %2557 = vmatpush.msra.mxu0 0.0
      %2558 = vmatpush.msra.mxu0 0.0
      %2559 = vmatpush.msra.mxu0 0.0
      %2560 = vmatpush.msra.mxu0 0.0
      %2561 = vmatpush.msra.mxu0 0.0
      %2562 = vmatpush.msra.mxu0 0.0
      %2563 = vmatpush.msra.mxu0 %v2427
      %2564 = vmatmul.f32.gmra.mxu0 %v581
      %v2565 = vpop.f32.mrf.mxu0
      %v2566 = vadd.f32 0.0, %v2565
      %2567 = vdwg.mxu0
      %2568 = vmatpush.msra.mxu0 0.0
      %2569 = vmatpush.msra.mxu0 0.0
      %2570 = vmatpush.msra.mxu0 0.0
      %2571 = vmatpush.msra.mxu0 0.0
      %2572 = vmatpush.msra.mxu0 0.0
      %2573 = vmatpush.msra.mxu0 0.0
      %2574 = vmatpush.msra.mxu0 0.0
      %2575 = vmatpush.msra.mxu0 0.0
      %2576 = vmatpush.msra.mxu0 0.0
      %2577 = vmatpush.msra.mxu0 0.0
      %2578 = vmatpush.msra.mxu0 0.0
      %2579 = vmatpush.msra.mxu0 0.0
      %2580 = vmatpush.msra.mxu0 0.0
      %2581 = vmatpush.msra.mxu0 0.0
      %2582 = vmatpush.msra.mxu0 0.0
      %2583 = vmatpush.msra.mxu0 %v2427
      %2584 = vmatmul.f32.gmra.mxu0 %v930
      %v2585 = vpop.f32.mrf.mxu0
      %v2586 = vadd.f32 0.0, %v2585
      %2587 = vdwg.mxu0
      %v2588 = vadd.f32 %v197, %v2446
      %v2589 = vadd.f32 %v197, %v2466
      %v2590 = vadd.f32 %v197, %v2486
      %v2591 = vadd.f32 %v197, %v2506
      %v2592 = vadd.f32 %v197, %v2526
      %v2593 = vadd.f32 %v197, %v2546
      %v2594 = vadd.f32 %v197, %v2566
      %v2595 = vadd.f32 %v197, %v2586
      %s2596 = scalar_lea.vmem %s1, 104
      %v2597 = vld [vmem:[%s2596] sm:$0xff]
      %2598 = vmatpush.msra.mxu0 0.0
      %2599 = vmatpush.msra.mxu0 0.0
      %2600 = vmatpush.msra.mxu0 0.0
      %2601 = vmatpush.msra.mxu0 0.0
      %2602 = vmatpush.msra.mxu0 0.0
      %2603 = vmatpush.msra.mxu0 0.0
      %2604 = vmatpush.msra.mxu0 0.0
      %2605 = vmatpush.msra.mxu0 0.0
      %2606 = vmatpush.msra.mxu0 0.0
      %2607 = vmatpush.msra.mxu0 0.0
      %2608 = vmatpush.msra.mxu0 0.0
      %2609 = vmatpush.msra.mxu0 0.0
      %2610 = vmatpush.msra.mxu0 0.0
      %2611 = vmatpush.msra.mxu0 0.0
      %2612 = vmatpush.msra.mxu0 0.0
      %2613 = vmatpush.msra.mxu0 %v2597
      %2614 = vmatmul.f32.gmra.mxu0 %v1178
      %v2615 = vpop.f32.mrf.mxu0
      %v2616 = vadd.f32 0.0, %v2615
      %2617 = vdwg.mxu0
      %2618 = vmatpush.msra.mxu0 0.0
      %2619 = vmatpush.msra.mxu0 0.0
      %2620 = vmatpush.msra.mxu0 0.0
      %2621 = vmatpush.msra.mxu0 0.0
      %2622 = vmatpush.msra.mxu0 0.0
      %2623 = vmatpush.msra.mxu0 0.0
      %2624 = vmatpush.msra.mxu0 0.0
      %2625 = vmatpush.msra.mxu0 0.0
      %2626 = vmatpush.msra.mxu0 0.0
      %2627 = vmatpush.msra.mxu0 0.0
      %2628 = vmatpush.msra.mxu0 0.0
      %2629 = vmatpush.msra.mxu0 0.0
      %2630 = vmatpush.msra.mxu0 0.0
      %2631 = vmatpush.msra.mxu0 0.0
      %2632 = vmatpush.msra.mxu0 0.0
      %2633 = vmatpush.msra.mxu0 %v2597
      %2634 = vmatmul.f32.gmra.mxu0 %v1203
      %v2635 = vpop.f32.mrf.mxu0
      %v2636 = vadd.f32 0.0, %v2635
      %2637 = vdwg.mxu0
      %2638 = vmatpush.msra.mxu0 0.0
      %2639 = vmatpush.msra.mxu0 0.0
      %2640 = vmatpush.msra.mxu0 0.0
      %2641 = vmatpush.msra.mxu0 0.0
      %2642 = vmatpush.msra.mxu0 0.0
      %2643 = vmatpush.msra.mxu0 0.0
      %2644 = vmatpush.msra.mxu0 0.0
      %2645 = vmatpush.msra.mxu0 0.0
      %2646 = vmatpush.msra.mxu0 0.0
      %2647 = vmatpush.msra.mxu0 0.0
      %2648 = vmatpush.msra.mxu0 0.0
      %2649 = vmatpush.msra.mxu0 0.0
      %2650 = vmatpush.msra.mxu0 0.0
      %2651 = vmatpush.msra.mxu0 0.0
      %2652 = vmatpush.msra.mxu0 0.0
      %2653 = vmatpush.msra.mxu0 %v2597
      %2654 = vmatmul.f32.gmra.mxu0 %v1228
      %v2655 = vpop.f32.mrf.mxu0
      %v2656 = vadd.f32 0.0, %v2655
      %2657 = vdwg.mxu0
      %2658 = vmatpush.msra.mxu0 0.0
      %2659 = vmatpush.msra.mxu0 0.0
      %2660 = vmatpush.msra.mxu0 0.0
      %2661 = vmatpush.msra.mxu0 0.0
      %2662 = vmatpush.msra.mxu0 0.0
      %2663 = vmatpush.msra.mxu0 0.0
      %2664 = vmatpush.msra.mxu0 0.0
      %2665 = vmatpush.msra.mxu0 0.0
      %2666 = vmatpush.msra.mxu0 0.0
      %2667 = vmatpush.msra.mxu0 0.0
      %2668 = vmatpush.msra.mxu0 0.0
      %2669 = vmatpush.msra.mxu0 0.0
      %2670 = vmatpush.msra.mxu0 0.0
      %2671 = vmatpush.msra.mxu0 0.0
      %2672 = vmatpush.msra.mxu0 0.0
      %2673 = vmatpush.msra.mxu0 %v2597
      %2674 = vmatmul.f32.gmra.mxu0 %v1253
      %v2675 = vpop.f32.mrf.mxu0
      %v2676 = vadd.f32 0.0, %v2675
      %2677 = vdwg.mxu0
      %2678 = vmatpush.msra.mxu0 0.0
      %2679 = vmatpush.msra.mxu0 0.0
      %2680 = vmatpush.msra.mxu0 0.0
      %2681 = vmatpush.msra.mxu0 0.0
      %2682 = vmatpush.msra.mxu0 0.0
      %2683 = vmatpush.msra.mxu0 0.0
      %2684 = vmatpush.msra.mxu0 0.0
      %2685 = vmatpush.msra.mxu0 0.0
      %2686 = vmatpush.msra.mxu0 0.0
      %2687 = vmatpush.msra.mxu0 0.0
      %2688 = vmatpush.msra.mxu0 0.0
      %2689 = vmatpush.msra.mxu0 0.0
      %2690 = vmatpush.msra.mxu0 0.0
      %2691 = vmatpush.msra.mxu0 0.0
      %2692 = vmatpush.msra.mxu0 0.0
      %2693 = vmatpush.msra.mxu0 %v2597
      %2694 = vmatmul.f32.gmra.mxu0 %v1278
      %v2695 = vpop.f32.mrf.mxu0
      %v2696 = vadd.f32 0.0, %v2695
      %2697 = vdwg.mxu0
      %2698 = vmatpush.msra.mxu0 0.0
      %2699 = vmatpush.msra.mxu0 0.0
      %2700 = vmatpush.msra.mxu0 0.0
      %2701 = vmatpush.msra.mxu0 0.0
      %2702 = vmatpush.msra.mxu0 0.0
      %2703 = vmatpush.msra.mxu0 0.0
      %2704 = vmatpush.msra.mxu0 0.0
      %2705 = vmatpush.msra.mxu0 0.0
      %2706 = vmatpush.msra.mxu0 0.0
      %2707 = vmatpush.msra.mxu0 0.0
      %2708 = vmatpush.msra.mxu0 0.0
      %2709 = vmatpush.msra.mxu0 0.0
      %2710 = vmatpush.msra.mxu0 0.0
      %2711 = vmatpush.msra.mxu0 0.0
      %2712 = vmatpush.msra.mxu0 0.0
      %2713 = vmatpush.msra.mxu0 %v2597
      %2714 = vmatmul.f32.gmra.mxu0 %v1303
      %v2715 = vpop.f32.mrf.mxu0
      %v2716 = vadd.f32 0.0, %v2715
      %2717 = vdwg.mxu0
      %2718 = vmatpush.msra.mxu0 0.0
      %2719 = vmatpush.msra.mxu0 0.0
      %2720 = vmatpush.msra.mxu0 0.0
      %2721 = vmatpush.msra.mxu0 0.0
      %2722 = vmatpush.msra.mxu0 0.0
      %2723 = vmatpush.msra.mxu0 0.0
      %2724 = vmatpush.msra.mxu0 0.0
      %2725 = vmatpush.msra.mxu0 0.0
      %2726 = vmatpush.msra.mxu0 0.0
      %2727 = vmatpush.msra.mxu0 0.0
      %2728 = vmatpush.msra.mxu0 0.0
      %2729 = vmatpush.msra.mxu0 0.0
      %2730 = vmatpush.msra.mxu0 0.0
      %2731 = vmatpush.msra.mxu0 0.0
      %2732 = vmatpush.msra.mxu0 0.0
      %2733 = vmatpush.msra.mxu0 %v2597
      %2734 = vmatmul.f32.gmra.mxu0 %v1328
      %v2735 = vpop.f32.mrf.mxu0
      %v2736 = vadd.f32 0.0, %v2735
      %2737 = vdwg.mxu0
      %2738 = vmatpush.msra.mxu0 0.0
      %2739 = vmatpush.msra.mxu0 0.0
      %2740 = vmatpush.msra.mxu0 0.0
      %2741 = vmatpush.msra.mxu0 0.0
      %2742 = vmatpush.msra.mxu0 0.0
      %2743 = vmatpush.msra.mxu0 0.0
      %2744 = vmatpush.msra.mxu0 0.0
      %2745 = vmatpush.msra.mxu0 0.0
      %2746 = vmatpush.msra.mxu0 0.0
      %2747 = vmatpush.msra.mxu0 0.0
      %2748 = vmatpush.msra.mxu0 0.0
      %2749 = vmatpush.msra.mxu0 0.0
      %2750 = vmatpush.msra.mxu0 0.0
      %2751 = vmatpush.msra.mxu0 0.0
      %2752 = vmatpush.msra.mxu0 0.0
      %2753 = vmatpush.msra.mxu0 %v2597
      %2754 = vmatmul.f32.gmra.mxu0 %v1673
      %v2755 = vpop.f32.mrf.mxu0
      %v2756 = vadd.f32 0.0, %v2755
      %2757 = vdwg.mxu0
      %v2758 = vadd.f32 %v2588, %v2616
      %v2759 = vadd.f32 %v2589, %v2636
      %v2760 = vadd.f32 %v2590, %v2656
      %v2761 = vadd.f32 %v2591, %v2676
      %v2762 = vadd.f32 %v2592, %v2696
      %v2763 = vadd.f32 %v2593, %v2716
      %v2764 = vadd.f32 %v2594, %v2736
      %v2765 = vadd.f32 %v2595, %v2756
      %s2766 = scalar_lea.vmem %s1, 112
      %v2767 = vld [vmem:[%s2766] sm:$0xff]
      %2768 = vmatpush.msra.mxu0 0.0
      %2769 = vmatpush.msra.mxu0 0.0
      %2770 = vmatpush.msra.mxu0 0.0
      %2771 = vmatpush.msra.mxu0 0.0
      %2772 = vmatpush.msra.mxu0 0.0
      %2773 = vmatpush.msra.mxu0 0.0
      %2774 = vmatpush.msra.mxu0 0.0
      %2775 = vmatpush.msra.mxu0 0.0
      %2776 = vmatpush.msra.mxu0 0.0
      %2777 = vmatpush.msra.mxu0 0.0
      %2778 = vmatpush.msra.mxu0 0.0
      %2779 = vmatpush.msra.mxu0 0.0
      %2780 = vmatpush.msra.mxu0 0.0
      %2781 = vmatpush.msra.mxu0 0.0
      %2782 = vmatpush.msra.mxu0 0.0
      %2783 = vmatpush.msra.mxu0 %v2767
      %2784 = vmatmul.f32.gmra.mxu0 %v451
      %v2785 = vpop.f32.mrf.mxu0
      %v2786 = vadd.f32 0.0, %v2785
      %2787 = vdwg.mxu0
      %2788 = vmatpush.msra.mxu0 0.0
      %2789 = vmatpush.msra.mxu0 0.0
      %2790 = vmatpush.msra.mxu0 0.0
      %2791 = vmatpush.msra.mxu0 0.0
      %2792 = vmatpush.msra.mxu0 0.0
      %2793 = vmatpush.msra.mxu0 0.0
      %2794 = vmatpush.msra.mxu0 0.0
      %2795 = vmatpush.msra.mxu0 0.0
      %2796 = vmatpush.msra.mxu0 0.0
      %2797 = vmatpush.msra.mxu0 0.0
      %2798 = vmatpush.msra.mxu0 0.0
      %2799 = vmatpush.msra.mxu0 0.0
      %2800 = vmatpush.msra.mxu0 0.0
      %2801 = vmatpush.msra.mxu0 0.0
      %2802 = vmatpush.msra.mxu0 0.0
      %2803 = vmatpush.msra.mxu0 %v2767
      %2804 = vmatmul.f32.gmra.mxu0 %v477
      %v2805 = vpop.f32.mrf.mxu0
      %v2806 = vadd.f32 0.0, %v2805
      %2807 = vdwg.mxu0
      %2808 = vmatpush.msra.mxu0 0.0
      %2809 = vmatpush.msra.mxu0 0.0
      %2810 = vmatpush.msra.mxu0 0.0
      %2811 = vmatpush.msra.mxu0 0.0
      %2812 = vmatpush.msra.mxu0 0.0
      %2813 = vmatpush.msra.mxu0 0.0
      %2814 = vmatpush.msra.mxu0 0.0
      %2815 = vmatpush.msra.mxu0 0.0
      %2816 = vmatpush.msra.mxu0 0.0
      %2817 = vmatpush.msra.mxu0 0.0
      %2818 = vmatpush.msra.mxu0 0.0
      %2819 = vmatpush.msra.mxu0 0.0
      %2820 = vmatpush.msra.mxu0 0.0
      %2821 = vmatpush.msra.mxu0 0.0
      %2822 = vmatpush.msra.mxu0 0.0
      %2823 = vmatpush.msra.mxu0 %v2767
      %2824 = vmatmul.f32.gmra.mxu0 %v503
      %v2825 = vpop.f32.mrf.mxu0
      %v2826 = vadd.f32 0.0, %v2825
      %2827 = vdwg.mxu0
      %2828 = vmatpush.msra.mxu0 0.0
      %2829 = vmatpush.msra.mxu0 0.0
      %2830 = vmatpush.msra.mxu0 0.0
      %2831 = vmatpush.msra.mxu0 0.0
      %2832 = vmatpush.msra.mxu0 0.0
      %2833 = vmatpush.msra.mxu0 0.0
      %2834 = vmatpush.msra.mxu0 0.0
      %2835 = vmatpush.msra.mxu0 0.0
      %2836 = vmatpush.msra.mxu0 0.0
      %2837 = vmatpush.msra.mxu0 0.0
      %2838 = vmatpush.msra.mxu0 0.0
      %2839 = vmatpush.msra.mxu0 0.0
      %2840 = vmatpush.msra.mxu0 0.0
      %2841 = vmatpush.msra.mxu0 0.0
      %2842 = vmatpush.msra.mxu0 0.0
      %2843 = vmatpush.msra.mxu0 %v2767
      %2844 = vmatmul.f32.gmra.mxu0 %v529
      %v2845 = vpop.f32.mrf.mxu0
      %v2846 = vadd.f32 0.0, %v2845
      %2847 = vdwg.mxu0
      %2848 = vmatpush.msra.mxu0 0.0
      %2849 = vmatpush.msra.mxu0 0.0
      %2850 = vmatpush.msra.mxu0 0.0
      %2851 = vmatpush.msra.mxu0 0.0
      %2852 = vmatpush.msra.mxu0 0.0
      %2853 = vmatpush.msra.mxu0 0.0
      %2854 = vmatpush.msra.mxu0 0.0
      %2855 = vmatpush.msra.mxu0 0.0
      %2856 = vmatpush.msra.mxu0 0.0
      %2857 = vmatpush.msra.mxu0 0.0
      %2858 = vmatpush.msra.mxu0 0.0
      %2859 = vmatpush.msra.mxu0 0.0
      %2860 = vmatpush.msra.mxu0 0.0
      %2861 = vmatpush.msra.mxu0 0.0
      %2862 = vmatpush.msra.mxu0 0.0
      %2863 = vmatpush.msra.mxu0 %v2767
      %2864 = vmatmul.f32.gmra.mxu0 %v555
      %v2865 = vpop.f32.mrf.mxu0
      %v2866 = vadd.f32 0.0, %v2865
      %2867 = vdwg.mxu0
      %2868 = vmatpush.msra.mxu0 0.0
      %2869 = vmatpush.msra.mxu0 0.0
      %2870 = vmatpush.msra.mxu0 0.0
      %2871 = vmatpush.msra.mxu0 0.0
      %2872 = vmatpush.msra.mxu0 0.0
      %2873 = vmatpush.msra.mxu0 0.0
      %2874 = vmatpush.msra.mxu0 0.0
      %2875 = vmatpush.msra.mxu0 0.0
      %2876 = vmatpush.msra.mxu0 0.0
      %2877 = vmatpush.msra.mxu0 0.0
      %2878 = vmatpush.msra.mxu0 0.0
      %2879 = vmatpush.msra.mxu0 0.0
      %2880 = vmatpush.msra.mxu0 0.0
      %2881 = vmatpush.msra.mxu0 0.0
      %2882 = vmatpush.msra.mxu0 0.0
      %2883 = vmatpush.msra.mxu0 %v2767
      %2884 = vmatmul.f32.gmra.mxu0 %v581
      %v2885 = vpop.f32.mrf.mxu0
      %v2886 = vadd.f32 0.0, %v2885
      %2887 = vdwg.mxu0
      %2888 = vmatpush.msra.mxu0 0.0
      %2889 = vmatpush.msra.mxu0 0.0
      %2890 = vmatpush.msra.mxu0 0.0
      %2891 = vmatpush.msra.mxu0 0.0
      %2892 = vmatpush.msra.mxu0 0.0
      %2893 = vmatpush.msra.mxu0 0.0
      %2894 = vmatpush.msra.mxu0 0.0
      %2895 = vmatpush.msra.mxu0 0.0
      %2896 = vmatpush.msra.mxu0 0.0
      %2897 = vmatpush.msra.mxu0 0.0
      %2898 = vmatpush.msra.mxu0 0.0
      %2899 = vmatpush.msra.mxu0 0.0
      %2900 = vmatpush.msra.mxu0 0.0
      %2901 = vmatpush.msra.mxu0 0.0
      %2902 = vmatpush.msra.mxu0 0.0
      %2903 = vmatpush.msra.mxu0 %v2767
      %2904 = vmatmul.f32.gmra.mxu0 %v930
      %v2905 = vpop.f32.mrf.mxu0
      %v2906 = vadd.f32 0.0, %v2905
      %2907 = vdwg.mxu0
      %2908 = vmatpush.msra.mxu0 0.0
      %2909 = vmatpush.msra.mxu0 0.0
      %2910 = vmatpush.msra.mxu0 0.0
      %2911 = vmatpush.msra.mxu0 0.0
      %2912 = vmatpush.msra.mxu0 0.0
      %2913 = vmatpush.msra.mxu0 0.0
      %2914 = vmatpush.msra.mxu0 0.0
      %2915 = vmatpush.msra.mxu0 0.0
      %2916 = vmatpush.msra.mxu0 0.0
      %2917 = vmatpush.msra.mxu0 0.0
      %2918 = vmatpush.msra.mxu0 0.0
      %2919 = vmatpush.msra.mxu0 0.0
      %2920 = vmatpush.msra.mxu0 0.0
      %2921 = vmatpush.msra.mxu0 0.0
      %2922 = vmatpush.msra.mxu0 0.0
      %2923 = vmatpush.msra.mxu0 %v2767
      %2924 = vmatmul.f32.gmra.mxu0 %v2379
      %v2925 = vpop.f32.mrf.mxu0
      %v2926 = vadd.f32 0.0, %v2925
      %2927 = vdwg.mxu0
      %v2928 = vadd.f32 %v2758, %v2786
      %v2929 = vadd.f32 %v2759, %v2806
      %v2930 = vadd.f32 %v2760, %v2826
      %v2931 = vadd.f32 %v2761, %v2846
      %v2932 = vadd.f32 %v2762, %v2866
      %v2933 = vadd.f32 %v2763, %v2886
      %v2934 = vadd.f32 %v2764, %v2906
      %v2935 = vadd.f32 %v2765, %v2926
      %s2936 = scalar_lea.vmem %s1, 120
      %v2937 = vld [vmem:[%s2936] sm:$0xff]
      %2938 = vmatpush.msra.mxu0 0.0
      %2939 = vmatpush.msra.mxu0 0.0
      %2940 = vmatpush.msra.mxu0 0.0
      %2941 = vmatpush.msra.mxu0 0.0
      %2942 = vmatpush.msra.mxu0 0.0
      %2943 = vmatpush.msra.mxu0 0.0
      %2944 = vmatpush.msra.mxu0 0.0
      %2945 = vmatpush.msra.mxu0 0.0
      %2946 = vmatpush.msra.mxu0 0.0
      %2947 = vmatpush.msra.mxu0 0.0
      %2948 = vmatpush.msra.mxu0 0.0
      %2949 = vmatpush.msra.mxu0 0.0
      %2950 = vmatpush.msra.mxu0 0.0
      %2951 = vmatpush.msra.mxu0 0.0
      %2952 = vmatpush.msra.mxu0 0.0
      %2953 = vmatpush.msra.mxu0 %v2937
      %2954 = vmatmul.f32.gmra.mxu0 %v1203
      %v2955 = vpop.f32.mrf.mxu0
      %v2956 = vadd.f32 0.0, %v2955
      %2957 = vdwg.mxu0
      %2958 = vmatpush.msra.mxu0 0.0
      %2959 = vmatpush.msra.mxu0 0.0
      %2960 = vmatpush.msra.mxu0 0.0
      %2961 = vmatpush.msra.mxu0 0.0
      %2962 = vmatpush.msra.mxu0 0.0
      %2963 = vmatpush.msra.mxu0 0.0
      %2964 = vmatpush.msra.mxu0 0.0
      %2965 = vmatpush.msra.mxu0 0.0
      %2966 = vmatpush.msra.mxu0 0.0
      %2967 = vmatpush.msra.mxu0 0.0
      %2968 = vmatpush.msra.mxu0 0.0
      %2969 = vmatpush.msra.mxu0 0.0
      %2970 = vmatpush.msra.mxu0 0.0
      %2971 = vmatpush.msra.mxu0 0.0
      %2972 = vmatpush.msra.mxu0 0.0
      %2973 = vmatpush.msra.mxu0 %v2937
      %2974 = vmatmul.f32.gmra.mxu0 %v1228
      %v2975 = vpop.f32.mrf.mxu0
      %v2976 = vadd.f32 0.0, %v2975
      %2977 = vdwg.mxu0
      %2978 = vmatpush.msra.mxu0 0.0
      %2979 = vmatpush.msra.mxu0 0.0
      %2980 = vmatpush.msra.mxu0 0.0
      %2981 = vmatpush.msra.mxu0 0.0
      %2982 = vmatpush.msra.mxu0 0.0
      %2983 = vmatpush.msra.mxu0 0.0
      %2984 = vmatpush.msra.mxu0 0.0
      %2985 = vmatpush.msra.mxu0 0.0
      %2986 = vmatpush.msra.mxu0 0.0
      %2987 = vmatpush.msra.mxu0 0.0
      %2988 = vmatpush.msra.mxu0 0.0
      %2989 = vmatpush.msra.mxu0 0.0
      %2990 = vmatpush.msra.mxu0 0.0
      %2991 = vmatpush.msra.mxu0 0.0
      %2992 = vmatpush.msra.mxu0 0.0
      %2993 = vmatpush.msra.mxu0 %v2937
      %2994 = vmatmul.f32.gmra.mxu0 %v1253
      %v2995 = vpop.f32.mrf.mxu0
      %v2996 = vadd.f32 0.0, %v2995
      %2997 = vdwg.mxu0
      %2998 = vmatpush.msra.mxu0 0.0
      %2999 = vmatpush.msra.mxu0 0.0
      %3000 = vmatpush.msra.mxu0 0.0
      %3001 = vmatpush.msra.mxu0 0.0
      %3002 = vmatpush.msra.mxu0 0.0
      %3003 = vmatpush.msra.mxu0 0.0
      %3004 = vmatpush.msra.mxu0 0.0
      %3005 = vmatpush.msra.mxu0 0.0
      %3006 = vmatpush.msra.mxu0 0.0
      %3007 = vmatpush.msra.mxu0 0.0
      %3008 = vmatpush.msra.mxu0 0.0
      %3009 = vmatpush.msra.mxu0 0.0
      %3010 = vmatpush.msra.mxu0 0.0
      %3011 = vmatpush.msra.mxu0 0.0
      %3012 = vmatpush.msra.mxu0 0.0
      %3013 = vmatpush.msra.mxu0 %v2937
      %3014 = vmatmul.f32.gmra.mxu0 %v1278
      %v3015 = vpop.f32.mrf.mxu0
      %v3016 = vadd.f32 0.0, %v3015
      %3017 = vdwg.mxu0
      %3018 = vmatpush.msra.mxu0 0.0
      %3019 = vmatpush.msra.mxu0 0.0
      %3020 = vmatpush.msra.mxu0 0.0
      %3021 = vmatpush.msra.mxu0 0.0
      %3022 = vmatpush.msra.mxu0 0.0
      %3023 = vmatpush.msra.mxu0 0.0
      %3024 = vmatpush.msra.mxu0 0.0
      %3025 = vmatpush.msra.mxu0 0.0
      %3026 = vmatpush.msra.mxu0 0.0
      %3027 = vmatpush.msra.mxu0 0.0
      %3028 = vmatpush.msra.mxu0 0.0
      %3029 = vmatpush.msra.mxu0 0.0
      %3030 = vmatpush.msra.mxu0 0.0
      %3031 = vmatpush.msra.mxu0 0.0
      %3032 = vmatpush.msra.mxu0 0.0
      %3033 = vmatpush.msra.mxu0 %v2937
      %3034 = vmatmul.f32.gmra.mxu0 %v1303
      %v3035 = vpop.f32.mrf.mxu0
      %v3036 = vadd.f32 0.0, %v3035
      %3037 = vdwg.mxu0
      %3038 = vmatpush.msra.mxu0 0.0
      %3039 = vmatpush.msra.mxu0 0.0
      %3040 = vmatpush.msra.mxu0 0.0
      %3041 = vmatpush.msra.mxu0 0.0
      %3042 = vmatpush.msra.mxu0 0.0
      %3043 = vmatpush.msra.mxu0 0.0
      %3044 = vmatpush.msra.mxu0 0.0
      %3045 = vmatpush.msra.mxu0 0.0
      %3046 = vmatpush.msra.mxu0 0.0
      %3047 = vmatpush.msra.mxu0 0.0
      %3048 = vmatpush.msra.mxu0 0.0
      %3049 = vmatpush.msra.mxu0 0.0
      %3050 = vmatpush.msra.mxu0 0.0
      %3051 = vmatpush.msra.mxu0 0.0
      %3052 = vmatpush.msra.mxu0 0.0
      %3053 = vmatpush.msra.mxu0 %v2937
      %3054 = vmatmul.f32.gmra.mxu0 %v1328
      %v3055 = vpop.f32.mrf.mxu0
      %v3056 = vadd.f32 0.0, %v3055
      %3057 = vdwg.mxu0
      %3058 = vmatpush.msra.mxu0 0.0
      %3059 = vmatpush.msra.mxu0 0.0
      %3060 = vmatpush.msra.mxu0 0.0
      %3061 = vmatpush.msra.mxu0 0.0
      %3062 = vmatpush.msra.mxu0 0.0
      %3063 = vmatpush.msra.mxu0 0.0
      %3064 = vmatpush.msra.mxu0 0.0
      %3065 = vmatpush.msra.mxu0 0.0
      %3066 = vmatpush.msra.mxu0 0.0
      %3067 = vmatpush.msra.mxu0 0.0
      %3068 = vmatpush.msra.mxu0 0.0
      %3069 = vmatpush.msra.mxu0 0.0
      %3070 = vmatpush.msra.mxu0 0.0
      %3071 = vmatpush.msra.mxu0 0.0
      %3072 = vmatpush.msra.mxu0 0.0
      %3073 = vmatpush.msra.mxu0 %v2937
      %3074 = vmatmul.f32.gmra.mxu0 %v1673
      %v3075 = vpop.f32.mrf.mxu0
      %v3076 = vadd.f32 0.0, %v3075
      %3077 = vdwg.mxu0
      %v3078 = vrot.slane %v192, 2
      %v3079 = vrot.slane %v193, 2
      %v3080 = vsel %vm1149, %v3078, %v3079
      %v3081 = vsel %vm199, %v3080, 0
      %3083 = vmatpush.msra.mxu0 0.0
      %3084 = vmatpush.msra.mxu0 0.0
      %3085 = vmatpush.msra.mxu0 0.0
      %3086 = vmatpush.msra.mxu0 0.0
      %3087 = vmatpush.msra.mxu0 0.0
      %3088 = vmatpush.msra.mxu0 0.0
      %3089 = vmatpush.msra.mxu0 0.0
      %3090 = vmatpush.msra.mxu0 0.0
      %3091 = vmatpush.msra.mxu0 0.0
      %3092 = vmatpush.msra.mxu0 0.0
      %3093 = vmatpush.msra.mxu0 0.0
      %3094 = vmatpush.msra.mxu0 0.0
      %3095 = vmatpush.msra.mxu0 0.0
      %3096 = vmatpush.msra.mxu0 0.0
      %3097 = vmatpush.msra.mxu0 0.0
      %3098 = vmatpush.msra.mxu0 %v2937
      %3099 = vmatmul.f32.gmra.mxu0 %v3081
      %v3100 = vpop.f32.mrf.mxu0
      %v3101 = vadd.f32 0.0, %v3100
      %3102 = vdwg.mxu0
      %v3103 = vadd.f32 %v2928, %v2956
      %v3104 = vadd.f32 %v2929, %v2976
      %v3105 = vadd.f32 %v2930, %v2996
      %v3106 = vadd.f32 %v2931, %v3016
      %v3107 = vadd.f32 %v2932, %v3036
      %v3108 = vadd.f32 %v2933, %v3056
      %v3109 = vadd.f32 %v2934, %v3076
      %v3110 = vadd.f32 %v2935, %v3101
      %v3111 = vmax.f32 %v3103, 0.0
      %v3112 = vmax.f32 %v3104, 0.0
      %v3113 = vmax.f32 %v3105, 0.0
      %v3114 = vmax.f32 %v3106, 0.0
      %v3115 = vmax.f32 %v3107, 0.0
      %v3116 = vmax.f32 %v3108, 0.0
      %v3117 = vmax.f32 %v3109, 0.0
      %v3118 = vmax.f32 %v3110, 0.0
      %s3119 = scalar_lea.vmem %s172, 192
      %3120 = vst.msk [vmem:[%s3119] sm:$0xff] %vm968, %v3111
      %3121 = vst.msk [vmem:[%s3119 + $0x8] sm:$0xff] %vm968, %v3112
      %3122 = vst.msk [vmem:[%s3119 + $0x10] sm:$0xff] %vm968, %v3113
      %3123 = vst.msk [vmem:[%s3119 + $0x18] sm:$0xff] %vm968, %v3114
      %3124 = vst.msk [vmem:[%s3119 + $0x20] sm:$0xff] %vm968, %v3115
      %3125 = vst.msk [vmem:[%s3119 + $0x28] sm:$0xff] %vm968, %v3116
      %3126 = vst.msk [vmem:[%s3119 + $0x30] sm:$0xff] %vm968, %v3117
      %3127 = vst.msk [vmem:[%s3119 + $0x38] sm:$0xff] %vm968, %v3118
      %p3128 = scmp.lt.s32.totalorder %s16, 1
      %s3129 = scalar_select %p3128, %s16, 1
      %s3130 = smul.addr %s3129, 32
      %s3131 = smul.addr %s3130, 8
      %s3132 = scalar_lea.vmem %s3, %s3131
      // Predicated region
      $region33: #{forward.18} parent=31 // pred_check
        %p3133 = pneg %p102
      $region34: #{forward.18} parent=31 // pred_check_branch
        %3135 = sbr.rel (%p3133) target = $region36
      $region35: #{forward.18} parent=31 // pred_region
        _
      $region36: #{forward.18} parent=31 // pred_fallthru
        _
    $region32: #{forward.18} parent=5 // pred_fallthru
      _
    %p3136 = scmp.le.s32.totalorder 2, %s11
    // Predicated region
    $region37: #{forward.18} parent=5 // pred_check
      %p3137 = pneg %p3136
    $region38: #{forward.18} parent=5 // pred_check_branch
      %3139 = sbr.rel (%p3137) target = $region40
    $region39: #{forward.18} parent=5 // pred_region
      %s3140 = ssub.s32 %s11, 2
      // Predicated region
      $region41: #{forward.18} parent=39 // pred_check
        %p3141 = pneg %p108
      $region42: #{forward.18} parent=39 // pred_check_branch
        %3143 = sbr.rel (%p3141) target = $region44
      $region43: #{forward.18} parent=39 // pred_region
        %p3144 = scmp.lt.s32.totalorder %s17, 1
        %s3145 = scalar_select %p3144, %s17, 1
        %s3146 = smul.addr %s3145, 32
        %s3147 = smul.addr %s3146, 8
        %s3148 = scalar_lea.vmem %s3, %s3147
      $region44: #{forward.18} parent=39 // pred_fallthru
        _
    $region40: #{forward.18} parent=5 // pred_fallthru
      _
  $region6: #{forward.18} parent=0 // loop_footer
    %s15 = sadd.s32 1, %s11
  $region7: #{forward.18} parent=0 // loop_footer_branch
    %10 = sbr.rel target = $region3
  $region8: #{forward.18} parent=0 // loop_exit
    _

</llo_original>
